<compile_context>
chip_gen: v7x
topology: tpu7x:2x2x1
jax: 0.10.0
libtpu: 0.0.40
codegen_flags: <defaults>
</compile_context>

<pallas_src>
import functools
import math

import jax
import jax.numpy as jnp
from jax.experimental import pallas as pl
from jax.experimental.pallas import tpu as pltpu


# Left halo width along W inside the padded VMEM scratch.  8 keeps the interior
# store sublane-aligned (unmasked) for f32; the right halo is 1.
_WPAD = 8


# -----------------------------------------------------------------------------
# In-kernel helpers
# -----------------------------------------------------------------------------
def _pad_to_scratch(scr_ref, x):
    """Zero the (N, H+2, W+_WPAD+1, C) f32 scratch and write x at (1, _WPAD)."""
    N, H, W, C = x.shape
    scr_ref[...] = jnp.zeros_like(scr_ref)
    scr_ref[:, 1:H + 1, _WPAD:_WPAD + W, :] = x


def _im2col_3x3(xp, hout, wout):
    """Gather the 9 shifted taps of a same-padded 3x3 conv.

    xp: (N, hout+2, wout+_WPAD+1, C) f32 padded input (interior at (1, _WPAD)).
    returns (N*hout*wout, 9*C) f32 im2col matrix (tap-major, channel-minor),
    matching weights reshaped HWIO -> (9*C, cout).
    """
    N, _, _, C = xp.shape
    cols = []
    for dy in range(3):
        for dx in range(3):
            c0 = _WPAD - 1 + dx
            cols.append(xp[:, dy:dy + hout, c0:c0 + wout, :]
                        .reshape(N * hout * wout, C))
    return jnp.concatenate(cols, axis=-1)


# -----------------------------------------------------------------------------
# Pallas kernels
# -----------------------------------------------------------------------------
def _conv3x3_kernel(x_ref, w_ref, b_ref, *rest, relu, has_residual):
    """3x3 'same' conv over the whole batch (one im2col matmul, K = 9*cin).

    x_ref: (N, H, W, cin) bf16   w_ref: (9*cin, cout) bf16   b_ref: (1, cout) f32
    optional res_ref: (N, H, W, cout);  o_ref: (N, H, W, cout);  xp_scr: padded f32
    """
    if has_residual:
        res_ref, o_ref, xp_scr = rest
    else:
        o_ref, xp_scr = rest
    N, H, W, cout = o_ref.shape
    M = N * H * W

    x = x_ref[...].astype(jnp.float32)
    _pad_to_scratch(xp_scr, x)                               # zero halo in VMEM
    patches = _im2col_3x3(xp_scr[...], H, W)                 # (M, 9*cin) f32
    acc = jnp.dot(patches.astype(jnp.bfloat16), w_ref[...],
                  preferred_element_type=jnp.float32)        # f32 accumulate
    acc = acc + b_ref[...]
    if relu:
        acc = jnp.maximum(acc, 0.0)
    if has_residual:
        acc = acc + res_ref[...].astype(jnp.float32).reshape(M, cout)
    o_ref[...] = acc.reshape(N, H, W, cout).astype(o_ref.dtype)


def _resblock_kernel(x_ref, weff_ref, beff_ref, w2_ref, b2_ref,
                     w3a_ref, w3b_ref, w3c_ref, b3_ref,
                     sew1_ref, sew2_ref, o_ref, xp_scr, x2p_scr):
    """One whole ResBlock (whole batch), fully fused in VMEM.

    x_ref : (N, H, W, F) bf16 unpadded input.
    weff  : re-parameterized 3x3 (9F, F) bf16  (brb_3x3 + 1x3 + 3x1 + 1x1 folded)
    w2    : conv2 3x3 (9F, F) bf16
    w3a/b/c: 1x1 conv3 splits (F, F) f32 for concat order [x3 | x2 | x]
    sew1/sew2: SE FC weights (F, F//r), (F//r, F) f32
    """
    N, H, W, F = o_ref.shape
    M = N * H * W
    x0 = x_ref[...].astype(jnp.float32)                      # (N, H, W, F)

    # (1) re-parameterized branch conv (3x3) + ReLU, interior only.
    _pad_to_scratch(xp_scr, x0)
    p1 = _im2col_3x3(xp_scr[...], H, W)                      # (M, 9F)
    x2 = jnp.maximum(
        jnp.dot(p1.astype(jnp.bfloat16), weff_ref[...],
                preferred_element_type=jnp.float32) + beff_ref[...], 0.0)

    # (2) conv2 (3x3) on zero-padded relu output (halo ring comes from scratch).
    _pad_to_scratch(x2p_scr, x2.reshape(N, H, W, F))
    p2 = _im2col_3x3(x2p_scr[...], H, W)
    x3 = jnp.dot(p2.astype(jnp.bfloat16), w2_ref[...],
                 preferred_element_type=jnp.float32) + b2_ref[...]

    # (3) conv3: 1x1 over concat([x3, x2, x]) expressed as three matmuls
    #     (no 3F-channel tensor ever built in HBM).
    x0f = x0.reshape(M, F)
    y = (jnp.dot(x3, w3a_ref[...], preferred_element_type=jnp.float32)
         + jnp.dot(x2, w3b_ref[...], preferred_element_type=jnp.float32)
         + jnp.dot(x0f, w3c_ref[...], preferred_element_type=jnp.float32)
         + b3_ref[...])

    # (4) SE attention per batch element (pool -> FC -> ReLU -> FC -> sigmoid ->
    #     scale) + residual, all in f32.
    y3 = y.reshape(N, H * W, F)
    s = jnp.mean(y3, axis=1)                                 # (N, F)
    s = jnp.maximum(
        jnp.dot(s, sew1_ref[...], preferred_element_type=jnp.float32), 0.0)
    s = jnp.dot(s, sew2_ref[...], preferred_element_type=jnp.float32)
    s = 1.0 / (1.0 + jnp.exp(-s))                            # sigmoid (EUP)
    out = y3 * s[:, None, :] + x0.reshape(N, H * W, F)
    o_ref[...] = out.reshape(N, H, W, F).astype(o_ref.dtype)


# -----------------------------------------------------------------------------
# Wrappers around pallas_call
# -----------------------------------------------------------------------------
def conv2d(x, w, b, relu=False, residual=None):
    """3x3 'same' conv over the whole batch in one pallas_call (no grid).

    x: (N,H,W,Cin) bf16, w: (3,3,Cin,Cout) f32 HWIO, b: (Cout,) f32.
    Optional `residual` (N,H,W,Cout) is added inside the kernel.
    """
    kh, kw, cin, cout = w.shape
    assert kh == 3 and kw == 3
    N, H, W, _ = x.shape
    w2d = w.reshape(9 * cin, cout).astype(jnp.bfloat16)      # im2col weight
    inputs = [x, w2d, b.reshape(1, cout)]
    if residual is not None:
        inputs.append(residual)
    kern = functools.partial(_conv3x3_kernel, relu=relu,
                             has_residual=residual is not None)
    return pl.pallas_call(
        kern,
        out_shape=jax.ShapeDtypeStruct((N, H, W, cout), x.dtype),
        scratch_shapes=[pltpu.VMEM((N, H + 2, W + _WPAD + 1, cin),
                                   jnp.float32)],
    )(*inputs)


def _reparam_branches(pb):
    """Fold the 1x3 / 3x1 / 1x1 branches into the 3x3 branch (exact, linear)."""
    w = pb['w33']
    w = w.at[1:2, :, :, :].add(pb['w13'])        # 1x3 -> middle row
    w = w.at[:, 1:2, :, :].add(pb['w31'])        # 3x1 -> middle column
    w = w.at[1:2, 1:2, :, :].add(pb['w11'])      # 1x1 -> center tap
    b = pb['b33'] + pb['b13'] + pb['b31'] + pb['b11']
    return w, b


def resblock_forward(pb, x):
    """Whole ResBlock as one fused pallas_call over the whole batch."""
    N, H, W, F = x.shape
    w_eff, b_eff = _reparam_branches(pb)
    weff2d = w_eff.reshape(9 * F, F).astype(jnp.bfloat16)
    w2_2d = pb['w2'].reshape(9 * F, F).astype(jnp.bfloat16)
    w3 = pb['w3'][0, 0]                          # (3F, F); concat order [x3|x2|x]
    w3a, w3b, w3c = w3[:F], w3[F:2 * F], w3[2 * F:]
    pad_shape = (N, H + 2, W + _WPAD + 1, F)
    return pl.pallas_call(
        _resblock_kernel,
        out_shape=jax.ShapeDtypeStruct((N, H, W, F), x.dtype),
        scratch_shapes=[pltpu.VMEM(pad_shape, jnp.float32),
                        pltpu.VMEM(pad_shape, jnp.float32)],
    )(x, weff2d, b_eff.reshape(1, F), w2_2d, pb['b2'].reshape(1, F),
      w3a, w3b, w3c, pb['b3'].reshape(1, F), pb['se_w1'], pb['se_w2'])


def pixel_shuffle_nhwc(x, r):
    # nn.PixelShuffle semantics (NCHW channel index = c*r*r + i*r + j),
    # expressed on NHWC data. Pure data re-arrangement -> plain JAX glue.
    N, H, W, C = x.shape
    cout = C // (r * r)
    x = x.reshape(N, H, W, cout, r, r)
    x = x.transpose(0, 1, 4, 2, 5, 3)            # N, H, i, W, j, cout
    return x.reshape(N, H * r, W * r, cout)


# -----------------------------------------------------------------------------
# Parameter init (deterministic, PyTorch-conv-like uniform fan-in init)
# -----------------------------------------------------------------------------
def _init_conv(key, kh, kw, cin, cout):
    k1, k2 = jax.random.split(key)
    bound = 1.0 / math.sqrt(kh * kw * cin)
    w = jax.random.uniform(k1, (kh, kw, cin, cout), jnp.float32, -bound, bound)
    b = jax.random.uniform(k2, (cout,), jnp.float32, -bound, bound)
    return w, b


def init_params(key, n_resblocks=2, n_feats=16, n_colors=3, reduction=8):
    keys = iter(jax.random.split(key, 16 + 8 * n_resblocks))

    def c(kh, kw, cin, cout):
        return _init_conv(next(keys), kh, kw, cin, cout)

    p = {}
    # head: conv(3->F) -> Upsampler(x2: conv F->4F + PixelShuffle) -> conv(F->3)
    p['head0'] = c(3, 3, n_colors, n_feats)
    p['head_up'] = c(3, 3, n_feats, 4 * n_feats)
    p['head2'] = c(3, 3, n_feats, n_colors)
    # body: conv(3->F) then ResBlocks
    p['body0'] = c(3, 3, n_colors, n_feats)
    blocks = []
    for _ in range(n_resblocks):
        pb = {}
        pb['w33'], pb['b33'] = c(3, 3, n_feats, n_feats)
        pb['w13'], pb['b13'] = c(1, 3, n_feats, n_feats)
        pb['w31'], pb['b31'] = c(3, 1, n_feats, n_feats)
        pb['w11'], pb['b11'] = c(1, 1, n_feats, n_feats)
        # NOTE: ResBlock.conv1 is defined in __init__ but never used in forward.
        pb['w2'], pb['b2'] = c(3, 3, n_feats, n_feats)
        pb['w3'], pb['b3'] = c(1, 1, 3 * n_feats, n_feats)
        cr = max(n_feats // reduction, 1)
        k1, k2 = jax.random.split(next(keys))
        pb['se_w1'] = jax.random.uniform(
            k1, (n_feats, cr), jnp.float32,
            -1.0 / math.sqrt(n_feats), 1.0 / math.sqrt(n_feats))
        pb['se_w2'] = jax.random.uniform(
            k2, (cr, n_feats), jnp.float32,
            -1.0 / math.sqrt(cr), 1.0 / math.sqrt(cr))
        blocks.append(pb)
    p['blocks'] = blocks
    # tail: Upsampler(x2) -> conv(F->3)
    p['tail_up'] = c(3, 3, n_feats, 4 * n_feats)
    p['tail1'] = c(3, 3, n_feats, n_colors)
    return p


# -----------------------------------------------------------------------------
# Forward pass
# -----------------------------------------------------------------------------
def drsenmk_forward(params, x_nchw):
    # NCHW -> NHWC, bf16 activations between kernels (f32 accumulation inside).
    x = jnp.transpose(x_nchw, (0, 2, 3, 1)).astype(jnp.bfloat16)
    # head(x)
    h = conv2d(x, *params['head0'])
    h = conv2d(h, *params['head_up'])
    h = pixel_shuffle_nhwc(h, 2)
    inp = conv2d(h, *params['head2'])
    # body(x)
    r = conv2d(x, *params['body0'])
    for pb in params['blocks']:
        r = resblock_forward(pb, r)
    # tail(res) + inp  (residual add fused into the last conv kernel)
    t = conv2d(r, *params['tail_up'])
    t = pixel_shuffle_nhwc(t, 2)
    out = conv2d(t, *params['tail1'], residual=inp)
    return jnp.transpose(out, (0, 3, 1, 2)).astype(x_nchw.dtype)


# -----------------------------------------------------------------------------
if __name__ == "__main__":
    key = jax.random.PRNGKey(0)
    kx, kp = jax.random.split(key)

    # Small config consistent with the module: n_resblocks=2, n_feats=16,
    # scale=2, n_colors=3; input NCHW (2, 3, 8, 8) -> output (2, 3, 16, 16).
    x = jax.random.normal(kx, (2, 3, 8, 8), jnp.float32)
    params = init_params(kp, n_resblocks=2, n_feats=16, n_colors=3, reduction=8)

    fwd = jax.jit(drsenmk_forward)
    out = fwd(params, x)
    jax.block_until_ready(out)
    assert out.shape == (2, 3, 16, 16), out.shape
    assert bool(jnp.isfinite(out).all())
    print("KERNEL_OK")
</pallas_src>

<mosaic_0001>
module attributes {stable_mosaic.version = 11 : i64} {
  func.func @_conv3x3_kernel(%arg0: memref<2x8x8x16xbf16, #tpu.memory_space<vmem>>, %arg1: memref<144x64xbf16, #tpu.memory_space<vmem>>, %arg2: memref<1x64xf32, #tpu.memory_space<vmem>>, %arg3: memref<2x8x8x64xbf16, #tpu.memory_space<vmem>>, %arg4: memref<2x10x17x16xf32, #tpu.memory_space<vmem>>) attributes {dimension_semantics = [], scalar_prefetch = 0 : i64, scratch_operands = 1 : i64, tpu.core_type = #tpu.core_type<tc>} {
    %c0 = arith.constant 0 : index
    %c0_0 = arith.constant 0 : index
    %c0_1 = arith.constant 0 : index
    %c0_2 = arith.constant 0 : index
    %0 = vector.load %arg0[%c0, %c0_0, %c0_1, %c0_2] : memref<2x8x8x16xbf16, #tpu.memory_space<vmem>>, vector<2x8x8x16xbf16>
    %1 = arith.extf %0 : vector<2x8x8x16xbf16> to vector<2x8x8x16xf32>
    %cst = arith.constant 0.000000e+00 : f32
    %2 = vector.broadcast %cst : f32 to vector<2x10x17x16xf32>
    %c0_3 = arith.constant 0 : index
    %c0_4 = arith.constant 0 : index
    %c0_5 = arith.constant 0 : index
    %c0_6 = arith.constant 0 : index
    %3 = vector.load %arg4[%c0_3, %c0_4, %c0_5, %c0_6] : memref<2x10x17x16xf32, #tpu.memory_space<vmem>>, vector<2x10x17x16xf32>
    tpu.vector_store %arg4[%c0_3, %c0_4, %c0_5, %c0_6], %2 {strides = array<i32>} : memref<2x10x17x16xf32, #tpu.memory_space<vmem>>, vector<2x10x17x16xf32>,
    %c0_7 = arith.constant 0 : index
    %c1 = arith.constant 1 : index
    %c8 = arith.constant 8 : index
    %c0_8 = arith.constant 0 : index
    %4 = vector.load %arg4[%c0_7, %c1, %c8, %c0_8] : memref<2x10x17x16xf32, #tpu.memory_space<vmem>>, vector<2x8x8x16xf32>
    tpu.vector_store %arg4[%c0_7, %c1, %c8, %c0_8], %1 {strides = array<i32>} : memref<2x10x17x16xf32, #tpu.memory_space<vmem>>, vector<2x8x8x16xf32>,
    %c0_9 = arith.constant 0 : index
    %c0_10 = arith.constant 0 : index
    %c0_11 = arith.constant 0 : index
    %c0_12 = arith.constant 0 : index
    %5 = vector.load %arg4[%c0_9, %c0_10, %c0_11, %c0_12] : memref<2x10x17x16xf32, #tpu.memory_space<vmem>>, vector<2x10x17x16xf32>
    %6 = vector.extract_strided_slice %5 {offsets = [0, 0, 7, 0], sizes = [2, 8, 8, 16], strides = [1, 1, 1, 1]} : vector<2x10x17x16xf32> to vector<2x8x8x16xf32>
    %7 = vector.shape_cast %6 : vector<2x8x8x16xf32> to vector<128x16xf32>
    %8 = vector.extract_strided_slice %5 {offsets = [0, 0, 8, 0], sizes = [2, 8, 8, 16], strides = [1, 1, 1, 1]} : vector<2x10x17x16xf32> to vector<2x8x8x16xf32>
    %9 = vector.shape_cast %8 : vector<2x8x8x16xf32> to vector<128x16xf32>
    %10 = vector.extract_strided_slice %5 {offsets = [0, 0, 9, 0], sizes = [2, 8, 8, 16], strides = [1, 1, 1, 1]} : vector<2x10x17x16xf32> to vector<2x8x8x16xf32>
    %11 = vector.shape_cast %10 : vector<2x8x8x16xf32> to vector<128x16xf32>
    %12 = vector.extract_strided_slice %5 {offsets = [0, 1, 7, 0], sizes = [2, 8, 8, 16], strides = [1, 1, 1, 1]} : vector<2x10x17x16xf32> to vector<2x8x8x16xf32>
    %13 = vector.shape_cast %12 : vector<2x8x8x16xf32> to vector<128x16xf32>
    %14 = vector.extract_strided_slice %5 {offsets = [0, 1, 8, 0], sizes = [2, 8, 8, 16], strides = [1, 1, 1, 1]} : vector<2x10x17x16xf32> to vector<2x8x8x16xf32>
    %15 = vector.shape_cast %14 : vector<2x8x8x16xf32> to vector<128x16xf32>
    %16 = vector.extract_strided_slice %5 {offsets = [0, 1, 9, 0], sizes = [2, 8, 8, 16], strides = [1, 1, 1, 1]} : vector<2x10x17x16xf32> to vector<2x8x8x16xf32>
    %17 = vector.shape_cast %16 : vector<2x8x8x16xf32> to vector<128x16xf32>
    %18 = vector.extract_strided_slice %5 {offsets = [0, 2, 7, 0], sizes = [2, 8, 8, 16], strides = [1, 1, 1, 1]} : vector<2x10x17x16xf32> to vector<2x8x8x16xf32>
    %19 = vector.shape_cast %18 : vector<2x8x8x16xf32> to vector<128x16xf32>
    %20 = vector.extract_strided_slice %5 {offsets = [0, 2, 8, 0], sizes = [2, 8, 8, 16], strides = [1, 1, 1, 1]} : vector<2x10x17x16xf32> to vector<2x8x8x16xf32>
    %21 = vector.shape_cast %20 : vector<2x8x8x16xf32> to vector<128x16xf32>
    %22 = vector.extract_strided_slice %5 {offsets = [0, 2, 9, 0], sizes = [2, 8, 8, 16], strides = [1, 1, 1, 1]} : vector<2x10x17x16xf32> to vector<2x8x8x16xf32>
    %23 = vector.shape_cast %22 : vector<2x8x8x16xf32> to vector<128x16xf32>
    %24 = tpu.concatenate %7, %9, %11, %13, %15, %17, %19, %21, %23 in 1 : vector<128x16xf32>, vector<128x16xf32>, vector<128x16xf32>, vector<128x16xf32>, vector<128x16xf32>, vector<128x16xf32>, vector<128x16xf32>, vector<128x16xf32>, vector<128x16xf32> -> vector<128x144xf32>
    %25 = arith.truncf %24 : vector<128x144xf32> to vector<128x144xbf16>
    %c0_13 = arith.constant 0 : index
    %c0_14 = arith.constant 0 : index
    %26 = vector.load %arg1[%c0_13, %c0_14] : memref<144x64xbf16, #tpu.memory_space<vmem>>, vector<144x64xbf16>
    %cst_15 = arith.constant dense<0.000000e+00> : vector<128x64xf32>
    %27 = tpu.matmul %25, %26, %cst_15 {dimension_numbers = #tpu.dot_dimension_numbers<[1], [0], [0], [1], [0, 0, 1, 1], [], []>} : vector<128x144xbf16>, vector<144x64xbf16>, vector<128x64xf32> -> vector<128x64xf32>
    %c0_16 = arith.constant 0 : index
    %c0_17 = arith.constant 0 : index
    %28 = vector.load %arg2[%c0_16, %c0_17] : memref<1x64xf32, #tpu.memory_space<vmem>>, vector<1x64xf32>
    %29 = vector.broadcast %28 : vector<1x64xf32> to vector<128x64xf32>
    %30 = arith.addf %27, %29 : vector<128x64xf32>
    %31 = vector.shape_cast %30 : vector<128x64xf32> to vector<2x8x8x64xf32>
    %32 = arith.truncf %31 : vector<2x8x8x64xf32> to vector<2x8x8x64xbf16>
    %c0_18 = arith.constant 0 : index
    %c0_19 = arith.constant 0 : index
    %c0_20 = arith.constant 0 : index
    %c0_21 = arith.constant 0 : index
    %33 = vector.load %arg3[%c0_18, %c0_19, %c0_20, %c0_21] : memref<2x8x8x64xbf16, #tpu.memory_space<vmem>>, vector<2x8x8x64xbf16>
    tpu.vector_store %arg3[%c0_18, %c0_19, %c0_20, %c0_21], %32 {strides = array<i32>} : memref<2x8x8x64xbf16, #tpu.memory_space<vmem>>, vector<2x8x8x64xbf16>,
    return
  }
}

module attributes {stable_mosaic.version = 11 : i64} {
  func.func @_conv3x3_kernel(%arg0: memref<2x8x8x3xbf16, #tpu.memory_space<vmem>>, %arg1: memref<27x16xbf16, #tpu.memory_space<vmem>>, %arg2: memref<1x16xf32, #tpu.memory_space<vmem>>, %arg3: memref<2x8x8x16xbf16, #tpu.memory_space<vmem>>, %arg4: memref<2x10x17x3xf32, #tpu.memory_space<vmem>>) attributes {dimension_semantics = [], scalar_prefetch = 0 : i64, scratch_operands = 1 : i64, tpu.core_type = #tpu.core_type<tc>} {
    %c0 = arith.constant 0 : index
    %c0_0 = arith.constant 0 : index
    %c0_1 = arith.constant 0 : index
    %c0_2 = arith.constant 0 : index
    %0 = vector.load %arg0[%c0, %c0_0, %c0_1, %c0_2] : memref<2x8x8x3xbf16, #tpu.memory_space<vmem>>, vector<2x8x8x3xbf16>
    %1 = arith.extf %0 : vector<2x8x8x3xbf16> to vector<2x8x8x3xf32>
    %cst = arith.constant 0.000000e+00 : f32
    %2 = vector.broadcast %cst : f32 to vector<2x10x17x3xf32>
    %c0_3 = arith.constant 0 : index
    %c0_4 = arith.constant 0 : index
    %c0_5 = arith.constant 0 : index
    %c0_6 = arith.constant 0 : index
    %3 = vector.load %arg4[%c0_3, %c0_4, %c0_5, %c0_6] : memref<2x10x17x3xf32, #tpu.memory_space<vmem>>, vector<2x10x17x3xf32>
    tpu.vector_store %arg4[%c0_3, %c0_4, %c0_5, %c0_6], %2 {strides = array<i32>} : memref<2x10x17x3xf32, #tpu.memory_space<vmem>>, vector<2x10x17x3xf32>,
    %c0_7 = arith.constant 0 : index
    %c1 = arith.constant 1 : index
    %c8 = arith.constant 8 : index
    %c0_8 = arith.constant 0 : index
    %4 = vector.load %arg4[%c0_7, %c1, %c8, %c0_8] : memref<2x10x17x3xf32, #tpu.memory_space<vmem>>, vector<2x8x8x3xf32>
    tpu.vector_store %arg4[%c0_7, %c1, %c8, %c0_8], %1 {strides = array<i32>} : memref<2x10x17x3xf32, #tpu.memory_space<vmem>>, vector<2x8x8x3xf32>,
    %c0_9 = arith.constant 0 : index
    %c0_10 = arith.constant 0 : index
    %c0_11 = arith.constant 0 : index
    %c0_12 = arith.constant 0 : index
    %5 = vector.load %arg4[%c0_9, %c0_10, %c0_11, %c0_12] : memref<2x10x17x3xf32, #tpu.memory_space<vmem>>, vector<2x10x17x3xf32>
    %6 = vector.extract_strided_slice %5 {offsets = [0, 0, 7, 0], sizes = [2, 8, 8, 3], strides = [1, 1, 1, 1]} : vector<2x10x17x3xf32> to vector<2x8x8x3xf32>
    %7 = vector.shape_cast %6 : vector<2x8x8x3xf32> to vector<128x3xf32>
    %8 = vector.extract_strided_slice %5 {offsets = [0, 0, 8, 0], sizes = [2, 8, 8, 3], strides = [1, 1, 1, 1]} : vector<2x10x17x3xf32> to vector<2x8x8x3xf32>
    %9 = vector.shape_cast %8 : vector<2x8x8x3xf32> to vector<128x3xf32>
    %10 = vector.extract_strided_slice %5 {offsets = [0, 0, 9, 0], sizes = [2, 8, 8, 3], strides = [1, 1, 1, 1]} : vector<2x10x17x3xf32> to vector<2x8x8x3xf32>
    %11 = vector.shape_cast %10 : vector<2x8x8x3xf32> to vector<128x3xf32>
    %12 = vector.extract_strided_slice %5 {offsets = [0, 1, 7, 0], sizes = [2, 8, 8, 3], strides = [1, 1, 1, 1]} : vector<2x10x17x3xf32> to vector<2x8x8x3xf32>
    %13 = vector.shape_cast %12 : vector<2x8x8x3xf32> to vector<128x3xf32>
    %14 = vector.extract_strided_slice %5 {offsets = [0, 1, 8, 0], sizes = [2, 8, 8, 3], strides = [1, 1, 1, 1]} : vector<2x10x17x3xf32> to vector<2x8x8x3xf32>
    %15 = vector.shape_cast %14 : vector<2x8x8x3xf32> to vector<128x3xf32>
    %16 = vector.extract_strided_slice %5 {offsets = [0, 1, 9, 0], sizes = [2, 8, 8, 3], strides = [1, 1, 1, 1]} : vector<2x10x17x3xf32> to vector<2x8x8x3xf32>
    %17 = vector.shape_cast %16 : vector<2x8x8x3xf32> to vector<128x3xf32>
    %18 = vector.extract_strided_slice %5 {offsets = [0, 2, 7, 0], sizes = [2, 8, 8, 3], strides = [1, 1, 1, 1]} : vector<2x10x17x3xf32> to vector<2x8x8x3xf32>
    %19 = vector.shape_cast %18 : vector<2x8x8x3xf32> to vector<128x3xf32>
    %20 = vector.extract_strided_slice %5 {offsets = [0, 2, 8, 0], sizes = [2, 8, 8, 3], strides = [1, 1, 1, 1]} : vector<2x10x17x3xf32> to vector<2x8x8x3xf32>
    %21 = vector.shape_cast %20 : vector<2x8x8x3xf32> to vector<128x3xf32>
    %22 = vector.extract_strided_slice %5 {offsets = [0, 2, 9, 0], sizes = [2, 8, 8, 3], strides = [1, 1, 1, 1]} : vector<2x10x17x3xf32> to vector<2x8x8x3xf32>
    %23 = vector.shape_cast %22 : vector<2x8x8x3xf32> to vector<128x3xf32>
    %24 = tpu.concatenate %7, %9, %11, %13, %15, %17, %19, %21, %23 in 1 : vector<128x3xf32>, vector<128x3xf32>, vector<128x3xf32>, vector<128x3xf32>, vector<128x3xf32>, vector<128x3xf32>, vector<128x3xf32>, vector<128x3xf32>, vector<128x3xf32> -> vector<128x27xf32>
    %25 = arith.truncf %24 : vector<128x27xf32> to vector<128x27xbf16>
    %c0_13 = arith.constant 0 : index
    %c0_14 = arith.constant 0 : index
    %26 = vector.load %arg1[%c0_13, %c0_14] : memref<27x16xbf16, #tpu.memory_space<vmem>>, vector<27x16xbf16>
    %cst_15 = arith.constant dense<0.000000e+00> : vector<128x16xf32>
    %27 = tpu.matmul %25, %26, %cst_15 {dimension_numbers = #tpu.dot_dimension_numbers<[1], [0], [0], [1], [0, 0, 1, 1], [], []>} : vector<128x27xbf16>, vector<27x16xbf16>, vector<128x16xf32> -> vector<128x16xf32>
    %c0_16 = arith.constant 0 : index
    %c0_17 = arith.constant 0 : index
    %28 = vector.load %arg2[%c0_16, %c0_17] : memref<1x16xf32, #tpu.memory_space<vmem>>, vector<1x16xf32>
    %29 = vector.broadcast %28 : vector<1x16xf32> to vector<128x16xf32>
    %30 = arith.addf %27, %29 : vector<128x16xf32>
    %31 = vector.shape_cast %30 : vector<128x16xf32> to vector<2x8x8x16xf32>
    %32 = arith.truncf %31 : vector<2x8x8x16xf32> to vector<2x8x8x16xbf16>
    %c0_18 = arith.constant 0 : index
    %c0_19 = arith.constant 0 : index
    %c0_20 = arith.constant 0 : index
    %c0_21 = arith.constant 0 : index
    %33 = vector.load %arg3[%c0_18, %c0_19, %c0_20, %c0_21] : memref<2x8x8x16xbf16, #tpu.memory_space<vmem>>, vector<2x8x8x16xbf16>
    tpu.vector_store %arg3[%c0_18, %c0_19, %c0_20, %c0_21], %32 {strides = array<i32>} : memref<2x8x8x16xbf16, #tpu.memory_space<vmem>>, vector<2x8x8x16xbf16>,
    return
  }
}

module attributes {stable_mosaic.version = 11 : i64} {
  func.func @_resblock_kernel(%arg0: memref<2x8x8x16xbf16, #tpu.memory_space<vmem>>, %arg1: memref<144x16xbf16, #tpu.memory_space<vmem>>, %arg2: memref<1x16xf32, #tpu.memory_space<vmem>>, %arg3: memref<144x16xbf16, #tpu.memory_space<vmem>>, %arg4: memref<1x16xf32, #tpu.memory_space<vmem>>, %arg5: memref<16x16xf32, #tpu.memory_space<vmem>>, %arg6: memref<16x16xf32, #tpu.memory_space<vmem>>, %arg7: memref<16x16xf32, #tpu.memory_space<vmem>>, %arg8: memref<1x16xf32, #tpu.memory_space<vmem>>, %arg9: memref<16x2xf32, #tpu.memory_space<vmem>>, %arg10: memref<2x16xf32, #tpu.memory_space<vmem>>, %arg11: memref<2x8x8x16xbf16, #tpu.memory_space<vmem>>, %arg12: memref<2x10x17x16xf32, #tpu.memory_space<vmem>>, %arg13: memref<2x10x17x16xf32, #tpu.memory_space<vmem>>) attributes {dimension_semantics = [], scalar_prefetch = 0 : i64, scratch_operands = 2 : i64, tpu.core_type = #tpu.core_type<tc>} {
    %c0 = arith.constant 0 : index
    %c0_0 = arith.constant 0 : index
    %c0_1 = arith.constant 0 : index
    %c0_2 = arith.constant 0 : index
    %0 = vector.load %arg0[%c0, %c0_0, %c0_1, %c0_2] : memref<2x8x8x16xbf16, #tpu.memory_space<vmem>>, vector<2x8x8x16xbf16>
    %1 = arith.extf %0 : vector<2x8x8x16xbf16> to vector<2x8x8x16xf32>
    %cst = arith.constant 0.000000e+00 : f32
    %2 = vector.broadcast %cst : f32 to vector<2x10x17x16xf32>
    %c0_3 = arith.constant 0 : index
    %c0_4 = arith.constant 0 : index
    %c0_5 = arith.constant 0 : index
    %c0_6 = arith.constant 0 : index
    %3 = vector.load %arg12[%c0_3, %c0_4, %c0_5, %c0_6] : memref<2x10x17x16xf32, #tpu.memory_space<vmem>>, vector<2x10x17x16xf32>
    tpu.vector_store %arg12[%c0_3, %c0_4, %c0_5, %c0_6], %2 {strides = array<i32>} : memref<2x10x17x16xf32, #tpu.memory_space<vmem>>, vector<2x10x17x16xf32>,
    %c0_7 = arith.constant 0 : index
    %c1 = arith.constant 1 : index
    %c8 = arith.constant 8 : index
    %c0_8 = arith.constant 0 : index
    %4 = vector.load %arg12[%c0_7, %c1, %c8, %c0_8] : memref<2x10x17x16xf32, #tpu.memory_space<vmem>>, vector<2x8x8x16xf32>
    tpu.vector_store %arg12[%c0_7, %c1, %c8, %c0_8], %1 {strides = array<i32>} : memref<2x10x17x16xf32, #tpu.memory_space<vmem>>, vector<2x8x8x16xf32>,
    %c0_9 = arith.constant 0 : index
    %c0_10 = arith.constant 0 : index
    %c0_11 = arith.constant 0 : index
    %c0_12 = arith.constant 0 : index
    %5 = vector.load %arg12[%c0_9, %c0_10, %c0_11, %c0_12] : memref<2x10x17x16xf32, #tpu.memory_space<vmem>>, vector<2x10x17x16xf32>
    %6 = vector.extract_strided_slice %5 {offsets = [0, 0, 7, 0], sizes = [2, 8, 8, 16], strides = [1, 1, 1, 1]} : vector<2x10x17x16xf32> to vector<2x8x8x16xf32>
    %7 = vector.shape_cast %6 : vector<2x8x8x16xf32> to vector<128x16xf32>
    %8 = vector.extract_strided_slice %5 {offsets = [0, 0, 8, 0], sizes = [2, 8, 8, 16], strides = [1, 1, 1, 1]} : vector<2x10x17x16xf32> to vector<2x8x8x16xf32>
    %9 = vector.shape_cast %8 : vector<2x8x8x16xf32> to vector<128x16xf32>
    %10 = vector.extract_strided_slice %5 {offsets = [0, 0, 9, 0], sizes = [2, 8, 8, 16], strides = [1, 1, 1, 1]} : vector<2x10x17x16xf32> to vector<2x8x8x16xf32>
    %11 = vector.shape_cast %10 : vector<2x8x8x16xf32> to vector<128x16xf32>
    %12 = vector.extract_strided_slice %5 {offsets = [0, 1, 7, 0], sizes = [2, 8, 8, 16], strides = [1, 1, 1, 1]} : vector<2x10x17x16xf32> to vector<2x8x8x16xf32>
    %13 = vector.shape_cast %12 : vector<2x8x8x16xf32> to vector<128x16xf32>
    %14 = vector.extract_strided_slice %5 {offsets = [0, 1, 8, 0], sizes = [2, 8, 8, 16], strides = [1, 1, 1, 1]} : vector<2x10x17x16xf32> to vector<2x8x8x16xf32>
    %15 = vector.shape_cast %14 : vector<2x8x8x16xf32> to vector<128x16xf32>
    %16 = vector.extract_strided_slice %5 {offsets = [0, 1, 9, 0], sizes = [2, 8, 8, 16], strides = [1, 1, 1, 1]} : vector<2x10x17x16xf32> to vector<2x8x8x16xf32>
    %17 = vector.shape_cast %16 : vector<2x8x8x16xf32> to vector<128x16xf32>
    %18 = vector.extract_strided_slice %5 {offsets = [0, 2, 7, 0], sizes = [2, 8, 8, 16], strides = [1, 1, 1, 1]} : vector<2x10x17x16xf32> to vector<2x8x8x16xf32>
    %19 = vector.shape_cast %18 : vector<2x8x8x16xf32> to vector<128x16xf32>
    %20 = vector.extract_strided_slice %5 {offsets = [0, 2, 8, 0], sizes = [2, 8, 8, 16], strides = [1, 1, 1, 1]} : vector<2x10x17x16xf32> to vector<2x8x8x16xf32>
    %21 = vector.shape_cast %20 : vector<2x8x8x16xf32> to vector<128x16xf32>
    %22 = vector.extract_strided_slice %5 {offsets = [0, 2, 9, 0], sizes = [2, 8, 8, 16], strides = [1, 1, 1, 1]} : vector<2x10x17x16xf32> to vector<2x8x8x16xf32>
    %23 = vector.shape_cast %22 : vector<2x8x8x16xf32> to vector<128x16xf32>
    %24 = tpu.concatenate %7, %9, %11, %13, %15, %17, %19, %21, %23 in 1 : vector<128x16xf32>, vector<128x16xf32>, vector<128x16xf32>, vector<128x16xf32>, vector<128x16xf32>, vector<128x16xf32>, vector<128x16xf32>, vector<128x16xf32>, vector<128x16xf32> -> vector<128x144xf32>
    %25 = arith.truncf %24 : vector<128x144xf32> to vector<128x144xbf16>
    %c0_13 = arith.constant 0 : index
    %c0_14 = arith.constant 0 : index
    %26 = vector.load %arg1[%c0_13, %c0_14] : memref<144x16xbf16, #tpu.memory_space<vmem>>, vector<144x16xbf16>
    %cst_15 = arith.constant dense<0.000000e+00> : vector<128x16xf32>
    %27 = tpu.matmul %25, %26, %cst_15 {dimension_numbers = #tpu.dot_dimension_numbers<[1], [0], [0], [1], [0, 0, 1, 1], [], []>} : vector<128x144xbf16>, vector<144x16xbf16>, vector<128x16xf32> -> vector<128x16xf32>
    %c0_16 = arith.constant 0 : index
    %c0_17 = arith.constant 0 : index
    %28 = vector.load %arg2[%c0_16, %c0_17] : memref<1x16xf32, #tpu.memory_space<vmem>>, vector<1x16xf32>
    %29 = vector.broadcast %28 : vector<1x16xf32> to vector<128x16xf32>
    %30 = arith.addf %27, %29 : vector<128x16xf32>
    %cst_18 = arith.constant 0.000000e+00 : f32
    %31 = vector.broadcast %cst_18 : f32 to vector<128x16xf32>
    %32 = arith.maximumf %30, %31 : vector<128x16xf32>
    %33 = vector.shape_cast %32 : vector<128x16xf32> to vector<2x8x8x16xf32>
    %cst_19 = arith.constant 0.000000e+00 : f32
    %34 = vector.broadcast %cst_19 : f32 to vector<2x10x17x16xf32>
    %c0_20 = arith.constant 0 : index
    %c0_21 = arith.constant 0 : index
    %c0_22 = arith.constant 0 : index
    %c0_23 = arith.constant 0 : index
    %35 = vector.load %arg13[%c0_20, %c0_21, %c0_22, %c0_23] : memref<2x10x17x16xf32, #tpu.memory_space<vmem>>, vector<2x10x17x16xf32>
    tpu.vector_store %arg13[%c0_20, %c0_21, %c0_22, %c0_23], %34 {strides = array<i32>} : memref<2x10x17x16xf32, #tpu.memory_space<vmem>>, vector<2x10x17x16xf32>,
    %c0_24 = arith.constant 0 : index
    %c1_25 = arith.constant 1 : index
    %c8_26 = arith.constant 8 : index
    %c0_27 = arith.constant 0 : index
    %36 = vector.load %arg13[%c0_24, %c1_25, %c8_26, %c0_27] : memref<2x10x17x16xf32, #tpu.memory_space<vmem>>, vector<2x8x8x16xf32>
    tpu.vector_store %arg13[%c0_24, %c1_25, %c8_26, %c0_27], %33 {strides = array<i32>} : memref<2x10x17x16xf32, #tpu.memory_space<vmem>>, vector<2x8x8x16xf32>,
    %c0_28 = arith.constant 0 : index
    %c0_29 = arith.constant 0 : index
    %c0_30 = arith.constant 0 : index
    %c0_31 = arith.constant 0 : index
    %37 = vector.load %arg13[%c0_28, %c0_29, %c0_30, %c0_31] : memref<2x10x17x16xf32, #tpu.memory_space<vmem>>, vector<2x10x17x16xf32>
    %38 = vector.extract_strided_slice %37 {offsets = [0, 0, 7, 0], sizes = [2, 8, 8, 16], strides = [1, 1, 1, 1]} : vector<2x10x17x16xf32> to vector<2x8x8x16xf32>
    %39 = vector.shape_cast %38 : vector<2x8x8x16xf32> to vector<128x16xf32>
    %40 = vector.extract_strided_slice %37 {offsets = [0, 0, 8, 0], sizes = [2, 8, 8, 16], strides = [1, 1, 1, 1]} : vector<2x10x17x16xf32> to vector<2x8x8x16xf32>
    %41 = vector.shape_cast %40 : vector<2x8x8x16xf32> to vector<128x16xf32>
    %42 = vector.extract_strided_slice %37 {offsets = [0, 0, 9, 0], sizes = [2, 8, 8, 16], strides = [1, 1, 1, 1]} : vector<2x10x17x16xf32> to vector<2x8x8x16xf32>
    %43 = vector.shape_cast %42 : vector<2x8x8x16xf32> to vector<128x16xf32>
    %44 = vector.extract_strided_slice %37 {offsets = [0, 1, 7, 0], sizes = [2, 8, 8, 16], strides = [1, 1, 1, 1]} : vector<2x10x17x16xf32> to vector<2x8x8x16xf32>
    %45 = vector.shape_cast %44 : vector<2x8x8x16xf32> to vector<128x16xf32>
    %46 = vector.extract_strided_slice %37 {offsets = [0, 1, 8, 0], sizes = [2, 8, 8, 16], strides = [1, 1, 1, 1]} : vector<2x10x17x16xf32> to vector<2x8x8x16xf32>
    %47 = vector.shape_cast %46 : vector<2x8x8x16xf32> to vector<128x16xf32>
    %48 = vector.extract_strided_slice %37 {offsets = [0, 1, 9, 0], sizes = [2, 8, 8, 16], strides = [1, 1, 1, 1]} : vector<2x10x17x16xf32> to vector<2x8x8x16xf32>
    %49 = vector.shape_cast %48 : vector<2x8x8x16xf32> to vector<128x16xf32>
    %50 = vector.extract_strided_slice %37 {offsets = [0, 2, 7, 0], sizes = [2, 8, 8, 16], strides = [1, 1, 1, 1]} : vector<2x10x17x16xf32> to vector<2x8x8x16xf32>
    %51 = vector.shape_cast %50 : vector<2x8x8x16xf32> to vector<128x16xf32>
    %52 = vector.extract_strided_slice %37 {offsets = [0, 2, 8, 0], sizes = [2, 8, 8, 16], strides = [1, 1, 1, 1]} : vector<2x10x17x16xf32> to vector<2x8x8x16xf32>
    %53 = vector.shape_cast %52 : vector<2x8x8x16xf32> to vector<128x16xf32>
    %54 = vector.extract_strided_slice %37 {offsets = [0, 2, 9, 0], sizes = [2, 8, 8, 16], strides = [1, 1, 1, 1]} : vector<2x10x17x16xf32> to vector<2x8x8x16xf32>
    %55 = vector.shape_cast %54 : vector<2x8x8x16xf32> to vector<128x16xf32>
    %56 = tpu.concatenate %39, %41, %43, %45, %47, %49, %51, %53, %55 in 1 : vector<128x16xf32>, vector<128x16xf32>, vector<128x16xf32>, vector<128x16xf32>, vector<128x16xf32>, vector<128x16xf32>, vector<128x16xf32>, vector<128x16xf32>, vector<128x16xf32> -> vector<128x144xf32>
    %57 = arith.truncf %56 : vector<128x144xf32> to vector<128x144xbf16>
    %c0_32 = arith.constant 0 : index
    %c0_33 = arith.constant 0 : index
    %58 = vector.load %arg3[%c0_32, %c0_33] : memref<144x16xbf16, #tpu.memory_space<vmem>>, vector<144x16xbf16>
    %cst_34 = arith.constant dense<0.000000e+00> : vector<128x16xf32>
    %59 = tpu.matmul %57, %58, %cst_34 {dimension_numbers = #tpu.dot_dimension_numbers<[1], [0], [0], [1], [0, 0, 1, 1], [], []>} : vector<128x144xbf16>, vector<144x16xbf16>, vector<128x16xf32> -> vector<128x16xf32>
    %c0_35 = arith.constant 0 : index
    %c0_36 = arith.constant 0 : index
    %60 = vector.load %arg4[%c0_35, %c0_36] : memref<1x16xf32, #tpu.memory_space<vmem>>, vector<1x16xf32>
    %61 = vector.broadcast %60 : vector<1x16xf32> to vector<128x16xf32>
    %62 = arith.addf %59, %61 : vector<128x16xf32>
    %63 = vector.shape_cast %1 : vector<2x8x8x16xf32> to vector<128x16xf32>
    %c0_37 = arith.constant 0 : index
    %c0_38 = arith.constant 0 : index
    %64 = vector.load %arg5[%c0_37, %c0_38] : memref<16x16xf32, #tpu.memory_space<vmem>>, vector<16x16xf32>
    %cst_39 = arith.constant dense<0.000000e+00> : vector<128x16xf32>
    %65 = tpu.matmul %62, %64, %cst_39 {dimension_numbers = #tpu.dot_dimension_numbers<[1], [0], [0], [1], [0, 0, 1, 1], [], []>} : vector<128x16xf32>, vector<16x16xf32>, vector<128x16xf32> -> vector<128x16xf32>
    %c0_40 = arith.constant 0 : index
    %c0_41 = arith.constant 0 : index
    %66 = vector.load %arg6[%c0_40, %c0_41] : memref<16x16xf32, #tpu.memory_space<vmem>>, vector<16x16xf32>
    %cst_42 = arith.constant dense<0.000000e+00> : vector<128x16xf32>
    %67 = tpu.matmul %32, %66, %cst_42 {dimension_numbers = #tpu.dot_dimension_numbers<[1], [0], [0], [1], [0, 0, 1, 1], [], []>} : vector<128x16xf32>, vector<16x16xf32>, vector<128x16xf32> -> vector<128x16xf32>
    %68 = arith.addf %65, %67 : vector<128x16xf32>
    %c0_43 = arith.constant 0 : index
    %c0_44 = arith.constant 0 : index
    %69 = vector.load %arg7[%c0_43, %c0_44] : memref<16x16xf32, #tpu.memory_space<vmem>>, vector<16x16xf32>
    %cst_45 = arith.constant dense<0.000000e+00> : vector<128x16xf32>
    %70 = tpu.matmul %63, %69, %cst_45 {dimension_numbers = #tpu.dot_dimension_numbers<[1], [0], [0], [1], [0, 0, 1, 1], [], []>} : vector<128x16xf32>, vector<16x16xf32>, vector<128x16xf32> -> vector<128x16xf32>
    %71 = arith.addf %68, %70 : vector<128x16xf32>
    %c0_46 = arith.constant 0 : index
    %c0_47 = arith.constant 0 : index
    %72 = vector.load %arg8[%c0_46, %c0_47] : memref<1x16xf32, #tpu.memory_space<vmem>>, vector<1x16xf32>
    %73 = vector.broadcast %72 : vector<1x16xf32> to vector<128x16xf32>
    %74 = arith.addf %71, %73 : vector<128x16xf32>
    %75 = vector.shape_cast %74 : vector<128x16xf32> to vector<2x64x16xf32>
    %cst_48 = arith.constant dense<0.000000e+00> : vector<2x16xf32>
    %76 = vector.multi_reduction <add>, %75, %cst_48 [1] : vector<2x64x16xf32> to vector<2x16xf32>
    %cst_49 = arith.constant 6.400000e+01 : f32
    %77 = vector.broadcast %cst_49 : f32 to vector<2x16xf32>
    %78 = arith.divf %76, %77 : vector<2x16xf32>
    %c0_50 = arith.constant 0 : index
    %c0_51 = arith.constant 0 : index
    %79 = vector.load %arg9[%c0_50, %c0_51] : memref<16x2xf32, #tpu.memory_space<vmem>>, vector<16x2xf32>
    %cst_52 = arith.constant dense<0.000000e+00> : vector<2x2xf32>
    %80 = tpu.matmul %78, %79, %cst_52 {dimension_numbers = #tpu.dot_dimension_numbers<[1], [0], [0], [1], [0, 0, 1, 1], [], []>} : vector<2x16xf32>, vector<16x2xf32>, vector<2x2xf32> -> vector<2x2xf32>
    %cst_53 = arith.constant 0.000000e+00 : f32
    %81 = vector.broadcast %cst_53 : f32 to vector<2x2xf32>
    %82 = arith.maximumf %80, %81 : vector<2x2xf32>
    %c0_54 = arith.constant 0 : index
    %c0_55 = arith.constant 0 : index
    %83 = vector.load %arg10[%c0_54, %c0_55] : memref<2x16xf32, #tpu.memory_space<vmem>>, vector<2x16xf32>
    %cst_56 = arith.constant dense<0.000000e+00> : vector<2x16xf32>
    %84 = tpu.matmul %82, %83, %cst_56 {dimension_numbers = #tpu.dot_dimension_numbers<[1], [0], [0], [1], [0, 0, 1, 1], [], []>} : vector<2x2xf32>, vector<2x16xf32>, vector<2x16xf32> -> vector<2x16xf32>
    %cst_57 = arith.constant 0.000000e+00 : f32
    %85 = vector.broadcast %cst_57 : f32 to vector<2x16xf32>
    %86 = arith.subf %85, %84 : vector<2x16xf32>
    %87 = math.exp %86 : vector<2x16xf32>
    %cst_58 = arith.constant 1.000000e+00 : f32
    %88 = vector.broadcast %cst_58 : f32 to vector<2x16xf32>
    %89 = arith.addf %88, %87 : vector<2x16xf32>
    %cst_59 = arith.constant 1.000000e+00 : f32
    %90 = vector.broadcast %cst_59 : f32 to vector<2x16xf32>
    %91 = arith.divf %90, %89 : vector<2x16xf32>
    %92 = vector.shape_cast %91 : vector<2x16xf32> to vector<2x1x16xf32>
    %93 = vector.broadcast %92 : vector<2x1x16xf32> to vector<2x64x16xf32>
    %94 = arith.mulf %75, %93 : vector<2x64x16xf32>
    %95 = vector.shape_cast %1 : vector<2x8x8x16xf32> to vector<2x64x16xf32>
    %96 = arith.addf %94, %95 : vector<2x64x16xf32>
    %97 = vector.shape_cast %96 : vector<2x64x16xf32> to vector<2x8x8x16xf32>
    %98 = arith.truncf %97 : vector<2x8x8x16xf32> to vector<2x8x8x16xbf16>
    %c0_60 = arith.constant 0 : index
    %c0_61 = arith.constant 0 : index
    %c0_62 = arith.constant 0 : index
    %c0_63 = arith.constant 0 : index
    %99 = vector.load %arg11[%c0_60, %c0_61, %c0_62, %c0_63] : memref<2x8x8x16xbf16, #tpu.memory_space<vmem>>, vector<2x8x8x16xbf16>
    tpu.vector_store %arg11[%c0_60, %c0_61, %c0_62, %c0_63], %98 {strides = array<i32>} : memref<2x8x8x16xbf16, #tpu.memory_space<vmem>>, vector<2x8x8x16xbf16>,
    return
  }
}

module attributes {stable_mosaic.version = 11 : i64} {
  func.func @_conv3x3_kernel(%arg0: memref<2x16x16x16xbf16, #tpu.memory_space<vmem>>, %arg1: memref<144x3xbf16, #tpu.memory_space<vmem>>, %arg2: memref<1x3xf32, #tpu.memory_space<vmem>>, %arg3: memref<2x16x16x3xbf16, #tpu.memory_space<vmem>>, %arg4: memref<2x18x25x16xf32, #tpu.memory_space<vmem>>) attributes {dimension_semantics = [], scalar_prefetch = 0 : i64, scratch_operands = 1 : i64, tpu.core_type = #tpu.core_type<tc>} {
    %c0 = arith.constant 0 : index
    %c0_0 = arith.constant 0 : index
    %c0_1 = arith.constant 0 : index
    %c0_2 = arith.constant 0 : index
    %0 = vector.load %arg0[%c0, %c0_0, %c0_1, %c0_2] : memref<2x16x16x16xbf16, #tpu.memory_space<vmem>>, vector<2x16x16x16xbf16>
    %1 = arith.extf %0 : vector<2x16x16x16xbf16> to vector<2x16x16x16xf32>
    %cst = arith.constant 0.000000e+00 : f32
    %2 = vector.broadcast %cst : f32 to vector<2x18x25x16xf32>
    %c0_3 = arith.constant 0 : index
    %c0_4 = arith.constant 0 : index
    %c0_5 = arith.constant 0 : index
    %c0_6 = arith.constant 0 : index
    %3 = vector.load %arg4[%c0_3, %c0_4, %c0_5, %c0_6] : memref<2x18x25x16xf32, #tpu.memory_space<vmem>>, vector<2x18x25x16xf32>
    tpu.vector_store %arg4[%c0_3, %c0_4, %c0_5, %c0_6], %2 {strides = array<i32>} : memref<2x18x25x16xf32, #tpu.memory_space<vmem>>, vector<2x18x25x16xf32>,
    %c0_7 = arith.constant 0 : index
    %c1 = arith.constant 1 : index
    %c8 = arith.constant 8 : index
    %c0_8 = arith.constant 0 : index
    %4 = vector.load %arg4[%c0_7, %c1, %c8, %c0_8] : memref<2x18x25x16xf32, #tpu.memory_space<vmem>>, vector<2x16x16x16xf32>
    tpu.vector_store %arg4[%c0_7, %c1, %c8, %c0_8], %1 {strides = array<i32>} : memref<2x18x25x16xf32, #tpu.memory_space<vmem>>, vector<2x16x16x16xf32>,
    %c0_9 = arith.constant 0 : index
    %c0_10 = arith.constant 0 : index
    %c0_11 = arith.constant 0 : index
    %c0_12 = arith.constant 0 : index
    %5 = vector.load %arg4[%c0_9, %c0_10, %c0_11, %c0_12] : memref<2x18x25x16xf32, #tpu.memory_space<vmem>>, vector<2x18x25x16xf32>
    %6 = vector.extract_strided_slice %5 {offsets = [0, 0, 7, 0], sizes = [2, 16, 16, 16], strides = [1, 1, 1, 1]} : vector<2x18x25x16xf32> to vector<2x16x16x16xf32>
    %7 = vector.shape_cast %6 : vector<2x16x16x16xf32> to vector<512x16xf32>
    %8 = vector.extract_strided_slice %5 {offsets = [0, 0, 8, 0], sizes = [2, 16, 16, 16], strides = [1, 1, 1, 1]} : vector<2x18x25x16xf32> to vector<2x16x16x16xf32>
    %9 = vector.shape_cast %8 : vector<2x16x16x16xf32> to vector<512x16xf32>
    %10 = vector.extract_strided_slice %5 {offsets = [0, 0, 9, 0], sizes = [2, 16, 16, 16], strides = [1, 1, 1, 1]} : vector<2x18x25x16xf32> to vector<2x16x16x16xf32>
    %11 = vector.shape_cast %10 : vector<2x16x16x16xf32> to vector<512x16xf32>
    %12 = vector.extract_strided_slice %5 {offsets = [0, 1, 7, 0], sizes = [2, 16, 16, 16], strides = [1, 1, 1, 1]} : vector<2x18x25x16xf32> to vector<2x16x16x16xf32>
    %13 = vector.shape_cast %12 : vector<2x16x16x16xf32> to vector<512x16xf32>
    %14 = vector.extract_strided_slice %5 {offsets = [0, 1, 8, 0], sizes = [2, 16, 16, 16], strides = [1, 1, 1, 1]} : vector<2x18x25x16xf32> to vector<2x16x16x16xf32>
    %15 = vector.shape_cast %14 : vector<2x16x16x16xf32> to vector<512x16xf32>
    %16 = vector.extract_strided_slice %5 {offsets = [0, 1, 9, 0], sizes = [2, 16, 16, 16], strides = [1, 1, 1, 1]} : vector<2x18x25x16xf32> to vector<2x16x16x16xf32>
    %17 = vector.shape_cast %16 : vector<2x16x16x16xf32> to vector<512x16xf32>
    %18 = vector.extract_strided_slice %5 {offsets = [0, 2, 7, 0], sizes = [2, 16, 16, 16], strides = [1, 1, 1, 1]} : vector<2x18x25x16xf32> to vector<2x16x16x16xf32>
    %19 = vector.shape_cast %18 : vector<2x16x16x16xf32> to vector<512x16xf32>
    %20 = vector.extract_strided_slice %5 {offsets = [0, 2, 8, 0], sizes = [2, 16, 16, 16], strides = [1, 1, 1, 1]} : vector<2x18x25x16xf32> to vector<2x16x16x16xf32>
    %21 = vector.shape_cast %20 : vector<2x16x16x16xf32> to vector<512x16xf32>
    %22 = vector.extract_strided_slice %5 {offsets = [0, 2, 9, 0], sizes = [2, 16, 16, 16], strides = [1, 1, 1, 1]} : vector<2x18x25x16xf32> to vector<2x16x16x16xf32>
    %23 = vector.shape_cast %22 : vector<2x16x16x16xf32> to vector<512x16xf32>
    %24 = tpu.concatenate %7, %9, %11, %13, %15, %17, %19, %21, %23 in 1 : vector<512x16xf32>, vector<512x16xf32>, vector<512x16xf32>, vector<512x16xf32>, vector<512x16xf32>, vector<512x16xf32>, vector<512x16xf32>, vector<512x16xf32>, vector<512x16xf32> -> vector<512x144xf32>
    %25 = arith.truncf %24 : vector<512x144xf32> to vector<512x144xbf16>
    %c0_13 = arith.constant 0 : index
    %c0_14 = arith.constant 0 : index
    %26 = vector.load %arg1[%c0_13, %c0_14] : memref<144x3xbf16, #tpu.memory_space<vmem>>, vector<144x3xbf16>
    %cst_15 = arith.constant dense<0.000000e+00> : vector<512x3xf32>
    %27 = tpu.matmul %25, %26, %cst_15 {dimension_numbers = #tpu.dot_dimension_numbers<[1], [0], [0], [1], [0, 0, 1, 1], [], []>} : vector<512x144xbf16>, vector<144x3xbf16>, vector<512x3xf32> -> vector<512x3xf32>
    %c0_16 = arith.constant 0 : index
    %c0_17 = arith.constant 0 : index
    %28 = vector.load %arg2[%c0_16, %c0_17] : memref<1x3xf32, #tpu.memory_space<vmem>>, vector<1x3xf32>
    %29 = vector.broadcast %28 : vector<1x3xf32> to vector<512x3xf32>
    %30 = arith.addf %27, %29 : vector<512x3xf32>
    %31 = vector.shape_cast %30 : vector<512x3xf32> to vector<2x16x16x3xf32>
    %32 = arith.truncf %31 : vector<2x16x16x3xf32> to vector<2x16x16x3xbf16>
    %c0_18 = arith.constant 0 : index
    %c0_19 = arith.constant 0 : index
    %c0_20 = arith.constant 0 : index
    %c0_21 = arith.constant 0 : index
    %33 = vector.load %arg3[%c0_18, %c0_19, %c0_20, %c0_21] : memref<2x16x16x3xbf16, #tpu.memory_space<vmem>>, vector<2x16x16x3xbf16>
    tpu.vector_store %arg3[%c0_18, %c0_19, %c0_20, %c0_21], %32 {strides = array<i32>} : memref<2x16x16x3xbf16, #tpu.memory_space<vmem>>, vector<2x16x16x3xbf16>,
    return
  }
}

module attributes {stable_mosaic.version = 11 : i64} {
  func.func @_conv3x3_kernel(%arg0: memref<2x16x16x16xbf16, #tpu.memory_space<vmem>>, %arg1: memref<144x3xbf16, #tpu.memory_space<vmem>>, %arg2: memref<1x3xf32, #tpu.memory_space<vmem>>, %arg3: memref<2x16x16x3xbf16, #tpu.memory_space<vmem>>, %arg4: memref<2x16x16x3xbf16, #tpu.memory_space<vmem>>, %arg5: memref<2x18x25x16xf32, #tpu.memory_space<vmem>>) attributes {dimension_semantics = [], scalar_prefetch = 0 : i64, scratch_operands = 1 : i64, tpu.core_type = #tpu.core_type<tc>} {
    %c0 = arith.constant 0 : index
    %c0_0 = arith.constant 0 : index
    %c0_1 = arith.constant 0 : index
    %c0_2 = arith.constant 0 : index
    %0 = vector.load %arg0[%c0, %c0_0, %c0_1, %c0_2] : memref<2x16x16x16xbf16, #tpu.memory_space<vmem>>, vector<2x16x16x16xbf16>
    %1 = arith.extf %0 : vector<2x16x16x16xbf16> to vector<2x16x16x16xf32>
    %cst = arith.constant 0.000000e+00 : f32
    %2 = vector.broadcast %cst : f32 to vector<2x18x25x16xf32>
    %c0_3 = arith.constant 0 : index
    %c0_4 = arith.constant 0 : index
    %c0_5 = arith.constant 0 : index
    %c0_6 = arith.constant 0 : index
    %3 = vector.load %arg5[%c0_3, %c0_4, %c0_5, %c0_6] : memref<2x18x25x16xf32, #tpu.memory_space<vmem>>, vector<2x18x25x16xf32>
    tpu.vector_store %arg5[%c0_3, %c0_4, %c0_5, %c0_6], %2 {strides = array<i32>} : memref<2x18x25x16xf32, #tpu.memory_space<vmem>>, vector<2x18x25x16xf32>,
    %c0_7 = arith.constant 0 : index
    %c1 = arith.constant 1 : index
    %c8 = arith.constant 8 : index
    %c0_8 = arith.constant 0 : index
    %4 = vector.load %arg5[%c0_7, %c1, %c8, %c0_8] : memref<2x18x25x16xf32, #tpu.memory_space<vmem>>, vector<2x16x16x16xf32>
    tpu.vector_store %arg5[%c0_7, %c1, %c8, %c0_8], %1 {strides = array<i32>} : memref<2x18x25x16xf32, #tpu.memory_space<vmem>>, vector<2x16x16x16xf32>,
    %c0_9 = arith.constant 0 : index
    %c0_10 = arith.constant 0 : index
    %c0_11 = arith.constant 0 : index
    %c0_12 = arith.constant 0 : index
    %5 = vector.load %arg5[%c0_9, %c0_10, %c0_11, %c0_12] : memref<2x18x25x16xf32, #tpu.memory_space<vmem>>, vector<2x18x25x16xf32>
    %6 = vector.extract_strided_slice %5 {offsets = [0, 0, 7, 0], sizes = [2, 16, 16, 16], strides = [1, 1, 1, 1]} : vector<2x18x25x16xf32> to vector<2x16x16x16xf32>
    %7 = vector.shape_cast %6 : vector<2x16x16x16xf32> to vector<512x16xf32>
    %8 = vector.extract_strided_slice %5 {offsets = [0, 0, 8, 0], sizes = [2, 16, 16, 16], strides = [1, 1, 1, 1]} : vector<2x18x25x16xf32> to vector<2x16x16x16xf32>
    %9 = vector.shape_cast %8 : vector<2x16x16x16xf32> to vector<512x16xf32>
    %10 = vector.extract_strided_slice %5 {offsets = [0, 0, 9, 0], sizes = [2, 16, 16, 16], strides = [1, 1, 1, 1]} : vector<2x18x25x16xf32> to vector<2x16x16x16xf32>
    %11 = vector.shape_cast %10 : vector<2x16x16x16xf32> to vector<512x16xf32>
    %12 = vector.extract_strided_slice %5 {offsets = [0, 1, 7, 0], sizes = [2, 16, 16, 16], strides = [1, 1, 1, 1]} : vector<2x18x25x16xf32> to vector<2x16x16x16xf32>
    %13 = vector.shape_cast %12 : vector<2x16x16x16xf32> to vector<512x16xf32>
    %14 = vector.extract_strided_slice %5 {offsets = [0, 1, 8, 0], sizes = [2, 16, 16, 16], strides = [1, 1, 1, 1]} : vector<2x18x25x16xf32> to vector<2x16x16x16xf32>
    %15 = vector.shape_cast %14 : vector<2x16x16x16xf32> to vector<512x16xf32>
    %16 = vector.extract_strided_slice %5 {offsets = [0, 1, 9, 0], sizes = [2, 16, 16, 16], strides = [1, 1, 1, 1]} : vector<2x18x25x16xf32> to vector<2x16x16x16xf32>
    %17 = vector.shape_cast %16 : vector<2x16x16x16xf32> to vector<512x16xf32>
    %18 = vector.extract_strided_slice %5 {offsets = [0, 2, 7, 0], sizes = [2, 16, 16, 16], strides = [1, 1, 1, 1]} : vector<2x18x25x16xf32> to vector<2x16x16x16xf32>
    %19 = vector.shape_cast %18 : vector<2x16x16x16xf32> to vector<512x16xf32>
    %20 = vector.extract_strided_slice %5 {offsets = [0, 2, 8, 0], sizes = [2, 16, 16, 16], strides = [1, 1, 1, 1]} : vector<2x18x25x16xf32> to vector<2x16x16x16xf32>
    %21 = vector.shape_cast %20 : vector<2x16x16x16xf32> to vector<512x16xf32>
    %22 = vector.extract_strided_slice %5 {offsets = [0, 2, 9, 0], sizes = [2, 16, 16, 16], strides = [1, 1, 1, 1]} : vector<2x18x25x16xf32> to vector<2x16x16x16xf32>
    %23 = vector.shape_cast %22 : vector<2x16x16x16xf32> to vector<512x16xf32>
    %24 = tpu.concatenate %7, %9, %11, %13, %15, %17, %19, %21, %23 in 1 : vector<512x16xf32>, vector<512x16xf32>, vector<512x16xf32>, vector<512x16xf32>, vector<512x16xf32>, vector<512x16xf32>, vector<512x16xf32>, vector<512x16xf32>, vector<512x16xf32> -> vector<512x144xf32>
    %25 = arith.truncf %24 : vector<512x144xf32> to vector<512x144xbf16>
    %c0_13 = arith.constant 0 : index
    %c0_14 = arith.constant 0 : index
    %26 = vector.load %arg1[%c0_13, %c0_14] : memref<144x3xbf16, #tpu.memory_space<vmem>>, vector<144x3xbf16>
    %cst_15 = arith.constant dense<0.000000e+00> : vector<512x3xf32>
    %27 = tpu.matmul %25, %26, %cst_15 {dimension_numbers = #tpu.dot_dimension_numbers<[1], [0], [0], [1], [0, 0, 1, 1], [], []>} : vector<512x144xbf16>, vector<144x3xbf16>, vector<512x3xf32> -> vector<512x3xf32>
    %c0_16 = arith.constant 0 : index
    %c0_17 = arith.constant 0 : index
    %28 = vector.load %arg2[%c0_16, %c0_17] : memref<1x3xf32, #tpu.memory_space<vmem>>, vector<1x3xf32>
    %29 = vector.broadcast %28 : vector<1x3xf32> to vector<512x3xf32>
    %30 = arith.addf %27, %29 : vector<512x3xf32>
    %c0_18 = arith.constant 0 : index
    %c0_19 = arith.constant 0 : index
    %c0_20 = arith.constant 0 : index
    %c0_21 = arith.constant 0 : index
    %31 = vector.load %arg3[%c0_18, %c0_19, %c0_20, %c0_21] : memref<2x16x16x3xbf16, #tpu.memory_space<vmem>>, vector<2x16x16x3xbf16>
    %32 = arith.extf %31 : vector<2x16x16x3xbf16> to vector<2x16x16x3xf32>
    %33 = vector.shape_cast %32 : vector<2x16x16x3xf32> to vector<512x3xf32>
    %34 = arith.addf %30, %33 : vector<512x3xf32>
    %35 = vector.shape_cast %34 : vector<512x3xf32> to vector<2x16x16x3xf32>
    %36 = arith.truncf %35 : vector<2x16x16x3xf32> to vector<2x16x16x3xbf16>
    %c0_22 = arith.constant 0 : index
    %c0_23 = arith.constant 0 : index
    %c0_24 = arith.constant 0 : index
    %c0_25 = arith.constant 0 : index
    %37 = vector.load %arg4[%c0_22, %c0_23, %c0_24, %c0_25] : memref<2x16x16x3xbf16, #tpu.memory_space<vmem>>, vector<2x16x16x3xbf16>
    tpu.vector_store %arg4[%c0_22, %c0_23, %c0_24, %c0_25], %36 {strides = array<i32>} : memref<2x16x16x3xbf16, #tpu.memory_space<vmem>>, vector<2x16x16x3xbf16>,
    return
  }
}

</mosaic_0001>

<llo_original>
// kernel: drsenmk_forward.14
$region0: #{drsenmk_forward.14}
  #allocation0 [shape = 'u32[]', space=smem, size = 0x4, offset = 0x4, fixed_abs, tag = 'smem constant byte address 0x4 - core index']
  #allocation1 [shape = 'u32[144,128]{1,0:T(1,128)}', space=vmem, size = 0x12000, scoped, tag = 'internal scratch']
  #allocation2 [shape = 'f32[2,10,17,16]{3,2,1,0:T(8,128)}', space=vmem, size = 0x3c000, scoped, tag = 'scratch operand']
  %s0 = inlined_call_operand.vmem [shape: bf16[2,8,8,16], index: 0, kind: input, shape index: {}]
  %s1 = inlined_call_operand.vmem [shape: bf16[144,64], index: 1, kind: input, shape index: {}]
  %s2 = inlined_call_operand.vmem [shape: f32[1,64], index: 2, kind: input, shape index: {}]
  %s3 = inlined_call_operand.vmem [shape: bf16[2,8,8,64], index: 3, kind: output, shape index: {}]
  %s4 = sld [smem:[#allocation0]]
  $region22: #{drsenmk_forward.14} parent=0
    _
  %s6 = ssub.s32 1, %s4
  %s7 = scalar_select 0, %s6, %s4
  // Predicated region
  $region2: #{drsenmk_forward.14} parent=0 // pred_check
    _
  $region3: #{drsenmk_forward.14} parent=0 // pred_check_branch
    %9 = sbr.rel (0) target = $region5
  $region4: #{drsenmk_forward.14} parent=0 // pred_region
    _
  $region5: #{drsenmk_forward.14} parent=0 // pred_fallthru
    _
  // Predicated region
  $region6: #{drsenmk_forward.14} parent=0 // pred_check
    _
  $region7: #{drsenmk_forward.14} parent=0 // pred_check_branch
    %11 = sbr.rel (0) target = $region9
  $region8: #{drsenmk_forward.14} parent=0 // pred_region
    _
  $region9: #{drsenmk_forward.14} parent=0 // pred_fallthru
    _
  // Predicated region
  $region10: #{drsenmk_forward.14} parent=0 // pred_check
    _
  $region11: #{drsenmk_forward.14} parent=0 // pred_check_branch
    %13 = sbr.rel (0) target = $region13
  $region12: #{drsenmk_forward.14} parent=0 // pred_region
    _
  $region13: #{drsenmk_forward.14} parent=0 // pred_fallthru
    _
  %v15 = vld [vmem:[%s0] sm:$0xf]
  %v16 = vld [vmem:[%s0 + $0x4] sm:$0xf]
  %v17 = vld [vmem:[%s0 + $0x8] sm:$0xf]
  %v18 = vld [vmem:[%s0 + $0xc] sm:$0xf]
  %v19 = vld [vmem:[%s0 + $0x10] sm:$0xf]
  %v20 = vld [vmem:[%s0 + $0x14] sm:$0xf]
  %v21 = vld [vmem:[%s0 + $0x18] sm:$0xf]
  %v22 = vld [vmem:[%s0 + $0x1c] sm:$0xf]
  %v23 = vld [vmem:[%s0 + $0x20] sm:$0xf]
  %v24 = vld [vmem:[%s0 + $0x24] sm:$0xf]
  %v25 = vld [vmem:[%s0 + $0x28] sm:$0xf]
  %v26 = vld [vmem:[%s0 + $0x2c] sm:$0xf]
  %v27 = vld [vmem:[%s0 + $0x30] sm:$0xf]
  %v28 = vld [vmem:[%s0 + $0x34] sm:$0xf]
  %v29 = vld [vmem:[%s0 + $0x38] sm:$0xf]
  %v30 = vld [vmem:[%s0 + $0x3c] sm:$0xf]
  %v31 = vunpack.c.l.bf16 %v15
  %v32 = vunpack.c.l.bf16 %v16
  %v33 = vunpack.c.l.bf16 %v17
  %v34 = vunpack.c.l.bf16 %v18
  %v35 = vunpack.c.l.bf16 %v19
  %v36 = vunpack.c.l.bf16 %v20
  %v37 = vunpack.c.l.bf16 %v21
  %v38 = vunpack.c.l.bf16 %v22
  %v39 = vunpack.c.l.bf16 %v23
  %v40 = vunpack.c.l.bf16 %v24
  %v41 = vunpack.c.l.bf16 %v25
  %v42 = vunpack.c.l.bf16 %v26
  %v43 = vunpack.c.l.bf16 %v27
  %v44 = vunpack.c.l.bf16 %v28
  %v45 = vunpack.c.l.bf16 %v29
  %v46 = vunpack.c.l.bf16 %v30
  %vm47 = vcmask 130048
  %48 = vst.msk [vmem:[#allocation2] sm:$0xff] %vm47, 0.0
  %49 = vst.msk [vmem:[#allocation2 + $0x8] sm:$0xff] %vm47, 0.0
  %vm50 = vcmask 122880
  %51 = vst.msk [vmem:[#allocation2 + $0x10] sm:$0x1] %vm50, 0.0
  %52 = vst.msk [vmem:[#allocation2 + $0x18] sm:$0xff] %vm47, 0.0
  %53 = vst.msk [vmem:[#allocation2 + $0x20] sm:$0xff] %vm47, 0.0
  %54 = vst.msk [vmem:[#allocation2 + $0x28] sm:$0x1] %vm50, 0.0
  %55 = vst.msk [vmem:[#allocation2 + $0x30] sm:$0xff] %vm47, 0.0
  %56 = vst.msk [vmem:[#allocation2 + $0x38] sm:$0xff] %vm47, 0.0
  %57 = vst.msk [vmem:[#allocation2 + $0x40] sm:$0x1] %vm50, 0.0
  %58 = vst.msk [vmem:[#allocation2 + $0x48] sm:$0xff] %vm47, 0.0
  %59 = vst.msk [vmem:[#allocation2 + $0x50] sm:$0xff] %vm47, 0.0
  %60 = vst.msk [vmem:[#allocation2 + $0x58] sm:$0x1] %vm50, 0.0
  %61 = vst.msk [vmem:[#allocation2 + $0x60] sm:$0xff] %vm47, 0.0
  %62 = vst.msk [vmem:[#allocation2 + $0x68] sm:$0xff] %vm47, 0.0
  %63 = vst.msk [vmem:[#allocation2 + $0x70] sm:$0x1] %vm50, 0.0
  %64 = vst.msk [vmem:[#allocation2 + $0x78] sm:$0xff] %vm47, 0.0
  %65 = vst.msk [vmem:[#allocation2 + $0x80] sm:$0xff] %vm47, 0.0
  %66 = vst.msk [vmem:[#allocation2 + $0x88] sm:$0x1] %vm50, 0.0
  %67 = vst.msk [vmem:[#allocation2 + $0x90] sm:$0xff] %vm47, 0.0
  %68 = vst.msk [vmem:[#allocation2 + $0x98] sm:$0xff] %vm47, 0.0
  %69 = vst.msk [vmem:[#allocation2 + $0xa0] sm:$0x1] %vm50, 0.0
  %70 = vst.msk [vmem:[#allocation2 + $0xa8] sm:$0xff] %vm47, 0.0
  %71 = vst.msk [vmem:[#allocation2 + $0xb0] sm:$0xff] %vm47, 0.0
  %72 = vst.msk [vmem:[#allocation2 + $0xb8] sm:$0x1] %vm50, 0.0
  %73 = vst.msk [vmem:[#allocation2 + $0xc0] sm:$0xff] %vm47, 0.0
  %74 = vst.msk [vmem:[#allocation2 + $0xc8] sm:$0xff] %vm47, 0.0
  %75 = vst.msk [vmem:[#allocation2 + $0xd0] sm:$0x1] %vm50, 0.0
  %76 = vst.msk [vmem:[#allocation2 + $0xd8] sm:$0xff] %vm47, 0.0
  %77 = vst.msk [vmem:[#allocation2 + $0xe0] sm:$0xff] %vm47, 0.0
  %78 = vst.msk [vmem:[#allocation2 + $0xe8] sm:$0x1] %vm50, 0.0
  %79 = vst.msk [vmem:[#allocation2 + $0xf0] sm:$0xff] %vm47, 0.0
  %80 = vst.msk [vmem:[#allocation2 + $0xf8] sm:$0xff] %vm47, 0.0
  %81 = vst.msk [vmem:[#allocation2 + $0x100] sm:$0x1] %vm50, 0.0
  %82 = vst.msk [vmem:[#allocation2 + $0x108] sm:$0xff] %vm47, 0.0
  %83 = vst.msk [vmem:[#allocation2 + $0x110] sm:$0xff] %vm47, 0.0
  %84 = vst.msk [vmem:[#allocation2 + $0x118] sm:$0x1] %vm50, 0.0
  %85 = vst.msk [vmem:[#allocation2 + $0x120] sm:$0xff] %vm47, 0.0
  %86 = vst.msk [vmem:[#allocation2 + $0x128] sm:$0xff] %vm47, 0.0
  %87 = vst.msk [vmem:[#allocation2 + $0x130] sm:$0x1] %vm50, 0.0
  %88 = vst.msk [vmem:[#allocation2 + $0x138] sm:$0xff] %vm47, 0.0
  %89 = vst.msk [vmem:[#allocation2 + $0x140] sm:$0xff] %vm47, 0.0
  %90 = vst.msk [vmem:[#allocation2 + $0x148] sm:$0x1] %vm50, 0.0
  %91 = vst.msk [vmem:[#allocation2 + $0x150] sm:$0xff] %vm47, 0.0
  %92 = vst.msk [vmem:[#allocation2 + $0x158] sm:$0xff] %vm47, 0.0
  %93 = vst.msk [vmem:[#allocation2 + $0x160] sm:$0x1] %vm50, 0.0
  %94 = vst.msk [vmem:[#allocation2 + $0x168] sm:$0xff] %vm47, 0.0
  %95 = vst.msk [vmem:[#allocation2 + $0x170] sm:$0xff] %vm47, 0.0
  %96 = vst.msk [vmem:[#allocation2 + $0x178] sm:$0x1] %vm50, 0.0
  %97 = vst.msk [vmem:[#allocation2 + $0x180] sm:$0xff] %vm47, 0.0
  %98 = vst.msk [vmem:[#allocation2 + $0x188] sm:$0xff] %vm47, 0.0
  %99 = vst.msk [vmem:[#allocation2 + $0x190] sm:$0x1] %vm50, 0.0
  %100 = vst.msk [vmem:[#allocation2 + $0x198] sm:$0xff] %vm47, 0.0
  %101 = vst.msk [vmem:[#allocation2 + $0x1a0] sm:$0xff] %vm47, 0.0
  %102 = vst.msk [vmem:[#allocation2 + $0x1a8] sm:$0x1] %vm50, 0.0
  %103 = vst.msk [vmem:[#allocation2 + $0x1b0] sm:$0xff] %vm47, 0.0
  %104 = vst.msk [vmem:[#allocation2 + $0x1b8] sm:$0xff] %vm47, 0.0
  %105 = vst.msk [vmem:[#allocation2 + $0x1c0] sm:$0x1] %vm50, 0.0
  %106 = vst.msk [vmem:[#allocation2 + $0x1c8] sm:$0xff] %vm47, 0.0
  %107 = vst.msk [vmem:[#allocation2 + $0x1d0] sm:$0xff] %vm47, 0.0
  %108 = vst.msk [vmem:[#allocation2 + $0x1d8] sm:$0x1] %vm50, 0.0
  %s109 = scalar_lea.vmem [#allocation2], 24
  %110 = vst.msk [vmem:[%s109 + $0x8] sm:$0xff] %vm47, %v31
  %111 = vst.msk [vmem:[%s109 + $0x20] sm:$0xff] %vm47, %v32
  %112 = vst.msk [vmem:[%s109 + $0x38] sm:$0xff] %vm47, %v33
  %113 = vst.msk [vmem:[%s109 + $0x50] sm:$0xff] %vm47, %v34
  %114 = vst.msk [vmem:[%s109 + $0x68] sm:$0xff] %vm47, %v35
  %115 = vst.msk [vmem:[%s109 + $0x80] sm:$0xff] %vm47, %v36
  %116 = vst.msk [vmem:[%s109 + $0x98] sm:$0xff] %vm47, %v37
  %117 = vst.msk [vmem:[%s109 + $0xb0] sm:$0xff] %vm47, %v38
  %118 = vst.msk [vmem:[%s109 + $0xf8] sm:$0xff] %vm47, %v39
  %119 = vst.msk [vmem:[%s109 + $0x110] sm:$0xff] %vm47, %v40
  %120 = vst.msk [vmem:[%s109 + $0x128] sm:$0xff] %vm47, %v41
  %121 = vst.msk [vmem:[%s109 + $0x140] sm:$0xff] %vm47, %v42
  %122 = vst.msk [vmem:[%s109 + $0x158] sm:$0xff] %vm47, %v43
  %123 = vst.msk [vmem:[%s109 + $0x170] sm:$0xff] %vm47, %v44
  %124 = vst.msk [vmem:[%s109 + $0x188] sm:$0xff] %vm47, %v45
  %125 = vst.msk [vmem:[%s109 + $0x1a0] sm:$0xff] %vm47, %v46
  %v126 = vld [vmem:[#allocation2] sm:$0xff]
  %v127 = vld [vmem:[#allocation2 + $0x8] sm:$0xff]
  %v128 = vld [vmem:[#allocation2 + $0x10] sm:$0x1]
  %v129 = vld [vmem:[#allocation2 + $0x18] sm:$0xff]
  %v130 = vld [vmem:[#allocation2 + $0x20] sm:$0xff]
  %v131 = vld [vmem:[#allocation2 + $0x28] sm:$0x1]
  %v132 = vld [vmem:[#allocation2 + $0x30] sm:$0xff]
  %v133 = vld [vmem:[#allocation2 + $0x38] sm:$0xff]
  %v134 = vld [vmem:[#allocation2 + $0x40] sm:$0x1]
  %v135 = vld [vmem:[#allocation2 + $0x48] sm:$0xff]
  %v136 = vld [vmem:[#allocation2 + $0x50] sm:$0xff]
  %v137 = vld [vmem:[#allocation2 + $0x58] sm:$0x1]
  %v138 = vld [vmem:[#allocation2 + $0x60] sm:$0xff]
  %v139 = vld [vmem:[#allocation2 + $0x68] sm:$0xff]
  %v140 = vld [vmem:[#allocation2 + $0x70] sm:$0x1]
  %v141 = vld [vmem:[#allocation2 + $0x78] sm:$0xff]
  %v142 = vld [vmem:[#allocation2 + $0x80] sm:$0xff]
  %v143 = vld [vmem:[#allocation2 + $0x88] sm:$0x1]
  %v144 = vld [vmem:[#allocation2 + $0x90] sm:$0xff]
  %v145 = vld [vmem:[#allocation2 + $0x98] sm:$0xff]
  %v146 = vld [vmem:[#allocation2 + $0xa0] sm:$0x1]
  %v147 = vld [vmem:[#allocation2 + $0xa8] sm:$0xff]
  %v148 = vld [vmem:[#allocation2 + $0xb0] sm:$0xff]
  %v149 = vld [vmem:[#allocation2 + $0xb8] sm:$0x1]
  %v150 = vld [vmem:[#allocation2 + $0xc0] sm:$0xff]
  %v151 = vld [vmem:[#allocation2 + $0xc8] sm:$0xff]
  %v152 = vld [vmem:[#allocation2 + $0xd0] sm:$0x1]
  %v153 = vld [vmem:[#allocation2 + $0xd8] sm:$0xff]
  %v154 = vld [vmem:[#allocation2 + $0xe0] sm:$0xff]
  %v155 = vld [vmem:[#allocation2 + $0xe8] sm:$0x1]
  %v156 = vld [vmem:[#allocation2 + $0xf0] sm:$0xff]
  %v157 = vld [vmem:[#allocation2 + $0xf8] sm:$0xff]
  %v158 = vld [vmem:[#allocation2 + $0x100] sm:$0x1]
  %v159 = vld [vmem:[#allocation2 + $0x108] sm:$0xff]
  %v160 = vld [vmem:[#allocation2 + $0x110] sm:$0xff]
  %v161 = vld [vmem:[#allocation2 + $0x118] sm:$0x1]
  %v162 = vld [vmem:[#allocation2 + $0x120] sm:$0xff]
  %v163 = vld [vmem:[#allocation2 + $0x128] sm:$0xff]
  %v164 = vld [vmem:[#allocation2 + $0x130] sm:$0x1]
  %v165 = vld [vmem:[#allocation2 + $0x138] sm:$0xff]
  %v166 = vld [vmem:[#allocation2 + $0x140] sm:$0xff]
  %v167 = vld [vmem:[#allocation2 + $0x148] sm:$0x1]
  %v168 = vld [vmem:[#allocation2 + $0x150] sm:$0xff]
  %v169 = vld [vmem:[#allocation2 + $0x158] sm:$0xff]
  %v170 = vld [vmem:[#allocation2 + $0x160] sm:$0x1]
  %v171 = vld [vmem:[#allocation2 + $0x168] sm:$0xff]
  %v172 = vld [vmem:[#allocation2 + $0x170] sm:$0xff]
  %v173 = vld [vmem:[#allocation2 + $0x178] sm:$0x1]
  %v174 = vld [vmem:[#allocation2 + $0x180] sm:$0xff]
  %v175 = vld [vmem:[#allocation2 + $0x188] sm:$0xff]
  %v176 = vld [vmem:[#allocation2 + $0x190] sm:$0x1]
  %v177 = vld [vmem:[#allocation2 + $0x198] sm:$0xff]
  %v178 = vld [vmem:[#allocation2 + $0x1a0] sm:$0xff]
  %v179 = vld [vmem:[#allocation2 + $0x1a8] sm:$0x1]
  %v180 = vld [vmem:[#allocation2 + $0x1b0] sm:$0xff]
  %v181 = vld [vmem:[#allocation2 + $0x1b8] sm:$0xff]
  %v182 = vld [vmem:[#allocation2 + $0x1c0] sm:$0x1]
  %v183 = vld [vmem:[#allocation2 + $0x1c8] sm:$0xff]
  %v184 = vld [vmem:[#allocation2 + $0x1d0] sm:$0xff]
  %v185 = vld [vmem:[#allocation2 + $0x1d8] sm:$0x1]
  %vm218 = vcmask 1040384
  %v219 = vrot.slane %v126, 7
  %v220 = vrot.slane %v127, 7
  %v221 = vsel %vm218, %v219, %v220
  %v222 = vrot.slane %v129, 7
  %v223 = vrot.slane %v130, 7
  %v224 = vsel %vm218, %v222, %v223
  %v225 = vrot.slane %v132, 7
  %v226 = vrot.slane %v133, 7
  %v227 = vsel %vm218, %v225, %v226
  %v228 = vrot.slane %v135, 7
  %v229 = vrot.slane %v136, 7
  %v230 = vsel %vm218, %v228, %v229
  %v231 = vrot.slane %v138, 7
  %v232 = vrot.slane %v139, 7
  %v233 = vsel %vm218, %v231, %v232
  %v234 = vrot.slane %v141, 7
  %v235 = vrot.slane %v142, 7
  %v236 = vsel %vm218, %v234, %v235
  %v237 = vrot.slane %v144, 7
  %v238 = vrot.slane %v145, 7
  %v239 = vsel %vm218, %v237, %v238
  %v240 = vrot.slane %v147, 7
  %v241 = vrot.slane %v148, 7
  %v242 = vsel %vm218, %v240, %v241
  %v243 = vrot.slane %v156, 7
  %v244 = vrot.slane %v157, 7
  %v245 = vsel %vm218, %v243, %v244
  %v246 = vrot.slane %v159, 7
  %v247 = vrot.slane %v160, 7
  %v248 = vsel %vm218, %v246, %v247
  %v249 = vrot.slane %v162, 7
  %v250 = vrot.slane %v163, 7
  %v251 = vsel %vm218, %v249, %v250
  %v252 = vrot.slane %v165, 7
  %v253 = vrot.slane %v166, 7
  %v254 = vsel %vm218, %v252, %v253
  %v255 = vrot.slane %v168, 7
  %v256 = vrot.slane %v169, 7
  %v257 = vsel %vm218, %v255, %v256
  %v258 = vrot.slane %v171, 7
  %v259 = vrot.slane %v172, 7
  %v260 = vsel %vm218, %v258, %v259
  %v261 = vrot.slane %v174, 7
  %v262 = vrot.slane %v175, 7
  %v263 = vsel %vm218, %v261, %v262
  %v264 = vrot.slane %v177, 7
  %v265 = vrot.slane %v178, 7
  %v266 = vsel %vm218, %v264, %v265
  %vm299 = vcmask 1046528
  %v300 = vrot.slane %v127, 1
  %v301 = vrot.slane %v128, 1
  %v302 = vsel %vm299, %v300, %v301
  %v303 = vrot.slane %v130, 1
  %v304 = vrot.slane %v131, 1
  %v305 = vsel %vm299, %v303, %v304
  %v306 = vrot.slane %v133, 1
  %v307 = vrot.slane %v134, 1
  %v308 = vsel %vm299, %v306, %v307
  %v309 = vrot.slane %v136, 1
  %v310 = vrot.slane %v137, 1
  %v311 = vsel %vm299, %v309, %v310
  %v312 = vrot.slane %v139, 1
  %v313 = vrot.slane %v140, 1
  %v314 = vsel %vm299, %v312, %v313
  %v315 = vrot.slane %v142, 1
  %v316 = vrot.slane %v143, 1
  %v317 = vsel %vm299, %v315, %v316
  %v318 = vrot.slane %v145, 1
  %v319 = vrot.slane %v146, 1
  %v320 = vsel %vm299, %v318, %v319
  %v321 = vrot.slane %v148, 1
  %v322 = vrot.slane %v149, 1
  %v323 = vsel %vm299, %v321, %v322
  %v324 = vrot.slane %v157, 1
  %v325 = vrot.slane %v158, 1
  %v326 = vsel %vm299, %v324, %v325
  %v327 = vrot.slane %v160, 1
  %v328 = vrot.slane %v161, 1
  %v329 = vsel %vm299, %v327, %v328
  %v330 = vrot.slane %v163, 1
  %v331 = vrot.slane %v164, 1
  %v332 = vsel %vm299, %v330, %v331
  %v333 = vrot.slane %v166, 1
  %v334 = vrot.slane %v167, 1
  %v335 = vsel %vm299, %v333, %v334
  %v336 = vrot.slane %v169, 1
  %v337 = vrot.slane %v170, 1
  %v338 = vsel %vm299, %v336, %v337
  %v339 = vrot.slane %v172, 1
  %v340 = vrot.slane %v173, 1
  %v341 = vsel %vm299, %v339, %v340
  %v342 = vrot.slane %v175, 1
  %v343 = vrot.slane %v176, 1
  %v344 = vsel %vm299, %v342, %v343
  %v345 = vrot.slane %v178, 1
  %v346 = vrot.slane %v179, 1
  %v347 = vsel %vm299, %v345, %v346
  %v352 = vrot.slane %v150, 7
  %v353 = vrot.slane %v151, 7
  %v354 = vsel %vm218, %v352, %v353
  %v355 = vrot.slane %v180, 7
  %v356 = vrot.slane %v181, 7
  %v357 = vsel %vm218, %v355, %v356
  %v360 = vrot.slane %v151, 1
  %v361 = vrot.slane %v152, 1
  %v362 = vsel %vm299, %v360, %v361
  %v363 = vrot.slane %v181, 1
  %v364 = vrot.slane %v182, 1
  %v365 = vsel %vm299, %v363, %v364
  %v370 = vrot.slane %v153, 7
  %v371 = vrot.slane %v154, 7
  %v372 = vsel %vm218, %v370, %v371
  %v373 = vrot.slane %v183, 7
  %v374 = vrot.slane %v184, 7
  %v375 = vsel %vm218, %v373, %v374
  %v378 = vrot.slane %v154, 1
  %v379 = vrot.slane %v155, 1
  %v380 = vsel %vm299, %v378, %v379
  %v381 = vrot.slane %v184, 1
  %v382 = vrot.slane %v185, 1
  %v383 = vsel %vm299, %v381, %v382
  %400 = vrot.lane.b32.xlu0 %v127, 16
  %v401 = vpop.permute.xlu0 %400
  %402 = vrot.lane.b32.xlu0 %v130, 16
  %v403 = vpop.permute.xlu0 %402
  %404 = vrot.lane.b32.xlu0 %v133, 16
  %v405 = vpop.permute.xlu0 %404
  %406 = vrot.lane.b32.xlu0 %v136, 16
  %v407 = vpop.permute.xlu0 %406
  %408 = vrot.lane.b32.xlu0 %v139, 16
  %v409 = vpop.permute.xlu0 %408
  %410 = vrot.lane.b32.xlu0 %v142, 16
  %v411 = vpop.permute.xlu0 %410
  %412 = vrot.lane.b32.xlu0 %v145, 16
  %v413 = vpop.permute.xlu0 %412
  %414 = vrot.lane.b32.xlu0 %v148, 16
  %v415 = vpop.permute.xlu0 %414
  %416 = vrot.lane.b32.xlu0 %v157, 16
  %v417 = vpop.permute.xlu0 %416
  %418 = vrot.lane.b32.xlu0 %v160, 16
  %v419 = vpop.permute.xlu0 %418
  %420 = vrot.lane.b32.xlu0 %v163, 16
  %v421 = vpop.permute.xlu0 %420
  %422 = vrot.lane.b32.xlu0 %v166, 16
  %v423 = vpop.permute.xlu0 %422
  %424 = vrot.lane.b32.xlu0 %v169, 16
  %v425 = vpop.permute.xlu0 %424
  %426 = vrot.lane.b32.xlu0 %v172, 16
  %v427 = vpop.permute.xlu0 %426
  %428 = vrot.lane.b32.xlu0 %v175, 16
  %v429 = vpop.permute.xlu0 %428
  %430 = vrot.lane.b32.xlu0 %v178, 16
  %v431 = vpop.permute.xlu0 %430
  %448 = vrot.lane.b32.xlu0 %v302, 32
  %v449 = vpop.permute.xlu0 %448
  %450 = vrot.lane.b32.xlu0 %v305, 32
  %v451 = vpop.permute.xlu0 %450
  %452 = vrot.lane.b32.xlu0 %v308, 32
  %v453 = vpop.permute.xlu0 %452
  %454 = vrot.lane.b32.xlu0 %v311, 32
  %v455 = vpop.permute.xlu0 %454
  %456 = vrot.lane.b32.xlu0 %v314, 32
  %v457 = vpop.permute.xlu0 %456
  %458 = vrot.lane.b32.xlu0 %v317, 32
  %v459 = vpop.permute.xlu0 %458
  %460 = vrot.lane.b32.xlu0 %v320, 32
  %v461 = vpop.permute.xlu0 %460
  %462 = vrot.lane.b32.xlu0 %v323, 32
  %v463 = vpop.permute.xlu0 %462
  %464 = vrot.lane.b32.xlu0 %v326, 32
  %v465 = vpop.permute.xlu0 %464
  %466 = vrot.lane.b32.xlu0 %v329, 32
  %v467 = vpop.permute.xlu0 %466
  %468 = vrot.lane.b32.xlu0 %v332, 32
  %v469 = vpop.permute.xlu0 %468
  %470 = vrot.lane.b32.xlu0 %v335, 32
  %v471 = vpop.permute.xlu0 %470
  %472 = vrot.lane.b32.xlu0 %v338, 32
  %v473 = vpop.permute.xlu0 %472
  %474 = vrot.lane.b32.xlu0 %v341, 32
  %v475 = vpop.permute.xlu0 %474
  %476 = vrot.lane.b32.xlu0 %v344, 32
  %v477 = vpop.permute.xlu0 %476
  %478 = vrot.lane.b32.xlu0 %v347, 32
  %v479 = vpop.permute.xlu0 %478
  %496 = vrot.lane.b32.xlu0 %v224, 48
  %v497 = vpop.permute.xlu0 %496
  %498 = vrot.lane.b32.xlu0 %v227, 48
  %v499 = vpop.permute.xlu0 %498
  %500 = vrot.lane.b32.xlu0 %v230, 48
  %v501 = vpop.permute.xlu0 %500
  %502 = vrot.lane.b32.xlu0 %v233, 48
  %v503 = vpop.permute.xlu0 %502
  %504 = vrot.lane.b32.xlu0 %v236, 48
  %v505 = vpop.permute.xlu0 %504
  %506 = vrot.lane.b32.xlu0 %v239, 48
  %v507 = vpop.permute.xlu0 %506
  %508 = vrot.lane.b32.xlu0 %v242, 48
  %v509 = vpop.permute.xlu0 %508
  %510 = vrot.lane.b32.xlu0 %v354, 48
  %v511 = vpop.permute.xlu0 %510
  %512 = vrot.lane.b32.xlu0 %v248, 48
  %v513 = vpop.permute.xlu0 %512
  %514 = vrot.lane.b32.xlu0 %v251, 48
  %v515 = vpop.permute.xlu0 %514
  %516 = vrot.lane.b32.xlu0 %v254, 48
  %v517 = vpop.permute.xlu0 %516
  %518 = vrot.lane.b32.xlu0 %v257, 48
  %v519 = vpop.permute.xlu0 %518
  %520 = vrot.lane.b32.xlu0 %v260, 48
  %v521 = vpop.permute.xlu0 %520
  %522 = vrot.lane.b32.xlu0 %v263, 48
  %v523 = vpop.permute.xlu0 %522
  %524 = vrot.lane.b32.xlu0 %v266, 48
  %v525 = vpop.permute.xlu0 %524
  %526 = vrot.lane.b32.xlu0 %v357, 48
  %v527 = vpop.permute.xlu0 %526
  %544 = vrot.lane.b32.xlu0 %v130, 64
  %v545 = vpop.permute.xlu0 %544
  %546 = vrot.lane.b32.xlu0 %v133, 64
  %v547 = vpop.permute.xlu0 %546
  %548 = vrot.lane.b32.xlu0 %v136, 64
  %v549 = vpop.permute.xlu0 %548
  %550 = vrot.lane.b32.xlu0 %v139, 64
  %v551 = vpop.permute.xlu0 %550
  %552 = vrot.lane.b32.xlu0 %v142, 64
  %v553 = vpop.permute.xlu0 %552
  %554 = vrot.lane.b32.xlu0 %v145, 64
  %v555 = vpop.permute.xlu0 %554
  %556 = vrot.lane.b32.xlu0 %v148, 64
  %v557 = vpop.permute.xlu0 %556
  %558 = vrot.lane.b32.xlu0 %v151, 64
  %v559 = vpop.permute.xlu0 %558
  %560 = vrot.lane.b32.xlu0 %v160, 64
  %v561 = vpop.permute.xlu0 %560
  %562 = vrot.lane.b32.xlu0 %v163, 64
  %v563 = vpop.permute.xlu0 %562
  %564 = vrot.lane.b32.xlu0 %v166, 64
  %v565 = vpop.permute.xlu0 %564
  %566 = vrot.lane.b32.xlu0 %v169, 64
  %v567 = vpop.permute.xlu0 %566
  %568 = vrot.lane.b32.xlu0 %v172, 64
  %v569 = vpop.permute.xlu0 %568
  %570 = vrot.lane.b32.xlu0 %v175, 64
  %v571 = vpop.permute.xlu0 %570
  %572 = vrot.lane.b32.xlu0 %v178, 64
  %v573 = vpop.permute.xlu0 %572
  %574 = vrot.lane.b32.xlu0 %v181, 64
  %v575 = vpop.permute.xlu0 %574
  %592 = vrot.lane.b32.xlu0 %v305, 80
  %v593 = vpop.permute.xlu0 %592
  %594 = vrot.lane.b32.xlu0 %v308, 80
  %v595 = vpop.permute.xlu0 %594
  %596 = vrot.lane.b32.xlu0 %v311, 80
  %v597 = vpop.permute.xlu0 %596
  %598 = vrot.lane.b32.xlu0 %v314, 80
  %v599 = vpop.permute.xlu0 %598
  %600 = vrot.lane.b32.xlu0 %v317, 80
  %v601 = vpop.permute.xlu0 %600
  %602 = vrot.lane.b32.xlu0 %v320, 80
  %v603 = vpop.permute.xlu0 %602
  %604 = vrot.lane.b32.xlu0 %v323, 80
  %v605 = vpop.permute.xlu0 %604
  %606 = vrot.lane.b32.xlu0 %v362, 80
  %v607 = vpop.permute.xlu0 %606
  %608 = vrot.lane.b32.xlu0 %v329, 80
  %v609 = vpop.permute.xlu0 %608
  %610 = vrot.lane.b32.xlu0 %v332, 80
  %v611 = vpop.permute.xlu0 %610
  %612 = vrot.lane.b32.xlu0 %v335, 80
  %v613 = vpop.permute.xlu0 %612
  %614 = vrot.lane.b32.xlu0 %v338, 80
  %v615 = vpop.permute.xlu0 %614
  %616 = vrot.lane.b32.xlu0 %v341, 80
  %v617 = vpop.permute.xlu0 %616
  %618 = vrot.lane.b32.xlu0 %v344, 80
  %v619 = vpop.permute.xlu0 %618
  %620 = vrot.lane.b32.xlu0 %v347, 80
  %v621 = vpop.permute.xlu0 %620
  %622 = vrot.lane.b32.xlu0 %v365, 80
  %v623 = vpop.permute.xlu0 %622
  %640 = vrot.lane.b32.xlu0 %v227, 96
  %v641 = vpop.permute.xlu0 %640
  %642 = vrot.lane.b32.xlu0 %v230, 96
  %v643 = vpop.permute.xlu0 %642
  %644 = vrot.lane.b32.xlu0 %v233, 96
  %v645 = vpop.permute.xlu0 %644
  %646 = vrot.lane.b32.xlu0 %v236, 96
  %v647 = vpop.permute.xlu0 %646
  %648 = vrot.lane.b32.xlu0 %v239, 96
  %v649 = vpop.permute.xlu0 %648
  %650 = vrot.lane.b32.xlu0 %v242, 96
  %v651 = vpop.permute.xlu0 %650
  %652 = vrot.lane.b32.xlu0 %v354, 96
  %v653 = vpop.permute.xlu0 %652
  %654 = vrot.lane.b32.xlu0 %v372, 96
  %v655 = vpop.permute.xlu0 %654
  %656 = vrot.lane.b32.xlu0 %v251, 96
  %v657 = vpop.permute.xlu0 %656
  %658 = vrot.lane.b32.xlu0 %v254, 96
  %v659 = vpop.permute.xlu0 %658
  %660 = vrot.lane.b32.xlu0 %v257, 96
  %v661 = vpop.permute.xlu0 %660
  %662 = vrot.lane.b32.xlu0 %v260, 96
  %v663 = vpop.permute.xlu0 %662
  %664 = vrot.lane.b32.xlu0 %v263, 96
  %v665 = vpop.permute.xlu0 %664
  %666 = vrot.lane.b32.xlu0 %v266, 96
  %v667 = vpop.permute.xlu0 %666
  %668 = vrot.lane.b32.xlu0 %v357, 96
  %v669 = vpop.permute.xlu0 %668
  %670 = vrot.lane.b32.xlu0 %v375, 96
  %v671 = vpop.permute.xlu0 %670
  %688 = vrot.lane.b32.xlu0 %v133, 112
  %v689 = vpop.permute.xlu0 %688
  %690 = vrot.lane.b32.xlu0 %v136, 112
  %v691 = vpop.permute.xlu0 %690
  %692 = vrot.lane.b32.xlu0 %v139, 112
  %v693 = vpop.permute.xlu0 %692
  %694 = vrot.lane.b32.xlu0 %v142, 112
  %v695 = vpop.permute.xlu0 %694
  %696 = vrot.lane.b32.xlu0 %v145, 112
  %v697 = vpop.permute.xlu0 %696
  %698 = vrot.lane.b32.xlu0 %v148, 112
  %v699 = vpop.permute.xlu0 %698
  %700 = vrot.lane.b32.xlu0 %v151, 112
  %v701 = vpop.permute.xlu0 %700
  %702 = vrot.lane.b32.xlu0 %v154, 112
  %v703 = vpop.permute.xlu0 %702
  %704 = vrot.lane.b32.xlu0 %v163, 112
  %v705 = vpop.permute.xlu0 %704
  %706 = vrot.lane.b32.xlu0 %v166, 112
  %v707 = vpop.permute.xlu0 %706
  %708 = vrot.lane.b32.xlu0 %v169, 112
  %v709 = vpop.permute.xlu0 %708
  %710 = vrot.lane.b32.xlu0 %v172, 112
  %v711 = vpop.permute.xlu0 %710
  %712 = vrot.lane.b32.xlu0 %v175, 112
  %v713 = vpop.permute.xlu0 %712
  %714 = vrot.lane.b32.xlu0 %v178, 112
  %v715 = vpop.permute.xlu0 %714
  %716 = vrot.lane.b32.xlu0 %v181, 112
  %v717 = vpop.permute.xlu0 %716
  %718 = vrot.lane.b32.xlu0 %v184, 112
  %v719 = vpop.permute.xlu0 %718
  %v736 = vsel %vm47, %v221, %v401
  %v737 = vsel %vm47, %v224, %v403
  %v738 = vsel %vm47, %v227, %v405
  %v739 = vsel %vm47, %v230, %v407
  %v740 = vsel %vm47, %v233, %v409
  %v741 = vsel %vm47, %v236, %v411
  %v742 = vsel %vm47, %v239, %v413
  %v743 = vsel %vm47, %v242, %v415
  %v744 = vsel %vm47, %v245, %v417
  %v745 = vsel %vm47, %v248, %v419
  %v746 = vsel %vm47, %v251, %v421
  %v747 = vsel %vm47, %v254, %v423
  %v748 = vsel %vm47, %v257, %v425
  %v749 = vsel %vm47, %v260, %v427
  %v750 = vsel %vm47, %v263, %v429
  %v751 = vsel %vm47, %v266, %v431
  %vm752 = vcmask 261120
  %v753 = vsel %vm752, %v736, %v449
  %v754 = vsel %vm752, %v737, %v451
  %v755 = vsel %vm752, %v738, %v453
  %v756 = vsel %vm752, %v739, %v455
  %v757 = vsel %vm752, %v740, %v457
  %v758 = vsel %vm752, %v741, %v459
  %v759 = vsel %vm752, %v742, %v461
  %v760 = vsel %vm752, %v743, %v463
  %v761 = vsel %vm752, %v744, %v465
  %v762 = vsel %vm752, %v745, %v467
  %v763 = vsel %vm752, %v746, %v469
  %v764 = vsel %vm752, %v747, %v471
  %v765 = vsel %vm752, %v748, %v473
  %v766 = vsel %vm752, %v749, %v475
  %v767 = vsel %vm752, %v750, %v477
  %v768 = vsel %vm752, %v751, %v479
  %vm769 = vcmask 392192
  %v770 = vsel %vm769, %v753, %v497
  %v771 = vsel %vm769, %v754, %v499
  %v772 = vsel %vm769, %v755, %v501
  %v773 = vsel %vm769, %v756, %v503
  %v774 = vsel %vm769, %v757, %v505
  %v775 = vsel %vm769, %v758, %v507
  %v776 = vsel %vm769, %v759, %v509
  %v777 = vsel %vm769, %v760, %v511
  %v778 = vsel %vm769, %v761, %v513
  %v779 = vsel %vm769, %v762, %v515
  %v780 = vsel %vm769, %v763, %v517
  %v781 = vsel %vm769, %v764, %v519
  %v782 = vsel %vm769, %v765, %v521
  %v783 = vsel %vm769, %v766, %v523
  %v784 = vsel %vm769, %v767, %v525
  %v785 = vsel %vm769, %v768, %v527
  %vm786 = vcmask 523264
  %v787 = vsel %vm786, %v770, %v545
  %v788 = vsel %vm786, %v771, %v547
  %v789 = vsel %vm786, %v772, %v549
  %v790 = vsel %vm786, %v773, %v551
  %v791 = vsel %vm786, %v774, %v553
  %v792 = vsel %vm786, %v775, %v555
  %v793 = vsel %vm786, %v776, %v557
  %v794 = vsel %vm786, %v777, %v559
  %v795 = vsel %vm786, %v778, %v561
  %v796 = vsel %vm786, %v779, %v563
  %v797 = vsel %vm786, %v780, %v565
  %v798 = vsel %vm786, %v781, %v567
  %v799 = vsel %vm786, %v782, %v569
  %v800 = vsel %vm786, %v783, %v571
  %v801 = vsel %vm786, %v784, %v573
  %v802 = vsel %vm786, %v785, %v575
  %vm803 = vcmask 654336
  %v804 = vsel %vm803, %v787, %v593
  %v805 = vsel %vm803, %v788, %v595
  %v806 = vsel %vm803, %v789, %v597
  %v807 = vsel %vm803, %v790, %v599
  %v808 = vsel %vm803, %v791, %v601
  %v809 = vsel %vm803, %v792, %v603
  %v810 = vsel %vm803, %v793, %v605
  %v811 = vsel %vm803, %v794, %v607
  %v812 = vsel %vm803, %v795, %v609
  %v813 = vsel %vm803, %v796, %v611
  %v814 = vsel %vm803, %v797, %v613
  %v815 = vsel %vm803, %v798, %v615
  %v816 = vsel %vm803, %v799, %v617
  %v817 = vsel %vm803, %v800, %v619
  %v818 = vsel %vm803, %v801, %v621
  %v819 = vsel %vm803, %v802, %v623
  %vm820 = vcmask 785408
  %v821 = vsel %vm820, %v804, %v641
  %v822 = vsel %vm820, %v805, %v643
  %v823 = vsel %vm820, %v806, %v645
  %v824 = vsel %vm820, %v807, %v647
  %v825 = vsel %vm820, %v808, %v649
  %v826 = vsel %vm820, %v809, %v651
  %v827 = vsel %vm820, %v810, %v653
  %v828 = vsel %vm820, %v811, %v655
  %v829 = vsel %vm820, %v812, %v657
  %v830 = vsel %vm820, %v813, %v659
  %v831 = vsel %vm820, %v814, %v661
  %v832 = vsel %vm820, %v815, %v663
  %v833 = vsel %vm820, %v816, %v665
  %v834 = vsel %vm820, %v817, %v667
  %v835 = vsel %vm820, %v818, %v669
  %v836 = vsel %vm820, %v819, %v671
  %vm837 = vcmask 916480
  %v838 = vsel %vm837, %v821, %v689
  %v839 = vsel %vm837, %v822, %v691
  %v840 = vsel %vm837, %v823, %v693
  %v841 = vsel %vm837, %v824, %v695
  %v842 = vsel %vm837, %v825, %v697
  %v843 = vsel %vm837, %v826, %v699
  %v844 = vsel %vm837, %v827, %v701
  %v845 = vsel %vm837, %v828, %v703
  %v846 = vsel %vm837, %v829, %v705
  %v847 = vsel %vm837, %v830, %v707
  %v848 = vsel %vm837, %v831, %v709
  %v849 = vsel %vm837, %v832, %v711
  %v850 = vsel %vm837, %v833, %v713
  %v851 = vsel %vm837, %v834, %v715
  %v852 = vsel %vm837, %v835, %v717
  %v853 = vsel %vm837, %v836, %v719
  %v854 = vpack.c.bf16 %v839, %v838
  %v855 = vpack.c.bf16 %v311, %v308
  %v856 = vpack.c.bf16 %v841, %v840
  %v857 = vpack.c.bf16 %v317, %v314
  %v858 = vpack.c.bf16 %v843, %v842
  %v859 = vpack.c.bf16 %v323, %v320
  %v860 = vpack.c.bf16 %v845, %v844
  %v861 = vpack.c.bf16 %v380, %v362
  %v862 = vpack.c.bf16 %v847, %v846
  %v863 = vpack.c.bf16 %v335, %v332
  %v864 = vpack.c.bf16 %v849, %v848
  %v865 = vpack.c.bf16 %v341, %v338
  %v866 = vpack.c.bf16 %v851, %v850
  %v867 = vpack.c.bf16 %v347, %v344
  %v868 = vpack.c.bf16 %v853, %v852
  %v869 = vpack.c.bf16 %v383, %v365
  %v870 = vld [vmem:[%s1] sm:$0xf]
  %v871 = vld [vmem:[%s1 + $0x4] sm:$0xf]
  %v872 = vld [vmem:[%s1 + $0x8] sm:$0xf]
  %v873 = vld [vmem:[%s1 + $0xc] sm:$0xf]
  %v874 = vld [vmem:[%s1 + $0x10] sm:$0xf]
  %v875 = vld [vmem:[%s1 + $0x14] sm:$0xf]
  %v876 = vld [vmem:[%s1 + $0x18] sm:$0xf]
  %v877 = vld [vmem:[%s1 + $0x1c] sm:$0xf]
  %v878 = vld [vmem:[%s1 + $0x20] sm:$0xf]
  %v879 = vld [vmem:[%s1 + $0x24] sm:$0xf]
  %v880 = vld [vmem:[%s1 + $0x28] sm:$0xf]
  %v881 = vld [vmem:[%s1 + $0x2c] sm:$0xf]
  %v882 = vld [vmem:[%s1 + $0x30] sm:$0xf]
  %v883 = vld [vmem:[%s1 + $0x34] sm:$0xf]
  %v884 = vld [vmem:[%s1 + $0x38] sm:$0xf]
  %v885 = vld [vmem:[%s1 + $0x3c] sm:$0xf]
  %v886 = vld [vmem:[%s1 + $0x40] sm:$0xf]
  %v887 = vld [vmem:[%s1 + $0x44] sm:$0xf]
  %v888 = vld [vmem:[%s2] sm:$0x1]
  %v890 = vlaneseq
  %v891 = vshrl.u32 %v890, 7
  %v892 = vsub.s32 0, %v891
  %v893 = vrot.slane %v888, %v892
  %v913 = vunpack.c.l.b16 %v870
  %v914 = vunpack.c.l.b16 %v871
  %v915 = vunpack.c.l.b16 %v872
  %v916 = vunpack.c.l.b16 %v873
  %v917 = vunpack.c.l.b16 %v874
  %v918 = vunpack.c.l.b16 %v875
  %v919 = vunpack.c.l.b16 %v876
  %v920 = vunpack.c.l.b16 %v877
  %v921 = vunpack.c.l.b16 %v878
  %v922 = vunpack.c.l.b16 %v879
  %v923 = vunpack.c.l.b16 %v880
  %v924 = vunpack.c.l.b16 %v881
  %v925 = vunpack.c.l.b16 %v882
  %v926 = vunpack.c.l.b16 %v883
  %v927 = vunpack.c.l.b16 %v884
  %v928 = vunpack.c.l.b16 %v885
  %v929 = vunpack.c.l.b16 %v886
  %v930 = vunpack.c.l.b16 %v887
  %v931 = vpack.c.b16 %v914, %v913
  %v932 = vpack.c.b16 %v916, %v915
  %v933 = vpack.c.b16 %v918, %v917
  %v934 = vpack.c.b16 %v920, %v919
  %v935 = vpack.c.b16 %v922, %v921
  %v936 = vpack.c.b16 %v924, %v923
  %v937 = vpack.c.b16 %v926, %v925
  %v938 = vpack.c.b16 %v928, %v927
  %v939 = vpack.c.b16 %v930, %v929
  %v950 = vsel %vm47, %v855, 0
  %v953 = vsel %vm47, %v857, 0
  %v956 = vsel %vm47, %v859, 0
  %v959 = vsel %vm47, %v861, 0
  %v962 = vsel %vm47, %v863, 0
  %v965 = vsel %vm47, %v865, 0
  %v968 = vsel %vm47, %v867, 0
  %v971 = vsel %vm47, %v869, 0
  %973 = vmatprep.subr.bf16.mxu0 0
  %974 = vmatpush1.bf16.msra.mxu0 %v931
  %975 = vmatprep.subr.bf16.mxu0 0
  %976 = vmatpush1.bf16.msra.mxu0 %v932
  %977 = vmatprep.subr.bf16.mxu0 0
  %978 = vmatpush1.bf16.msra.mxu0 %v933
  %979 = vmatprep.subr.bf16.mxu0 0
  %980 = vmatpush1.bf16.msra.mxu0 %v934
  %981 = vmatprep.subr.bf16.mxu0 0
  %982 = vmatpush1.bf16.msra.mxu0 %v935
  %983 = vmatprep.subr.bf16.mxu0 0
  %984 = vmatpush1.bf16.msra.mxu0 %v936
  %985 = vmatprep.subr.bf16.mxu0 0
  %986 = vmatpush1.bf16.msra.mxu0 %v937
  %987 = vmatprep.subr.bf16.mxu0 0
  %988 = vmatpush1.bf16.msra.mxu0 %v938
  %989 = vmatprep.subr.bf16.mxu0 0
  %990 = vmatpush1.bf16.msra.mxu0 %v939
  %991 = vmatprep.subr.bf16.mxu0 0
  %992 = vmatpush1.bf16.msra.mxu0 0
  %993 = vmatprep.subr.bf16.mxu0 0
  %994 = vmatpush1.bf16.msra.mxu0 0
  %995 = vmatprep.subr.bf16.mxu0 0
  %996 = vmatpush1.bf16.msra.mxu0 0
  %997 = vmatprep.subr.bf16.mxu0 0
  %998 = vmatpush1.bf16.msra.mxu0 0
  %999 = vmatprep.subr.bf16.mxu0 0
  %1000 = vmatpush1.bf16.msra.mxu0 0
  %1001 = vmatprep.subr.bf16.mxu0 0
  %1002 = vmatpush1.bf16.msra.mxu0 0
  %1003 = vmatprep.subr.bf16.mxu0 0
  %1004 = vmatpush1.bf16.msra.mxu0 0
  %1005 = vmatprep.mubr.bf16.mxu0 %v950
  %1006 = vmatmul.mubr.bf16.gmra.mrb[0].mxu0 %v854
  %v1007 = vpop.f32.mrb[0].mxu0
  %v1008 = vadd.f32 %v893, %v1007
  %v1009 = vpop.f32.mrb[0].mxu0
  %v1010 = vpop.f32.mrb[0].mxu0
  %v1011 = vadd.f32 %v893, %v1010
  %v1012 = vpop.f32.mrb[0].mxu0
  %1013 = vmatprep.mubr.bf16.mxu0 %v953
  %1014 = vmatmul.mubr.bf16.gmra.mrb[0].mxu0 %v856
  %v1015 = vpop.f32.mrb[0].mxu0
  %v1016 = vadd.f32 %v893, %v1015
  %v1017 = vpop.f32.mrb[0].mxu0
  %v1018 = vpop.f32.mrb[0].mxu0
  %v1019 = vadd.f32 %v893, %v1018
  %v1020 = vpop.f32.mrb[0].mxu0
  %1021 = vmatprep.mubr.bf16.mxu0 %v956
  %1022 = vmatmul.mubr.bf16.gmra.mrb[0].mxu0 %v858
  %v1023 = vpop.f32.mrb[0].mxu0
  %v1024 = vadd.f32 %v893, %v1023
  %v1025 = vpop.f32.mrb[0].mxu0
  %v1026 = vpop.f32.mrb[0].mxu0
  %v1027 = vadd.f32 %v893, %v1026
  %v1028 = vpop.f32.mrb[0].mxu0
  %1029 = vmatprep.mubr.bf16.mxu0 %v959
  %1030 = vmatmul.mubr.bf16.gmra.mrb[0].mxu0 %v860
  %v1031 = vpop.f32.mrb[0].mxu0
  %v1032 = vadd.f32 %v893, %v1031
  %v1033 = vpop.f32.mrb[0].mxu0
  %v1034 = vpop.f32.mrb[0].mxu0
  %v1035 = vadd.f32 %v893, %v1034
  %v1036 = vpop.f32.mrb[0].mxu0
  %1037 = vmatprep.mubr.bf16.mxu0 %v962
  %1038 = vmatmul.mubr.bf16.gmra.mrb[0].mxu0 %v862
  %v1039 = vpop.f32.mrb[0].mxu0
  %v1040 = vadd.f32 %v893, %v1039
  %v1041 = vpop.f32.mrb[0].mxu0
  %v1042 = vpop.f32.mrb[0].mxu0
  %v1043 = vadd.f32 %v893, %v1042
  %v1044 = vpop.f32.mrb[0].mxu0
  %1045 = vmatprep.mubr.bf16.mxu0 %v965
  %1046 = vmatmul.mubr.bf16.gmra.mrb[0].mxu0 %v864
  %v1047 = vpop.f32.mrb[0].mxu0
  %v1048 = vadd.f32 %v893, %v1047
  %v1049 = vpop.f32.mrb[0].mxu0
  %v1050 = vpop.f32.mrb[0].mxu0
  %v1051 = vadd.f32 %v893, %v1050
  %v1052 = vpop.f32.mrb[0].mxu0
  %1053 = vmatprep.mubr.bf16.mxu0 %v968
  %1054 = vmatmul.mubr.bf16.gmra.mrb[0].mxu0 %v866
  %v1055 = vpop.f32.mrb[0].mxu0
  %v1056 = vadd.f32 %v893, %v1055
  %v1057 = vpop.f32.mrb[0].mxu0
  %v1058 = vpop.f32.mrb[0].mxu0
  %v1059 = vadd.f32 %v893, %v1058
  %v1060 = vpop.f32.mrb[0].mxu0
  %1061 = vmatprep.mubr.bf16.mxu0 %v971
  %1062 = vmatmul.mubr.bf16.gmra.mrb[0].mxu0 %v868
  %v1063 = vpop.f32.mrb[0].mxu0
  %v1064 = vadd.f32 %v893, %v1063
  %v1065 = vpop.f32.mrb[0].mxu0
  %v1066 = vpop.f32.mrb[0].mxu0
  %v1067 = vadd.f32 %v893, %v1066
  %v1068 = vpop.f32.mrb[0].mxu0
  %1069 = vdwg.mxu0
  %v1070 = vpack.c.bf16 %v1008, %v1008
  %v1071 = vpack.c.bf16 %v1011, %v1011
  %v1072 = vpack.c.bf16 %v1016, %v1016
  %v1073 = vpack.c.bf16 %v1019, %v1019
  %v1074 = vpack.c.bf16 %v1024, %v1024
  %v1075 = vpack.c.bf16 %v1027, %v1027
  %v1076 = vpack.c.bf16 %v1032, %v1032
  %v1077 = vpack.c.bf16 %v1035, %v1035
  %v1078 = vpack.c.bf16 %v1040, %v1040
  %v1079 = vpack.c.bf16 %v1043, %v1043
  %v1080 = vpack.c.bf16 %v1048, %v1048
  %v1081 = vpack.c.bf16 %v1051, %v1051
  %v1082 = vpack.c.bf16 %v1056, %v1056
  %v1083 = vpack.c.bf16 %v1059, %v1059
  %v1084 = vpack.c.bf16 %v1064, %v1064
  %v1085 = vpack.c.bf16 %v1067, %v1067
  %vm1086 = vcmask 519168
  %1087 = vst.msk [vmem:[%s3] sm:$0xf] %vm1086, %v1070
  %1088 = vst.msk [vmem:[%s3 + $0x4] sm:$0xf] %vm1086, %v1071
  %1089 = vst.msk [vmem:[%s3 + $0x8] sm:$0xf] %vm1086, %v1072
  %1090 = vst.msk [vmem:[%s3 + $0xc] sm:$0xf] %vm1086, %v1073
  %1091 = vst.msk [vmem:[%s3 + $0x10] sm:$0xf] %vm1086, %v1074
  %1092 = vst.msk [vmem:[%s3 + $0x14] sm:$0xf] %vm1086, %v1075
  %1093 = vst.msk [vmem:[%s3 + $0x18] sm:$0xf] %vm1086, %v1076
  %1094 = vst.msk [vmem:[%s3 + $0x1c] sm:$0xf] %vm1086, %v1077
  %1095 = vst.msk [vmem:[%s3 + $0x20] sm:$0xf] %vm1086, %v1078
  %1096 = vst.msk [vmem:[%s3 + $0x24] sm:$0xf] %vm1086, %v1079
  %1097 = vst.msk [vmem:[%s3 + $0x28] sm:$0xf] %vm1086, %v1080
  %1098 = vst.msk [vmem:[%s3 + $0x2c] sm:$0xf] %vm1086, %v1081
  %1099 = vst.msk [vmem:[%s3 + $0x30] sm:$0xf] %vm1086, %v1082
  %1100 = vst.msk [vmem:[%s3 + $0x34] sm:$0xf] %vm1086, %v1083
  %1101 = vst.msk [vmem:[%s3 + $0x38] sm:$0xf] %vm1086, %v1084
  %1102 = vst.msk [vmem:[%s3 + $0x3c] sm:$0xf] %vm1086, %v1085
  // Predicated region
  $region14: #{drsenmk_forward.14} parent=0 // pred_check
    _
  $region15: #{drsenmk_forward.14} parent=0 // pred_check_branch
    %1104 = sbr.rel (0) target = $region17
  $region16: #{drsenmk_forward.14} parent=0 // pred_region
    _
  $region17: #{drsenmk_forward.14} parent=0 // pred_fallthru
    _
  // Predicated region
  $region18: #{drsenmk_forward.14} parent=0 // pred_check
    _
  $region19: #{drsenmk_forward.14} parent=0 // pred_check_branch
    %1106 = sbr.rel (0) target = $region21
  $region20: #{drsenmk_forward.14} parent=0 // pred_region
    _
  $region21: #{drsenmk_forward.14} parent=0 // pred_fallthru
    _

// kernel: drsenmk_forward.11
$region0: #{drsenmk_forward.11}
  #allocation0 [shape = 'u32[]', space=smem, size = 0x4, offset = 0x4, fixed_abs, tag = 'smem constant byte address 0x4 - core index']
  #allocation1 [shape = 'u32[144,128]{1,0:T(1,128)}', space=vmem, size = 0x12000, scoped, tag = 'internal scratch']
  #allocation2 [shape = 'f32[2,10,17,3]{3,2,1,0:T(8,128)}', space=vmem, size = 0x3c000, scoped, tag = 'scratch operand']
  %s0 = inlined_call_operand.vmem [shape: bf16[2,8,8,3], index: 0, kind: input, shape index: {}]
  %s1 = inlined_call_operand.vmem [shape: bf16[27,16], index: 1, kind: input, shape index: {}]
  %s2 = inlined_call_operand.vmem [shape: f32[1,16], index: 2, kind: input, shape index: {}]
  %s3 = inlined_call_operand.vmem [shape: bf16[2,8,8,16], index: 3, kind: output, shape index: {}]
  %s4 = sld [smem:[#allocation0]]
  $region22: #{drsenmk_forward.11} parent=0
    _
  %s6 = ssub.s32 1, %s4
  %s7 = scalar_select 0, %s6, %s4
  // Predicated region
  $region2: #{drsenmk_forward.11} parent=0 // pred_check
    _
  $region3: #{drsenmk_forward.11} parent=0 // pred_check_branch
    %9 = sbr.rel (0) target = $region5
  $region4: #{drsenmk_forward.11} parent=0 // pred_region
    _
  $region5: #{drsenmk_forward.11} parent=0 // pred_fallthru
    _
  // Predicated region
  $region6: #{drsenmk_forward.11} parent=0 // pred_check
    _
  $region7: #{drsenmk_forward.11} parent=0 // pred_check_branch
    %11 = sbr.rel (0) target = $region9
  $region8: #{drsenmk_forward.11} parent=0 // pred_region
    _
  $region9: #{drsenmk_forward.11} parent=0 // pred_fallthru
    _
  // Predicated region
  $region10: #{drsenmk_forward.11} parent=0 // pred_check
    _
  $region11: #{drsenmk_forward.11} parent=0 // pred_check_branch
    %13 = sbr.rel (0) target = $region13
  $region12: #{drsenmk_forward.11} parent=0 // pred_region
    _
  $region13: #{drsenmk_forward.11} parent=0 // pred_fallthru
    _
  %v15 = vld [vmem:[%s0] sm:$0xf]
  %v16 = vld [vmem:[%s0 + $0x4] sm:$0xf]
  %v17 = vld [vmem:[%s0 + $0x8] sm:$0xf]
  %v18 = vld [vmem:[%s0 + $0xc] sm:$0xf]
  %v19 = vld [vmem:[%s0 + $0x10] sm:$0xf]
  %v20 = vld [vmem:[%s0 + $0x14] sm:$0xf]
  %v21 = vld [vmem:[%s0 + $0x18] sm:$0xf]
  %v22 = vld [vmem:[%s0 + $0x1c] sm:$0xf]
  %v23 = vld [vmem:[%s0 + $0x20] sm:$0xf]
  %v24 = vld [vmem:[%s0 + $0x24] sm:$0xf]
  %v25 = vld [vmem:[%s0 + $0x28] sm:$0xf]
  %v26 = vld [vmem:[%s0 + $0x2c] sm:$0xf]
  %v27 = vld [vmem:[%s0 + $0x30] sm:$0xf]
  %v28 = vld [vmem:[%s0 + $0x34] sm:$0xf]
  %v29 = vld [vmem:[%s0 + $0x38] sm:$0xf]
  %v30 = vld [vmem:[%s0 + $0x3c] sm:$0xf]
  %v31 = vunpack.c.l.bf16 %v15
  %v32 = vunpack.c.l.bf16 %v16
  %v33 = vunpack.c.l.bf16 %v17
  %v34 = vunpack.c.l.bf16 %v18
  %v35 = vunpack.c.l.bf16 %v19
  %v36 = vunpack.c.l.bf16 %v20
  %v37 = vunpack.c.l.bf16 %v21
  %v38 = vunpack.c.l.bf16 %v22
  %v39 = vunpack.c.l.bf16 %v23
  %v40 = vunpack.c.l.bf16 %v24
  %v41 = vunpack.c.l.bf16 %v25
  %v42 = vunpack.c.l.bf16 %v26
  %v43 = vunpack.c.l.bf16 %v27
  %v44 = vunpack.c.l.bf16 %v28
  %v45 = vunpack.c.l.bf16 %v29
  %v46 = vunpack.c.l.bf16 %v30
  %vm47 = vcmask 23552
  %48 = vst.msk [vmem:[#allocation2] sm:$0xff] %vm47, 0.0
  %49 = vst.msk [vmem:[#allocation2 + $0x8] sm:$0xff] %vm47, 0.0
  %vm50 = vcmask 16384
  %51 = vst.msk [vmem:[#allocation2 + $0x10] sm:$0x1] %vm50, 0.0
  %52 = vst.msk [vmem:[#allocation2 + $0x18] sm:$0xff] %vm47, 0.0
  %53 = vst.msk [vmem:[#allocation2 + $0x20] sm:$0xff] %vm47, 0.0
  %54 = vst.msk [vmem:[#allocation2 + $0x28] sm:$0x1] %vm50, 0.0
  %55 = vst.msk [vmem:[#allocation2 + $0x30] sm:$0xff] %vm47, 0.0
  %56 = vst.msk [vmem:[#allocation2 + $0x38] sm:$0xff] %vm47, 0.0
  %57 = vst.msk [vmem:[#allocation2 + $0x40] sm:$0x1] %vm50, 0.0
  %58 = vst.msk [vmem:[#allocation2 + $0x48] sm:$0xff] %vm47, 0.0
  %59 = vst.msk [vmem:[#allocation2 + $0x50] sm:$0xff] %vm47, 0.0
  %60 = vst.msk [vmem:[#allocation2 + $0x58] sm:$0x1] %vm50, 0.0
  %61 = vst.msk [vmem:[#allocation2 + $0x60] sm:$0xff] %vm47, 0.0
  %62 = vst.msk [vmem:[#allocation2 + $0x68] sm:$0xff] %vm47, 0.0
  %63 = vst.msk [vmem:[#allocation2 + $0x70] sm:$0x1] %vm50, 0.0
  %64 = vst.msk [vmem:[#allocation2 + $0x78] sm:$0xff] %vm47, 0.0
  %65 = vst.msk [vmem:[#allocation2 + $0x80] sm:$0xff] %vm47, 0.0
  %66 = vst.msk [vmem:[#allocation2 + $0x88] sm:$0x1] %vm50, 0.0
  %67 = vst.msk [vmem:[#allocation2 + $0x90] sm:$0xff] %vm47, 0.0
  %68 = vst.msk [vmem:[#allocation2 + $0x98] sm:$0xff] %vm47, 0.0
  %69 = vst.msk [vmem:[#allocation2 + $0xa0] sm:$0x1] %vm50, 0.0
  %70 = vst.msk [vmem:[#allocation2 + $0xa8] sm:$0xff] %vm47, 0.0
  %71 = vst.msk [vmem:[#allocation2 + $0xb0] sm:$0xff] %vm47, 0.0
  %72 = vst.msk [vmem:[#allocation2 + $0xb8] sm:$0x1] %vm50, 0.0
  %73 = vst.msk [vmem:[#allocation2 + $0xc0] sm:$0xff] %vm47, 0.0
  %74 = vst.msk [vmem:[#allocation2 + $0xc8] sm:$0xff] %vm47, 0.0
  %75 = vst.msk [vmem:[#allocation2 + $0xd0] sm:$0x1] %vm50, 0.0
  %76 = vst.msk [vmem:[#allocation2 + $0xd8] sm:$0xff] %vm47, 0.0
  %77 = vst.msk [vmem:[#allocation2 + $0xe0] sm:$0xff] %vm47, 0.0
  %78 = vst.msk [vmem:[#allocation2 + $0xe8] sm:$0x1] %vm50, 0.0
  %79 = vst.msk [vmem:[#allocation2 + $0xf0] sm:$0xff] %vm47, 0.0
  %80 = vst.msk [vmem:[#allocation2 + $0xf8] sm:$0xff] %vm47, 0.0
  %81 = vst.msk [vmem:[#allocation2 + $0x100] sm:$0x1] %vm50, 0.0
  %82 = vst.msk [vmem:[#allocation2 + $0x108] sm:$0xff] %vm47, 0.0
  %83 = vst.msk [vmem:[#allocation2 + $0x110] sm:$0xff] %vm47, 0.0
  %84 = vst.msk [vmem:[#allocation2 + $0x118] sm:$0x1] %vm50, 0.0
  %85 = vst.msk [vmem:[#allocation2 + $0x120] sm:$0xff] %vm47, 0.0
  %86 = vst.msk [vmem:[#allocation2 + $0x128] sm:$0xff] %vm47, 0.0
  %87 = vst.msk [vmem:[#allocation2 + $0x130] sm:$0x1] %vm50, 0.0
  %88 = vst.msk [vmem:[#allocation2 + $0x138] sm:$0xff] %vm47, 0.0
  %89 = vst.msk [vmem:[#allocation2 + $0x140] sm:$0xff] %vm47, 0.0
  %90 = vst.msk [vmem:[#allocation2 + $0x148] sm:$0x1] %vm50, 0.0
  %91 = vst.msk [vmem:[#allocation2 + $0x150] sm:$0xff] %vm47, 0.0
  %92 = vst.msk [vmem:[#allocation2 + $0x158] sm:$0xff] %vm47, 0.0
  %93 = vst.msk [vmem:[#allocation2 + $0x160] sm:$0x1] %vm50, 0.0
  %94 = vst.msk [vmem:[#allocation2 + $0x168] sm:$0xff] %vm47, 0.0
  %95 = vst.msk [vmem:[#allocation2 + $0x170] sm:$0xff] %vm47, 0.0
  %96 = vst.msk [vmem:[#allocation2 + $0x178] sm:$0x1] %vm50, 0.0
  %97 = vst.msk [vmem:[#allocation2 + $0x180] sm:$0xff] %vm47, 0.0
  %98 = vst.msk [vmem:[#allocation2 + $0x188] sm:$0xff] %vm47, 0.0
  %99 = vst.msk [vmem:[#allocation2 + $0x190] sm:$0x1] %vm50, 0.0
  %100 = vst.msk [vmem:[#allocation2 + $0x198] sm:$0xff] %vm47, 0.0
  %101 = vst.msk [vmem:[#allocation2 + $0x1a0] sm:$0xff] %vm47, 0.0
  %102 = vst.msk [vmem:[#allocation2 + $0x1a8] sm:$0x1] %vm50, 0.0
  %103 = vst.msk [vmem:[#allocation2 + $0x1b0] sm:$0xff] %vm47, 0.0
  %104 = vst.msk [vmem:[#allocation2 + $0x1b8] sm:$0xff] %vm47, 0.0
  %105 = vst.msk [vmem:[#allocation2 + $0x1c0] sm:$0x1] %vm50, 0.0
  %106 = vst.msk [vmem:[#allocation2 + $0x1c8] sm:$0xff] %vm47, 0.0
  %107 = vst.msk [vmem:[#allocation2 + $0x1d0] sm:$0xff] %vm47, 0.0
  %108 = vst.msk [vmem:[#allocation2 + $0x1d8] sm:$0x1] %vm50, 0.0
  %s109 = scalar_lea.vmem [#allocation2], 24
  %110 = vst.msk [vmem:[%s109 + $0x8] sm:$0xff] %vm47, %v31
  %111 = vst.msk [vmem:[%s109 + $0x20] sm:$0xff] %vm47, %v32
  %112 = vst.msk [vmem:[%s109 + $0x38] sm:$0xff] %vm47, %v33
  %113 = vst.msk [vmem:[%s109 + $0x50] sm:$0xff] %vm47, %v34
  %114 = vst.msk [vmem:[%s109 + $0x68] sm:$0xff] %vm47, %v35
  %115 = vst.msk [vmem:[%s109 + $0x80] sm:$0xff] %vm47, %v36
  %116 = vst.msk [vmem:[%s109 + $0x98] sm:$0xff] %vm47, %v37
  %117 = vst.msk [vmem:[%s109 + $0xb0] sm:$0xff] %vm47, %v38
  %118 = vst.msk [vmem:[%s109 + $0xf8] sm:$0xff] %vm47, %v39
  %119 = vst.msk [vmem:[%s109 + $0x110] sm:$0xff] %vm47, %v40
  %120 = vst.msk [vmem:[%s109 + $0x128] sm:$0xff] %vm47, %v41
  %121 = vst.msk [vmem:[%s109 + $0x140] sm:$0xff] %vm47, %v42
  %122 = vst.msk [vmem:[%s109 + $0x158] sm:$0xff] %vm47, %v43
  %123 = vst.msk [vmem:[%s109 + $0x170] sm:$0xff] %vm47, %v44
  %124 = vst.msk [vmem:[%s109 + $0x188] sm:$0xff] %vm47, %v45
  %125 = vst.msk [vmem:[%s109 + $0x1a0] sm:$0xff] %vm47, %v46
  %v126 = vld [vmem:[#allocation2] sm:$0xff]
  %v127 = vld [vmem:[#allocation2 + $0x8] sm:$0xff]
  %v128 = vld [vmem:[#allocation2 + $0x10] sm:$0x1]
  %v129 = vld [vmem:[#allocation2 + $0x18] sm:$0xff]
  %v130 = vld [vmem:[#allocation2 + $0x20] sm:$0xff]
  %v131 = vld [vmem:[#allocation2 + $0x28] sm:$0x1]
  %v132 = vld [vmem:[#allocation2 + $0x30] sm:$0xff]
  %v133 = vld [vmem:[#allocation2 + $0x38] sm:$0xff]
  %v134 = vld [vmem:[#allocation2 + $0x40] sm:$0x1]
  %v135 = vld [vmem:[#allocation2 + $0x48] sm:$0xff]
  %v136 = vld [vmem:[#allocation2 + $0x50] sm:$0xff]
  %v137 = vld [vmem:[#allocation2 + $0x58] sm:$0x1]
  %v138 = vld [vmem:[#allocation2 + $0x60] sm:$0xff]
  %v139 = vld [vmem:[#allocation2 + $0x68] sm:$0xff]
  %v140 = vld [vmem:[#allocation2 + $0x70] sm:$0x1]
  %v141 = vld [vmem:[#allocation2 + $0x78] sm:$0xff]
  %v142 = vld [vmem:[#allocation2 + $0x80] sm:$0xff]
  %v143 = vld [vmem:[#allocation2 + $0x88] sm:$0x1]
  %v144 = vld [vmem:[#allocation2 + $0x90] sm:$0xff]
  %v145 = vld [vmem:[#allocation2 + $0x98] sm:$0xff]
  %v146 = vld [vmem:[#allocation2 + $0xa0] sm:$0x1]
  %v147 = vld [vmem:[#allocation2 + $0xa8] sm:$0xff]
  %v148 = vld [vmem:[#allocation2 + $0xb0] sm:$0xff]
  %v149 = vld [vmem:[#allocation2 + $0xb8] sm:$0x1]
  %v150 = vld [vmem:[#allocation2 + $0xc0] sm:$0xff]
  %v151 = vld [vmem:[#allocation2 + $0xc8] sm:$0xff]
  %v152 = vld [vmem:[#allocation2 + $0xd0] sm:$0x1]
  %v153 = vld [vmem:[#allocation2 + $0xd8] sm:$0xff]
  %v154 = vld [vmem:[#allocation2 + $0xe0] sm:$0xff]
  %v155 = vld [vmem:[#allocation2 + $0xe8] sm:$0x1]
  %v156 = vld [vmem:[#allocation2 + $0xf0] sm:$0xff]
  %v157 = vld [vmem:[#allocation2 + $0xf8] sm:$0xff]
  %v158 = vld [vmem:[#allocation2 + $0x100] sm:$0x1]
  %v159 = vld [vmem:[#allocation2 + $0x108] sm:$0xff]
  %v160 = vld [vmem:[#allocation2 + $0x110] sm:$0xff]
  %v161 = vld [vmem:[#allocation2 + $0x118] sm:$0x1]
  %v162 = vld [vmem:[#allocation2 + $0x120] sm:$0xff]
  %v163 = vld [vmem:[#allocation2 + $0x128] sm:$0xff]
  %v164 = vld [vmem:[#allocation2 + $0x130] sm:$0x1]
  %v165 = vld [vmem:[#allocation2 + $0x138] sm:$0xff]
  %v166 = vld [vmem:[#allocation2 + $0x140] sm:$0xff]
  %v167 = vld [vmem:[#allocation2 + $0x148] sm:$0x1]
  %v168 = vld [vmem:[#allocation2 + $0x150] sm:$0xff]
  %v169 = vld [vmem:[#allocation2 + $0x158] sm:$0xff]
  %v170 = vld [vmem:[#allocation2 + $0x160] sm:$0x1]
  %v171 = vld [vmem:[#allocation2 + $0x168] sm:$0xff]
  %v172 = vld [vmem:[#allocation2 + $0x170] sm:$0xff]
  %v173 = vld [vmem:[#allocation2 + $0x178] sm:$0x1]
  %v174 = vld [vmem:[#allocation2 + $0x180] sm:$0xff]
  %v175 = vld [vmem:[#allocation2 + $0x188] sm:$0xff]
  %v176 = vld [vmem:[#allocation2 + $0x190] sm:$0x1]
  %v177 = vld [vmem:[#allocation2 + $0x198] sm:$0xff]
  %v178 = vld [vmem:[#allocation2 + $0x1a0] sm:$0xff]
  %v179 = vld [vmem:[#allocation2 + $0x1a8] sm:$0x1]
  %v180 = vld [vmem:[#allocation2 + $0x1b0] sm:$0xff]
  %v181 = vld [vmem:[#allocation2 + $0x1b8] sm:$0xff]
  %v182 = vld [vmem:[#allocation2 + $0x1c0] sm:$0x1]
  %v183 = vld [vmem:[#allocation2 + $0x1c8] sm:$0xff]
  %v184 = vld [vmem:[#allocation2 + $0x1d0] sm:$0xff]
  %v185 = vld [vmem:[#allocation2 + $0x1d8] sm:$0x1]
  %vm218 = vcmask 1040384
  %v219 = vrot.slane %v126, 7
  %v220 = vrot.slane %v127, 7
  %v221 = vsel %vm218, %v219, %v220
  %v222 = vrot.slane %v129, 7
  %v223 = vrot.slane %v130, 7
  %v224 = vsel %vm218, %v222, %v223
  %v225 = vrot.slane %v132, 7
  %v226 = vrot.slane %v133, 7
  %v227 = vsel %vm218, %v225, %v226
  %v228 = vrot.slane %v135, 7
  %v229 = vrot.slane %v136, 7
  %v230 = vsel %vm218, %v228, %v229
  %v231 = vrot.slane %v138, 7
  %v232 = vrot.slane %v139, 7
  %v233 = vsel %vm218, %v231, %v232
  %v234 = vrot.slane %v141, 7
  %v235 = vrot.slane %v142, 7
  %v236 = vsel %vm218, %v234, %v235
  %v237 = vrot.slane %v144, 7
  %v238 = vrot.slane %v145, 7
  %v239 = vsel %vm218, %v237, %v238
  %v240 = vrot.slane %v147, 7
  %v241 = vrot.slane %v148, 7
  %v242 = vsel %vm218, %v240, %v241
  %v243 = vrot.slane %v156, 7
  %v244 = vrot.slane %v157, 7
  %v245 = vsel %vm218, %v243, %v244
  %v246 = vrot.slane %v159, 7
  %v247 = vrot.slane %v160, 7
  %v248 = vsel %vm218, %v246, %v247
  %v249 = vrot.slane %v162, 7
  %v250 = vrot.slane %v163, 7
  %v251 = vsel %vm218, %v249, %v250
  %v252 = vrot.slane %v165, 7
  %v253 = vrot.slane %v166, 7
  %v254 = vsel %vm218, %v252, %v253
  %v255 = vrot.slane %v168, 7
  %v256 = vrot.slane %v169, 7
  %v257 = vsel %vm218, %v255, %v256
  %v258 = vrot.slane %v171, 7
  %v259 = vrot.slane %v172, 7
  %v260 = vsel %vm218, %v258, %v259
  %v261 = vrot.slane %v174, 7
  %v262 = vrot.slane %v175, 7
  %v263 = vsel %vm218, %v261, %v262
  %v264 = vrot.slane %v177, 7
  %v265 = vrot.slane %v178, 7
  %v266 = vsel %vm218, %v264, %v265
  %vm299 = vcmask 1046528
  %v300 = vrot.slane %v127, 1
  %v301 = vrot.slane %v128, 1
  %v302 = vsel %vm299, %v300, %v301
  %v303 = vrot.slane %v130, 1
  %v304 = vrot.slane %v131, 1
  %v305 = vsel %vm299, %v303, %v304
  %v306 = vrot.slane %v133, 1
  %v307 = vrot.slane %v134, 1
  %v308 = vsel %vm299, %v306, %v307
  %v309 = vrot.slane %v136, 1
  %v310 = vrot.slane %v137, 1
  %v311 = vsel %vm299, %v309, %v310
  %v312 = vrot.slane %v139, 1
  %v313 = vrot.slane %v140, 1
  %v314 = vsel %vm299, %v312, %v313
  %v315 = vrot.slane %v142, 1
  %v316 = vrot.slane %v143, 1
  %v317 = vsel %vm299, %v315, %v316
  %v318 = vrot.slane %v145, 1
  %v319 = vrot.slane %v146, 1
  %v320 = vsel %vm299, %v318, %v319
  %v321 = vrot.slane %v148, 1
  %v322 = vrot.slane %v149, 1
  %v323 = vsel %vm299, %v321, %v322
  %v324 = vrot.slane %v157, 1
  %v325 = vrot.slane %v158, 1
  %v326 = vsel %vm299, %v324, %v325
  %v327 = vrot.slane %v160, 1
  %v328 = vrot.slane %v161, 1
  %v329 = vsel %vm299, %v327, %v328
  %v330 = vrot.slane %v163, 1
  %v331 = vrot.slane %v164, 1
  %v332 = vsel %vm299, %v330, %v331
  %v333 = vrot.slane %v166, 1
  %v334 = vrot.slane %v167, 1
  %v335 = vsel %vm299, %v333, %v334
  %v336 = vrot.slane %v169, 1
  %v337 = vrot.slane %v170, 1
  %v338 = vsel %vm299, %v336, %v337
  %v339 = vrot.slane %v172, 1
  %v340 = vrot.slane %v173, 1
  %v341 = vsel %vm299, %v339, %v340
  %v342 = vrot.slane %v175, 1
  %v343 = vrot.slane %v176, 1
  %v344 = vsel %vm299, %v342, %v343
  %v345 = vrot.slane %v178, 1
  %v346 = vrot.slane %v179, 1
  %v347 = vsel %vm299, %v345, %v346
  %v352 = vrot.slane %v150, 7
  %v353 = vrot.slane %v151, 7
  %v354 = vsel %vm218, %v352, %v353
  %v355 = vrot.slane %v180, 7
  %v356 = vrot.slane %v181, 7
  %v357 = vsel %vm218, %v355, %v356
  %v360 = vrot.slane %v151, 1
  %v361 = vrot.slane %v152, 1
  %v362 = vsel %vm299, %v360, %v361
  %v363 = vrot.slane %v181, 1
  %v364 = vrot.slane %v182, 1
  %v365 = vsel %vm299, %v363, %v364
  %v370 = vrot.slane %v153, 7
  %v371 = vrot.slane %v154, 7
  %v372 = vsel %vm218, %v370, %v371
  %v373 = vrot.slane %v183, 7
  %v374 = vrot.slane %v184, 7
  %v375 = vsel %vm218, %v373, %v374
  %v378 = vrot.slane %v154, 1
  %v379 = vrot.slane %v155, 1
  %v380 = vsel %vm299, %v378, %v379
  %v381 = vrot.slane %v184, 1
  %v382 = vrot.slane %v185, 1
  %v383 = vsel %vm299, %v381, %v382
  %384 = vrot.lane.b32.xlu0 %v127, 3
  %v385 = vpop.permute.xlu0 %384
  %386 = vrot.lane.b32.xlu0 %v130, 3
  %v387 = vpop.permute.xlu0 %386
  %388 = vrot.lane.b32.xlu0 %v133, 3
  %v389 = vpop.permute.xlu0 %388
  %390 = vrot.lane.b32.xlu0 %v136, 3
  %v391 = vpop.permute.xlu0 %390
  %392 = vrot.lane.b32.xlu0 %v139, 3
  %v393 = vpop.permute.xlu0 %392
  %394 = vrot.lane.b32.xlu0 %v142, 3
  %v395 = vpop.permute.xlu0 %394
  %396 = vrot.lane.b32.xlu0 %v145, 3
  %v397 = vpop.permute.xlu0 %396
  %398 = vrot.lane.b32.xlu0 %v148, 3
  %v399 = vpop.permute.xlu0 %398
  %400 = vrot.lane.b32.xlu0 %v157, 3
  %v401 = vpop.permute.xlu0 %400
  %402 = vrot.lane.b32.xlu0 %v160, 3
  %v403 = vpop.permute.xlu0 %402
  %404 = vrot.lane.b32.xlu0 %v163, 3
  %v405 = vpop.permute.xlu0 %404
  %406 = vrot.lane.b32.xlu0 %v166, 3
  %v407 = vpop.permute.xlu0 %406
  %408 = vrot.lane.b32.xlu0 %v169, 3
  %v409 = vpop.permute.xlu0 %408
  %410 = vrot.lane.b32.xlu0 %v172, 3
  %v411 = vpop.permute.xlu0 %410
  %412 = vrot.lane.b32.xlu0 %v175, 3
  %v413 = vpop.permute.xlu0 %412
  %414 = vrot.lane.b32.xlu0 %v178, 3
  %v415 = vpop.permute.xlu0 %414
  %432 = vrot.lane.b32.xlu0 %v302, 6
  %v433 = vpop.permute.xlu0 %432
  %434 = vrot.lane.b32.xlu0 %v305, 6
  %v435 = vpop.permute.xlu0 %434
  %436 = vrot.lane.b32.xlu0 %v308, 6
  %v437 = vpop.permute.xlu0 %436
  %438 = vrot.lane.b32.xlu0 %v311, 6
  %v439 = vpop.permute.xlu0 %438
  %440 = vrot.lane.b32.xlu0 %v314, 6
  %v441 = vpop.permute.xlu0 %440
  %442 = vrot.lane.b32.xlu0 %v317, 6
  %v443 = vpop.permute.xlu0 %442
  %444 = vrot.lane.b32.xlu0 %v320, 6
  %v445 = vpop.permute.xlu0 %444
  %446 = vrot.lane.b32.xlu0 %v323, 6
  %v447 = vpop.permute.xlu0 %446
  %448 = vrot.lane.b32.xlu0 %v326, 6
  %v449 = vpop.permute.xlu0 %448
  %450 = vrot.lane.b32.xlu0 %v329, 6
  %v451 = vpop.permute.xlu0 %450
  %452 = vrot.lane.b32.xlu0 %v332, 6
  %v453 = vpop.permute.xlu0 %452
  %454 = vrot.lane.b32.xlu0 %v335, 6
  %v455 = vpop.permute.xlu0 %454
  %456 = vrot.lane.b32.xlu0 %v338, 6
  %v457 = vpop.permute.xlu0 %456
  %458 = vrot.lane.b32.xlu0 %v341, 6
  %v459 = vpop.permute.xlu0 %458
  %460 = vrot.lane.b32.xlu0 %v344, 6
  %v461 = vpop.permute.xlu0 %460
  %462 = vrot.lane.b32.xlu0 %v347, 6
  %v463 = vpop.permute.xlu0 %462
  %480 = vrot.lane.b32.xlu0 %v224, 9
  %v481 = vpop.permute.xlu0 %480
  %482 = vrot.lane.b32.xlu0 %v227, 9
  %v483 = vpop.permute.xlu0 %482
  %484 = vrot.lane.b32.xlu0 %v230, 9
  %v485 = vpop.permute.xlu0 %484
  %486 = vrot.lane.b32.xlu0 %v233, 9
  %v487 = vpop.permute.xlu0 %486
  %488 = vrot.lane.b32.xlu0 %v236, 9
  %v489 = vpop.permute.xlu0 %488
  %490 = vrot.lane.b32.xlu0 %v239, 9
  %v491 = vpop.permute.xlu0 %490
  %492 = vrot.lane.b32.xlu0 %v242, 9
  %v493 = vpop.permute.xlu0 %492
  %494 = vrot.lane.b32.xlu0 %v354, 9
  %v495 = vpop.permute.xlu0 %494
  %496 = vrot.lane.b32.xlu0 %v248, 9
  %v497 = vpop.permute.xlu0 %496
  %498 = vrot.lane.b32.xlu0 %v251, 9
  %v499 = vpop.permute.xlu0 %498
  %500 = vrot.lane.b32.xlu0 %v254, 9
  %v501 = vpop.permute.xlu0 %500
  %502 = vrot.lane.b32.xlu0 %v257, 9
  %v503 = vpop.permute.xlu0 %502
  %504 = vrot.lane.b32.xlu0 %v260, 9
  %v505 = vpop.permute.xlu0 %504
  %506 = vrot.lane.b32.xlu0 %v263, 9
  %v507 = vpop.permute.xlu0 %506
  %508 = vrot.lane.b32.xlu0 %v266, 9
  %v509 = vpop.permute.xlu0 %508
  %510 = vrot.lane.b32.xlu0 %v357, 9
  %v511 = vpop.permute.xlu0 %510
  %528 = vrot.lane.b32.xlu0 %v130, 12
  %v529 = vpop.permute.xlu0 %528
  %530 = vrot.lane.b32.xlu0 %v133, 12
  %v531 = vpop.permute.xlu0 %530
  %532 = vrot.lane.b32.xlu0 %v136, 12
  %v533 = vpop.permute.xlu0 %532
  %534 = vrot.lane.b32.xlu0 %v139, 12
  %v535 = vpop.permute.xlu0 %534
  %536 = vrot.lane.b32.xlu0 %v142, 12
  %v537 = vpop.permute.xlu0 %536
  %538 = vrot.lane.b32.xlu0 %v145, 12
  %v539 = vpop.permute.xlu0 %538
  %540 = vrot.lane.b32.xlu0 %v148, 12
  %v541 = vpop.permute.xlu0 %540
  %542 = vrot.lane.b32.xlu0 %v151, 12
  %v543 = vpop.permute.xlu0 %542
  %544 = vrot.lane.b32.xlu0 %v160, 12
  %v545 = vpop.permute.xlu0 %544
  %546 = vrot.lane.b32.xlu0 %v163, 12
  %v547 = vpop.permute.xlu0 %546
  %548 = vrot.lane.b32.xlu0 %v166, 12
  %v549 = vpop.permute.xlu0 %548
  %550 = vrot.lane.b32.xlu0 %v169, 12
  %v551 = vpop.permute.xlu0 %550
  %552 = vrot.lane.b32.xlu0 %v172, 12
  %v553 = vpop.permute.xlu0 %552
  %554 = vrot.lane.b32.xlu0 %v175, 12
  %v555 = vpop.permute.xlu0 %554
  %556 = vrot.lane.b32.xlu0 %v178, 12
  %v557 = vpop.permute.xlu0 %556
  %558 = vrot.lane.b32.xlu0 %v181, 12
  %v559 = vpop.permute.xlu0 %558
  %576 = vrot.lane.b32.xlu0 %v305, 15
  %v577 = vpop.permute.xlu0 %576
  %578 = vrot.lane.b32.xlu0 %v308, 15
  %v579 = vpop.permute.xlu0 %578
  %580 = vrot.lane.b32.xlu0 %v311, 15
  %v581 = vpop.permute.xlu0 %580
  %582 = vrot.lane.b32.xlu0 %v314, 15
  %v583 = vpop.permute.xlu0 %582
  %584 = vrot.lane.b32.xlu0 %v317, 15
  %v585 = vpop.permute.xlu0 %584
  %586 = vrot.lane.b32.xlu0 %v320, 15
  %v587 = vpop.permute.xlu0 %586
  %588 = vrot.lane.b32.xlu0 %v323, 15
  %v589 = vpop.permute.xlu0 %588
  %590 = vrot.lane.b32.xlu0 %v362, 15
  %v591 = vpop.permute.xlu0 %590
  %592 = vrot.lane.b32.xlu0 %v329, 15
  %v593 = vpop.permute.xlu0 %592
  %594 = vrot.lane.b32.xlu0 %v332, 15
  %v595 = vpop.permute.xlu0 %594
  %596 = vrot.lane.b32.xlu0 %v335, 15
  %v597 = vpop.permute.xlu0 %596
  %598 = vrot.lane.b32.xlu0 %v338, 15
  %v599 = vpop.permute.xlu0 %598
  %600 = vrot.lane.b32.xlu0 %v341, 15
  %v601 = vpop.permute.xlu0 %600
  %602 = vrot.lane.b32.xlu0 %v344, 15
  %v603 = vpop.permute.xlu0 %602
  %604 = vrot.lane.b32.xlu0 %v347, 15
  %v605 = vpop.permute.xlu0 %604
  %606 = vrot.lane.b32.xlu0 %v365, 15
  %v607 = vpop.permute.xlu0 %606
  %624 = vrot.lane.b32.xlu0 %v227, 18
  %v625 = vpop.permute.xlu0 %624
  %626 = vrot.lane.b32.xlu0 %v230, 18
  %v627 = vpop.permute.xlu0 %626
  %628 = vrot.lane.b32.xlu0 %v233, 18
  %v629 = vpop.permute.xlu0 %628
  %630 = vrot.lane.b32.xlu0 %v236, 18
  %v631 = vpop.permute.xlu0 %630
  %632 = vrot.lane.b32.xlu0 %v239, 18
  %v633 = vpop.permute.xlu0 %632
  %634 = vrot.lane.b32.xlu0 %v242, 18
  %v635 = vpop.permute.xlu0 %634
  %636 = vrot.lane.b32.xlu0 %v354, 18
  %v637 = vpop.permute.xlu0 %636
  %638 = vrot.lane.b32.xlu0 %v372, 18
  %v639 = vpop.permute.xlu0 %638
  %640 = vrot.lane.b32.xlu0 %v251, 18
  %v641 = vpop.permute.xlu0 %640
  %642 = vrot.lane.b32.xlu0 %v254, 18
  %v643 = vpop.permute.xlu0 %642
  %644 = vrot.lane.b32.xlu0 %v257, 18
  %v645 = vpop.permute.xlu0 %644
  %646 = vrot.lane.b32.xlu0 %v260, 18
  %v647 = vpop.permute.xlu0 %646
  %648 = vrot.lane.b32.xlu0 %v263, 18
  %v649 = vpop.permute.xlu0 %648
  %650 = vrot.lane.b32.xlu0 %v266, 18
  %v651 = vpop.permute.xlu0 %650
  %652 = vrot.lane.b32.xlu0 %v357, 18
  %v653 = vpop.permute.xlu0 %652
  %654 = vrot.lane.b32.xlu0 %v375, 18
  %v655 = vpop.permute.xlu0 %654
  %672 = vrot.lane.b32.xlu0 %v133, 21
  %v673 = vpop.permute.xlu0 %672
  %674 = vrot.lane.b32.xlu0 %v136, 21
  %v675 = vpop.permute.xlu0 %674
  %676 = vrot.lane.b32.xlu0 %v139, 21
  %v677 = vpop.permute.xlu0 %676
  %678 = vrot.lane.b32.xlu0 %v142, 21
  %v679 = vpop.permute.xlu0 %678
  %680 = vrot.lane.b32.xlu0 %v145, 21
  %v681 = vpop.permute.xlu0 %680
  %682 = vrot.lane.b32.xlu0 %v148, 21
  %v683 = vpop.permute.xlu0 %682
  %684 = vrot.lane.b32.xlu0 %v151, 21
  %v685 = vpop.permute.xlu0 %684
  %686 = vrot.lane.b32.xlu0 %v154, 21
  %v687 = vpop.permute.xlu0 %686
  %688 = vrot.lane.b32.xlu0 %v163, 21
  %v689 = vpop.permute.xlu0 %688
  %690 = vrot.lane.b32.xlu0 %v166, 21
  %v691 = vpop.permute.xlu0 %690
  %692 = vrot.lane.b32.xlu0 %v169, 21
  %v693 = vpop.permute.xlu0 %692
  %694 = vrot.lane.b32.xlu0 %v172, 21
  %v695 = vpop.permute.xlu0 %694
  %696 = vrot.lane.b32.xlu0 %v175, 21
  %v697 = vpop.permute.xlu0 %696
  %698 = vrot.lane.b32.xlu0 %v178, 21
  %v699 = vpop.permute.xlu0 %698
  %700 = vrot.lane.b32.xlu0 %v181, 21
  %v701 = vpop.permute.xlu0 %700
  %702 = vrot.lane.b32.xlu0 %v184, 21
  %v703 = vpop.permute.xlu0 %702
  %720 = vrot.lane.b32.xlu0 %v308, 24
  %v721 = vpop.permute.xlu0 %720
  %722 = vrot.lane.b32.xlu0 %v311, 24
  %v723 = vpop.permute.xlu0 %722
  %724 = vrot.lane.b32.xlu0 %v314, 24
  %v725 = vpop.permute.xlu0 %724
  %726 = vrot.lane.b32.xlu0 %v317, 24
  %v727 = vpop.permute.xlu0 %726
  %728 = vrot.lane.b32.xlu0 %v320, 24
  %v729 = vpop.permute.xlu0 %728
  %730 = vrot.lane.b32.xlu0 %v323, 24
  %v731 = vpop.permute.xlu0 %730
  %732 = vrot.lane.b32.xlu0 %v362, 24
  %v733 = vpop.permute.xlu0 %732
  %734 = vrot.lane.b32.xlu0 %v380, 24
  %v735 = vpop.permute.xlu0 %734
  %736 = vrot.lane.b32.xlu0 %v332, 24
  %v737 = vpop.permute.xlu0 %736
  %738 = vrot.lane.b32.xlu0 %v335, 24
  %v739 = vpop.permute.xlu0 %738
  %740 = vrot.lane.b32.xlu0 %v338, 24
  %v741 = vpop.permute.xlu0 %740
  %742 = vrot.lane.b32.xlu0 %v341, 24
  %v743 = vpop.permute.xlu0 %742
  %744 = vrot.lane.b32.xlu0 %v344, 24
  %v745 = vpop.permute.xlu0 %744
  %746 = vrot.lane.b32.xlu0 %v347, 24
  %v747 = vpop.permute.xlu0 %746
  %748 = vrot.lane.b32.xlu0 %v365, 24
  %v749 = vpop.permute.xlu0 %748
  %750 = vrot.lane.b32.xlu0 %v383, 24
  %v751 = vpop.permute.xlu0 %750
  %v768 = vsel %vm47, %v221, %v385
  %v769 = vsel %vm47, %v224, %v387
  %v770 = vsel %vm47, %v227, %v389
  %v771 = vsel %vm47, %v230, %v391
  %v772 = vsel %vm47, %v233, %v393
  %v773 = vsel %vm47, %v236, %v395
  %v774 = vsel %vm47, %v239, %v397
  %v775 = vsel %vm47, %v242, %v399
  %v776 = vsel %vm47, %v245, %v401
  %v777 = vsel %vm47, %v248, %v403
  %v778 = vsel %vm47, %v251, %v405
  %v779 = vsel %vm47, %v254, %v407
  %v780 = vsel %vm47, %v257, %v409
  %v781 = vsel %vm47, %v260, %v411
  %v782 = vsel %vm47, %v263, %v413
  %v783 = vsel %vm47, %v266, %v415
  %vm784 = vcmask 48128
  %v785 = vsel %vm784, %v768, %v433
  %v786 = vsel %vm784, %v769, %v435
  %v787 = vsel %vm784, %v770, %v437
  %v788 = vsel %vm784, %v771, %v439
  %v789 = vsel %vm784, %v772, %v441
  %v790 = vsel %vm784, %v773, %v443
  %v791 = vsel %vm784, %v774, %v445
  %v792 = vsel %vm784, %v775, %v447
  %v793 = vsel %vm784, %v776, %v449
  %v794 = vsel %vm784, %v777, %v451
  %v795 = vsel %vm784, %v778, %v453
  %v796 = vsel %vm784, %v779, %v455
  %v797 = vsel %vm784, %v780, %v457
  %v798 = vsel %vm784, %v781, %v459
  %v799 = vsel %vm784, %v782, %v461
  %v800 = vsel %vm784, %v783, %v463
  %vm801 = vcmask 72704
  %v802 = vsel %vm801, %v785, %v481
  %v803 = vsel %vm801, %v786, %v483
  %v804 = vsel %vm801, %v787, %v485
  %v805 = vsel %vm801, %v788, %v487
  %v806 = vsel %vm801, %v789, %v489
  %v807 = vsel %vm801, %v790, %v491
  %v808 = vsel %vm801, %v791, %v493
  %v809 = vsel %vm801, %v792, %v495
  %v810 = vsel %vm801, %v793, %v497
  %v811 = vsel %vm801, %v794, %v499
  %v812 = vsel %vm801, %v795, %v501
  %v813 = vsel %vm801, %v796, %v503
  %v814 = vsel %vm801, %v797, %v505
  %v815 = vsel %vm801, %v798, %v507
  %v816 = vsel %vm801, %v799, %v509
  %v817 = vsel %vm801, %v800, %v511
  %vm818 = vcmask 97280
  %v819 = vsel %vm818, %v802, %v529
  %v820 = vsel %vm818, %v803, %v531
  %v821 = vsel %vm818, %v804, %v533
  %v822 = vsel %vm818, %v805, %v535
  %v823 = vsel %vm818, %v806, %v537
  %v824 = vsel %vm818, %v807, %v539
  %v825 = vsel %vm818, %v808, %v541
  %v826 = vsel %vm818, %v809, %v543
  %v827 = vsel %vm818, %v810, %v545
  %v828 = vsel %vm818, %v811, %v547
  %v829 = vsel %vm818, %v812, %v549
  %v830 = vsel %vm818, %v813, %v551
  %v831 = vsel %vm818, %v814, %v553
  %v832 = vsel %vm818, %v815, %v555
  %v833 = vsel %vm818, %v816, %v557
  %v834 = vsel %vm818, %v817, %v559
  %vm835 = vcmask 121856
  %v836 = vsel %vm835, %v819, %v577
  %v837 = vsel %vm835, %v820, %v579
  %v838 = vsel %vm835, %v821, %v581
  %v839 = vsel %vm835, %v822, %v583
  %v840 = vsel %vm835, %v823, %v585
  %v841 = vsel %vm835, %v824, %v587
  %v842 = vsel %vm835, %v825, %v589
  %v843 = vsel %vm835, %v826, %v591
  %v844 = vsel %vm835, %v827, %v593
  %v845 = vsel %vm835, %v828, %v595
  %v846 = vsel %vm835, %v829, %v597
  %v847 = vsel %vm835, %v830, %v599
  %v848 = vsel %vm835, %v831, %v601
  %v849 = vsel %vm835, %v832, %v603
  %v850 = vsel %vm835, %v833, %v605
  %v851 = vsel %vm835, %v834, %v607
  %vm852 = vcmask 146432
  %v853 = vsel %vm852, %v836, %v625
  %v854 = vsel %vm852, %v837, %v627
  %v855 = vsel %vm852, %v838, %v629
  %v856 = vsel %vm852, %v839, %v631
  %v857 = vsel %vm852, %v840, %v633
  %v858 = vsel %vm852, %v841, %v635
  %v859 = vsel %vm852, %v842, %v637
  %v860 = vsel %vm852, %v843, %v639
  %v861 = vsel %vm852, %v844, %v641
  %v862 = vsel %vm852, %v845, %v643
  %v863 = vsel %vm852, %v846, %v645
  %v864 = vsel %vm852, %v847, %v647
  %v865 = vsel %vm852, %v848, %v649
  %v866 = vsel %vm852, %v849, %v651
  %v867 = vsel %vm852, %v850, %v653
  %v868 = vsel %vm852, %v851, %v655
  %vm869 = vcmask 171008
  %v870 = vsel %vm869, %v853, %v673
  %v871 = vsel %vm869, %v854, %v675
  %v872 = vsel %vm869, %v855, %v677
  %v873 = vsel %vm869, %v856, %v679
  %v874 = vsel %vm869, %v857, %v681
  %v875 = vsel %vm869, %v858, %v683
  %v876 = vsel %vm869, %v859, %v685
  %v877 = vsel %vm869, %v860, %v687
  %v878 = vsel %vm869, %v861, %v689
  %v879 = vsel %vm869, %v862, %v691
  %v880 = vsel %vm869, %v863, %v693
  %v881 = vsel %vm869, %v864, %v695
  %v882 = vsel %vm869, %v865, %v697
  %v883 = vsel %vm869, %v866, %v699
  %v884 = vsel %vm869, %v867, %v701
  %v885 = vsel %vm869, %v868, %v703
  %vm886 = vcmask 195584
  %v887 = vsel %vm886, %v870, %v721
  %v888 = vsel %vm886, %v871, %v723
  %v889 = vsel %vm886, %v872, %v725
  %v890 = vsel %vm886, %v873, %v727
  %v891 = vsel %vm886, %v874, %v729
  %v892 = vsel %vm886, %v875, %v731
  %v893 = vsel %vm886, %v876, %v733
  %v894 = vsel %vm886, %v877, %v735
  %v895 = vsel %vm886, %v878, %v737
  %v896 = vsel %vm886, %v879, %v739
  %v897 = vsel %vm886, %v880, %v741
  %v898 = vsel %vm886, %v881, %v743
  %v899 = vsel %vm886, %v882, %v745
  %v900 = vsel %vm886, %v883, %v747
  %v901 = vsel %vm886, %v884, %v749
  %v902 = vsel %vm886, %v885, %v751
  %v903 = vpack.c.bf16 %v888, %v887
  %v904 = vpack.c.bf16 %v890, %v889
  %v905 = vpack.c.bf16 %v892, %v891
  %v906 = vpack.c.bf16 %v894, %v893
  %v907 = vpack.c.bf16 %v896, %v895
  %v908 = vpack.c.bf16 %v898, %v897
  %v909 = vpack.c.bf16 %v900, %v899
  %v910 = vpack.c.bf16 %v902, %v901
  %v911 = vld [vmem:[%s1] sm:$0xf]
  %v912 = vld [vmem:[%s1 + $0x4] sm:$0xf]
  %v913 = vld [vmem:[%s1 + $0x8] sm:$0xf]
  %v914 = vld [vmem:[%s1 + $0xc] sm:$0x3]
  %v915 = vld [vmem:[%s2] sm:$0x1]
  %v917 = vlaneseq
  %v918 = vshrl.u32 %v917, 7
  %v919 = vsub.s32 0, %v918
  %v920 = vrot.slane %v915, %v919
  %v926 = vunpack.c.l.b16 %v911
  %v927 = vunpack.c.l.b16 %v912
  %v928 = vunpack.c.l.b16 %v913
  %v929 = vunpack.c.l.b16 %v914
  %v930 = vpack.c.b16 %v927, %v926
  %v931 = vpack.c.b16 %v929, %v928
  %vm933 = vcmask 220160
  %v935 = vsel %vm933, %v903, 0
  %v938 = vsel %vm933, %v904, 0
  %v941 = vsel %vm933, %v905, 0
  %v944 = vsel %vm933, %v906, 0
  %v947 = vsel %vm933, %v907, 0
  %v950 = vsel %vm933, %v908, 0
  %v953 = vsel %vm933, %v909, 0
  %v956 = vsel %vm933, %v910, 0
  %vm958 = vcmask 1044480
  %vm959 = vcmask 1045504
  %v960 = vsel %vm958, 4294967295, 65535
  %v961 = vsel %vm959, %v960, 0
  %v963 = vand.u32 %v931, %v961
  %965 = vmatprep.subr.bf16.mxu0 0
  %966 = vmatpush1.bf16.msra.mxu0 %v930
  %967 = vmatprep.subr.bf16.mxu0 0
  %968 = vmatpush1.bf16.msra.mxu0 %v963
  %969 = vmatprep.subr.bf16.mxu0 0
  %970 = vmatpush1.bf16.msra.mxu0 0
  %971 = vmatprep.subr.bf16.mxu0 0
  %972 = vmatpush1.bf16.msra.mxu0 0
  %973 = vmatprep.subr.bf16.mxu0 0
  %974 = vmatpush1.bf16.msra.mxu0 0
  %975 = vmatprep.subr.bf16.mxu0 0
  %976 = vmatpush1.bf16.msra.mxu0 0
  %977 = vmatprep.subr.bf16.mxu0 0
  %978 = vmatpush1.bf16.msra.mxu0 0
  %979 = vmatprep.subr.bf16.mxu0 0
  %980 = vmatpush1.bf16.msra.mxu0 0
  %981 = vmatprep.subr.bf16.mxu0 0
  %982 = vmatpush1.bf16.msra.mxu0 0
  %983 = vmatprep.subr.bf16.mxu0 0
  %984 = vmatpush1.bf16.msra.mxu0 0
  %985 = vmatprep.subr.bf16.mxu0 0
  %986 = vmatpush1.bf16.msra.mxu0 0
  %987 = vmatprep.subr.bf16.mxu0 0
  %988 = vmatpush1.bf16.msra.mxu0 0
  %989 = vmatprep.subr.bf16.mxu0 0
  %990 = vmatpush1.bf16.msra.mxu0 0
  %991 = vmatprep.subr.bf16.mxu0 0
  %992 = vmatpush1.bf16.msra.mxu0 0
  %993 = vmatprep.subr.bf16.mxu0 0
  %994 = vmatpush1.bf16.msra.mxu0 0
  %995 = vmatprep.subr.bf16.mxu0 0
  %996 = vmatpush1.bf16.msra.mxu0 0
  %997 = vmatprep.mubr.bf16.mxu0 0
  %998 = vmatmul.mubr.bf16.gmra.mrb[0].mxu0 %v935
  %v999 = vpop.f32.mrb[0].mxu0
  %v1000 = vadd.f32 %v920, %v999
  %v1001 = vpop.f32.mrb[0].mxu0
  %v1002 = vpop.f32.mrb[0].mxu0
  %v1003 = vadd.f32 %v920, %v1002
  %v1004 = vpop.f32.mrb[0].mxu0
  %1005 = vmatprep.mubr.bf16.mxu0 0
  %1006 = vmatmul.mubr.bf16.gmra.mrb[0].mxu0 %v938
  %v1007 = vpop.f32.mrb[0].mxu0
  %v1008 = vadd.f32 %v920, %v1007
  %v1009 = vpop.f32.mrb[0].mxu0
  %v1010 = vpop.f32.mrb[0].mxu0
  %v1011 = vadd.f32 %v920, %v1010
  %v1012 = vpop.f32.mrb[0].mxu0
  %1013 = vmatprep.mubr.bf16.mxu0 0
  %1014 = vmatmul.mubr.bf16.gmra.mrb[0].mxu0 %v941
  %v1015 = vpop.f32.mrb[0].mxu0
  %v1016 = vadd.f32 %v920, %v1015
  %v1017 = vpop.f32.mrb[0].mxu0
  %v1018 = vpop.f32.mrb[0].mxu0
  %v1019 = vadd.f32 %v920, %v1018
  %v1020 = vpop.f32.mrb[0].mxu0
  %1021 = vmatprep.mubr.bf16.mxu0 0
  %1022 = vmatmul.mubr.bf16.gmra.mrb[0].mxu0 %v944
  %v1023 = vpop.f32.mrb[0].mxu0
  %v1024 = vadd.f32 %v920, %v1023
  %v1025 = vpop.f32.mrb[0].mxu0
  %v1026 = vpop.f32.mrb[0].mxu0
  %v1027 = vadd.f32 %v920, %v1026
  %v1028 = vpop.f32.mrb[0].mxu0
  %1029 = vmatprep.mubr.bf16.mxu0 0
  %1030 = vmatmul.mubr.bf16.gmra.mrb[0].mxu0 %v947
  %v1031 = vpop.f32.mrb[0].mxu0
  %v1032 = vadd.f32 %v920, %v1031
  %v1033 = vpop.f32.mrb[0].mxu0
  %v1034 = vpop.f32.mrb[0].mxu0
  %v1035 = vadd.f32 %v920, %v1034
  %v1036 = vpop.f32.mrb[0].mxu0
  %1037 = vmatprep.mubr.bf16.mxu0 0
  %1038 = vmatmul.mubr.bf16.gmra.mrb[0].mxu0 %v950
  %v1039 = vpop.f32.mrb[0].mxu0
  %v1040 = vadd.f32 %v920, %v1039
  %v1041 = vpop.f32.mrb[0].mxu0
  %v1042 = vpop.f32.mrb[0].mxu0
  %v1043 = vadd.f32 %v920, %v1042
  %v1044 = vpop.f32.mrb[0].mxu0
  %1045 = vmatprep.mubr.bf16.mxu0 0
  %1046 = vmatmul.mubr.bf16.gmra.mrb[0].mxu0 %v953
  %v1047 = vpop.f32.mrb[0].mxu0
  %v1048 = vadd.f32 %v920, %v1047
  %v1049 = vpop.f32.mrb[0].mxu0
  %v1050 = vpop.f32.mrb[0].mxu0
  %v1051 = vadd.f32 %v920, %v1050
  %v1052 = vpop.f32.mrb[0].mxu0
  %1053 = vmatprep.mubr.bf16.mxu0 0
  %1054 = vmatmul.mubr.bf16.gmra.mrb[0].mxu0 %v956
  %v1055 = vpop.f32.mrb[0].mxu0
  %v1056 = vadd.f32 %v920, %v1055
  %v1057 = vpop.f32.mrb[0].mxu0
  %v1058 = vpop.f32.mrb[0].mxu0
  %v1059 = vadd.f32 %v920, %v1058
  %v1060 = vpop.f32.mrb[0].mxu0
  %1061 = vdwg.mxu0
  %v1062 = vpack.c.bf16 %v1000, %v1000
  %v1063 = vpack.c.bf16 %v1003, %v1003
  %v1064 = vpack.c.bf16 %v1008, %v1008
  %v1065 = vpack.c.bf16 %v1011, %v1011
  %v1066 = vpack.c.bf16 %v1016, %v1016
  %v1067 = vpack.c.bf16 %v1019, %v1019
  %v1068 = vpack.c.bf16 %v1024, %v1024
  %v1069 = vpack.c.bf16 %v1027, %v1027
  %v1070 = vpack.c.bf16 %v1032, %v1032
  %v1071 = vpack.c.bf16 %v1035, %v1035
  %v1072 = vpack.c.bf16 %v1040, %v1040
  %v1073 = vpack.c.bf16 %v1043, %v1043
  %v1074 = vpack.c.bf16 %v1048, %v1048
  %v1075 = vpack.c.bf16 %v1051, %v1051
  %v1076 = vpack.c.bf16 %v1056, %v1056
  %v1077 = vpack.c.bf16 %v1059, %v1059
  %vm1078 = vcmask 125952
  %1079 = vst.msk [vmem:[%s3] sm:$0xf] %vm1078, %v1062
  %1080 = vst.msk [vmem:[%s3 + $0x4] sm:$0xf] %vm1078, %v1063
  %1081 = vst.msk [vmem:[%s3 + $0x8] sm:$0xf] %vm1078, %v1064
  %1082 = vst.msk [vmem:[%s3 + $0xc] sm:$0xf] %vm1078, %v1065
  %1083 = vst.msk [vmem:[%s3 + $0x10] sm:$0xf] %vm1078, %v1066
  %1084 = vst.msk [vmem:[%s3 + $0x14] sm:$0xf] %vm1078, %v1067
  %1085 = vst.msk [vmem:[%s3 + $0x18] sm:$0xf] %vm1078, %v1068
  %1086 = vst.msk [vmem:[%s3 + $0x1c] sm:$0xf] %vm1078, %v1069
  %1087 = vst.msk [vmem:[%s3 + $0x20] sm:$0xf] %vm1078, %v1070
  %1088 = vst.msk [vmem:[%s3 + $0x24] sm:$0xf] %vm1078, %v1071
  %1089 = vst.msk [vmem:[%s3 + $0x28] sm:$0xf] %vm1078, %v1072
  %1090 = vst.msk [vmem:[%s3 + $0x2c] sm:$0xf] %vm1078, %v1073
  %1091 = vst.msk [vmem:[%s3 + $0x30] sm:$0xf] %vm1078, %v1074
  %1092 = vst.msk [vmem:[%s3 + $0x34] sm:$0xf] %vm1078, %v1075
  %1093 = vst.msk [vmem:[%s3 + $0x38] sm:$0xf] %vm1078, %v1076
  %1094 = vst.msk [vmem:[%s3 + $0x3c] sm:$0xf] %vm1078, %v1077
  // Predicated region
  $region14: #{drsenmk_forward.11} parent=0 // pred_check
    _
  $region15: #{drsenmk_forward.11} parent=0 // pred_check_branch
    %1096 = sbr.rel (0) target = $region17
  $region16: #{drsenmk_forward.11} parent=0 // pred_region
    _
  $region17: #{drsenmk_forward.11} parent=0 // pred_fallthru
    _
  // Predicated region
  $region18: #{drsenmk_forward.11} parent=0 // pred_check
    _
  $region19: #{drsenmk_forward.11} parent=0 // pred_check_branch
    %1098 = sbr.rel (0) target = $region21
  $region20: #{drsenmk_forward.11} parent=0 // pred_region
    _
  $region21: #{drsenmk_forward.11} parent=0 // pred_fallthru
    _

// kernel: drsenmk_forward.12
$region0: #{drsenmk_forward.12}
  #allocation0 [shape = 'u32[]', space=smem, size = 0x4, offset = 0x4, fixed_abs, tag = 'smem constant byte address 0x4 - core index']
  #allocation1 [shape = 'u32[144,128]{1,0:T(1,128)}', space=vmem, size = 0x12000, scoped, tag = 'internal scratch']
  #allocation2 [shape = 'f32[2,10,17,16]{3,2,1,0:T(8,128)}', space=vmem, size = 0x3c000, scoped, tag = 'scratch operand']
  #allocation3 [shape = 'f32[2,10,17,16]{3,2,1,0:T(8,128)}', space=vmem, size = 0x3c000, scoped, tag = 'scratch operand']
  %s0 = inlined_call_operand.vmem [shape: bf16[2,8,8,16], index: 0, kind: input, shape index: {}]
  %s1 = inlined_call_operand.vmem [shape: bf16[144,16], index: 1, kind: input, shape index: {}]
  %s2 = inlined_call_operand.vmem [shape: f32[1,16], index: 2, kind: input, shape index: {}]
  %s3 = inlined_call_operand.vmem [shape: bf16[144,16], index: 3, kind: input, shape index: {}]
  %s4 = inlined_call_operand.vmem [shape: f32[1,16], index: 4, kind: input, shape index: {}]
  %s5 = inlined_call_operand.vmem [shape: f32[16,16], index: 5, kind: input, shape index: {}]
  %s6 = inlined_call_operand.vmem [shape: f32[16,16], index: 6, kind: input, shape index: {}]
  %s7 = inlined_call_operand.vmem [shape: f32[16,16], index: 7, kind: input, shape index: {}]
  %s8 = inlined_call_operand.vmem [shape: f32[1,16], index: 8, kind: input, shape index: {}]
  %s9 = inlined_call_operand.vmem [shape: f32[16,2], index: 9, kind: input, shape index: {}]
  %s10 = inlined_call_operand.vmem [shape: f32[2,16], index: 10, kind: input, shape index: {}]
  %s11 = inlined_call_operand.vmem [shape: bf16[2,8,8,16], index: 11, kind: output, shape index: {}]
  %s12 = sld [smem:[#allocation0]]
  $region54: #{drsenmk_forward.12} parent=0
    _
  %s14 = ssub.s32 1, %s12
  %s15 = scalar_select 0, %s14, %s12
  // Predicated region
  $region2: #{drsenmk_forward.12} parent=0 // pred_check
    _
  $region3: #{drsenmk_forward.12} parent=0 // pred_check_branch
    %17 = sbr.rel (0) target = $region5
  $region4: #{drsenmk_forward.12} parent=0 // pred_region
    _
  $region5: #{drsenmk_forward.12} parent=0 // pred_fallthru
    _
  // Predicated region
  $region6: #{drsenmk_forward.12} parent=0 // pred_check
    _
  $region7: #{drsenmk_forward.12} parent=0 // pred_check_branch
    %19 = sbr.rel (0) target = $region9
  $region8: #{drsenmk_forward.12} parent=0 // pred_region
    _
  $region9: #{drsenmk_forward.12} parent=0 // pred_fallthru
    _
  // Predicated region
  $region10: #{drsenmk_forward.12} parent=0 // pred_check
    _
  $region11: #{drsenmk_forward.12} parent=0 // pred_check_branch
    %21 = sbr.rel (0) target = $region13
  $region12: #{drsenmk_forward.12} parent=0 // pred_region
    _
  $region13: #{drsenmk_forward.12} parent=0 // pred_fallthru
    _
  // Predicated region
  $region14: #{drsenmk_forward.12} parent=0 // pred_check
    _
  $region15: #{drsenmk_forward.12} parent=0 // pred_check_branch
    %23 = sbr.rel (0) target = $region17
  $region16: #{drsenmk_forward.12} parent=0 // pred_region
    _
  $region17: #{drsenmk_forward.12} parent=0 // pred_fallthru
    _
  // Predicated region
  $region18: #{drsenmk_forward.12} parent=0 // pred_check
    _
  $region19: #{drsenmk_forward.12} parent=0 // pred_check_branch
    %25 = sbr.rel (0) target = $region21
  $region20: #{drsenmk_forward.12} parent=0 // pred_region
    _
  $region21: #{drsenmk_forward.12} parent=0 // pred_fallthru
    _
  // Predicated region
  $region22: #{drsenmk_forward.12} parent=0 // pred_check
    _
  $region23: #{drsenmk_forward.12} parent=0 // pred_check_branch
    %27 = sbr.rel (0) target = $region25
  $region24: #{drsenmk_forward.12} parent=0 // pred_region
    _
  $region25: #{drsenmk_forward.12} parent=0 // pred_fallthru
    _
  // Predicated region
  $region26: #{drsenmk_forward.12} parent=0 // pred_check
    _
  $region27: #{drsenmk_forward.12} parent=0 // pred_check_branch
    %29 = sbr.rel (0) target = $region29
  $region28: #{drsenmk_forward.12} parent=0 // pred_region
    _
  $region29: #{drsenmk_forward.12} parent=0 // pred_fallthru
    _
  // Predicated region
  $region30: #{drsenmk_forward.12} parent=0 // pred_check
    _
  $region31: #{drsenmk_forward.12} parent=0 // pred_check_branch
    %31 = sbr.rel (0) target = $region33
  $region32: #{drsenmk_forward.12} parent=0 // pred_region
    _
  $region33: #{drsenmk_forward.12} parent=0 // pred_fallthru
    _
  // Predicated region
  $region34: #{drsenmk_forward.12} parent=0 // pred_check
    _
  $region35: #{drsenmk_forward.12} parent=0 // pred_check_branch
    %33 = sbr.rel (0) target = $region37
  $region36: #{drsenmk_forward.12} parent=0 // pred_region
    _
  $region37: #{drsenmk_forward.12} parent=0 // pred_fallthru
    _
  // Predicated region
  $region38: #{drsenmk_forward.12} parent=0 // pred_check
    _
  $region39: #{drsenmk_forward.12} parent=0 // pred_check_branch
    %35 = sbr.rel (0) target = $region41
  $region40: #{drsenmk_forward.12} parent=0 // pred_region
    _
  $region41: #{drsenmk_forward.12} parent=0 // pred_fallthru
    _
  // Predicated region
  $region42: #{drsenmk_forward.12} parent=0 // pred_check
    _
  $region43: #{drsenmk_forward.12} parent=0 // pred_check_branch
    %37 = sbr.rel (0) target = $region45
  $region44: #{drsenmk_forward.12} parent=0 // pred_region
    _
  $region45: #{drsenmk_forward.12} parent=0 // pred_fallthru
    _
  %v39 = vld [vmem:[%s0] sm:$0xf]
  %v40 = vld [vmem:[%s0 + $0x4] sm:$0xf]
  %v41 = vld [vmem:[%s0 + $0x8] sm:$0xf]
  %v42 = vld [vmem:[%s0 + $0xc] sm:$0xf]
  %v43 = vld [vmem:[%s0 + $0x10] sm:$0xf]
  %v44 = vld [vmem:[%s0 + $0x14] sm:$0xf]
  %v45 = vld [vmem:[%s0 + $0x18] sm:$0xf]
  %v46 = vld [vmem:[%s0 + $0x1c] sm:$0xf]
  %v47 = vld [vmem:[%s0 + $0x20] sm:$0xf]
  %v48 = vld [vmem:[%s0 + $0x24] sm:$0xf]
  %v49 = vld [vmem:[%s0 + $0x28] sm:$0xf]
  %v50 = vld [vmem:[%s0 + $0x2c] sm:$0xf]
  %v51 = vld [vmem:[%s0 + $0x30] sm:$0xf]
  %v52 = vld [vmem:[%s0 + $0x34] sm:$0xf]
  %v53 = vld [vmem:[%s0 + $0x38] sm:$0xf]
  %v54 = vld [vmem:[%s0 + $0x3c] sm:$0xf]
  %v55 = vunpack.c.l.bf16 %v39
  %v56 = vunpack.c.l.bf16 %v40
  %v57 = vunpack.c.l.bf16 %v41
  %v58 = vunpack.c.l.bf16 %v42
  %v59 = vunpack.c.l.bf16 %v43
  %v60 = vunpack.c.l.bf16 %v44
  %v61 = vunpack.c.l.bf16 %v45
  %v62 = vunpack.c.l.bf16 %v46
  %v63 = vunpack.c.l.bf16 %v47
  %v64 = vunpack.c.l.bf16 %v48
  %v65 = vunpack.c.l.bf16 %v49
  %v66 = vunpack.c.l.bf16 %v50
  %v67 = vunpack.c.l.bf16 %v51
  %v68 = vunpack.c.l.bf16 %v52
  %v69 = vunpack.c.l.bf16 %v53
  %v70 = vunpack.c.l.bf16 %v54
  %vm71 = vcmask 130048
  %72 = vst.msk [vmem:[#allocation2] sm:$0xff] %vm71, 0.0
  %73 = vst.msk [vmem:[#allocation2 + $0x8] sm:$0xff] %vm71, 0.0
  %vm74 = vcmask 122880
  %75 = vst.msk [vmem:[#allocation2 + $0x10] sm:$0x1] %vm74, 0.0
  %76 = vst.msk [vmem:[#allocation2 + $0x18] sm:$0xff] %vm71, 0.0
  %77 = vst.msk [vmem:[#allocation2 + $0x20] sm:$0xff] %vm71, 0.0
  %78 = vst.msk [vmem:[#allocation2 + $0x28] sm:$0x1] %vm74, 0.0
  %79 = vst.msk [vmem:[#allocation2 + $0x30] sm:$0xff] %vm71, 0.0
  %80 = vst.msk [vmem:[#allocation2 + $0x38] sm:$0xff] %vm71, 0.0
  %81 = vst.msk [vmem:[#allocation2 + $0x40] sm:$0x1] %vm74, 0.0
  %82 = vst.msk [vmem:[#allocation2 + $0x48] sm:$0xff] %vm71, 0.0
  %83 = vst.msk [vmem:[#allocation2 + $0x50] sm:$0xff] %vm71, 0.0
  %84 = vst.msk [vmem:[#allocation2 + $0x58] sm:$0x1] %vm74, 0.0
  %85 = vst.msk [vmem:[#allocation2 + $0x60] sm:$0xff] %vm71, 0.0
  %86 = vst.msk [vmem:[#allocation2 + $0x68] sm:$0xff] %vm71, 0.0
  %87 = vst.msk [vmem:[#allocation2 + $0x70] sm:$0x1] %vm74, 0.0
  %88 = vst.msk [vmem:[#allocation2 + $0x78] sm:$0xff] %vm71, 0.0
  %89 = vst.msk [vmem:[#allocation2 + $0x80] sm:$0xff] %vm71, 0.0
  %90 = vst.msk [vmem:[#allocation2 + $0x88] sm:$0x1] %vm74, 0.0
  %91 = vst.msk [vmem:[#allocation2 + $0x90] sm:$0xff] %vm71, 0.0
  %92 = vst.msk [vmem:[#allocation2 + $0x98] sm:$0xff] %vm71, 0.0
  %93 = vst.msk [vmem:[#allocation2 + $0xa0] sm:$0x1] %vm74, 0.0
  %94 = vst.msk [vmem:[#allocation2 + $0xa8] sm:$0xff] %vm71, 0.0
  %95 = vst.msk [vmem:[#allocation2 + $0xb0] sm:$0xff] %vm71, 0.0
  %96 = vst.msk [vmem:[#allocation2 + $0xb8] sm:$0x1] %vm74, 0.0
  %97 = vst.msk [vmem:[#allocation2 + $0xc0] sm:$0xff] %vm71, 0.0
  %98 = vst.msk [vmem:[#allocation2 + $0xc8] sm:$0xff] %vm71, 0.0
  %99 = vst.msk [vmem:[#allocation2 + $0xd0] sm:$0x1] %vm74, 0.0
  %100 = vst.msk [vmem:[#allocation2 + $0xd8] sm:$0xff] %vm71, 0.0
  %101 = vst.msk [vmem:[#allocation2 + $0xe0] sm:$0xff] %vm71, 0.0
  %102 = vst.msk [vmem:[#allocation2 + $0xe8] sm:$0x1] %vm74, 0.0
  %103 = vst.msk [vmem:[#allocation2 + $0xf0] sm:$0xff] %vm71, 0.0
  %104 = vst.msk [vmem:[#allocation2 + $0xf8] sm:$0xff] %vm71, 0.0
  %105 = vst.msk [vmem:[#allocation2 + $0x100] sm:$0x1] %vm74, 0.0
  %106 = vst.msk [vmem:[#allocation2 + $0x108] sm:$0xff] %vm71, 0.0
  %107 = vst.msk [vmem:[#allocation2 + $0x110] sm:$0xff] %vm71, 0.0
  %108 = vst.msk [vmem:[#allocation2 + $0x118] sm:$0x1] %vm74, 0.0
  %109 = vst.msk [vmem:[#allocation2 + $0x120] sm:$0xff] %vm71, 0.0
  %110 = vst.msk [vmem:[#allocation2 + $0x128] sm:$0xff] %vm71, 0.0
  %111 = vst.msk [vmem:[#allocation2 + $0x130] sm:$0x1] %vm74, 0.0
  %112 = vst.msk [vmem:[#allocation2 + $0x138] sm:$0xff] %vm71, 0.0
  %113 = vst.msk [vmem:[#allocation2 + $0x140] sm:$0xff] %vm71, 0.0
  %114 = vst.msk [vmem:[#allocation2 + $0x148] sm:$0x1] %vm74, 0.0
  %115 = vst.msk [vmem:[#allocation2 + $0x150] sm:$0xff] %vm71, 0.0
  %116 = vst.msk [vmem:[#allocation2 + $0x158] sm:$0xff] %vm71, 0.0
  %117 = vst.msk [vmem:[#allocation2 + $0x160] sm:$0x1] %vm74, 0.0
  %118 = vst.msk [vmem:[#allocation2 + $0x168] sm:$0xff] %vm71, 0.0
  %119 = vst.msk [vmem:[#allocation2 + $0x170] sm:$0xff] %vm71, 0.0
  %120 = vst.msk [vmem:[#allocation2 + $0x178] sm:$0x1] %vm74, 0.0
  %121 = vst.msk [vmem:[#allocation2 + $0x180] sm:$0xff] %vm71, 0.0
  %122 = vst.msk [vmem:[#allocation2 + $0x188] sm:$0xff] %vm71, 0.0
  %123 = vst.msk [vmem:[#allocation2 + $0x190] sm:$0x1] %vm74, 0.0
  %124 = vst.msk [vmem:[#allocation2 + $0x198] sm:$0xff] %vm71, 0.0
  %125 = vst.msk [vmem:[#allocation2 + $0x1a0] sm:$0xff] %vm71, 0.0
  %126 = vst.msk [vmem:[#allocation2 + $0x1a8] sm:$0x1] %vm74, 0.0
  %127 = vst.msk [vmem:[#allocation2 + $0x1b0] sm:$0xff] %vm71, 0.0
  %128 = vst.msk [vmem:[#allocation2 + $0x1b8] sm:$0xff] %vm71, 0.0
  %129 = vst.msk [vmem:[#allocation2 + $0x1c0] sm:$0x1] %vm74, 0.0
  %130 = vst.msk [vmem:[#allocation2 + $0x1c8] sm:$0xff] %vm71, 0.0
  %131 = vst.msk [vmem:[#allocation2 + $0x1d0] sm:$0xff] %vm71, 0.0
  %132 = vst.msk [vmem:[#allocation2 + $0x1d8] sm:$0x1] %vm74, 0.0
  %s133 = scalar_lea.vmem [#allocation2], 24
  %134 = vst.msk [vmem:[%s133 + $0x8] sm:$0xff] %vm71, %v55
  %135 = vst.msk [vmem:[%s133 + $0x20] sm:$0xff] %vm71, %v56
  %136 = vst.msk [vmem:[%s133 + $0x38] sm:$0xff] %vm71, %v57
  %137 = vst.msk [vmem:[%s133 + $0x50] sm:$0xff] %vm71, %v58
  %138 = vst.msk [vmem:[%s133 + $0x68] sm:$0xff] %vm71, %v59
  %139 = vst.msk [vmem:[%s133 + $0x80] sm:$0xff] %vm71, %v60
  %140 = vst.msk [vmem:[%s133 + $0x98] sm:$0xff] %vm71, %v61
  %141 = vst.msk [vmem:[%s133 + $0xb0] sm:$0xff] %vm71, %v62
  %142 = vst.msk [vmem:[%s133 + $0xf8] sm:$0xff] %vm71, %v63
  %143 = vst.msk [vmem:[%s133 + $0x110] sm:$0xff] %vm71, %v64
  %144 = vst.msk [vmem:[%s133 + $0x128] sm:$0xff] %vm71, %v65
  %145 = vst.msk [vmem:[%s133 + $0x140] sm:$0xff] %vm71, %v66
  %146 = vst.msk [vmem:[%s133 + $0x158] sm:$0xff] %vm71, %v67
  %147 = vst.msk [vmem:[%s133 + $0x170] sm:$0xff] %vm71, %v68
  %148 = vst.msk [vmem:[%s133 + $0x188] sm:$0xff] %vm71, %v69
  %149 = vst.msk [vmem:[%s133 + $0x1a0] sm:$0xff] %vm71, %v70
  %v150 = vld [vmem:[#allocation2] sm:$0xff]
  %v151 = vld [vmem:[#allocation2 + $0x8] sm:$0xff]
  %v152 = vld [vmem:[#allocation2 + $0x10] sm:$0x1]
  %v153 = vld [vmem:[#allocation2 + $0x18] sm:$0xff]
  %v154 = vld [vmem:[#allocation2 + $0x20] sm:$0xff]
  %v155 = vld [vmem:[#allocation2 + $0x28] sm:$0x1]
  %v156 = vld [vmem:[#allocation2 + $0x30] sm:$0xff]
  %v157 = vld [vmem:[#allocation2 + $0x38] sm:$0xff]
  %v158 = vld [vmem:[#allocation2 + $0x40] sm:$0x1]
  %v159 = vld [vmem:[#allocation2 + $0x48] sm:$0xff]
  %v160 = vld [vmem:[#allocation2 + $0x50] sm:$0xff]
  %v161 = vld [vmem:[#allocation2 + $0x58] sm:$0x1]
  %v162 = vld [vmem:[#allocation2 + $0x60] sm:$0xff]
  %v163 = vld [vmem:[#allocation2 + $0x68] sm:$0xff]
  %v164 = vld [vmem:[#allocation2 + $0x70] sm:$0x1]
  %v165 = vld [vmem:[#allocation2 + $0x78] sm:$0xff]
  %v166 = vld [vmem:[#allocation2 + $0x80] sm:$0xff]
  %v167 = vld [vmem:[#allocation2 + $0x88] sm:$0x1]
  %v168 = vld [vmem:[#allocation2 + $0x90] sm:$0xff]
  %v169 = vld [vmem:[#allocation2 + $0x98] sm:$0xff]
  %v170 = vld [vmem:[#allocation2 + $0xa0] sm:$0x1]
  %v171 = vld [vmem:[#allocation2 + $0xa8] sm:$0xff]
  %v172 = vld [vmem:[#allocation2 + $0xb0] sm:$0xff]
  %v173 = vld [vmem:[#allocation2 + $0xb8] sm:$0x1]
  %v174 = vld [vmem:[#allocation2 + $0xc0] sm:$0xff]
  %v175 = vld [vmem:[#allocation2 + $0xc8] sm:$0xff]
  %v176 = vld [vmem:[#allocation2 + $0xd0] sm:$0x1]
  %v177 = vld [vmem:[#allocation2 + $0xd8] sm:$0xff]
  %v178 = vld [vmem:[#allocation2 + $0xe0] sm:$0xff]
  %v179 = vld [vmem:[#allocation2 + $0xe8] sm:$0x1]
  %v180 = vld [vmem:[#allocation2 + $0xf0] sm:$0xff]
  %v181 = vld [vmem:[#allocation2 + $0xf8] sm:$0xff]
  %v182 = vld [vmem:[#allocation2 + $0x100] sm:$0x1]
  %v183 = vld [vmem:[#allocation2 + $0x108] sm:$0xff]
  %v184 = vld [vmem:[#allocation2 + $0x110] sm:$0xff]
  %v185 = vld [vmem:[#allocation2 + $0x118] sm:$0x1]
  %v186 = vld [vmem:[#allocation2 + $0x120] sm:$0xff]
  %v187 = vld [vmem:[#allocation2 + $0x128] sm:$0xff]
  %v188 = vld [vmem:[#allocation2 + $0x130] sm:$0x1]
  %v189 = vld [vmem:[#allocation2 + $0x138] sm:$0xff]
  %v190 = vld [vmem:[#allocation2 + $0x140] sm:$0xff]
  %v191 = vld [vmem:[#allocation2 + $0x148] sm:$0x1]
  %v192 = vld [vmem:[#allocation2 + $0x150] sm:$0xff]
  %v193 = vld [vmem:[#allocation2 + $0x158] sm:$0xff]
  %v194 = vld [vmem:[#allocation2 + $0x160] sm:$0x1]
  %v195 = vld [vmem:[#allocation2 + $0x168] sm:$0xff]
  %v196 = vld [vmem:[#allocation2 + $0x170] sm:$0xff]
  %v197 = vld [vmem:[#allocation2 + $0x178] sm:$0x1]
  %v198 = vld [vmem:[#allocation2 + $0x180] sm:$0xff]
  %v199 = vld [vmem:[#allocation2 + $0x188] sm:$0xff]
  %v200 = vld [vmem:[#allocation2 + $0x190] sm:$0x1]
  %v201 = vld [vmem:[#allocation2 + $0x198] sm:$0xff]
  %v202 = vld [vmem:[#allocation2 + $0x1a0] sm:$0xff]
  %v203 = vld [vmem:[#allocation2 + $0x1a8] sm:$0x1]
  %v204 = vld [vmem:[#allocation2 + $0x1b0] sm:$0xff]
  %v205 = vld [vmem:[#allocation2 + $0x1b8] sm:$0xff]
  %v206 = vld [vmem:[#allocation2 + $0x1c0] sm:$0x1]
  %v207 = vld [vmem:[#allocation2 + $0x1c8] sm:$0xff]
  %v208 = vld [vmem:[#allocation2 + $0x1d0] sm:$0xff]
  %v209 = vld [vmem:[#allocation2 + $0x1d8] sm:$0x1]
  %vm242 = vcmask 1040384
  %v243 = vrot.slane %v150, 7
  %v244 = vrot.slane %v151, 7
  %v245 = vsel %vm242, %v243, %v244
  %v246 = vrot.slane %v153, 7
  %v247 = vrot.slane %v154, 7
  %v248 = vsel %vm242, %v246, %v247
  %v249 = vrot.slane %v156, 7
  %v250 = vrot.slane %v157, 7
  %v251 = vsel %vm242, %v249, %v250
  %v252 = vrot.slane %v159, 7
  %v253 = vrot.slane %v160, 7
  %v254 = vsel %vm242, %v252, %v253
  %v255 = vrot.slane %v162, 7
  %v256 = vrot.slane %v163, 7
  %v257 = vsel %vm242, %v255, %v256
  %v258 = vrot.slane %v165, 7
  %v259 = vrot.slane %v166, 7
  %v260 = vsel %vm242, %v258, %v259
  %v261 = vrot.slane %v168, 7
  %v262 = vrot.slane %v169, 7
  %v263 = vsel %vm242, %v261, %v262
  %v264 = vrot.slane %v171, 7
  %v265 = vrot.slane %v172, 7
  %v266 = vsel %vm242, %v264, %v265
  %v267 = vrot.slane %v180, 7
  %v268 = vrot.slane %v181, 7
  %v269 = vsel %vm242, %v267, %v268
  %v270 = vrot.slane %v183, 7
  %v271 = vrot.slane %v184, 7
  %v272 = vsel %vm242, %v270, %v271
  %v273 = vrot.slane %v186, 7
  %v274 = vrot.slane %v187, 7
  %v275 = vsel %vm242, %v273, %v274
  %v276 = vrot.slane %v189, 7
  %v277 = vrot.slane %v190, 7
  %v278 = vsel %vm242, %v276, %v277
  %v279 = vrot.slane %v192, 7
  %v280 = vrot.slane %v193, 7
  %v281 = vsel %vm242, %v279, %v280
  %v282 = vrot.slane %v195, 7
  %v283 = vrot.slane %v196, 7
  %v284 = vsel %vm242, %v282, %v283
  %v285 = vrot.slane %v198, 7
  %v286 = vrot.slane %v199, 7
  %v287 = vsel %vm242, %v285, %v286
  %v288 = vrot.slane %v201, 7
  %v289 = vrot.slane %v202, 7
  %v290 = vsel %vm242, %v288, %v289
  %vm323 = vcmask 1046528
  %v324 = vrot.slane %v151, 1
  %v325 = vrot.slane %v152, 1
  %v326 = vsel %vm323, %v324, %v325
  %v327 = vrot.slane %v154, 1
  %v328 = vrot.slane %v155, 1
  %v329 = vsel %vm323, %v327, %v328
  %v330 = vrot.slane %v157, 1
  %v331 = vrot.slane %v158, 1
  %v332 = vsel %vm323, %v330, %v331
  %v333 = vrot.slane %v160, 1
  %v334 = vrot.slane %v161, 1
  %v335 = vsel %vm323, %v333, %v334
  %v336 = vrot.slane %v163, 1
  %v337 = vrot.slane %v164, 1
  %v338 = vsel %vm323, %v336, %v337
  %v339 = vrot.slane %v166, 1
  %v340 = vrot.slane %v167, 1
  %v341 = vsel %vm323, %v339, %v340
  %v342 = vrot.slane %v169, 1
  %v343 = vrot.slane %v170, 1
  %v344 = vsel %vm323, %v342, %v343
  %v345 = vrot.slane %v172, 1
  %v346 = vrot.slane %v173, 1
  %v347 = vsel %vm323, %v345, %v346
  %v348 = vrot.slane %v181, 1
  %v349 = vrot.slane %v182, 1
  %v350 = vsel %vm323, %v348, %v349
  %v351 = vrot.slane %v184, 1
  %v352 = vrot.slane %v185, 1
  %v353 = vsel %vm323, %v351, %v352
  %v354 = vrot.slane %v187, 1
  %v355 = vrot.slane %v188, 1
  %v356 = vsel %vm323, %v354, %v355
  %v357 = vrot.slane %v190, 1
  %v358 = vrot.slane %v191, 1
  %v359 = vsel %vm323, %v357, %v358
  %v360 = vrot.slane %v193, 1
  %v361 = vrot.slane %v194, 1
  %v362 = vsel %vm323, %v360, %v361
  %v363 = vrot.slane %v196, 1
  %v364 = vrot.slane %v197, 1
  %v365 = vsel %vm323, %v363, %v364
  %v366 = vrot.slane %v199, 1
  %v367 = vrot.slane %v200, 1
  %v368 = vsel %vm323, %v366, %v367
  %v369 = vrot.slane %v202, 1
  %v370 = vrot.slane %v203, 1
  %v371 = vsel %vm323, %v369, %v370
  %v376 = vrot.slane %v174, 7
  %v377 = vrot.slane %v175, 7
  %v378 = vsel %vm242, %v376, %v377
  %v379 = vrot.slane %v204, 7
  %v380 = vrot.slane %v205, 7
  %v381 = vsel %vm242, %v379, %v380
  %v384 = vrot.slane %v175, 1
  %v385 = vrot.slane %v176, 1
  %v386 = vsel %vm323, %v384, %v385
  %v387 = vrot.slane %v205, 1
  %v388 = vrot.slane %v206, 1
  %v389 = vsel %vm323, %v387, %v388
  %v394 = vrot.slane %v177, 7
  %v395 = vrot.slane %v178, 7
  %v396 = vsel %vm242, %v394, %v395
  %v397 = vrot.slane %v207, 7
  %v398 = vrot.slane %v208, 7
  %v399 = vsel %vm242, %v397, %v398
  %v402 = vrot.slane %v178, 1
  %v403 = vrot.slane %v179, 1
  %v404 = vsel %vm323, %v402, %v403
  %v405 = vrot.slane %v208, 1
  %v406 = vrot.slane %v209, 1
  %v407 = vsel %vm323, %v405, %v406
  %424 = vrot.lane.b32.xlu0 %v151, 16
  %v425 = vpop.permute.xlu0 %424
  %426 = vrot.lane.b32.xlu0 %v154, 16
  %v427 = vpop.permute.xlu0 %426
  %428 = vrot.lane.b32.xlu0 %v157, 16
  %v429 = vpop.permute.xlu0 %428
  %430 = vrot.lane.b32.xlu0 %v160, 16
  %v431 = vpop.permute.xlu0 %430
  %432 = vrot.lane.b32.xlu0 %v163, 16
  %v433 = vpop.permute.xlu0 %432
  %434 = vrot.lane.b32.xlu0 %v166, 16
  %v435 = vpop.permute.xlu0 %434
  %436 = vrot.lane.b32.xlu0 %v169, 16
  %v437 = vpop.permute.xlu0 %436
  %438 = vrot.lane.b32.xlu0 %v172, 16
  %v439 = vpop.permute.xlu0 %438
  %440 = vrot.lane.b32.xlu0 %v181, 16
  %v441 = vpop.permute.xlu0 %440
  %442 = vrot.lane.b32.xlu0 %v184, 16
  %v443 = vpop.permute.xlu0 %442
  %444 = vrot.lane.b32.xlu0 %v187, 16
  %v445 = vpop.permute.xlu0 %444
  %446 = vrot.lane.b32.xlu0 %v190, 16
  %v447 = vpop.permute.xlu0 %446
  %448 = vrot.lane.b32.xlu0 %v193, 16
  %v449 = vpop.permute.xlu0 %448
  %450 = vrot.lane.b32.xlu0 %v196, 16
  %v451 = vpop.permute.xlu0 %450
  %452 = vrot.lane.b32.xlu0 %v199, 16
  %v453 = vpop.permute.xlu0 %452
  %454 = vrot.lane.b32.xlu0 %v202, 16
  %v455 = vpop.permute.xlu0 %454
  %472 = vrot.lane.b32.xlu0 %v326, 32
  %v473 = vpop.permute.xlu0 %472
  %474 = vrot.lane.b32.xlu0 %v329, 32
  %v475 = vpop.permute.xlu0 %474
  %476 = vrot.lane.b32.xlu0 %v332, 32
  %v477 = vpop.permute.xlu0 %476
  %478 = vrot.lane.b32.xlu0 %v335, 32
  %v479 = vpop.permute.xlu0 %478
  %480 = vrot.lane.b32.xlu0 %v338, 32
  %v481 = vpop.permute.xlu0 %480
  %482 = vrot.lane.b32.xlu0 %v341, 32
  %v483 = vpop.permute.xlu0 %482
  %484 = vrot.lane.b32.xlu0 %v344, 32
  %v485 = vpop.permute.xlu0 %484
  %486 = vrot.lane.b32.xlu0 %v347, 32
  %v487 = vpop.permute.xlu0 %486
  %488 = vrot.lane.b32.xlu0 %v350, 32
  %v489 = vpop.permute.xlu0 %488
  %490 = vrot.lane.b32.xlu0 %v353, 32
  %v491 = vpop.permute.xlu0 %490
  %492 = vrot.lane.b32.xlu0 %v356, 32
  %v493 = vpop.permute.xlu0 %492
  %494 = vrot.lane.b32.xlu0 %v359, 32
  %v495 = vpop.permute.xlu0 %494
  %496 = vrot.lane.b32.xlu0 %v362, 32
  %v497 = vpop.permute.xlu0 %496
  %498 = vrot.lane.b32.xlu0 %v365, 32
  %v499 = vpop.permute.xlu0 %498
  %500 = vrot.lane.b32.xlu0 %v368, 32
  %v501 = vpop.permute.xlu0 %500
  %502 = vrot.lane.b32.xlu0 %v371, 32
  %v503 = vpop.permute.xlu0 %502
  %520 = vrot.lane.b32.xlu0 %v248, 48
  %v521 = vpop.permute.xlu0 %520
  %522 = vrot.lane.b32.xlu0 %v251, 48
  %v523 = vpop.permute.xlu0 %522
  %524 = vrot.lane.b32.xlu0 %v254, 48
  %v525 = vpop.permute.xlu0 %524
  %526 = vrot.lane.b32.xlu0 %v257, 48
  %v527 = vpop.permute.xlu0 %526
  %528 = vrot.lane.b32.xlu0 %v260, 48
  %v529 = vpop.permute.xlu0 %528
  %530 = vrot.lane.b32.xlu0 %v263, 48
  %v531 = vpop.permute.xlu0 %530
  %532 = vrot.lane.b32.xlu0 %v266, 48
  %v533 = vpop.permute.xlu0 %532
  %534 = vrot.lane.b32.xlu0 %v378, 48
  %v535 = vpop.permute.xlu0 %534
  %536 = vrot.lane.b32.xlu0 %v272, 48
  %v537 = vpop.permute.xlu0 %536
  %538 = vrot.lane.b32.xlu0 %v275, 48
  %v539 = vpop.permute.xlu0 %538
  %540 = vrot.lane.b32.xlu0 %v278, 48
  %v541 = vpop.permute.xlu0 %540
  %542 = vrot.lane.b32.xlu0 %v281, 48
  %v543 = vpop.permute.xlu0 %542
  %544 = vrot.lane.b32.xlu0 %v284, 48
  %v545 = vpop.permute.xlu0 %544
  %546 = vrot.lane.b32.xlu0 %v287, 48
  %v547 = vpop.permute.xlu0 %546
  %548 = vrot.lane.b32.xlu0 %v290, 48
  %v549 = vpop.permute.xlu0 %548
  %550 = vrot.lane.b32.xlu0 %v381, 48
  %v551 = vpop.permute.xlu0 %550
  %568 = vrot.lane.b32.xlu0 %v154, 64
  %v569 = vpop.permute.xlu0 %568
  %570 = vrot.lane.b32.xlu0 %v157, 64
  %v571 = vpop.permute.xlu0 %570
  %572 = vrot.lane.b32.xlu0 %v160, 64
  %v573 = vpop.permute.xlu0 %572
  %574 = vrot.lane.b32.xlu0 %v163, 64
  %v575 = vpop.permute.xlu0 %574
  %576 = vrot.lane.b32.xlu0 %v166, 64
  %v577 = vpop.permute.xlu0 %576
  %578 = vrot.lane.b32.xlu0 %v169, 64
  %v579 = vpop.permute.xlu0 %578
  %580 = vrot.lane.b32.xlu0 %v172, 64
  %v581 = vpop.permute.xlu0 %580
  %582 = vrot.lane.b32.xlu0 %v175, 64
  %v583 = vpop.permute.xlu0 %582
  %584 = vrot.lane.b32.xlu0 %v184, 64
  %v585 = vpop.permute.xlu0 %584
  %586 = vrot.lane.b32.xlu0 %v187, 64
  %v587 = vpop.permute.xlu0 %586
  %588 = vrot.lane.b32.xlu0 %v190, 64
  %v589 = vpop.permute.xlu0 %588
  %590 = vrot.lane.b32.xlu0 %v193, 64
  %v591 = vpop.permute.xlu0 %590
  %592 = vrot.lane.b32.xlu0 %v196, 64
  %v593 = vpop.permute.xlu0 %592
  %594 = vrot.lane.b32.xlu0 %v199, 64
  %v595 = vpop.permute.xlu0 %594
  %596 = vrot.lane.b32.xlu0 %v202, 64
  %v597 = vpop.permute.xlu0 %596
  %598 = vrot.lane.b32.xlu0 %v205, 64
  %v599 = vpop.permute.xlu0 %598
  %616 = vrot.lane.b32.xlu0 %v329, 80
  %v617 = vpop.permute.xlu0 %616
  %618 = vrot.lane.b32.xlu0 %v332, 80
  %v619 = vpop.permute.xlu0 %618
  %620 = vrot.lane.b32.xlu0 %v335, 80
  %v621 = vpop.permute.xlu0 %620
  %622 = vrot.lane.b32.xlu0 %v338, 80
  %v623 = vpop.permute.xlu0 %622
  %624 = vrot.lane.b32.xlu0 %v341, 80
  %v625 = vpop.permute.xlu0 %624
  %626 = vrot.lane.b32.xlu0 %v344, 80
  %v627 = vpop.permute.xlu0 %626
  %628 = vrot.lane.b32.xlu0 %v347, 80
  %v629 = vpop.permute.xlu0 %628
  %630 = vrot.lane.b32.xlu0 %v386, 80
  %v631 = vpop.permute.xlu0 %630
  %632 = vrot.lane.b32.xlu0 %v353, 80
  %v633 = vpop.permute.xlu0 %632
  %634 = vrot.lane.b32.xlu0 %v356, 80
  %v635 = vpop.permute.xlu0 %634
  %636 = vrot.lane.b32.xlu0 %v359, 80
  %v637 = vpop.permute.xlu0 %636
  %638 = vrot.lane.b32.xlu0 %v362, 80
  %v639 = vpop.permute.xlu0 %638
  %640 = vrot.lane.b32.xlu0 %v365, 80
  %v641 = vpop.permute.xlu0 %640
  %642 = vrot.lane.b32.xlu0 %v368, 80
  %v643 = vpop.permute.xlu0 %642
  %644 = vrot.lane.b32.xlu0 %v371, 80
  %v645 = vpop.permute.xlu0 %644
  %646 = vrot.lane.b32.xlu0 %v389, 80
  %v647 = vpop.permute.xlu0 %646
  %664 = vrot.lane.b32.xlu0 %v251, 96
  %v665 = vpop.permute.xlu0 %664
  %666 = vrot.lane.b32.xlu0 %v254, 96
  %v667 = vpop.permute.xlu0 %666
  %668 = vrot.lane.b32.xlu0 %v257, 96
  %v669 = vpop.permute.xlu0 %668
  %670 = vrot.lane.b32.xlu0 %v260, 96
  %v671 = vpop.permute.xlu0 %670
  %672 = vrot.lane.b32.xlu0 %v263, 96
  %v673 = vpop.permute.xlu0 %672
  %674 = vrot.lane.b32.xlu0 %v266, 96
  %v675 = vpop.permute.xlu0 %674
  %676 = vrot.lane.b32.xlu0 %v378, 96
  %v677 = vpop.permute.xlu0 %676
  %678 = vrot.lane.b32.xlu0 %v396, 96
  %v679 = vpop.permute.xlu0 %678
  %680 = vrot.lane.b32.xlu0 %v275, 96
  %v681 = vpop.permute.xlu0 %680
  %682 = vrot.lane.b32.xlu0 %v278, 96
  %v683 = vpop.permute.xlu0 %682
  %684 = vrot.lane.b32.xlu0 %v281, 96
  %v685 = vpop.permute.xlu0 %684
  %686 = vrot.lane.b32.xlu0 %v284, 96
  %v687 = vpop.permute.xlu0 %686
  %688 = vrot.lane.b32.xlu0 %v287, 96
  %v689 = vpop.permute.xlu0 %688
  %690 = vrot.lane.b32.xlu0 %v290, 96
  %v691 = vpop.permute.xlu0 %690
  %692 = vrot.lane.b32.xlu0 %v381, 96
  %v693 = vpop.permute.xlu0 %692
  %694 = vrot.lane.b32.xlu0 %v399, 96
  %v695 = vpop.permute.xlu0 %694
  %712 = vrot.lane.b32.xlu0 %v157, 112
  %v713 = vpop.permute.xlu0 %712
  %714 = vrot.lane.b32.xlu0 %v160, 112
  %v715 = vpop.permute.xlu0 %714
  %716 = vrot.lane.b32.xlu0 %v163, 112
  %v717 = vpop.permute.xlu0 %716
  %718 = vrot.lane.b32.xlu0 %v166, 112
  %v719 = vpop.permute.xlu0 %718
  %720 = vrot.lane.b32.xlu0 %v169, 112
  %v721 = vpop.permute.xlu0 %720
  %722 = vrot.lane.b32.xlu0 %v172, 112
  %v723 = vpop.permute.xlu0 %722
  %724 = vrot.lane.b32.xlu0 %v175, 112
  %v725 = vpop.permute.xlu0 %724
  %726 = vrot.lane.b32.xlu0 %v178, 112
  %v727 = vpop.permute.xlu0 %726
  %728 = vrot.lane.b32.xlu0 %v187, 112
  %v729 = vpop.permute.xlu0 %728
  %730 = vrot.lane.b32.xlu0 %v190, 112
  %v731 = vpop.permute.xlu0 %730
  %732 = vrot.lane.b32.xlu0 %v193, 112
  %v733 = vpop.permute.xlu0 %732
  %734 = vrot.lane.b32.xlu0 %v196, 112
  %v735 = vpop.permute.xlu0 %734
  %736 = vrot.lane.b32.xlu0 %v199, 112
  %v737 = vpop.permute.xlu0 %736
  %738 = vrot.lane.b32.xlu0 %v202, 112
  %v739 = vpop.permute.xlu0 %738
  %740 = vrot.lane.b32.xlu0 %v205, 112
  %v741 = vpop.permute.xlu0 %740
  %742 = vrot.lane.b32.xlu0 %v208, 112
  %v743 = vpop.permute.xlu0 %742
  %v760 = vsel %vm71, %v245, %v425
  %v761 = vsel %vm71, %v248, %v427
  %v762 = vsel %vm71, %v251, %v429
  %v763 = vsel %vm71, %v254, %v431
  %v764 = vsel %vm71, %v257, %v433
  %v765 = vsel %vm71, %v260, %v435
  %v766 = vsel %vm71, %v263, %v437
  %v767 = vsel %vm71, %v266, %v439
  %v768 = vsel %vm71, %v269, %v441
  %v769 = vsel %vm71, %v272, %v443
  %v770 = vsel %vm71, %v275, %v445
  %v771 = vsel %vm71, %v278, %v447
  %v772 = vsel %vm71, %v281, %v449
  %v773 = vsel %vm71, %v284, %v451
  %v774 = vsel %vm71, %v287, %v453
  %v775 = vsel %vm71, %v290, %v455
  %vm776 = vcmask 261120
  %v777 = vsel %vm776, %v760, %v473
  %v778 = vsel %vm776, %v761, %v475
  %v779 = vsel %vm776, %v762, %v477
  %v780 = vsel %vm776, %v763, %v479
  %v781 = vsel %vm776, %v764, %v481
  %v782 = vsel %vm776, %v765, %v483
  %v783 = vsel %vm776, %v766, %v485
  %v784 = vsel %vm776, %v767, %v487
  %v785 = vsel %vm776, %v768, %v489
  %v786 = vsel %vm776, %v769, %v491
  %v787 = vsel %vm776, %v770, %v493
  %v788 = vsel %vm776, %v771, %v495
  %v789 = vsel %vm776, %v772, %v497
  %v790 = vsel %vm776, %v773, %v499
  %v791 = vsel %vm776, %v774, %v501
  %v792 = vsel %vm776, %v775, %v503
  %vm793 = vcmask 392192
  %v794 = vsel %vm793, %v777, %v521
  %v795 = vsel %vm793, %v778, %v523
  %v796 = vsel %vm793, %v779, %v525
  %v797 = vsel %vm793, %v780, %v527
  %v798 = vsel %vm793, %v781, %v529
  %v799 = vsel %vm793, %v782, %v531
  %v800 = vsel %vm793, %v783, %v533
  %v801 = vsel %vm793, %v784, %v535
  %v802 = vsel %vm793, %v785, %v537
  %v803 = vsel %vm793, %v786, %v539
  %v804 = vsel %vm793, %v787, %v541
  %v805 = vsel %vm793, %v788, %v543
  %v806 = vsel %vm793, %v789, %v545
  %v807 = vsel %vm793, %v790, %v547
  %v808 = vsel %vm793, %v791, %v549
  %v809 = vsel %vm793, %v792, %v551
  %vm810 = vcmask 523264
  %v811 = vsel %vm810, %v794, %v569
  %v812 = vsel %vm810, %v795, %v571
  %v813 = vsel %vm810, %v796, %v573
  %v814 = vsel %vm810, %v797, %v575
  %v815 = vsel %vm810, %v798, %v577
  %v816 = vsel %vm810, %v799, %v579
  %v817 = vsel %vm810, %v800, %v581
  %v818 = vsel %vm810, %v801, %v583
  %v819 = vsel %vm810, %v802, %v585
  %v820 = vsel %vm810, %v803, %v587
  %v821 = vsel %vm810, %v804, %v589
  %v822 = vsel %vm810, %v805, %v591
  %v823 = vsel %vm810, %v806, %v593
  %v824 = vsel %vm810, %v807, %v595
  %v825 = vsel %vm810, %v808, %v597
  %v826 = vsel %vm810, %v809, %v599
  %vm827 = vcmask 654336
  %v828 = vsel %vm827, %v811, %v617
  %v829 = vsel %vm827, %v812, %v619
  %v830 = vsel %vm827, %v813, %v621
  %v831 = vsel %vm827, %v814, %v623
  %v832 = vsel %vm827, %v815, %v625
  %v833 = vsel %vm827, %v816, %v627
  %v834 = vsel %vm827, %v817, %v629
  %v835 = vsel %vm827, %v818, %v631
  %v836 = vsel %vm827, %v819, %v633
  %v837 = vsel %vm827, %v820, %v635
  %v838 = vsel %vm827, %v821, %v637
  %v839 = vsel %vm827, %v822, %v639
  %v840 = vsel %vm827, %v823, %v641
  %v841 = vsel %vm827, %v824, %v643
  %v842 = vsel %vm827, %v825, %v645
  %v843 = vsel %vm827, %v826, %v647
  %vm844 = vcmask 785408
  %v845 = vsel %vm844, %v828, %v665
  %v846 = vsel %vm844, %v829, %v667
  %v847 = vsel %vm844, %v830, %v669
  %v848 = vsel %vm844, %v831, %v671
  %v849 = vsel %vm844, %v832, %v673
  %v850 = vsel %vm844, %v833, %v675
  %v851 = vsel %vm844, %v834, %v677
  %v852 = vsel %vm844, %v835, %v679
  %v853 = vsel %vm844, %v836, %v681
  %v854 = vsel %vm844, %v837, %v683
  %v855 = vsel %vm844, %v838, %v685
  %v856 = vsel %vm844, %v839, %v687
  %v857 = vsel %vm844, %v840, %v689
  %v858 = vsel %vm844, %v841, %v691
  %v859 = vsel %vm844, %v842, %v693
  %v860 = vsel %vm844, %v843, %v695
  %vm861 = vcmask 916480
  %v862 = vsel %vm861, %v845, %v713
  %v863 = vsel %vm861, %v846, %v715
  %v864 = vsel %vm861, %v847, %v717
  %v865 = vsel %vm861, %v848, %v719
  %v866 = vsel %vm861, %v849, %v721
  %v867 = vsel %vm861, %v850, %v723
  %v868 = vsel %vm861, %v851, %v725
  %v869 = vsel %vm861, %v852, %v727
  %v870 = vsel %vm861, %v853, %v729
  %v871 = vsel %vm861, %v854, %v731
  %v872 = vsel %vm861, %v855, %v733
  %v873 = vsel %vm861, %v856, %v735
  %v874 = vsel %vm861, %v857, %v737
  %v875 = vsel %vm861, %v858, %v739
  %v876 = vsel %vm861, %v859, %v741
  %v877 = vsel %vm861, %v860, %v743
  %v878 = vpack.c.bf16 %v863, %v862
  %v879 = vpack.c.bf16 %v335, %v332
  %v880 = vpack.c.bf16 %v865, %v864
  %v881 = vpack.c.bf16 %v341, %v338
  %v882 = vpack.c.bf16 %v867, %v866
  %v883 = vpack.c.bf16 %v347, %v344
  %v884 = vpack.c.bf16 %v869, %v868
  %v885 = vpack.c.bf16 %v404, %v386
  %v886 = vpack.c.bf16 %v871, %v870
  %v887 = vpack.c.bf16 %v359, %v356
  %v888 = vpack.c.bf16 %v873, %v872
  %v889 = vpack.c.bf16 %v365, %v362
  %v890 = vpack.c.bf16 %v875, %v874
  %v891 = vpack.c.bf16 %v371, %v368
  %v892 = vpack.c.bf16 %v877, %v876
  %v893 = vpack.c.bf16 %v407, %v389
  %v894 = vld [vmem:[%s1] sm:$0xf]
  %v895 = vld [vmem:[%s1 + $0x4] sm:$0xf]
  %v896 = vld [vmem:[%s1 + $0x8] sm:$0xf]
  %v897 = vld [vmem:[%s1 + $0xc] sm:$0xf]
  %v898 = vld [vmem:[%s1 + $0x10] sm:$0xf]
  %v899 = vld [vmem:[%s1 + $0x14] sm:$0xf]
  %v900 = vld [vmem:[%s1 + $0x18] sm:$0xf]
  %v901 = vld [vmem:[%s1 + $0x1c] sm:$0xf]
  %v902 = vld [vmem:[%s1 + $0x20] sm:$0xf]
  %v903 = vld [vmem:[%s1 + $0x24] sm:$0xf]
  %v904 = vld [vmem:[%s1 + $0x28] sm:$0xf]
  %v905 = vld [vmem:[%s1 + $0x2c] sm:$0xf]
  %v906 = vld [vmem:[%s1 + $0x30] sm:$0xf]
  %v907 = vld [vmem:[%s1 + $0x34] sm:$0xf]
  %v908 = vld [vmem:[%s1 + $0x38] sm:$0xf]
  %v909 = vld [vmem:[%s1 + $0x3c] sm:$0xf]
  %v910 = vld [vmem:[%s1 + $0x40] sm:$0xf]
  %v911 = vld [vmem:[%s1 + $0x44] sm:$0xf]
  %v912 = vld [vmem:[%s2] sm:$0x1]
  %v914 = vlaneseq
  %v915 = vshrl.u32 %v914, 7
  %v916 = vsub.s32 0, %v915
  %v917 = vrot.slane %v912, %v916
  %v937 = vunpack.c.l.b16 %v894
  %v938 = vunpack.c.l.b16 %v895
  %v939 = vunpack.c.l.b16 %v896
  %v940 = vunpack.c.l.b16 %v897
  %v941 = vunpack.c.l.b16 %v898
  %v942 = vunpack.c.l.b16 %v899
  %v943 = vunpack.c.l.b16 %v900
  %v944 = vunpack.c.l.b16 %v901
  %v945 = vunpack.c.l.b16 %v902
  %v946 = vunpack.c.l.b16 %v903
  %v947 = vunpack.c.l.b16 %v904
  %v948 = vunpack.c.l.b16 %v905
  %v949 = vunpack.c.l.b16 %v906
  %v950 = vunpack.c.l.b16 %v907
  %v951 = vunpack.c.l.b16 %v908
  %v952 = vunpack.c.l.b16 %v909
  %v953 = vunpack.c.l.b16 %v910
  %v954 = vunpack.c.l.b16 %v911
  %v955 = vpack.c.b16 %v938, %v937
  %v956 = vpack.c.b16 %v940, %v939
  %v957 = vpack.c.b16 %v942, %v941
  %v958 = vpack.c.b16 %v944, %v943
  %v959 = vpack.c.b16 %v946, %v945
  %v960 = vpack.c.b16 %v948, %v947
  %v961 = vpack.c.b16 %v950, %v949
  %v962 = vpack.c.b16 %v952, %v951
  %v963 = vpack.c.b16 %v954, %v953
  %v974 = vsel %vm71, %v879, 0
  %v977 = vsel %vm71, %v881, 0
  %v980 = vsel %vm71, %v883, 0
  %v983 = vsel %vm71, %v885, 0
  %v986 = vsel %vm71, %v887, 0
  %v989 = vsel %vm71, %v889, 0
  %v992 = vsel %vm71, %v891, 0
  %v995 = vsel %vm71, %v893, 0
  %997 = vmatprep.subr.bf16.mxu0 0
  %998 = vmatpush1.bf16.msra.mxu0 %v955
  %999 = vmatprep.subr.bf16.mxu0 0
  %1000 = vmatpush1.bf16.msra.mxu0 %v956
  %1001 = vmatprep.subr.bf16.mxu0 0
  %1002 = vmatpush1.bf16.msra.mxu0 %v957
  %1003 = vmatprep.subr.bf16.mxu0 0
  %1004 = vmatpush1.bf16.msra.mxu0 %v958
  %1005 = vmatprep.subr.bf16.mxu0 0
  %1006 = vmatpush1.bf16.msra.mxu0 %v959
  %1007 = vmatprep.subr.bf16.mxu0 0
  %1008 = vmatpush1.bf16.msra.mxu0 %v960
  %1009 = vmatprep.subr.bf16.mxu0 0
  %1010 = vmatpush1.bf16.msra.mxu0 %v961
  %1011 = vmatprep.subr.bf16.mxu0 0
  %1012 = vmatpush1.bf16.msra.mxu0 %v962
  %1013 = vmatprep.subr.bf16.mxu0 0
  %1014 = vmatpush1.bf16.msra.mxu0 %v963
  %1015 = vmatprep.subr.bf16.mxu0 0
  %1016 = vmatpush1.bf16.msra.mxu0 0
  %1017 = vmatprep.subr.bf16.mxu0 0
  %1018 = vmatpush1.bf16.msra.mxu0 0
  %1019 = vmatprep.subr.bf16.mxu0 0
  %1020 = vmatpush1.bf16.msra.mxu0 0
  %1021 = vmatprep.subr.bf16.mxu0 0
  %1022 = vmatpush1.bf16.msra.mxu0 0
  %1023 = vmatprep.subr.bf16.mxu0 0
  %1024 = vmatpush1.bf16.msra.mxu0 0
  %1025 = vmatprep.subr.bf16.mxu0 0
  %1026 = vmatpush1.bf16.msra.mxu0 0
  %1027 = vmatprep.subr.bf16.mxu0 0
  %1028 = vmatpush1.bf16.msra.mxu0 0
  %1029 = vmatprep.mubr.bf16.mxu0 %v974
  %1030 = vmatmul.mubr.bf16.gmra.mrb[0].mxu0 %v878
  %v1031 = vpop.f32.mrb[0].mxu0
  %v1032 = vadd.f32 %v917, %v1031
  %v1033 = vpop.f32.mrb[0].mxu0
  %v1034 = vpop.f32.mrb[0].mxu0
  %v1035 = vadd.f32 %v917, %v1034
  %v1036 = vpop.f32.mrb[0].mxu0
  %1037 = vmatprep.mubr.bf16.mxu0 %v977
  %1038 = vmatmul.mubr.bf16.gmra.mrb[0].mxu0 %v880
  %v1039 = vpop.f32.mrb[0].mxu0
  %v1040 = vadd.f32 %v917, %v1039
  %v1041 = vpop.f32.mrb[0].mxu0
  %v1042 = vpop.f32.mrb[0].mxu0
  %v1043 = vadd.f32 %v917, %v1042
  %v1044 = vpop.f32.mrb[0].mxu0
  %1045 = vmatprep.mubr.bf16.mxu0 %v980
  %1046 = vmatmul.mubr.bf16.gmra.mrb[0].mxu0 %v882
  %v1047 = vpop.f32.mrb[0].mxu0
  %v1048 = vadd.f32 %v917, %v1047
  %v1049 = vpop.f32.mrb[0].mxu0
  %v1050 = vpop.f32.mrb[0].mxu0
  %v1051 = vadd.f32 %v917, %v1050
  %v1052 = vpop.f32.mrb[0].mxu0
  %1053 = vmatprep.mubr.bf16.mxu0 %v983
  %1054 = vmatmul.mubr.bf16.gmra.mrb[0].mxu0 %v884
  %v1055 = vpop.f32.mrb[0].mxu0
  %v1056 = vadd.f32 %v917, %v1055
  %v1057 = vpop.f32.mrb[0].mxu0
  %v1058 = vpop.f32.mrb[0].mxu0
  %v1059 = vadd.f32 %v917, %v1058
  %v1060 = vpop.f32.mrb[0].mxu0
  %1061 = vmatprep.mubr.bf16.mxu0 %v986
  %1062 = vmatmul.mubr.bf16.gmra.mrb[0].mxu0 %v886
  %v1063 = vpop.f32.mrb[0].mxu0
  %v1064 = vadd.f32 %v917, %v1063
  %v1065 = vpop.f32.mrb[0].mxu0
  %v1066 = vpop.f32.mrb[0].mxu0
  %v1067 = vadd.f32 %v917, %v1066
  %v1068 = vpop.f32.mrb[0].mxu0
  %1069 = vmatprep.mubr.bf16.mxu0 %v989
  %1070 = vmatmul.mubr.bf16.gmra.mrb[0].mxu0 %v888
  %v1071 = vpop.f32.mrb[0].mxu0
  %v1072 = vadd.f32 %v917, %v1071
  %v1073 = vpop.f32.mrb[0].mxu0
  %v1074 = vpop.f32.mrb[0].mxu0
  %v1075 = vadd.f32 %v917, %v1074
  %v1076 = vpop.f32.mrb[0].mxu0
  %1077 = vmatprep.mubr.bf16.mxu0 %v992
  %1078 = vmatmul.mubr.bf16.gmra.mrb[0].mxu0 %v890
  %v1079 = vpop.f32.mrb[0].mxu0
  %v1080 = vadd.f32 %v917, %v1079
  %v1081 = vpop.f32.mrb[0].mxu0
  %v1082 = vpop.f32.mrb[0].mxu0
  %v1083 = vadd.f32 %v917, %v1082
  %v1084 = vpop.f32.mrb[0].mxu0
  %1085 = vmatprep.mubr.bf16.mxu0 %v995
  %1086 = vmatmul.mubr.bf16.gmra.mrb[0].mxu0 %v892
  %v1087 = vpop.f32.mrb[0].mxu0
  %v1088 = vadd.f32 %v917, %v1087
  %v1089 = vpop.f32.mrb[0].mxu0
  %v1090 = vpop.f32.mrb[0].mxu0
  %v1091 = vadd.f32 %v917, %v1090
  %v1092 = vpop.f32.mrb[0].mxu0
  %1093 = vdwg.mxu0
  %v1094 = vmax.f32 %v1032, 0.0
  %v1095 = vmax.f32 %v1035, 0.0
  %v1096 = vmax.f32 %v1040, 0.0
  %v1097 = vmax.f32 %v1043, 0.0
  %v1098 = vmax.f32 %v1048, 0.0
  %v1099 = vmax.f32 %v1051, 0.0
  %v1100 = vmax.f32 %v1056, 0.0
  %v1101 = vmax.f32 %v1059, 0.0
  %v1102 = vmax.f32 %v1064, 0.0
  %v1103 = vmax.f32 %v1067, 0.0
  %v1104 = vmax.f32 %v1072, 0.0
  %v1105 = vmax.f32 %v1075, 0.0
  %v1106 = vmax.f32 %v1080, 0.0
  %v1107 = vmax.f32 %v1083, 0.0
  %v1108 = vmax.f32 %v1088, 0.0
  %v1109 = vmax.f32 %v1091, 0.0
  %1110 = vst.msk [vmem:[#allocation3] sm:$0xff] %vm71, 0.0
  %1111 = vst.msk [vmem:[#allocation3 + $0x8] sm:$0xff] %vm71, 0.0
  %1112 = vst.msk [vmem:[#allocation3 + $0x10] sm:$0x1] %vm74, 0.0
  %1113 = vst.msk [vmem:[#allocation3 + $0x18] sm:$0xff] %vm71, 0.0
  %1114 = vst.msk [vmem:[#allocation3 + $0x20] sm:$0xff] %vm71, 0.0
  %1115 = vst.msk [vmem:[#allocation3 + $0x28] sm:$0x1] %vm74, 0.0
  %1116 = vst.msk [vmem:[#allocation3 + $0x30] sm:$0xff] %vm71, 0.0
  %1117 = vst.msk [vmem:[#allocation3 + $0x38] sm:$0xff] %vm71, 0.0
  %1118 = vst.msk [vmem:[#allocation3 + $0x40] sm:$0x1] %vm74, 0.0
  %1119 = vst.msk [vmem:[#allocation3 + $0x48] sm:$0xff] %vm71, 0.0
  %1120 = vst.msk [vmem:[#allocation3 + $0x50] sm:$0xff] %vm71, 0.0
  %1121 = vst.msk [vmem:[#allocation3 + $0x58] sm:$0x1] %vm74, 0.0
  %1122 = vst.msk [vmem:[#allocation3 + $0x60] sm:$0xff] %vm71, 0.0
  %1123 = vst.msk [vmem:[#allocation3 + $0x68] sm:$0xff] %vm71, 0.0
  %1124 = vst.msk [vmem:[#allocation3 + $0x70] sm:$0x1] %vm74, 0.0
  %1125 = vst.msk [vmem:[#allocation3 + $0x78] sm:$0xff] %vm71, 0.0
  %1126 = vst.msk [vmem:[#allocation3 + $0x80] sm:$0xff] %vm71, 0.0
  %1127 = vst.msk [vmem:[#allocation3 + $0x88] sm:$0x1] %vm74, 0.0
  %1128 = vst.msk [vmem:[#allocation3 + $0x90] sm:$0xff] %vm71, 0.0
  %1129 = vst.msk [vmem:[#allocation3 + $0x98] sm:$0xff] %vm71, 0.0
  %1130 = vst.msk [vmem:[#allocation3 + $0xa0] sm:$0x1] %vm74, 0.0
  %1131 = vst.msk [vmem:[#allocation3 + $0xa8] sm:$0xff] %vm71, 0.0
  %1132 = vst.msk [vmem:[#allocation3 + $0xb0] sm:$0xff] %vm71, 0.0
  %1133 = vst.msk [vmem:[#allocation3 + $0xb8] sm:$0x1] %vm74, 0.0
  %1134 = vst.msk [vmem:[#allocation3 + $0xc0] sm:$0xff] %vm71, 0.0
  %1135 = vst.msk [vmem:[#allocation3 + $0xc8] sm:$0xff] %vm71, 0.0
  %1136 = vst.msk [vmem:[#allocation3 + $0xd0] sm:$0x1] %vm74, 0.0
  %1137 = vst.msk [vmem:[#allocation3 + $0xd8] sm:$0xff] %vm71, 0.0
  %1138 = vst.msk [vmem:[#allocation3 + $0xe0] sm:$0xff] %vm71, 0.0
  %1139 = vst.msk [vmem:[#allocation3 + $0xe8] sm:$0x1] %vm74, 0.0
  %1140 = vst.msk [vmem:[#allocation3 + $0xf0] sm:$0xff] %vm71, 0.0
  %1141 = vst.msk [vmem:[#allocation3 + $0xf8] sm:$0xff] %vm71, 0.0
  %1142 = vst.msk [vmem:[#allocation3 + $0x100] sm:$0x1] %vm74, 0.0
  %1143 = vst.msk [vmem:[#allocation3 + $0x108] sm:$0xff] %vm71, 0.0
  %1144 = vst.msk [vmem:[#allocation3 + $0x110] sm:$0xff] %vm71, 0.0
  %1145 = vst.msk [vmem:[#allocation3 + $0x118] sm:$0x1] %vm74, 0.0
  %1146 = vst.msk [vmem:[#allocation3 + $0x120] sm:$0xff] %vm71, 0.0
  %1147 = vst.msk [vmem:[#allocation3 + $0x128] sm:$0xff] %vm71, 0.0
  %1148 = vst.msk [vmem:[#allocation3 + $0x130] sm:$0x1] %vm74, 0.0
  %1149 = vst.msk [vmem:[#allocation3 + $0x138] sm:$0xff] %vm71, 0.0
  %1150 = vst.msk [vmem:[#allocation3 + $0x140] sm:$0xff] %vm71, 0.0
  %1151 = vst.msk [vmem:[#allocation3 + $0x148] sm:$0x1] %vm74, 0.0
  %1152 = vst.msk [vmem:[#allocation3 + $0x150] sm:$0xff] %vm71, 0.0
  %1153 = vst.msk [vmem:[#allocation3 + $0x158] sm:$0xff] %vm71, 0.0
  %1154 = vst.msk [vmem:[#allocation3 + $0x160] sm:$0x1] %vm74, 0.0
  %1155 = vst.msk [vmem:[#allocation3 + $0x168] sm:$0xff] %vm71, 0.0
  %1156 = vst.msk [vmem:[#allocation3 + $0x170] sm:$0xff] %vm71, 0.0
  %1157 = vst.msk [vmem:[#allocation3 + $0x178] sm:$0x1] %vm74, 0.0
  %1158 = vst.msk [vmem:[#allocation3 + $0x180] sm:$0xff] %vm71, 0.0
  %1159 = vst.msk [vmem:[#allocation3 + $0x188] sm:$0xff] %vm71, 0.0
  %1160 = vst.msk [vmem:[#allocation3 + $0x190] sm:$0x1] %vm74, 0.0
  %1161 = vst.msk [vmem:[#allocation3 + $0x198] sm:$0xff] %vm71, 0.0
  %1162 = vst.msk [vmem:[#allocation3 + $0x1a0] sm:$0xff] %vm71, 0.0
  %1163 = vst.msk [vmem:[#allocation3 + $0x1a8] sm:$0x1] %vm74, 0.0
  %1164 = vst.msk [vmem:[#allocation3 + $0x1b0] sm:$0xff] %vm71, 0.0
  %1165 = vst.msk [vmem:[#allocation3 + $0x1b8] sm:$0xff] %vm71, 0.0
  %1166 = vst.msk [vmem:[#allocation3 + $0x1c0] sm:$0x1] %vm74, 0.0
  %1167 = vst.msk [vmem:[#allocation3 + $0x1c8] sm:$0xff] %vm71, 0.0
  %1168 = vst.msk [vmem:[#allocation3 + $0x1d0] sm:$0xff] %vm71, 0.0
  %1169 = vst.msk [vmem:[#allocation3 + $0x1d8] sm:$0x1] %vm74, 0.0
  %s1170 = scalar_lea.vmem [#allocation3], 24
  %1171 = vst.msk [vmem:[%s1170 + $0x8] sm:$0xff] %vm71, %v1094
  %1172 = vst.msk [vmem:[%s1170 + $0x20] sm:$0xff] %vm71, %v1095
  %1173 = vst.msk [vmem:[%s1170 + $0x38] sm:$0xff] %vm71, %v1096
  %1174 = vst.msk [vmem:[%s1170 + $0x50] sm:$0xff] %vm71, %v1097
  %1175 = vst.msk [vmem:[%s1170 + $0x68] sm:$0xff] %vm71, %v1098
  %1176 = vst.msk [vmem:[%s1170 + $0x80] sm:$0xff] %vm71, %v1099
  %1177 = vst.msk [vmem:[%s1170 + $0x98] sm:$0xff] %vm71, %v1100
  %1178 = vst.msk [vmem:[%s1170 + $0xb0] sm:$0xff] %vm71, %v1101
  %1179 = vst.msk [vmem:[%s1170 + $0xf8] sm:$0xff] %vm71, %v1102
  %1180 = vst.msk [vmem:[%s1170 + $0x110] sm:$0xff] %vm71, %v1103
  %1181 = vst.msk [vmem:[%s1170 + $0x128] sm:$0xff] %vm71, %v1104
  %1182 = vst.msk [vmem:[%s1170 + $0x140] sm:$0xff] %vm71, %v1105
  %1183 = vst.msk [vmem:[%s1170 + $0x158] sm:$0xff] %vm71, %v1106
  %1184 = vst.msk [vmem:[%s1170 + $0x170] sm:$0xff] %vm71, %v1107
  %1185 = vst.msk [vmem:[%s1170 + $0x188] sm:$0xff] %vm71, %v1108
  %1186 = vst.msk [vmem:[%s1170 + $0x1a0] sm:$0xff] %vm71, %v1109
  %v1187 = vld [vmem:[#allocation3] sm:$0xff]
  %v1188 = vld [vmem:[#allocation3 + $0x8] sm:$0xff]
  %v1189 = vld [vmem:[#allocation3 + $0x10] sm:$0x1]
  %v1190 = vld [vmem:[#allocation3 + $0x18] sm:$0xff]
  %v1191 = vld [vmem:[#allocation3 + $0x20] sm:$0xff]
  %v1192 = vld [vmem:[#allocation3 + $0x28] sm:$0x1]
  %v1193 = vld [vmem:[#allocation3 + $0x30] sm:$0xff]
  %v1194 = vld [vmem:[#allocation3 + $0x38] sm:$0xff]
  %v1195 = vld [vmem:[#allocation3 + $0x40] sm:$0x1]
  %v1196 = vld [vmem:[#allocation3 + $0x48] sm:$0xff]
  %v1197 = vld [vmem:[#allocation3 + $0x50] sm:$0xff]
  %v1198 = vld [vmem:[#allocation3 + $0x58] sm:$0x1]
  %v1199 = vld [vmem:[#allocation3 + $0x60] sm:$0xff]
  %v1200 = vld [vmem:[#allocation3 + $0x68] sm:$0xff]
  %v1201 = vld [vmem:[#allocation3 + $0x70] sm:$0x1]
  %v1202 = vld [vmem:[#allocation3 + $0x78] sm:$0xff]
  %v1203 = vld [vmem:[#allocation3 + $0x80] sm:$0xff]
  %v1204 = vld [vmem:[#allocation3 + $0x88] sm:$0x1]
  %v1205 = vld [vmem:[#allocation3 + $0x90] sm:$0xff]
  %v1206 = vld [vmem:[#allocation3 + $0x98] sm:$0xff]
  %v1207 = vld [vmem:[#allocation3 + $0xa0] sm:$0x1]
  %v1208 = vld [vmem:[#allocation3 + $0xa8] sm:$0xff]
  %v1209 = vld [vmem:[#allocation3 + $0xb0] sm:$0xff]
  %v1210 = vld [vmem:[#allocation3 + $0xb8] sm:$0x1]
  %v1211 = vld [vmem:[#allocation3 + $0xc0] sm:$0xff]
  %v1212 = vld [vmem:[#allocation3 + $0xc8] sm:$0xff]
  %v1213 = vld [vmem:[#allocation3 + $0xd0] sm:$0x1]
  %v1214 = vld [vmem:[#allocation3 + $0xd8] sm:$0xff]
  %v1215 = vld [vmem:[#allocation3 + $0xe0] sm:$0xff]
  %v1216 = vld [vmem:[#allocation3 + $0xe8] sm:$0x1]
  %v1217 = vld [vmem:[#allocation3 + $0xf0] sm:$0xff]
  %v1218 = vld [vmem:[#allocation3 + $0xf8] sm:$0xff]
  %v1219 = vld [vmem:[#allocation3 + $0x100] sm:$0x1]
  %v1220 = vld [vmem:[#allocation3 + $0x108] sm:$0xff]
  %v1221 = vld [vmem:[#allocation3 + $0x110] sm:$0xff]
  %v1222 = vld [vmem:[#allocation3 + $0x118] sm:$0x1]
  %v1223 = vld [vmem:[#allocation3 + $0x120] sm:$0xff]
  %v1224 = vld [vmem:[#allocation3 + $0x128] sm:$0xff]
  %v1225 = vld [vmem:[#allocation3 + $0x130] sm:$0x1]
  %v1226 = vld [vmem:[#allocation3 + $0x138] sm:$0xff]
  %v1227 = vld [vmem:[#allocation3 + $0x140] sm:$0xff]
  %v1228 = vld [vmem:[#allocation3 + $0x148] sm:$0x1]
  %v1229 = vld [vmem:[#allocation3 + $0x150] sm:$0xff]
  %v1230 = vld [vmem:[#allocation3 + $0x158] sm:$0xff]
  %v1231 = vld [vmem:[#allocation3 + $0x160] sm:$0x1]
  %v1232 = vld [vmem:[#allocation3 + $0x168] sm:$0xff]
  %v1233 = vld [vmem:[#allocation3 + $0x170] sm:$0xff]
  %v1234 = vld [vmem:[#allocation3 + $0x178] sm:$0x1]
  %v1235 = vld [vmem:[#allocation3 + $0x180] sm:$0xff]
  %v1236 = vld [vmem:[#allocation3 + $0x188] sm:$0xff]
  %v1237 = vld [vmem:[#allocation3 + $0x190] sm:$0x1]
  %v1238 = vld [vmem:[#allocation3 + $0x198] sm:$0xff]
  %v1239 = vld [vmem:[#allocation3 + $0x1a0] sm:$0xff]
  %v1240 = vld [vmem:[#allocation3 + $0x1a8] sm:$0x1]
  %v1241 = vld [vmem:[#allocation3 + $0x1b0] sm:$0xff]
  %v1242 = vld [vmem:[#allocation3 + $0x1b8] sm:$0xff]
  %v1243 = vld [vmem:[#allocation3 + $0x1c0] sm:$0x1]
  %v1244 = vld [vmem:[#allocation3 + $0x1c8] sm:$0xff]
  %v1245 = vld [vmem:[#allocation3 + $0x1d0] sm:$0xff]
  %v1246 = vld [vmem:[#allocation3 + $0x1d8] sm:$0x1]
  %v1279 = vrot.slane %v1187, 7
  %v1280 = vrot.slane %v1188, 7
  %v1281 = vsel %vm242, %v1279, %v1280
  %v1282 = vrot.slane %v1190, 7
  %v1283 = vrot.slane %v1191, 7
  %v1284 = vsel %vm242, %v1282, %v1283
  %v1285 = vrot.slane %v1193, 7
  %v1286 = vrot.slane %v1194, 7
  %v1287 = vsel %vm242, %v1285, %v1286
  %v1288 = vrot.slane %v1196, 7
  %v1289 = vrot.slane %v1197, 7
  %v1290 = vsel %vm242, %v1288, %v1289
  %v1291 = vrot.slane %v1199, 7
  %v1292 = vrot.slane %v1200, 7
  %v1293 = vsel %vm242, %v1291, %v1292
  %v1294 = vrot.slane %v1202, 7
  %v1295 = vrot.slane %v1203, 7
  %v1296 = vsel %vm242, %v1294, %v1295
  %v1297 = vrot.slane %v1205, 7
  %v1298 = vrot.slane %v1206, 7
  %v1299 = vsel %vm242, %v1297, %v1298
  %v1300 = vrot.slane %v1208, 7
  %v1301 = vrot.slane %v1209, 7
  %v1302 = vsel %vm242, %v1300, %v1301
  %v1303 = vrot.slane %v1217, 7
  %v1304 = vrot.slane %v1218, 7
  %v1305 = vsel %vm242, %v1303, %v1304
  %v1306 = vrot.slane %v1220, 7
  %v1307 = vrot.slane %v1221, 7
  %v1308 = vsel %vm242, %v1306, %v1307
  %v1309 = vrot.slane %v1223, 7
  %v1310 = vrot.slane %v1224, 7
  %v1311 = vsel %vm242, %v1309, %v1310
  %v1312 = vrot.slane %v1226, 7
  %v1313 = vrot.slane %v1227, 7
  %v1314 = vsel %vm242, %v1312, %v1313
  %v1315 = vrot.slane %v1229, 7
  %v1316 = vrot.slane %v1230, 7
  %v1317 = vsel %vm242, %v1315, %v1316
  %v1318 = vrot.slane %v1232, 7
  %v1319 = vrot.slane %v1233, 7
  %v1320 = vsel %vm242, %v1318, %v1319
  %v1321 = vrot.slane %v1235, 7
  %v1322 = vrot.slane %v1236, 7
  %v1323 = vsel %vm242, %v1321, %v1322
  %v1324 = vrot.slane %v1238, 7
  %v1325 = vrot.slane %v1239, 7
  %v1326 = vsel %vm242, %v1324, %v1325
  %v1359 = vrot.slane %v1188, 1
  %v1360 = vrot.slane %v1189, 1
  %v1361 = vsel %vm323, %v1359, %v1360
  %v1362 = vrot.slane %v1191, 1
  %v1363 = vrot.slane %v1192, 1
  %v1364 = vsel %vm323, %v1362, %v1363
  %v1365 = vrot.slane %v1194, 1
  %v1366 = vrot.slane %v1195, 1
  %v1367 = vsel %vm323, %v1365, %v1366
  %v1368 = vrot.slane %v1197, 1
  %v1369 = vrot.slane %v1198, 1
  %v1370 = vsel %vm323, %v1368, %v1369
  %v1371 = vrot.slane %v1200, 1
  %v1372 = vrot.slane %v1201, 1
  %v1373 = vsel %vm323, %v1371, %v1372
  %v1374 = vrot.slane %v1203, 1
  %v1375 = vrot.slane %v1204, 1
  %v1376 = vsel %vm323, %v1374, %v1375
  %v1377 = vrot.slane %v1206, 1
  %v1378 = vrot.slane %v1207, 1
  %v1379 = vsel %vm323, %v1377, %v1378
  %v1380 = vrot.slane %v1209, 1
  %v1381 = vrot.slane %v1210, 1
  %v1382 = vsel %vm323, %v1380, %v1381
  %v1383 = vrot.slane %v1218, 1
  %v1384 = vrot.slane %v1219, 1
  %v1385 = vsel %vm323, %v1383, %v1384
  %v1386 = vrot.slane %v1221, 1
  %v1387 = vrot.slane %v1222, 1
  %v1388 = vsel %vm323, %v1386, %v1387
  %v1389 = vrot.slane %v1224, 1
  %v1390 = vrot.slane %v1225, 1
  %v1391 = vsel %vm323, %v1389, %v1390
  %v1392 = vrot.slane %v1227, 1
  %v1393 = vrot.slane %v1228, 1
  %v1394 = vsel %vm323, %v1392, %v1393
  %v1395 = vrot.slane %v1230, 1
  %v1396 = vrot.slane %v1231, 1
  %v1397 = vsel %vm323, %v1395, %v1396
  %v1398 = vrot.slane %v1233, 1
  %v1399 = vrot.slane %v1234, 1
  %v1400 = vsel %vm323, %v1398, %v1399
  %v1401 = vrot.slane %v1236, 1
  %v1402 = vrot.slane %v1237, 1
  %v1403 = vsel %vm323, %v1401, %v1402
  %v1404 = vrot.slane %v1239, 1
  %v1405 = vrot.slane %v1240, 1
  %v1406 = vsel %vm323, %v1404, %v1405
  %v1411 = vrot.slane %v1211, 7
  %v1412 = vrot.slane %v1212, 7
  %v1413 = vsel %vm242, %v1411, %v1412
  %v1414 = vrot.slane %v1241, 7
  %v1415 = vrot.slane %v1242, 7
  %v1416 = vsel %vm242, %v1414, %v1415
  %v1419 = vrot.slane %v1212, 1
  %v1420 = vrot.slane %v1213, 1
  %v1421 = vsel %vm323, %v1419, %v1420
  %v1422 = vrot.slane %v1242, 1
  %v1423 = vrot.slane %v1243, 1
  %v1424 = vsel %vm323, %v1422, %v1423
  %v1429 = vrot.slane %v1214, 7
  %v1430 = vrot.slane %v1215, 7
  %v1431 = vsel %vm242, %v1429, %v1430
  %v1432 = vrot.slane %v1244, 7
  %v1433 = vrot.slane %v1245, 7
  %v1434 = vsel %vm242, %v1432, %v1433
  %v1437 = vrot.slane %v1215, 1
  %v1438 = vrot.slane %v1216, 1
  %v1439 = vsel %vm323, %v1437, %v1438
  %v1440 = vrot.slane %v1245, 1
  %v1441 = vrot.slane %v1246, 1
  %v1442 = vsel %vm323, %v1440, %v1441
  %1459 = vrot.lane.b32.xlu0 %v1188, 16
  %v1460 = vpop.permute.xlu0 %1459
  %1461 = vrot.lane.b32.xlu0 %v1191, 16
  %v1462 = vpop.permute.xlu0 %1461
  %1463 = vrot.lane.b32.xlu0 %v1194, 16
  %v1464 = vpop.permute.xlu0 %1463
  %1465 = vrot.lane.b32.xlu0 %v1197, 16
  %v1466 = vpop.permute.xlu0 %1465
  %1467 = vrot.lane.b32.xlu0 %v1200, 16
  %v1468 = vpop.permute.xlu0 %1467
  %1469 = vrot.lane.b32.xlu0 %v1203, 16
  %v1470 = vpop.permute.xlu0 %1469
  %1471 = vrot.lane.b32.xlu0 %v1206, 16
  %v1472 = vpop.permute.xlu0 %1471
  %1473 = vrot.lane.b32.xlu0 %v1209, 16
  %v1474 = vpop.permute.xlu0 %1473
  %1475 = vrot.lane.b32.xlu0 %v1218, 16
  %v1476 = vpop.permute.xlu0 %1475
  %1477 = vrot.lane.b32.xlu0 %v1221, 16
  %v1478 = vpop.permute.xlu0 %1477
  %1479 = vrot.lane.b32.xlu0 %v1224, 16
  %v1480 = vpop.permute.xlu0 %1479
  %1481 = vrot.lane.b32.xlu0 %v1227, 16
  %v1482 = vpop.permute.xlu0 %1481
  %1483 = vrot.lane.b32.xlu0 %v1230, 16
  %v1484 = vpop.permute.xlu0 %1483
  %1485 = vrot.lane.b32.xlu0 %v1233, 16
  %v1486 = vpop.permute.xlu0 %1485
  %1487 = vrot.lane.b32.xlu0 %v1236, 16
  %v1488 = vpop.permute.xlu0 %1487
  %1489 = vrot.lane.b32.xlu0 %v1239, 16
  %v1490 = vpop.permute.xlu0 %1489
  %1507 = vrot.lane.b32.xlu0 %v1361, 32
  %v1508 = vpop.permute.xlu0 %1507
  %1509 = vrot.lane.b32.xlu0 %v1364, 32
  %v1510 = vpop.permute.xlu0 %1509
  %1511 = vrot.lane.b32.xlu0 %v1367, 32
  %v1512 = vpop.permute.xlu0 %1511
  %1513 = vrot.lane.b32.xlu0 %v1370, 32
  %v1514 = vpop.permute.xlu0 %1513
  %1515 = vrot.lane.b32.xlu0 %v1373, 32
  %v1516 = vpop.permute.xlu0 %1515
  %1517 = vrot.lane.b32.xlu0 %v1376, 32
  %v1518 = vpop.permute.xlu0 %1517
  %1519 = vrot.lane.b32.xlu0 %v1379, 32
  %v1520 = vpop.permute.xlu0 %1519
  %1521 = vrot.lane.b32.xlu0 %v1382, 32
  %v1522 = vpop.permute.xlu0 %1521
  %1523 = vrot.lane.b32.xlu0 %v1385, 32
  %v1524 = vpop.permute.xlu0 %1523
  %1525 = vrot.lane.b32.xlu0 %v1388, 32
  %v1526 = vpop.permute.xlu0 %1525
  %1527 = vrot.lane.b32.xlu0 %v1391, 32
  %v1528 = vpop.permute.xlu0 %1527
  %1529 = vrot.lane.b32.xlu0 %v1394, 32
  %v1530 = vpop.permute.xlu0 %1529
  %1531 = vrot.lane.b32.xlu0 %v1397, 32
  %v1532 = vpop.permute.xlu0 %1531
  %1533 = vrot.lane.b32.xlu0 %v1400, 32
  %v1534 = vpop.permute.xlu0 %1533
  %1535 = vrot.lane.b32.xlu0 %v1403, 32
  %v1536 = vpop.permute.xlu0 %1535
  %1537 = vrot.lane.b32.xlu0 %v1406, 32
  %v1538 = vpop.permute.xlu0 %1537
  %1555 = vrot.lane.b32.xlu0 %v1284, 48
  %v1556 = vpop.permute.xlu0 %1555
  %1557 = vrot.lane.b32.xlu0 %v1287, 48
  %v1558 = vpop.permute.xlu0 %1557
  %1559 = vrot.lane.b32.xlu0 %v1290, 48
  %v1560 = vpop.permute.xlu0 %1559
  %1561 = vrot.lane.b32.xlu0 %v1293, 48
  %v1562 = vpop.permute.xlu0 %1561
  %1563 = vrot.lane.b32.xlu0 %v1296, 48
  %v1564 = vpop.permute.xlu0 %1563
  %1565 = vrot.lane.b32.xlu0 %v1299, 48
  %v1566 = vpop.permute.xlu0 %1565
  %1567 = vrot.lane.b32.xlu0 %v1302, 48
  %v1568 = vpop.permute.xlu0 %1567
  %1569 = vrot.lane.b32.xlu0 %v1413, 48
  %v1570 = vpop.permute.xlu0 %1569
  %1571 = vrot.lane.b32.xlu0 %v1308, 48
  %v1572 = vpop.permute.xlu0 %1571
  %1573 = vrot.lane.b32.xlu0 %v1311, 48
  %v1574 = vpop.permute.xlu0 %1573
  %1575 = vrot.lane.b32.xlu0 %v1314, 48
  %v1576 = vpop.permute.xlu0 %1575
  %1577 = vrot.lane.b32.xlu0 %v1317, 48
  %v1578 = vpop.permute.xlu0 %1577
  %1579 = vrot.lane.b32.xlu0 %v1320, 48
  %v1580 = vpop.permute.xlu0 %1579
  %1581 = vrot.lane.b32.xlu0 %v1323, 48
  %v1582 = vpop.permute.xlu0 %1581
  %1583 = vrot.lane.b32.xlu0 %v1326, 48
  %v1584 = vpop.permute.xlu0 %1583
  %1585 = vrot.lane.b32.xlu0 %v1416, 48
  %v1586 = vpop.permute.xlu0 %1585
  %1603 = vrot.lane.b32.xlu0 %v1191, 64
  %v1604 = vpop.permute.xlu0 %1603
  %1605 = vrot.lane.b32.xlu0 %v1194, 64
  %v1606 = vpop.permute.xlu0 %1605
  %1607 = vrot.lane.b32.xlu0 %v1197, 64
  %v1608 = vpop.permute.xlu0 %1607
  %1609 = vrot.lane.b32.xlu0 %v1200, 64
  %v1610 = vpop.permute.xlu0 %1609
  %1611 = vrot.lane.b32.xlu0 %v1203, 64
  %v1612 = vpop.permute.xlu0 %1611
  %1613 = vrot.lane.b32.xlu0 %v1206, 64
  %v1614 = vpop.permute.xlu0 %1613
  %1615 = vrot.lane.b32.xlu0 %v1209, 64
  %v1616 = vpop.permute.xlu0 %1615
  %1617 = vrot.lane.b32.xlu0 %v1212, 64
  %v1618 = vpop.permute.xlu0 %1617
  %1619 = vrot.lane.b32.xlu0 %v1221, 64
  %v1620 = vpop.permute.xlu0 %1619
  %1621 = vrot.lane.b32.xlu0 %v1224, 64
  %v1622 = vpop.permute.xlu0 %1621
  %1623 = vrot.lane.b32.xlu0 %v1227, 64
  %v1624 = vpop.permute.xlu0 %1623
  %1625 = vrot.lane.b32.xlu0 %v1230, 64
  %v1626 = vpop.permute.xlu0 %1625
  %1627 = vrot.lane.b32.xlu0 %v1233, 64
  %v1628 = vpop.permute.xlu0 %1627
  %1629 = vrot.lane.b32.xlu0 %v1236, 64
  %v1630 = vpop.permute.xlu0 %1629
  %1631 = vrot.lane.b32.xlu0 %v1239, 64
  %v1632 = vpop.permute.xlu0 %1631
  %1633 = vrot.lane.b32.xlu0 %v1242, 64
  %v1634 = vpop.permute.xlu0 %1633
  %1651 = vrot.lane.b32.xlu0 %v1364, 80
  %v1652 = vpop.permute.xlu0 %1651
  %1653 = vrot.lane.b32.xlu0 %v1367, 80
  %v1654 = vpop.permute.xlu0 %1653
  %1655 = vrot.lane.b32.xlu0 %v1370, 80
  %v1656 = vpop.permute.xlu0 %1655
  %1657 = vrot.lane.b32.xlu0 %v1373, 80
  %v1658 = vpop.permute.xlu0 %1657
  %1659 = vrot.lane.b32.xlu0 %v1376, 80
  %v1660 = vpop.permute.xlu0 %1659
  %1661 = vrot.lane.b32.xlu0 %v1379, 80
  %v1662 = vpop.permute.xlu0 %1661
  %1663 = vrot.lane.b32.xlu0 %v1382, 80
  %v1664 = vpop.permute.xlu0 %1663
  %1665 = vrot.lane.b32.xlu0 %v1421, 80
  %v1666 = vpop.permute.xlu0 %1665
  %1667 = vrot.lane.b32.xlu0 %v1388, 80
  %v1668 = vpop.permute.xlu0 %1667
  %1669 = vrot.lane.b32.xlu0 %v1391, 80
  %v1670 = vpop.permute.xlu0 %1669
  %1671 = vrot.lane.b32.xlu0 %v1394, 80
  %v1672 = vpop.permute.xlu0 %1671
  %1673 = vrot.lane.b32.xlu0 %v1397, 80
  %v1674 = vpop.permute.xlu0 %1673
  %1675 = vrot.lane.b32.xlu0 %v1400, 80
  %v1676 = vpop.permute.xlu0 %1675
  %1677 = vrot.lane.b32.xlu0 %v1403, 80
  %v1678 = vpop.permute.xlu0 %1677
  %1679 = vrot.lane.b32.xlu0 %v1406, 80
  %v1680 = vpop.permute.xlu0 %1679
  %1681 = vrot.lane.b32.xlu0 %v1424, 80
  %v1682 = vpop.permute.xlu0 %1681
  %1699 = vrot.lane.b32.xlu0 %v1287, 96
  %v1700 = vpop.permute.xlu0 %1699
  %1701 = vrot.lane.b32.xlu0 %v1290, 96
  %v1702 = vpop.permute.xlu0 %1701
  %1703 = vrot.lane.b32.xlu0 %v1293, 96
  %v1704 = vpop.permute.xlu0 %1703
  %1705 = vrot.lane.b32.xlu0 %v1296, 96
  %v1706 = vpop.permute.xlu0 %1705
  %1707 = vrot.lane.b32.xlu0 %v1299, 96
  %v1708 = vpop.permute.xlu0 %1707
  %1709 = vrot.lane.b32.xlu0 %v1302, 96
  %v1710 = vpop.permute.xlu0 %1709
  %1711 = vrot.lane.b32.xlu0 %v1413, 96
  %v1712 = vpop.permute.xlu0 %1711
  %1713 = vrot.lane.b32.xlu0 %v1431, 96
  %v1714 = vpop.permute.xlu0 %1713
  %1715 = vrot.lane.b32.xlu0 %v1311, 96
  %v1716 = vpop.permute.xlu0 %1715
  %1717 = vrot.lane.b32.xlu0 %v1314, 96
  %v1718 = vpop.permute.xlu0 %1717
  %1719 = vrot.lane.b32.xlu0 %v1317, 96
  %v1720 = vpop.permute.xlu0 %1719
  %1721 = vrot.lane.b32.xlu0 %v1320, 96
  %v1722 = vpop.permute.xlu0 %1721
  %1723 = vrot.lane.b32.xlu0 %v1323, 96
  %v1724 = vpop.permute.xlu0 %1723
  %1725 = vrot.lane.b32.xlu0 %v1326, 96
  %v1726 = vpop.permute.xlu0 %1725
  %1727 = vrot.lane.b32.xlu0 %v1416, 96
  %v1728 = vpop.permute.xlu0 %1727
  %1729 = vrot.lane.b32.xlu0 %v1434, 96
  %v1730 = vpop.permute.xlu0 %1729
  %1747 = vrot.lane.b32.xlu0 %v1194, 112
  %v1748 = vpop.permute.xlu0 %1747
  %1749 = vrot.lane.b32.xlu0 %v1197, 112
  %v1750 = vpop.permute.xlu0 %1749
  %1751 = vrot.lane.b32.xlu0 %v1200, 112
  %v1752 = vpop.permute.xlu0 %1751
  %1753 = vrot.lane.b32.xlu0 %v1203, 112
  %v1754 = vpop.permute.xlu0 %1753
  %1755 = vrot.lane.b32.xlu0 %v1206, 112
  %v1756 = vpop.permute.xlu0 %1755
  %1757 = vrot.lane.b32.xlu0 %v1209, 112
  %v1758 = vpop.permute.xlu0 %1757
  %1759 = vrot.lane.b32.xlu0 %v1212, 112
  %v1760 = vpop.permute.xlu0 %1759
  %1761 = vrot.lane.b32.xlu0 %v1215, 112
  %v1762 = vpop.permute.xlu0 %1761
  %1763 = vrot.lane.b32.xlu0 %v1224, 112
  %v1764 = vpop.permute.xlu0 %1763
  %1765 = vrot.lane.b32.xlu0 %v1227, 112
  %v1766 = vpop.permute.xlu0 %1765
  %1767 = vrot.lane.b32.xlu0 %v1230, 112
  %v1768 = vpop.permute.xlu0 %1767
  %1769 = vrot.lane.b32.xlu0 %v1233, 112
  %v1770 = vpop.permute.xlu0 %1769
  %1771 = vrot.lane.b32.xlu0 %v1236, 112
  %v1772 = vpop.permute.xlu0 %1771
  %1773 = vrot.lane.b32.xlu0 %v1239, 112
  %v1774 = vpop.permute.xlu0 %1773
  %1775 = vrot.lane.b32.xlu0 %v1242, 112
  %v1776 = vpop.permute.xlu0 %1775
  %1777 = vrot.lane.b32.xlu0 %v1245, 112
  %v1778 = vpop.permute.xlu0 %1777
  %v1795 = vsel %vm71, %v1281, %v1460
  %v1796 = vsel %vm71, %v1284, %v1462
  %v1797 = vsel %vm71, %v1287, %v1464
  %v1798 = vsel %vm71, %v1290, %v1466
  %v1799 = vsel %vm71, %v1293, %v1468
  %v1800 = vsel %vm71, %v1296, %v1470
  %v1801 = vsel %vm71, %v1299, %v1472
  %v1802 = vsel %vm71, %v1302, %v1474
  %v1803 = vsel %vm71, %v1305, %v1476
  %v1804 = vsel %vm71, %v1308, %v1478
  %v1805 = vsel %vm71, %v1311, %v1480
  %v1806 = vsel %vm71, %v1314, %v1482
  %v1807 = vsel %vm71, %v1317, %v1484
  %v1808 = vsel %vm71, %v1320, %v1486
  %v1809 = vsel %vm71, %v1323, %v1488
  %v1810 = vsel %vm71, %v1326, %v1490
  %v1811 = vsel %vm776, %v1795, %v1508
  %v1812 = vsel %vm776, %v1796, %v1510
  %v1813 = vsel %vm776, %v1797, %v1512
  %v1814 = vsel %vm776, %v1798, %v1514
  %v1815 = vsel %vm776, %v1799, %v1516
  %v1816 = vsel %vm776, %v1800, %v1518
  %v1817 = vsel %vm776, %v1801, %v1520
  %v1818 = vsel %vm776, %v1802, %v1522
  %v1819 = vsel %vm776, %v1803, %v1524
  %v1820 = vsel %vm776, %v1804, %v1526
  %v1821 = vsel %vm776, %v1805, %v1528
  %v1822 = vsel %vm776, %v1806, %v1530
  %v1823 = vsel %vm776, %v1807, %v1532
  %v1824 = vsel %vm776, %v1808, %v1534
  %v1825 = vsel %vm776, %v1809, %v1536
  %v1826 = vsel %vm776, %v1810, %v1538
  %v1827 = vsel %vm793, %v1811, %v1556
  %v1828 = vsel %vm793, %v1812, %v1558
  %v1829 = vsel %vm793, %v1813, %v1560
  %v1830 = vsel %vm793, %v1814, %v1562
  %v1831 = vsel %vm793, %v1815, %v1564
  %v1832 = vsel %vm793, %v1816, %v1566
  %v1833 = vsel %vm793, %v1817, %v1568
  %v1834 = vsel %vm793, %v1818, %v1570
  %v1835 = vsel %vm793, %v1819, %v1572
  %v1836 = vsel %vm793, %v1820, %v1574
  %v1837 = vsel %vm793, %v1821, %v1576
  %v1838 = vsel %vm793, %v1822, %v1578
  %v1839 = vsel %vm793, %v1823, %v1580
  %v1840 = vsel %vm793, %v1824, %v1582
  %v1841 = vsel %vm793, %v1825, %v1584
  %v1842 = vsel %vm793, %v1826, %v1586
  %v1843 = vsel %vm810, %v1827, %v1604
  %v1844 = vsel %vm810, %v1828, %v1606
  %v1845 = vsel %vm810, %v1829, %v1608
  %v1846 = vsel %vm810, %v1830, %v1610
  %v1847 = vsel %vm810, %v1831, %v1612
  %v1848 = vsel %vm810, %v1832, %v1614
  %v1849 = vsel %vm810, %v1833, %v1616
  %v1850 = vsel %vm810, %v1834, %v1618
  %v1851 = vsel %vm810, %v1835, %v1620
  %v1852 = vsel %vm810, %v1836, %v1622
  %v1853 = vsel %vm810, %v1837, %v1624
  %v1854 = vsel %vm810, %v1838, %v1626
  %v1855 = vsel %vm810, %v1839, %v1628
  %v1856 = vsel %vm810, %v1840, %v1630
  %v1857 = vsel %vm810, %v1841, %v1632
  %v1858 = vsel %vm810, %v1842, %v1634
  %v1859 = vsel %vm827, %v1843, %v1652
  %v1860 = vsel %vm827, %v1844, %v1654
  %v1861 = vsel %vm827, %v1845, %v1656
  %v1862 = vsel %vm827, %v1846, %v1658
  %v1863 = vsel %vm827, %v1847, %v1660
  %v1864 = vsel %vm827, %v1848, %v1662
  %v1865 = vsel %vm827, %v1849, %v1664
  %v1866 = vsel %vm827, %v1850, %v1666
  %v1867 = vsel %vm827, %v1851, %v1668
  %v1868 = vsel %vm827, %v1852, %v1670
  %v1869 = vsel %vm827, %v1853, %v1672
  %v1870 = vsel %vm827, %v1854, %v1674
  %v1871 = vsel %vm827, %v1855, %v1676
  %v1872 = vsel %vm827, %v1856, %v1678
  %v1873 = vsel %vm827, %v1857, %v1680
  %v1874 = vsel %vm827, %v1858, %v1682
  %v1875 = vsel %vm844, %v1859, %v1700
  %v1876 = vsel %vm844, %v1860, %v1702
  %v1877 = vsel %vm844, %v1861, %v1704
  %v1878 = vsel %vm844, %v1862, %v1706
  %v1879 = vsel %vm844, %v1863, %v1708
  %v1880 = vsel %vm844, %v1864, %v1710
  %v1881 = vsel %vm844, %v1865, %v1712
  %v1882 = vsel %vm844, %v1866, %v1714
  %v1883 = vsel %vm844, %v1867, %v1716
  %v1884 = vsel %vm844, %v1868, %v1718
  %v1885 = vsel %vm844, %v1869, %v1720
  %v1886 = vsel %vm844, %v1870, %v1722
  %v1887 = vsel %vm844, %v1871, %v1724
  %v1888 = vsel %vm844, %v1872, %v1726
  %v1889 = vsel %vm844, %v1873, %v1728
  %v1890 = vsel %vm844, %v1874, %v1730
  %v1891 = vsel %vm861, %v1875, %v1748
  %v1892 = vsel %vm861, %v1876, %v1750
  %v1893 = vsel %vm861, %v1877, %v1752
  %v1894 = vsel %vm861, %v1878, %v1754
  %v1895 = vsel %vm861, %v1879, %v1756
  %v1896 = vsel %vm861, %v1880, %v1758
  %v1897 = vsel %vm861, %v1881, %v1760
  %v1898 = vsel %vm861, %v1882, %v1762
  %v1899 = vsel %vm861, %v1883, %v1764
  %v1900 = vsel %vm861, %v1884, %v1766
  %v1901 = vsel %vm861, %v1885, %v1768
  %v1902 = vsel %vm861, %v1886, %v1770
  %v1903 = vsel %vm861, %v1887, %v1772
  %v1904 = vsel %vm861, %v1888, %v1774
  %v1905 = vsel %vm861, %v1889, %v1776
  %v1906 = vsel %vm861, %v1890, %v1778
  %v1907 = vpack.c.bf16 %v1892, %v1891
  %v1908 = vpack.c.bf16 %v1370, %v1367
  %v1909 = vpack.c.bf16 %v1894, %v1893
  %v1910 = vpack.c.bf16 %v1376, %v1373
  %v1911 = vpack.c.bf16 %v1896, %v1895
  %v1912 = vpack.c.bf16 %v1382, %v1379
  %v1913 = vpack.c.bf16 %v1898, %v1897
  %v1914 = vpack.c.bf16 %v1439, %v1421
  %v1915 = vpack.c.bf16 %v1900, %v1899
  %v1916 = vpack.c.bf16 %v1394, %v1391
  %v1917 = vpack.c.bf16 %v1902, %v1901
  %v1918 = vpack.c.bf16 %v1400, %v1397
  %v1919 = vpack.c.bf16 %v1904, %v1903
  %v1920 = vpack.c.bf16 %v1406, %v1403
  %v1921 = vpack.c.bf16 %v1906, %v1905
  %v1922 = vpack.c.bf16 %v1442, %v1424
  %v1923 = vld [vmem:[%s3] sm:$0xf]
  %v1924 = vld [vmem:[%s3 + $0x4] sm:$0xf]
  %v1925 = vld [vmem:[%s3 + $0x8] sm:$0xf]
  %v1926 = vld [vmem:[%s3 + $0xc] sm:$0xf]
  %v1927 = vld [vmem:[%s3 + $0x10] sm:$0xf]
  %v1928 = vld [vmem:[%s3 + $0x14] sm:$0xf]
  %v1929 = vld [vmem:[%s3 + $0x18] sm:$0xf]
  %v1930 = vld [vmem:[%s3 + $0x1c] sm:$0xf]
  %v1931 = vld [vmem:[%s3 + $0x20] sm:$0xf]
  %v1932 = vld [vmem:[%s3 + $0x24] sm:$0xf]
  %v1933 = vld [vmem:[%s3 + $0x28] sm:$0xf]
  %v1934 = vld [vmem:[%s3 + $0x2c] sm:$0xf]
  %v1935 = vld [vmem:[%s3 + $0x30] sm:$0xf]
  %v1936 = vld [vmem:[%s3 + $0x34] sm:$0xf]
  %v1937 = vld [vmem:[%s3 + $0x38] sm:$0xf]
  %v1938 = vld [vmem:[%s3 + $0x3c] sm:$0xf]
  %v1939 = vld [vmem:[%s3 + $0x40] sm:$0xf]
  %v1940 = vld [vmem:[%s3 + $0x44] sm:$0xf]
  %v1941 = vld [vmem:[%s4] sm:$0x1]
  %v1943 = vlaneseq
  %v1944 = vshrl.u32 %v1943, 7
  %v1945 = vsub.s32 0, %v1944
  %v1946 = vrot.slane %v1941, %v1945
  %v1966 = vunpack.c.l.b16 %v1923
  %v1967 = vunpack.c.l.b16 %v1924
  %v1968 = vunpack.c.l.b16 %v1925
  %v1969 = vunpack.c.l.b16 %v1926
  %v1970 = vunpack.c.l.b16 %v1927
  %v1971 = vunpack.c.l.b16 %v1928
  %v1972 = vunpack.c.l.b16 %v1929
  %v1973 = vunpack.c.l.b16 %v1930
  %v1974 = vunpack.c.l.b16 %v1931
  %v1975 = vunpack.c.l.b16 %v1932
  %v1976 = vunpack.c.l.b16 %v1933
  %v1977 = vunpack.c.l.b16 %v1934
  %v1978 = vunpack.c.l.b16 %v1935
  %v1979 = vunpack.c.l.b16 %v1936
  %v1980 = vunpack.c.l.b16 %v1937
  %v1981 = vunpack.c.l.b16 %v1938
  %v1982 = vunpack.c.l.b16 %v1939
  %v1983 = vunpack.c.l.b16 %v1940
  %v1984 = vpack.c.b16 %v1967, %v1966
  %v1985 = vpack.c.b16 %v1969, %v1968
  %v1986 = vpack.c.b16 %v1971, %v1970
  %v1987 = vpack.c.b16 %v1973, %v1972
  %v1988 = vpack.c.b16 %v1975, %v1974
  %v1989 = vpack.c.b16 %v1977, %v1976
  %v1990 = vpack.c.b16 %v1979, %v1978
  %v1991 = vpack.c.b16 %v1981, %v1980
  %v1992 = vpack.c.b16 %v1983, %v1982
  %v2003 = vsel %vm71, %v1908, 0
  %v2006 = vsel %vm71, %v1910, 0
  %v2009 = vsel %vm71, %v1912, 0
  %v2012 = vsel %vm71, %v1914, 0
  %v2015 = vsel %vm71, %v1916, 0
  %v2018 = vsel %vm71, %v1918, 0
  %v2021 = vsel %vm71, %v1920, 0
  %v2024 = vsel %vm71, %v1922, 0
  %2026 = vmatprep.subr.bf16.mxu0 0
  %2027 = vmatpush1.bf16.msra.mxu0 %v1984
  %2028 = vmatprep.subr.bf16.mxu0 0
  %2029 = vmatpush1.bf16.msra.mxu0 %v1985
  %2030 = vmatprep.subr.bf16.mxu0 0
  %2031 = vmatpush1.bf16.msra.mxu0 %v1986
  %2032 = vmatprep.subr.bf16.mxu0 0
  %2033 = vmatpush1.bf16.msra.mxu0 %v1987
  %2034 = vmatprep.subr.bf16.mxu0 0
  %2035 = vmatpush1.bf16.msra.mxu0 %v1988
  %2036 = vmatprep.subr.bf16.mxu0 0
  %2037 = vmatpush1.bf16.msra.mxu0 %v1989
  %2038 = vmatprep.subr.bf16.mxu0 0
  %2039 = vmatpush1.bf16.msra.mxu0 %v1990
  %2040 = vmatprep.subr.bf16.mxu0 0
  %2041 = vmatpush1.bf16.msra.mxu0 %v1991
  %2042 = vmatprep.subr.bf16.mxu0 0
  %2043 = vmatpush1.bf16.msra.mxu0 %v1992
  %2044 = vmatprep.subr.bf16.mxu0 0
  %2045 = vmatpush1.bf16.msra.mxu0 0
  %2046 = vmatprep.subr.bf16.mxu0 0
  %2047 = vmatpush1.bf16.msra.mxu0 0
  %2048 = vmatprep.subr.bf16.mxu0 0
  %2049 = vmatpush1.bf16.msra.mxu0 0
  %2050 = vmatprep.subr.bf16.mxu0 0
  %2051 = vmatpush1.bf16.msra.mxu0 0
  %2052 = vmatprep.subr.bf16.mxu0 0
  %2053 = vmatpush1.bf16.msra.mxu0 0
  %2054 = vmatprep.subr.bf16.mxu0 0
  %2055 = vmatpush1.bf16.msra.mxu0 0
  %2056 = vmatprep.subr.bf16.mxu0 0
  %2057 = vmatpush1.bf16.msra.mxu0 0
  %2058 = vmatprep.mubr.bf16.mxu0 %v2003
  %2059 = vmatmul.mubr.bf16.gmra.mrb[0].mxu0 %v1907
  %v2060 = vpop.f32.mrb[0].mxu0
  %v2061 = vadd.f32 %v1946, %v2060
  %v2062 = vpop.f32.mrb[0].mxu0
  %v2063 = vpop.f32.mrb[0].mxu0
  %v2064 = vadd.f32 %v1946, %v2063
  %v2065 = vpop.f32.mrb[0].mxu0
  %2066 = vmatprep.mubr.bf16.mxu0 %v2006
  %2067 = vmatmul.mubr.bf16.gmra.mrb[0].mxu0 %v1909
  %v2068 = vpop.f32.mrb[0].mxu0
  %v2069 = vadd.f32 %v1946, %v2068
  %v2070 = vpop.f32.mrb[0].mxu0
  %v2071 = vpop.f32.mrb[0].mxu0
  %v2072 = vadd.f32 %v1946, %v2071
  %v2073 = vpop.f32.mrb[0].mxu0
  %2074 = vmatprep.mubr.bf16.mxu0 %v2009
  %2075 = vmatmul.mubr.bf16.gmra.mrb[0].mxu0 %v1911
  %v2076 = vpop.f32.mrb[0].mxu0
  %v2077 = vadd.f32 %v1946, %v2076
  %v2078 = vpop.f32.mrb[0].mxu0
  %v2079 = vpop.f32.mrb[0].mxu0
  %v2080 = vadd.f32 %v1946, %v2079
  %v2081 = vpop.f32.mrb[0].mxu0
  %2082 = vmatprep.mubr.bf16.mxu0 %v2012
  %2083 = vmatmul.mubr.bf16.gmra.mrb[0].mxu0 %v1913
  %v2084 = vpop.f32.mrb[0].mxu0
  %v2085 = vadd.f32 %v1946, %v2084
  %v2086 = vpop.f32.mrb[0].mxu0
  %v2087 = vpop.f32.mrb[0].mxu0
  %v2088 = vadd.f32 %v1946, %v2087
  %v2089 = vpop.f32.mrb[0].mxu0
  %2090 = vmatprep.mubr.bf16.mxu0 %v2015
  %2091 = vmatmul.mubr.bf16.gmra.mrb[0].mxu0 %v1915
  %v2092 = vpop.f32.mrb[0].mxu0
  %v2093 = vadd.f32 %v1946, %v2092
  %v2094 = vpop.f32.mrb[0].mxu0
  %v2095 = vpop.f32.mrb[0].mxu0
  %v2096 = vadd.f32 %v1946, %v2095
  %v2097 = vpop.f32.mrb[0].mxu0
  %2098 = vmatprep.mubr.bf16.mxu0 %v2018
  %2099 = vmatmul.mubr.bf16.gmra.mrb[0].mxu0 %v1917
  %v2100 = vpop.f32.mrb[0].mxu0
  %v2101 = vadd.f32 %v1946, %v2100
  %v2102 = vpop.f32.mrb[0].mxu0
  %v2103 = vpop.f32.mrb[0].mxu0
  %v2104 = vadd.f32 %v1946, %v2103
  %v2105 = vpop.f32.mrb[0].mxu0
  %2106 = vmatprep.mubr.bf16.mxu0 %v2021
  %2107 = vmatmul.mubr.bf16.gmra.mrb[0].mxu0 %v1919
  %v2108 = vpop.f32.mrb[0].mxu0
  %v2109 = vadd.f32 %v1946, %v2108
  %v2110 = vpop.f32.mrb[0].mxu0
  %v2111 = vpop.f32.mrb[0].mxu0
  %v2112 = vadd.f32 %v1946, %v2111
  %v2113 = vpop.f32.mrb[0].mxu0
  %2114 = vmatprep.mubr.bf16.mxu0 %v2024
  %2115 = vmatmul.mubr.bf16.gmra.mrb[0].mxu0 %v1921
  %v2116 = vpop.f32.mrb[0].mxu0
  %v2117 = vadd.f32 %v1946, %v2116
  %v2118 = vpop.f32.mrb[0].mxu0
  %v2119 = vpop.f32.mrb[0].mxu0
  %v2120 = vadd.f32 %v1946, %v2119
  %v2121 = vpop.f32.mrb[0].mxu0
  %2122 = vdwg.mxu0
  %v2123 = vld [vmem:[%s5] sm:$0xff]
  %v2124 = vld [vmem:[%s5 + $0x8] sm:$0xff]
  %v2125 = vld [vmem:[%s6] sm:$0xff]
  %v2126 = vld [vmem:[%s6 + $0x8] sm:$0xff]
  %v2128 = vsel %vm71, %v1094, 0
  %v2131 = vsel %vm71, %v1095, 0
  %v2134 = vsel %vm71, %v1096, 0
  %v2137 = vsel %vm71, %v1097, 0
  %v2140 = vsel %vm71, %v1098, 0
  %v2143 = vsel %vm71, %v1099, 0
  %v2146 = vsel %vm71, %v1100, 0
  %v2149 = vsel %vm71, %v1101, 0
  %v2152 = vsel %vm71, %v1102, 0
  %v2155 = vsel %vm71, %v1103, 0
  %v2158 = vsel %vm71, %v1104, 0
  %v2161 = vsel %vm71, %v1105, 0
  %v2164 = vsel %vm71, %v1106, 0
  %v2167 = vsel %vm71, %v1107, 0
  %v2170 = vsel %vm71, %v1108, 0
  %v2173 = vsel %vm71, %v1109, 0
  %2175 = vmatprep.subr.mxu0 0.0
  %2176 = vmatpush1.msra.mxu0 %v2125
  %2177 = vmatprep.subr.mxu0 0.0
  %2178 = vmatpush1.msra.mxu0 %v2126
  %2179 = vmatprep.subr.mxu0 0.0
  %2180 = vmatpush1.msra.mxu0 0.0
  %2181 = vmatprep.subr.mxu0 0.0
  %2182 = vmatpush1.msra.mxu0 0.0
  %2183 = vmatprep.subr.mxu0 0.0
  %2184 = vmatpush1.msra.mxu0 0.0
  %2185 = vmatprep.subr.mxu0 0.0
  %2186 = vmatpush1.msra.mxu0 0.0
  %2187 = vmatprep.subr.mxu0 0.0
  %2188 = vmatpush1.msra.mxu0 0.0
  %2189 = vmatprep.subr.mxu0 0.0
  %2190 = vmatpush1.msra.mxu0 0.0
  %2191 = vmatprep.subr.mxu0 0.0
  %2192 = vmatpush1.msra.mxu0 0.0
  %2193 = vmatprep.subr.mxu0 0.0
  %2194 = vmatpush1.msra.mxu0 0.0
  %2195 = vmatprep.subr.mxu0 0.0
  %2196 = vmatpush1.msra.mxu0 0.0
  %2197 = vmatprep.subr.mxu0 0.0
  %2198 = vmatpush1.msra.mxu0 0.0
  %2199 = vmatprep.subr.mxu0 0.0
  %2200 = vmatpush1.msra.mxu0 0.0
  %2201 = vmatprep.subr.mxu0 0.0
  %2202 = vmatpush1.msra.mxu0 0.0
  %2203 = vmatprep.subr.mxu0 0.0
  %2204 = vmatpush1.msra.mxu0 0.0
  %2205 = vmatprep.subr.mxu0 0.0
  %2206 = vmatpush1.msra.mxu0 0.0
  %2207 = vmatprep.subr.mxu0 0.0
  %2208 = vmatpush1.msra.mxu0 0.0
  %2209 = vmatprep.subr.mxu0 0.0
  %2210 = vmatpush1.msra.mxu0 0.0
  %2211 = vmatprep.subr.mxu0 0.0
  %2212 = vmatpush1.msra.mxu0 0.0
  %2213 = vmatprep.subr.mxu0 0.0
  %2214 = vmatpush1.msra.mxu0 0.0
  %2215 = vmatprep.subr.mxu0 0.0
  %2216 = vmatpush1.msra.mxu0 0.0
  %2217 = vmatprep.subr.mxu0 0.0
  %2218 = vmatpush1.msra.mxu0 0.0
  %2219 = vmatprep.subr.mxu0 0.0
  %2220 = vmatpush1.msra.mxu0 0.0
  %2221 = vmatprep.subr.mxu0 0.0
  %2222 = vmatpush1.msra.mxu0 0.0
  %2223 = vmatprep.subr.mxu0 0.0
  %2224 = vmatpush1.msra.mxu0 0.0
  %2225 = vmatprep.subr.mxu0 0.0
  %2226 = vmatpush1.msra.mxu0 0.0
  %2227 = vmatprep.subr.mxu0 0.0
  %2228 = vmatpush1.msra.mxu0 0.0
  %2229 = vmatprep.subr.mxu0 0.0
  %2230 = vmatpush1.msra.mxu0 0.0
  %2231 = vmatprep.subr.mxu0 0.0
  %2232 = vmatpush1.msra.mxu0 0.0
  %2233 = vmatprep.subr.mxu0 0.0
  %2234 = vmatpush1.msra.mxu0 0.0
  %2235 = vmatprep.subr.mxu0 0.0
  %2236 = vmatpush1.msra.mxu0 0.0
  %2237 = vmatprep.subr.mxu0 0.0
  %2238 = vmatpush1.msra.mxu0 0.0
  %2239 = vmatprep.mubr.f32.mxu0 0.0
  %2240 = vmatmul.mubr.f32.gmra.mrb[0].mxu0 %v2128
  %v2241 = vpop.f32.mrb[0].mxu0
  %v2242 = vadd.f32 0.0, %v2241
  %v2243 = vpop.f32.mrb[0].mxu0
  %2244 = vmatprep.mubr.f32.mxu0 0.0
  %2245 = vmatmul.mubr.f32.gmra.mrb[0].mxu0 %v2131
  %v2246 = vpop.f32.mrb[0].mxu0
  %v2247 = vadd.f32 0.0, %v2246
  %v2248 = vpop.f32.mrb[0].mxu0
  %2249 = vmatprep.mubr.f32.mxu0 0.0
  %2250 = vmatmul.mubr.f32.gmra.mrb[0].mxu0 %v2134
  %v2251 = vpop.f32.mrb[0].mxu0
  %v2252 = vadd.f32 0.0, %v2251
  %v2253 = vpop.f32.mrb[0].mxu0
  %2254 = vmatprep.mubr.f32.mxu0 0.0
  %2255 = vmatmul.mubr.f32.gmra.mrb[0].mxu0 %v2137
  %v2256 = vpop.f32.mrb[0].mxu0
  %v2257 = vadd.f32 0.0, %v2256
  %v2258 = vpop.f32.mrb[0].mxu0
  %2259 = vmatprep.mubr.f32.mxu0 0.0
  %2260 = vmatmul.mubr.f32.gmra.mrb[0].mxu0 %v2140
  %v2261 = vpop.f32.mrb[0].mxu0
  %v2262 = vadd.f32 0.0, %v2261
  %v2263 = vpop.f32.mrb[0].mxu0
  %2264 = vmatprep.mubr.f32.mxu0 0.0
  %2265 = vmatmul.mubr.f32.gmra.mrb[0].mxu0 %v2143
  %v2266 = vpop.f32.mrb[0].mxu0
  %v2267 = vadd.f32 0.0, %v2266
  %v2268 = vpop.f32.mrb[0].mxu0
  %2269 = vmatprep.mubr.f32.mxu0 0.0
  %2270 = vmatmul.mubr.f32.gmra.mrb[0].mxu0 %v2146
  %v2271 = vpop.f32.mrb[0].mxu0
  %v2272 = vadd.f32 0.0, %v2271
  %v2273 = vpop.f32.mrb[0].mxu0
  %2274 = vmatprep.mubr.f32.mxu0 0.0
  %2275 = vmatmul.mubr.f32.gmra.mrb[0].mxu0 %v2149
  %v2276 = vpop.f32.mrb[0].mxu0
  %v2277 = vadd.f32 0.0, %v2276
  %v2278 = vpop.f32.mrb[0].mxu0
  %2279 = vmatprep.mubr.f32.mxu0 0.0
  %2280 = vmatmul.mubr.f32.gmra.mrb[0].mxu0 %v2152
  %v2281 = vpop.f32.mrb[0].mxu0
  %v2282 = vadd.f32 0.0, %v2281
  %v2283 = vpop.f32.mrb[0].mxu0
  %2284 = vmatprep.mubr.f32.mxu0 0.0
  %2285 = vmatmul.mubr.f32.gmra.mrb[0].mxu0 %v2155
  %v2286 = vpop.f32.mrb[0].mxu0
  %v2287 = vadd.f32 0.0, %v2286
  %v2288 = vpop.f32.mrb[0].mxu0
  %2289 = vmatprep.mubr.f32.mxu0 0.0
  %2290 = vmatmul.mubr.f32.gmra.mrb[0].mxu0 %v2158
  %v2291 = vpop.f32.mrb[0].mxu0
  %v2292 = vadd.f32 0.0, %v2291
  %v2293 = vpop.f32.mrb[0].mxu0
  %2294 = vmatprep.mubr.f32.mxu0 0.0
  %2295 = vmatmul.mubr.f32.gmra.mrb[0].mxu0 %v2161
  %v2296 = vpop.f32.mrb[0].mxu0
  %v2297 = vadd.f32 0.0, %v2296
  %v2298 = vpop.f32.mrb[0].mxu0
  %2299 = vmatprep.mubr.f32.mxu0 0.0
  %2300 = vmatmul.mubr.f32.gmra.mrb[0].mxu0 %v2164
  %v2301 = vpop.f32.mrb[0].mxu0
  %v2302 = vadd.f32 0.0, %v2301
  %v2303 = vpop.f32.mrb[0].mxu0
  %2304 = vmatprep.mubr.f32.mxu0 0.0
  %2305 = vmatmul.mubr.f32.gmra.mrb[0].mxu0 %v2167
  %v2306 = vpop.f32.mrb[0].mxu0
  %v2307 = vadd.f32 0.0, %v2306
  %v2308 = vpop.f32.mrb[0].mxu0
  %2309 = vmatprep.mubr.f32.mxu0 0.0
  %2310 = vmatmul.mubr.f32.gmra.mrb[0].mxu0 %v2170
  %v2311 = vpop.f32.mrb[0].mxu0
  %v2312 = vadd.f32 0.0, %v2311
  %v2313 = vpop.f32.mrb[0].mxu0
  %2314 = vmatprep.mubr.f32.mxu0 0.0
  %2315 = vmatmul.mubr.f32.gmra.mrb[0].mxu0 %v2173
  %v2316 = vpop.f32.mrb[0].mxu0
  %v2317 = vadd.f32 0.0, %v2316
  %v2318 = vpop.f32.mrb[0].mxu0
  %2319 = vdwg.mxu0
  %v2321 = vsel %vm71, %v2061, 0
  %v2324 = vsel %vm71, %v2064, 0
  %v2327 = vsel %vm71, %v2069, 0
  %v2330 = vsel %vm71, %v2072, 0
  %v2333 = vsel %vm71, %v2077, 0
  %v2336 = vsel %vm71, %v2080, 0
  %v2339 = vsel %vm71, %v2085, 0
  %v2342 = vsel %vm71, %v2088, 0
  %v2345 = vsel %vm71, %v2093, 0
  %v2348 = vsel %vm71, %v2096, 0
  %v2351 = vsel %vm71, %v2101, 0
  %v2354 = vsel %vm71, %v2104, 0
  %v2357 = vsel %vm71, %v2109, 0
  %v2360 = vsel %vm71, %v2112, 0
  %v2363 = vsel %vm71, %v2117, 0
  %v2366 = vsel %vm71, %v2120, 0
  %2368 = vmatprep.subr.mxu0 0.0
  %2369 = vmatpush1.msra.mxu0 %v2123
  %2370 = vmatprep.subr.mxu0 0.0
  %2371 = vmatpush1.msra.mxu0 %v2124
  %2372 = vmatprep.subr.mxu0 0.0
  %2373 = vmatpush1.msra.mxu0 0.0
  %2374 = vmatprep.subr.mxu0 0.0
  %2375 = vmatpush1.msra.mxu0 0.0
  %2376 = vmatprep.subr.mxu0 0.0
  %2377 = vmatpush1.msra.mxu0 0.0
  %2378 = vmatprep.subr.mxu0 0.0
  %2379 = vmatpush1.msra.mxu0 0.0
  %2380 = vmatprep.subr.mxu0 0.0
  %2381 = vmatpush1.msra.mxu0 0.0
  %2382 = vmatprep.subr.mxu0 0.0
  %2383 = vmatpush1.msra.mxu0 0.0
  %2384 = vmatprep.subr.mxu0 0.0
  %2385 = vmatpush1.msra.mxu0 0.0
  %2386 = vmatprep.subr.mxu0 0.0
  %2387 = vmatpush1.msra.mxu0 0.0
  %2388 = vmatprep.subr.mxu0 0.0
  %2389 = vmatpush1.msra.mxu0 0.0
  %2390 = vmatprep.subr.mxu0 0.0
  %2391 = vmatpush1.msra.mxu0 0.0
  %2392 = vmatprep.subr.mxu0 0.0
  %2393 = vmatpush1.msra.mxu0 0.0
  %2394 = vmatprep.subr.mxu0 0.0
  %2395 = vmatpush1.msra.mxu0 0.0
  %2396 = vmatprep.subr.mxu0 0.0
  %2397 = vmatpush1.msra.mxu0 0.0
  %2398 = vmatprep.subr.mxu0 0.0
  %2399 = vmatpush1.msra.mxu0 0.0
  %2400 = vmatprep.subr.mxu0 0.0
  %2401 = vmatpush1.msra.mxu0 0.0
  %2402 = vmatprep.subr.mxu0 0.0
  %2403 = vmatpush1.msra.mxu0 0.0
  %2404 = vmatprep.subr.mxu0 0.0
  %2405 = vmatpush1.msra.mxu0 0.0
  %2406 = vmatprep.subr.mxu0 0.0
  %2407 = vmatpush1.msra.mxu0 0.0
  %2408 = vmatprep.subr.mxu0 0.0
  %2409 = vmatpush1.msra.mxu0 0.0
  %2410 = vmatprep.subr.mxu0 0.0
  %2411 = vmatpush1.msra.mxu0 0.0
  %2412 = vmatprep.subr.mxu0 0.0
  %2413 = vmatpush1.msra.mxu0 0.0
  %2414 = vmatprep.subr.mxu0 0.0
  %2415 = vmatpush1.msra.mxu0 0.0
  %2416 = vmatprep.subr.mxu0 0.0
  %2417 = vmatpush1.msra.mxu0 0.0
  %2418 = vmatprep.subr.mxu0 0.0
  %2419 = vmatpush1.msra.mxu0 0.0
  %2420 = vmatprep.subr.mxu0 0.0
  %2421 = vmatpush1.msra.mxu0 0.0
  %2422 = vmatprep.subr.mxu0 0.0
  %2423 = vmatpush1.msra.mxu0 0.0
  %2424 = vmatprep.subr.mxu0 0.0
  %2425 = vmatpush1.msra.mxu0 0.0
  %2426 = vmatprep.subr.mxu0 0.0
  %2427 = vmatpush1.msra.mxu0 0.0
  %2428 = vmatprep.subr.mxu0 0.0
  %2429 = vmatpush1.msra.mxu0 0.0
  %2430 = vmatprep.subr.mxu0 0.0
  %2431 = vmatpush1.msra.mxu0 0.0
  %2432 = vmatprep.mubr.f32.mxu0 0.0
  %2433 = vmatmul.mubr.f32.gmra.mrb[0].mxu0 %v2321
  %v2434 = vpop.f32.mrb[0].mxu0
  %v2435 = vadd.f32 %v2242, %v2434
  %v2436 = vpop.f32.mrb[0].mxu0
  %2437 = vmatprep.mubr.f32.mxu0 0.0
  %2438 = vmatmul.mubr.f32.gmra.mrb[0].mxu0 %v2324
  %v2439 = vpop.f32.mrb[0].mxu0
  %v2440 = vadd.f32 %v2247, %v2439
  %v2441 = vpop.f32.mrb[0].mxu0
  %2442 = vmatprep.mubr.f32.mxu0 0.0
  %2443 = vmatmul.mubr.f32.gmra.mrb[0].mxu0 %v2327
  %v2444 = vpop.f32.mrb[0].mxu0
  %v2445 = vadd.f32 %v2252, %v2444
  %v2446 = vpop.f32.mrb[0].mxu0
  %2447 = vmatprep.mubr.f32.mxu0 0.0
  %2448 = vmatmul.mubr.f32.gmra.mrb[0].mxu0 %v2330
  %v2449 = vpop.f32.mrb[0].mxu0
  %v2450 = vadd.f32 %v2257, %v2449
  %v2451 = vpop.f32.mrb[0].mxu0
  %2452 = vmatprep.mubr.f32.mxu0 0.0
  %2453 = vmatmul.mubr.f32.gmra.mrb[0].mxu0 %v2333
  %v2454 = vpop.f32.mrb[0].mxu0
  %v2455 = vadd.f32 %v2262, %v2454
  %v2456 = vpop.f32.mrb[0].mxu0
  %2457 = vmatprep.mubr.f32.mxu0 0.0
  %2458 = vmatmul.mubr.f32.gmra.mrb[0].mxu0 %v2336
  %v2459 = vpop.f32.mrb[0].mxu0
  %v2460 = vadd.f32 %v2267, %v2459
  %v2461 = vpop.f32.mrb[0].mxu0
  %2462 = vmatprep.mubr.f32.mxu0 0.0
  %2463 = vmatmul.mubr.f32.gmra.mrb[0].mxu0 %v2339
  %v2464 = vpop.f32.mrb[0].mxu0
  %v2465 = vadd.f32 %v2272, %v2464
  %v2466 = vpop.f32.mrb[0].mxu0
  %2467 = vmatprep.mubr.f32.mxu0 0.0
  %2468 = vmatmul.mubr.f32.gmra.mrb[0].mxu0 %v2342
  %v2469 = vpop.f32.mrb[0].mxu0
  %v2470 = vadd.f32 %v2277, %v2469
  %v2471 = vpop.f32.mrb[0].mxu0
  %2472 = vmatprep.mubr.f32.mxu0 0.0
  %2473 = vmatmul.mubr.f32.gmra.mrb[0].mxu0 %v2345
  %v2474 = vpop.f32.mrb[0].mxu0
  %v2475 = vadd.f32 %v2282, %v2474
  %v2476 = vpop.f32.mrb[0].mxu0
  %2477 = vmatprep.mubr.f32.mxu0 0.0
  %2478 = vmatmul.mubr.f32.gmra.mrb[0].mxu0 %v2348
  %v2479 = vpop.f32.mrb[0].mxu0
  %v2480 = vadd.f32 %v2287, %v2479
  %v2481 = vpop.f32.mrb[0].mxu0
  %2482 = vmatprep.mubr.f32.mxu0 0.0
  %2483 = vmatmul.mubr.f32.gmra.mrb[0].mxu0 %v2351
  %v2484 = vpop.f32.mrb[0].mxu0
  %v2485 = vadd.f32 %v2292, %v2484
  %v2486 = vpop.f32.mrb[0].mxu0
  %2487 = vmatprep.mubr.f32.mxu0 0.0
  %2488 = vmatmul.mubr.f32.gmra.mrb[0].mxu0 %v2354
  %v2489 = vpop.f32.mrb[0].mxu0
  %v2490 = vadd.f32 %v2297, %v2489
  %v2491 = vpop.f32.mrb[0].mxu0
  %2492 = vmatprep.mubr.f32.mxu0 0.0
  %2493 = vmatmul.mubr.f32.gmra.mrb[0].mxu0 %v2357
  %v2494 = vpop.f32.mrb[0].mxu0
  %v2495 = vadd.f32 %v2302, %v2494
  %v2496 = vpop.f32.mrb[0].mxu0
  %2497 = vmatprep.mubr.f32.mxu0 0.0
  %2498 = vmatmul.mubr.f32.gmra.mrb[0].mxu0 %v2360
  %v2499 = vpop.f32.mrb[0].mxu0
  %v2500 = vadd.f32 %v2307, %v2499
  %v2501 = vpop.f32.mrb[0].mxu0
  %2502 = vmatprep.mubr.f32.mxu0 0.0
  %2503 = vmatmul.mubr.f32.gmra.mrb[0].mxu0 %v2363
  %v2504 = vpop.f32.mrb[0].mxu0
  %v2505 = vadd.f32 %v2312, %v2504
  %v2506 = vpop.f32.mrb[0].mxu0
  %2507 = vmatprep.mubr.f32.mxu0 0.0
  %2508 = vmatmul.mubr.f32.gmra.mrb[0].mxu0 %v2366
  %v2509 = vpop.f32.mrb[0].mxu0
  %v2510 = vadd.f32 %v2317, %v2509
  %v2511 = vpop.f32.mrb[0].mxu0
  %2512 = vdwg.mxu0
  %v2513 = vld [vmem:[%s7] sm:$0xff]
  %v2514 = vld [vmem:[%s7 + $0x8] sm:$0xff]
  %v2516 = vsel %vm71, %v55, 0
  %v2519 = vsel %vm71, %v56, 0
  %v2522 = vsel %vm71, %v57, 0
  %v2525 = vsel %vm71, %v58, 0
  %v2528 = vsel %vm71, %v59, 0
  %v2531 = vsel %vm71, %v60, 0
  %v2534 = vsel %vm71, %v61, 0
  %v2537 = vsel %vm71, %v62, 0
  %v2540 = vsel %vm71, %v63, 0
  %v2543 = vsel %vm71, %v64, 0
  %v2546 = vsel %vm71, %v65, 0
  %v2549 = vsel %vm71, %v66, 0
  %v2552 = vsel %vm71, %v67, 0
  %v2555 = vsel %vm71, %v68, 0
  %v2558 = vsel %vm71, %v69, 0
  %v2561 = vsel %vm71, %v70, 0
  %2563 = vmatprep.subr.mxu0 0.0
  %2564 = vmatpush1.msra.mxu0 %v2513
  %2565 = vmatprep.subr.mxu0 0.0
  %2566 = vmatpush1.msra.mxu0 %v2514
  %2567 = vmatprep.subr.mxu0 0.0
  %2568 = vmatpush1.msra.mxu0 0.0
  %2569 = vmatprep.subr.mxu0 0.0
  %2570 = vmatpush1.msra.mxu0 0.0
  %2571 = vmatprep.subr.mxu0 0.0
  %2572 = vmatpush1.msra.mxu0 0.0
  %2573 = vmatprep.subr.mxu0 0.0
  %2574 = vmatpush1.msra.mxu0 0.0
  %2575 = vmatprep.subr.mxu0 0.0
  %2576 = vmatpush1.msra.mxu0 0.0
  %2577 = vmatprep.subr.mxu0 0.0
  %2578 = vmatpush1.msra.mxu0 0.0
  %2579 = vmatprep.subr.mxu0 0.0
  %2580 = vmatpush1.msra.mxu0 0.0
  %2581 = vmatprep.subr.mxu0 0.0
  %2582 = vmatpush1.msra.mxu0 0.0
  %2583 = vmatprep.subr.mxu0 0.0
  %2584 = vmatpush1.msra.mxu0 0.0
  %2585 = vmatprep.subr.mxu0 0.0
  %2586 = vmatpush1.msra.mxu0 0.0
  %2587 = vmatprep.subr.mxu0 0.0
  %2588 = vmatpush1.msra.mxu0 0.0
  %2589 = vmatprep.subr.mxu0 0.0
  %2590 = vmatpush1.msra.mxu0 0.0
  %2591 = vmatprep.subr.mxu0 0.0
  %2592 = vmatpush1.msra.mxu0 0.0
  %2593 = vmatprep.subr.mxu0 0.0
  %2594 = vmatpush1.msra.mxu0 0.0
  %2595 = vmatprep.subr.mxu0 0.0
  %2596 = vmatpush1.msra.mxu0 0.0
  %2597 = vmatprep.subr.mxu0 0.0
  %2598 = vmatpush1.msra.mxu0 0.0
  %2599 = vmatprep.subr.mxu0 0.0
  %2600 = vmatpush1.msra.mxu0 0.0
  %2601 = vmatprep.subr.mxu0 0.0
  %2602 = vmatpush1.msra.mxu0 0.0
  %2603 = vmatprep.subr.mxu0 0.0
  %2604 = vmatpush1.msra.mxu0 0.0
  %2605 = vmatprep.subr.mxu0 0.0
  %2606 = vmatpush1.msra.mxu0 0.0
  %2607 = vmatprep.subr.mxu0 0.0
  %2608 = vmatpush1.msra.mxu0 0.0
  %2609 = vmatprep.subr.mxu0 0.0
  %2610 = vmatpush1.msra.mxu0 0.0
  %2611 = vmatprep.subr.mxu0 0.0
  %2612 = vmatpush1.msra.mxu0 0.0
  %2613 = vmatprep.subr.mxu0 0.0
  %2614 = vmatpush1.msra.mxu0 0.0
  %2615 = vmatprep.subr.mxu0 0.0
  %2616 = vmatpush1.msra.mxu0 0.0
  %2617 = vmatprep.subr.mxu0 0.0
  %2618 = vmatpush1.msra.mxu0 0.0
  %2619 = vmatprep.subr.mxu0 0.0
  %2620 = vmatpush1.msra.mxu0 0.0
  %2621 = vmatprep.subr.mxu0 0.0
  %2622 = vmatpush1.msra.mxu0 0.0
  %2623 = vmatprep.subr.mxu0 0.0
  %2624 = vmatpush1.msra.mxu0 0.0
  %2625 = vmatprep.subr.mxu0 0.0
  %2626 = vmatpush1.msra.mxu0 0.0
  %2627 = vmatprep.mubr.f32.mxu0 0.0
  %2628 = vmatmul.mubr.f32.gmra.mrb[0].mxu0 %v2516
  %v2629 = vpop.f32.mrb[0].mxu0
  %v2630 = vadd.f32 0.0, %v2629
  %v2631 = vpop.f32.mrb[0].mxu0
  %2632 = vmatprep.mubr.f32.mxu0 0.0
  %2633 = vmatmul.mubr.f32.gmra.mrb[0].mxu0 %v2519
  %v2634 = vpop.f32.mrb[0].mxu0
  %v2635 = vadd.f32 0.0, %v2634
  %v2636 = vpop.f32.mrb[0].mxu0
  %2637 = vmatprep.mubr.f32.mxu0 0.0
  %2638 = vmatmul.mubr.f32.gmra.mrb[0].mxu0 %v2522
  %v2639 = vpop.f32.mrb[0].mxu0
  %v2640 = vadd.f32 0.0, %v2639
  %v2641 = vpop.f32.mrb[0].mxu0
  %2642 = vmatprep.mubr.f32.mxu0 0.0
  %2643 = vmatmul.mubr.f32.gmra.mrb[0].mxu0 %v2525
  %v2644 = vpop.f32.mrb[0].mxu0
  %v2645 = vadd.f32 0.0, %v2644
  %v2646 = vpop.f32.mrb[0].mxu0
  %2647 = vmatprep.mubr.f32.mxu0 0.0
  %2648 = vmatmul.mubr.f32.gmra.mrb[0].mxu0 %v2528
  %v2649 = vpop.f32.mrb[0].mxu0
  %v2650 = vadd.f32 0.0, %v2649
  %v2651 = vpop.f32.mrb[0].mxu0
  %2652 = vmatprep.mubr.f32.mxu0 0.0
  %2653 = vmatmul.mubr.f32.gmra.mrb[0].mxu0 %v2531
  %v2654 = vpop.f32.mrb[0].mxu0
  %v2655 = vadd.f32 0.0, %v2654
  %v2656 = vpop.f32.mrb[0].mxu0
  %2657 = vmatprep.mubr.f32.mxu0 0.0
  %2658 = vmatmul.mubr.f32.gmra.mrb[0].mxu0 %v2534
  %v2659 = vpop.f32.mrb[0].mxu0
  %v2660 = vadd.f32 0.0, %v2659
  %v2661 = vpop.f32.mrb[0].mxu0
  %2662 = vmatprep.mubr.f32.mxu0 0.0
  %2663 = vmatmul.mubr.f32.gmra.mrb[0].mxu0 %v2537
  %v2664 = vpop.f32.mrb[0].mxu0
  %v2665 = vadd.f32 0.0, %v2664
  %v2666 = vpop.f32.mrb[0].mxu0
  %2667 = vmatprep.mubr.f32.mxu0 0.0
  %2668 = vmatmul.mubr.f32.gmra.mrb[0].mxu0 %v2540
  %v2669 = vpop.f32.mrb[0].mxu0
  %v2670 = vadd.f32 0.0, %v2669
  %v2671 = vpop.f32.mrb[0].mxu0
  %2672 = vmatprep.mubr.f32.mxu0 0.0
  %2673 = vmatmul.mubr.f32.gmra.mrb[0].mxu0 %v2543
  %v2674 = vpop.f32.mrb[0].mxu0
  %v2675 = vadd.f32 0.0, %v2674
  %v2676 = vpop.f32.mrb[0].mxu0
  %2677 = vmatprep.mubr.f32.mxu0 0.0
  %2678 = vmatmul.mubr.f32.gmra.mrb[0].mxu0 %v2546
  %v2679 = vpop.f32.mrb[0].mxu0
  %v2680 = vadd.f32 0.0, %v2679
  %v2681 = vpop.f32.mrb[0].mxu0
  %2682 = vmatprep.mubr.f32.mxu0 0.0
  %2683 = vmatmul.mubr.f32.gmra.mrb[0].mxu0 %v2549
  %v2684 = vpop.f32.mrb[0].mxu0
  %v2685 = vadd.f32 0.0, %v2684
  %v2686 = vpop.f32.mrb[0].mxu0
  %2687 = vmatprep.mubr.f32.mxu0 0.0
  %2688 = vmatmul.mubr.f32.gmra.mrb[0].mxu0 %v2552
  %v2689 = vpop.f32.mrb[0].mxu0
  %v2690 = vadd.f32 0.0, %v2689
  %v2691 = vpop.f32.mrb[0].mxu0
  %2692 = vmatprep.mubr.f32.mxu0 0.0
  %2693 = vmatmul.mubr.f32.gmra.mrb[0].mxu0 %v2555
  %v2694 = vpop.f32.mrb[0].mxu0
  %v2695 = vadd.f32 0.0, %v2694
  %v2696 = vpop.f32.mrb[0].mxu0
  %2697 = vmatprep.mubr.f32.mxu0 0.0
  %2698 = vmatmul.mubr.f32.gmra.mrb[0].mxu0 %v2558
  %v2699 = vpop.f32.mrb[0].mxu0
  %v2700 = vadd.f32 0.0, %v2699
  %v2701 = vpop.f32.mrb[0].mxu0
  %2702 = vmatprep.mubr.f32.mxu0 0.0
  %2703 = vmatmul.mubr.f32.gmra.mrb[0].mxu0 %v2561
  %v2704 = vpop.f32.mrb[0].mxu0
  %v2705 = vadd.f32 0.0, %v2704
  %v2706 = vpop.f32.mrb[0].mxu0
  %2707 = vdwg.mxu0
  %v2708 = vadd.f32 %v2435, %v2630
  %v2709 = vadd.f32 %v2440, %v2635
  %v2710 = vadd.f32 %v2445, %v2640
  %v2711 = vadd.f32 %v2450, %v2645
  %v2712 = vadd.f32 %v2455, %v2650
  %v2713 = vadd.f32 %v2460, %v2655
  %v2714 = vadd.f32 %v2465, %v2660
  %v2715 = vadd.f32 %v2470, %v2665
  %v2716 = vadd.f32 %v2475, %v2670
  %v2717 = vadd.f32 %v2480, %v2675
  %v2718 = vadd.f32 %v2485, %v2680
  %v2719 = vadd.f32 %v2490, %v2685
  %v2720 = vadd.f32 %v2495, %v2690
  %v2721 = vadd.f32 %v2500, %v2695
  %v2722 = vadd.f32 %v2505, %v2700
  %v2723 = vadd.f32 %v2510, %v2705
  %v2724 = vld [vmem:[%s8] sm:$0x1]
  %v2726 = vlaneseq
  %v2727 = vshrl.u32 %v2726, 7
  %v2728 = vsub.s32 0, %v2727
  %v2729 = vrot.slane %v2724, %v2728
  %v2731 = vadd.f32 %v2708, %v2729
  %v2732 = vadd.f32 %v2709, %v2729
  %v2733 = vadd.f32 %v2710, %v2729
  %v2734 = vadd.f32 %v2711, %v2729
  %v2735 = vadd.f32 %v2712, %v2729
  %v2736 = vadd.f32 %v2713, %v2729
  %v2737 = vadd.f32 %v2714, %v2729
  %v2738 = vadd.f32 %v2715, %v2729
  %v2739 = vadd.f32 %v2716, %v2729
  %v2740 = vadd.f32 %v2717, %v2729
  %v2741 = vadd.f32 %v2718, %v2729
  %v2742 = vadd.f32 %v2719, %v2729
  %v2743 = vadd.f32 %v2720, %v2729
  %v2744 = vadd.f32 %v2721, %v2729
  %v2745 = vadd.f32 %v2722, %v2729
  %v2746 = vadd.f32 %v2723, %v2729
  %v2747 = vsel %vm71, %v2731, 0.0
  %v2748 = vsel %vm71, %v2732, 0.0
  %v2749 = vadd.f32 %v2747, %v2748
  %v2750 = vsel %vm71, %v2733, 0.0
  %v2751 = vadd.f32 %v2749, %v2750
  %v2752 = vsel %vm71, %v2734, 0.0
  %v2753 = vadd.f32 %v2751, %v2752
  %v2754 = vsel %vm71, %v2735, 0.0
  %v2755 = vadd.f32 %v2753, %v2754
  %v2756 = vsel %vm71, %v2736, 0.0
  %v2757 = vadd.f32 %v2755, %v2756
  %v2758 = vsel %vm71, %v2737, 0.0
  %v2759 = vadd.f32 %v2757, %v2758
  %v2760 = vsel %vm71, %v2738, 0.0
  %v2761 = vadd.f32 %v2759, %v2760
  %v2762 = vrot.slane %v2761, 4
  %v2763 = vadd.f32 %v2761, %v2762
  %v2764 = vrot.slane %v2763, 2
  %v2765 = vadd.f32 %v2763, %v2764
  %v2766 = vrot.slane %v2765, 1
  %v2767 = vadd.f32 %v2765, %v2766
  %v2768 = vsel %vm71, %v2739, 0.0
  %v2769 = vsel %vm71, %v2740, 0.0
  %v2770 = vadd.f32 %v2768, %v2769
  %v2771 = vsel %vm71, %v2741, 0.0
  %v2772 = vadd.f32 %v2770, %v2771
  %v2773 = vsel %vm71, %v2742, 0.0
  %v2774 = vadd.f32 %v2772, %v2773
  %v2775 = vsel %vm71, %v2743, 0.0
  %v2776 = vadd.f32 %v2774, %v2775
  %v2777 = vsel %vm71, %v2744, 0.0
  %v2778 = vadd.f32 %v2776, %v2777
  %v2779 = vsel %vm71, %v2745, 0.0
  %v2780 = vadd.f32 %v2778, %v2779
  %v2781 = vsel %vm71, %v2746, 0.0
  %v2782 = vadd.f32 %v2780, %v2781
  %v2783 = vrot.slane %v2782, 4
  %v2784 = vadd.f32 %v2782, %v2783
  %v2785 = vrot.slane %v2784, 2
  %v2786 = vadd.f32 %v2784, %v2785
  %v2787 = vrot.slane %v2786, 1
  %v2788 = vadd.f32 %v2786, %v2787
  %v2789 = vrcp.pop 64.0
  %v2790 = vmul.f32 %v2767, %v2789
  %v2791 = vmul.f32 %v2788, %v2789
  %v2792 = vld [vmem:[%s9] sm:$0xff]
  %v2793 = vld [vmem:[%s9 + $0x8] sm:$0xff]
  %vm2796 = vcmask 1041409
  %v2797 = vsel %vm2796, %v2791, %v2790
  %v2798 = vsel %vm71, %v2797, 0
  %2800 = vmatprep.subr.mxu0 0.0
  %2801 = vmatpush1.msra.mxu0 %v2792
  %2802 = vmatprep.subr.mxu0 0.0
  %2803 = vmatpush1.msra.mxu0 %v2793
  %2804 = vmatprep.subr.mxu0 0.0
  %2805 = vmatpush1.msra.mxu0 0.0
  %2806 = vmatprep.subr.mxu0 0.0
  %2807 = vmatpush1.msra.mxu0 0.0
  %2808 = vmatprep.subr.mxu0 0.0
  %2809 = vmatpush1.msra.mxu0 0.0
  %2810 = vmatprep.subr.mxu0 0.0
  %2811 = vmatpush1.msra.mxu0 0.0
  %2812 = vmatprep.subr.mxu0 0.0
  %2813 = vmatpush1.msra.mxu0 0.0
  %2814 = vmatprep.subr.mxu0 0.0
  %2815 = vmatpush1.msra.mxu0 0.0
  %2816 = vmatprep.subr.mxu0 0.0
  %2817 = vmatpush1.msra.mxu0 0.0
  %2818 = vmatprep.subr.mxu0 0.0
  %2819 = vmatpush1.msra.mxu0 0.0
  %2820 = vmatprep.subr.mxu0 0.0
  %2821 = vmatpush1.msra.mxu0 0.0
  %2822 = vmatprep.subr.mxu0 0.0
  %2823 = vmatpush1.msra.mxu0 0.0
  %2824 = vmatprep.subr.mxu0 0.0
  %2825 = vmatpush1.msra.mxu0 0.0
  %2826 = vmatprep.subr.mxu0 0.0
  %2827 = vmatpush1.msra.mxu0 0.0
  %2828 = vmatprep.subr.mxu0 0.0
  %2829 = vmatpush1.msra.mxu0 0.0
  %2830 = vmatprep.subr.mxu0 0.0
  %2831 = vmatpush1.msra.mxu0 0.0
  %2832 = vmatprep.subr.mxu0 0.0
  %2833 = vmatpush1.msra.mxu0 0.0
  %2834 = vmatprep.subr.mxu0 0.0
  %2835 = vmatpush1.msra.mxu0 0.0
  %2836 = vmatprep.subr.mxu0 0.0
  %2837 = vmatpush1.msra.mxu0 0.0
  %2838 = vmatprep.subr.mxu0 0.0
  %2839 = vmatpush1.msra.mxu0 0.0
  %2840 = vmatprep.subr.mxu0 0.0
  %2841 = vmatpush1.msra.mxu0 0.0
  %2842 = vmatprep.subr.mxu0 0.0
  %2843 = vmatpush1.msra.mxu0 0.0
  %2844 = vmatprep.subr.mxu0 0.0
  %2845 = vmatpush1.msra.mxu0 0.0
  %2846 = vmatprep.subr.mxu0 0.0
  %2847 = vmatpush1.msra.mxu0 0.0
  %2848 = vmatprep.subr.mxu0 0.0
  %2849 = vmatpush1.msra.mxu0 0.0
  %2850 = vmatprep.subr.mxu0 0.0
  %2851 = vmatpush1.msra.mxu0 0.0
  %2852 = vmatprep.subr.mxu0 0.0
  %2853 = vmatpush1.msra.mxu0 0.0
  %2854 = vmatprep.subr.mxu0 0.0
  %2855 = vmatpush1.msra.mxu0 0.0
  %2856 = vmatprep.subr.mxu0 0.0
  %2857 = vmatpush1.msra.mxu0 0.0
  %2858 = vmatprep.subr.mxu0 0.0
  %2859 = vmatpush1.msra.mxu0 0.0
  %2860 = vmatprep.subr.mxu0 0.0
  %2861 = vmatpush1.msra.mxu0 0.0
  %2862 = vmatprep.subr.mxu0 0.0
  %2863 = vmatpush1.msra.mxu0 0.0
  %2864 = vmatprep.mubr.f32.mxu0 0.0
  %2865 = vmatmul.mubr.f32.gmra.mrb[0].mxu0 %v2798
  %v2866 = vpop.f32.mrb[0].mxu0
  %v2867 = vadd.f32 0.0, %v2866
  %v2868 = vpop.f32.mrb[0].mxu0
  %2869 = vdwg.mxu0
  %v2870 = vmax.f32 %v2867, 0.0
  %v2871 = vld [vmem:[%s10] sm:$0x3]
  %vm2872 = vcmask 15360
  %v2874 = vsel %vm2872, %v2870, 0
  %vm2876 = vcmask 1041408
  %v2878 = vsel %vm2876, %v2871, 0
  %2880 = vmatprep.subr.mxu0 0.0
  %2881 = vmatpush1.msra.mxu0 %v2878
  %2882 = vmatprep.subr.mxu0 0.0
  %2883 = vmatpush1.msra.mxu0 0.0
  %2884 = vmatprep.subr.mxu0 0.0
  %2885 = vmatpush1.msra.mxu0 0.0
  %2886 = vmatprep.subr.mxu0 0.0
  %2887 = vmatpush1.msra.mxu0 0.0
  %2888 = vmatprep.subr.mxu0 0.0
  %2889 = vmatpush1.msra.mxu0 0.0
  %2890 = vmatprep.subr.mxu0 0.0
  %2891 = vmatpush1.msra.mxu0 0.0
  %2892 = vmatprep.subr.mxu0 0.0
  %2893 = vmatpush1.msra.mxu0 0.0
  %2894 = vmatprep.subr.mxu0 0.0
  %2895 = vmatpush1.msra.mxu0 0.0
  %2896 = vmatprep.subr.mxu0 0.0
  %2897 = vmatpush1.msra.mxu0 0.0
  %2898 = vmatprep.subr.mxu0 0.0
  %2899 = vmatpush1.msra.mxu0 0.0
  %2900 = vmatprep.subr.mxu0 0.0
  %2901 = vmatpush1.msra.mxu0 0.0
  %2902 = vmatprep.subr.mxu0 0.0
  %2903 = vmatpush1.msra.mxu0 0.0
  %2904 = vmatprep.subr.mxu0 0.0
  %2905 = vmatpush1.msra.mxu0 0.0
  %2906 = vmatprep.subr.mxu0 0.0
  %2907 = vmatpush1.msra.mxu0 0.0
  %2908 = vmatprep.subr.mxu0 0.0
  %2909 = vmatpush1.msra.mxu0 0.0
  %2910 = vmatprep.subr.mxu0 0.0
  %2911 = vmatpush1.msra.mxu0 0.0
  %2912 = vmatprep.subr.mxu0 0.0
  %2913 = vmatpush1.msra.mxu0 0.0
  %2914 = vmatprep.subr.mxu0 0.0
  %2915 = vmatpush1.msra.mxu0 0.0
  %2916 = vmatprep.subr.mxu0 0.0
  %2917 = vmatpush1.msra.mxu0 0.0
  %2918 = vmatprep.subr.mxu0 0.0
  %2919 = vmatpush1.msra.mxu0 0.0
  %2920 = vmatprep.subr.mxu0 0.0
  %2921 = vmatpush1.msra.mxu0 0.0
  %2922 = vmatprep.subr.mxu0 0.0
  %2923 = vmatpush1.msra.mxu0 0.0
  %2924 = vmatprep.subr.mxu0 0.0
  %2925 = vmatpush1.msra.mxu0 0.0
  %2926 = vmatprep.subr.mxu0 0.0
  %2927 = vmatpush1.msra.mxu0 0.0
  %2928 = vmatprep.subr.mxu0 0.0
  %2929 = vmatpush1.msra.mxu0 0.0
  %2930 = vmatprep.subr.mxu0 0.0
  %2931 = vmatpush1.msra.mxu0 0.0
  %2932 = vmatprep.subr.mxu0 0.0
  %2933 = vmatpush1.msra.mxu0 0.0
  %2934 = vmatprep.subr.mxu0 0.0
  %2935 = vmatpush1.msra.mxu0 0.0
  %2936 = vmatprep.subr.mxu0 0.0
  %2937 = vmatpush1.msra.mxu0 0.0
  %2938 = vmatprep.subr.mxu0 0.0
  %2939 = vmatpush1.msra.mxu0 0.0
  %2940 = vmatprep.subr.mxu0 0.0
  %2941 = vmatpush1.msra.mxu0 0.0
  %2942 = vmatprep.subr.mxu0 0.0
  %2943 = vmatpush1.msra.mxu0 0.0
  %2944 = vmatprep.mubr.f32.mxu0 0.0
  %2945 = vmatmul.mubr.f32.gmra.mrb[0].mxu0 %v2874
  %v2946 = vpop.f32.mrb[0].mxu0
  %v2947 = vadd.f32 0.0, %v2946
  %v2948 = vpop.f32.mrb[0].mxu0
  %2949 = vdwg.mxu0
  %v2950 = vsub.f32 0.0, %v2947
  %v2951 = vmul.f32 %v2950, 1.442695
  %v2952 = vpow.pop %v2951
  %v2953 = vadd.f32 %v2952, 1.0
  %v2954 = vrcp.pop %v2953
  %v2955 = vmul.f32 1.0, %v2954
  %v2958 = vunpack.c.l.s4 1966171168
  %v2959 = vunpack.c.0.s8 %v2958
  %v2960 = vlaneseq
  %v2961 = vshrl.u32 %v2960, 7
  %v2962 = vsub.s32 %v2959, %v2961
  %v2963 = vrot.slane %v2955, %v2962
  %v2964 = vcombine.high %v2963, %v2963
  %v2966 = vunpack.c.l.s4 1966171168
  %v2967 = vunpack.c.0.s8 %v2966
  %v2968 = vlaneseq
  %v2969 = vshrl.u32 %v2968, 7
  %v2970 = vsub.s32 %v2967, %v2969
  %v2971 = vrot.slane %v2963, %v2970
  %v2973 = vunpack.c.l.s4 1966171168
  %v2974 = vunpack.c.0.s8 %v2973
  %v2975 = vlaneseq
  %v2976 = vshrl.u32 %v2975, 7
  %v2977 = vsub.s32 %v2974, %v2976
  %v2978 = vrot.slane %v2964, %v2977
  %v2979 = vlaneseq
  %v2980 = vshrl.u32 %v2979, 7
  %v2981 = vsub.s32 0, %v2980
  %v2982 = vrot.slane %v2971, %v2981
  %v2983 = vlaneseq
  %v2984 = vshrl.u32 %v2983, 7
  %v2985 = vsub.s32 0, %v2984
  %v2986 = vrot.slane %v2978, %v2985
  %v2989 = vmul.f32 %v2731, %v2982
  %v2990 = vmul.f32 %v2732, %v2982
  %v2991 = vmul.f32 %v2733, %v2982
  %v2992 = vmul.f32 %v2734, %v2982
  %v2993 = vmul.f32 %v2735, %v2982
  %v2994 = vmul.f32 %v2736, %v2982
  %v2995 = vmul.f32 %v2737, %v2982
  %v2996 = vmul.f32 %v2738, %v2982
  %v2997 = vmul.f32 %v2739, %v2986
  %v2998 = vmul.f32 %v2740, %v2986
  %v2999 = vmul.f32 %v2741, %v2986
  %v3000 = vmul.f32 %v2742, %v2986
  %v3001 = vmul.f32 %v2743, %v2986
  %v3002 = vmul.f32 %v2744, %v2986
  %v3003 = vmul.f32 %v2745, %v2986
  %v3004 = vmul.f32 %v2746, %v2986
  %v3005 = vadd.f32 %v2989, %v55
  %v3006 = vadd.f32 %v2990, %v56
  %v3007 = vadd.f32 %v2991, %v57
  %v3008 = vadd.f32 %v2992, %v58
  %v3009 = vadd.f32 %v2993, %v59
  %v3010 = vadd.f32 %v2994, %v60
  %v3011 = vadd.f32 %v2995, %v61
  %v3012 = vadd.f32 %v2996, %v62
  %v3013 = vadd.f32 %v2997, %v63
  %v3014 = vadd.f32 %v2998, %v64
  %v3015 = vadd.f32 %v2999, %v65
  %v3016 = vadd.f32 %v3000, %v66
  %v3017 = vadd.f32 %v3001, %v67
  %v3018 = vadd.f32 %v3002, %v68
  %v3019 = vadd.f32 %v3003, %v69
  %v3020 = vadd.f32 %v3004, %v70
  %v3021 = vpack.c.bf16 %v3005, %v3005
  %v3022 = vpack.c.bf16 %v3006, %v3006
  %v3023 = vpack.c.bf16 %v3007, %v3007
  %v3024 = vpack.c.bf16 %v3008, %v3008
  %v3025 = vpack.c.bf16 %v3009, %v3009
  %v3026 = vpack.c.bf16 %v3010, %v3010
  %v3027 = vpack.c.bf16 %v3011, %v3011
  %v3028 = vpack.c.bf16 %v3012, %v3012
  %v3029 = vpack.c.bf16 %v3013, %v3013
  %v3030 = vpack.c.bf16 %v3014, %v3014
  %v3031 = vpack.c.bf16 %v3015, %v3015
  %v3032 = vpack.c.bf16 %v3016, %v3016
  %v3033 = vpack.c.bf16 %v3017, %v3017
  %v3034 = vpack.c.bf16 %v3018, %v3018
  %v3035 = vpack.c.bf16 %v3019, %v3019
  %v3036 = vpack.c.bf16 %v3020, %v3020
  %vm3037 = vcmask 125952
  %3038 = vst.msk [vmem:[%s11] sm:$0xf] %vm3037, %v3021
  %3039 = vst.msk [vmem:[%s11 + $0x4] sm:$0xf] %vm3037, %v3022
  %3040 = vst.msk [vmem:[%s11 + $0x8] sm:$0xf] %vm3037, %v3023
  %3041 = vst.msk [vmem:[%s11 + $0xc] sm:$0xf] %vm3037, %v3024
  %3042 = vst.msk [vmem:[%s11 + $0x10] sm:$0xf] %vm3037, %v3025
  %3043 = vst.msk [vmem:[%s11 + $0x14] sm:$0xf] %vm3037, %v3026
  %3044 = vst.msk [vmem:[%s11 + $0x18] sm:$0xf] %vm3037, %v3027
  %3045 = vst.msk [vmem:[%s11 + $0x1c] sm:$0xf] %vm3037, %v3028
  %3046 = vst.msk [vmem:[%s11 + $0x20] sm:$0xf] %vm3037, %v3029
  %3047 = vst.msk [vmem:[%s11 + $0x24] sm:$0xf] %vm3037, %v3030
  %3048 = vst.msk [vmem:[%s11 + $0x28] sm:$0xf] %vm3037, %v3031
  %3049 = vst.msk [vmem:[%s11 + $0x2c] sm:$0xf] %vm3037, %v3032
  %3050 = vst.msk [vmem:[%s11 + $0x30] sm:$0xf] %vm3037, %v3033
  %3051 = vst.msk [vmem:[%s11 + $0x34] sm:$0xf] %vm3037, %v3034
  %3052 = vst.msk [vmem:[%s11 + $0x38] sm:$0xf] %vm3037, %v3035
  %3053 = vst.msk [vmem:[%s11 + $0x3c] sm:$0xf] %vm3037, %v3036
  // Predicated region
  $region46: #{drsenmk_forward.12} parent=0 // pred_check
    _
  $region47: #{drsenmk_forward.12} parent=0 // pred_check_branch
    %3055 = sbr.rel (0) target = $region49
  $region48: #{drsenmk_forward.12} parent=0 // pred_region
    _
  $region49: #{drsenmk_forward.12} parent=0 // pred_fallthru
    _
  // Predicated region
  $region50: #{drsenmk_forward.12} parent=0 // pred_check
    _
  $region51: #{drsenmk_forward.12} parent=0 // pred_check_branch
    %3057 = sbr.rel (0) target = $region53
  $region52: #{drsenmk_forward.12} parent=0 // pred_region
    _
  $region53: #{drsenmk_forward.12} parent=0 // pred_fallthru
    _

// kernel: drsenmk_forward.10
$region0: #{drsenmk_forward.10}
  #allocation0 [shape = 'u32[]', space=smem, size = 0x4, offset = 0x4, fixed_abs, tag = 'smem constant byte address 0x4 - core index']
  #allocation1 [shape = 'u32[144,128]{1,0:T(1,128)}', space=vmem, size = 0x12000, scoped, tag = 'internal scratch']
  #allocation2 [shape = 'f32[2,18,25,16]{3,2,1,0:T(8,128)}', space=vmem, size = 0x90000, scoped, tag = 'scratch operand']
  %s0 = inlined_call_operand.vmem [shape: bf16[2,16,16,16], index: 0, kind: input, shape index: {}]
  %s1 = inlined_call_operand.vmem [shape: bf16[144,3], index: 1, kind: input, shape index: {}]
  %s2 = inlined_call_operand.vmem [shape: f32[1,3], index: 2, kind: input, shape index: {}]
  %s3 = inlined_call_operand.vmem [shape: bf16[2,16,16,3], index: 3, kind: output, shape index: {}]
  %s4 = sld [smem:[#allocation0]]
  $region22: #{drsenmk_forward.10} parent=0
    _
  %s6 = ssub.s32 1, %s4
  %s7 = scalar_select 0, %s6, %s4
  // Predicated region
  $region2: #{drsenmk_forward.10} parent=0 // pred_check
    _
  $region3: #{drsenmk_forward.10} parent=0 // pred_check_branch
    %9 = sbr.rel (0) target = $region5
  $region4: #{drsenmk_forward.10} parent=0 // pred_region
    _
  $region5: #{drsenmk_forward.10} parent=0 // pred_fallthru
    _
  // Predicated region
  $region6: #{drsenmk_forward.10} parent=0 // pred_check
    _
  $region7: #{drsenmk_forward.10} parent=0 // pred_check_branch
    %11 = sbr.rel (0) target = $region9
  $region8: #{drsenmk_forward.10} parent=0 // pred_region
    _
  $region9: #{drsenmk_forward.10} parent=0 // pred_fallthru
    _
  // Predicated region
  $region10: #{drsenmk_forward.10} parent=0 // pred_check
    _
  $region11: #{drsenmk_forward.10} parent=0 // pred_check_branch
    %13 = sbr.rel (0) target = $region13
  $region12: #{drsenmk_forward.10} parent=0 // pred_region
    _
  $region13: #{drsenmk_forward.10} parent=0 // pred_fallthru
    _
  %v15 = vld [vmem:[%s0] sm:$0xf]
  %v16 = vld [vmem:[%s0 + $0x4] sm:$0xf]
  %v17 = vld [vmem:[%s0 + $0x8] sm:$0xf]
  %v18 = vld [vmem:[%s0 + $0xc] sm:$0xf]
  %v19 = vld [vmem:[%s0 + $0x10] sm:$0xf]
  %v20 = vld [vmem:[%s0 + $0x14] sm:$0xf]
  %v21 = vld [vmem:[%s0 + $0x18] sm:$0xf]
  %v22 = vld [vmem:[%s0 + $0x1c] sm:$0xf]
  %v23 = vld [vmem:[%s0 + $0x20] sm:$0xf]
  %v24 = vld [vmem:[%s0 + $0x24] sm:$0xf]
  %v25 = vld [vmem:[%s0 + $0x28] sm:$0xf]
  %v26 = vld [vmem:[%s0 + $0x2c] sm:$0xf]
  %v27 = vld [vmem:[%s0 + $0x30] sm:$0xf]
  %v28 = vld [vmem:[%s0 + $0x34] sm:$0xf]
  %v29 = vld [vmem:[%s0 + $0x38] sm:$0xf]
  %v30 = vld [vmem:[%s0 + $0x3c] sm:$0xf]
  %v31 = vld [vmem:[%s0 + $0x40] sm:$0xf]
  %v32 = vld [vmem:[%s0 + $0x44] sm:$0xf]
  %v33 = vld [vmem:[%s0 + $0x48] sm:$0xf]
  %v34 = vld [vmem:[%s0 + $0x4c] sm:$0xf]
  %v35 = vld [vmem:[%s0 + $0x50] sm:$0xf]
  %v36 = vld [vmem:[%s0 + $0x54] sm:$0xf]
  %v37 = vld [vmem:[%s0 + $0x58] sm:$0xf]
  %v38 = vld [vmem:[%s0 + $0x5c] sm:$0xf]
  %v39 = vld [vmem:[%s0 + $0x60] sm:$0xf]
  %v40 = vld [vmem:[%s0 + $0x64] sm:$0xf]
  %v41 = vld [vmem:[%s0 + $0x68] sm:$0xf]
  %v42 = vld [vmem:[%s0 + $0x6c] sm:$0xf]
  %v43 = vld [vmem:[%s0 + $0x70] sm:$0xf]
  %v44 = vld [vmem:[%s0 + $0x74] sm:$0xf]
  %v45 = vld [vmem:[%s0 + $0x78] sm:$0xf]
  %v46 = vld [vmem:[%s0 + $0x7c] sm:$0xf]
  %v47 = vld [vmem:[%s0 + $0x80] sm:$0xf]
  %v48 = vld [vmem:[%s0 + $0x84] sm:$0xf]
  %v49 = vld [vmem:[%s0 + $0x88] sm:$0xf]
  %v50 = vld [vmem:[%s0 + $0x8c] sm:$0xf]
  %v51 = vld [vmem:[%s0 + $0x90] sm:$0xf]
  %v52 = vld [vmem:[%s0 + $0x94] sm:$0xf]
  %v53 = vld [vmem:[%s0 + $0x98] sm:$0xf]
  %v54 = vld [vmem:[%s0 + $0x9c] sm:$0xf]
  %v55 = vld [vmem:[%s0 + $0xa0] sm:$0xf]
  %v56 = vld [vmem:[%s0 + $0xa4] sm:$0xf]
  %v57 = vld [vmem:[%s0 + $0xa8] sm:$0xf]
  %v58 = vld [vmem:[%s0 + $0xac] sm:$0xf]
  %v59 = vld [vmem:[%s0 + $0xb0] sm:$0xf]
  %v60 = vld [vmem:[%s0 + $0xb4] sm:$0xf]
  %v61 = vld [vmem:[%s0 + $0xb8] sm:$0xf]
  %v62 = vld [vmem:[%s0 + $0xbc] sm:$0xf]
  %v63 = vld [vmem:[%s0 + $0xc0] sm:$0xf]
  %v64 = vld [vmem:[%s0 + $0xc4] sm:$0xf]
  %v65 = vld [vmem:[%s0 + $0xc8] sm:$0xf]
  %v66 = vld [vmem:[%s0 + $0xcc] sm:$0xf]
  %v67 = vld [vmem:[%s0 + $0xd0] sm:$0xf]
  %v68 = vld [vmem:[%s0 + $0xd4] sm:$0xf]
  %v69 = vld [vmem:[%s0 + $0xd8] sm:$0xf]
  %v70 = vld [vmem:[%s0 + $0xdc] sm:$0xf]
  %v71 = vld [vmem:[%s0 + $0xe0] sm:$0xf]
  %v72 = vld [vmem:[%s0 + $0xe4] sm:$0xf]
  %v73 = vld [vmem:[%s0 + $0xe8] sm:$0xf]
  %v74 = vld [vmem:[%s0 + $0xec] sm:$0xf]
  %v75 = vld [vmem:[%s0 + $0xf0] sm:$0xf]
  %v76 = vld [vmem:[%s0 + $0xf4] sm:$0xf]
  %v77 = vld [vmem:[%s0 + $0xf8] sm:$0xf]
  %v78 = vld [vmem:[%s0 + $0xfc] sm:$0xf]
  %v79 = vunpack.c.l.bf16 %v15
  %v80 = vunpack.c.l.bf16 %v16
  %v81 = vunpack.c.l.bf16 %v17
  %v82 = vunpack.c.l.bf16 %v18
  %v83 = vunpack.c.l.bf16 %v19
  %v84 = vunpack.c.l.bf16 %v20
  %v85 = vunpack.c.l.bf16 %v21
  %v86 = vunpack.c.l.bf16 %v22
  %v87 = vunpack.c.l.bf16 %v23
  %v88 = vunpack.c.l.bf16 %v24
  %v89 = vunpack.c.l.bf16 %v25
  %v90 = vunpack.c.l.bf16 %v26
  %v91 = vunpack.c.l.bf16 %v27
  %v92 = vunpack.c.l.bf16 %v28
  %v93 = vunpack.c.l.bf16 %v29
  %v94 = vunpack.c.l.bf16 %v30
  %v95 = vunpack.c.l.bf16 %v31
  %v96 = vunpack.c.l.bf16 %v32
  %v97 = vunpack.c.l.bf16 %v33
  %v98 = vunpack.c.l.bf16 %v34
  %v99 = vunpack.c.l.bf16 %v35
  %v100 = vunpack.c.l.bf16 %v36
  %v101 = vunpack.c.l.bf16 %v37
  %v102 = vunpack.c.l.bf16 %v38
  %v103 = vunpack.c.l.bf16 %v39
  %v104 = vunpack.c.l.bf16 %v40
  %v105 = vunpack.c.l.bf16 %v41
  %v106 = vunpack.c.l.bf16 %v42
  %v107 = vunpack.c.l.bf16 %v43
  %v108 = vunpack.c.l.bf16 %v44
  %v109 = vunpack.c.l.bf16 %v45
  %v110 = vunpack.c.l.bf16 %v46
  %v111 = vunpack.c.l.bf16 %v47
  %v112 = vunpack.c.l.bf16 %v48
  %v113 = vunpack.c.l.bf16 %v49
  %v114 = vunpack.c.l.bf16 %v50
  %v115 = vunpack.c.l.bf16 %v51
  %v116 = vunpack.c.l.bf16 %v52
  %v117 = vunpack.c.l.bf16 %v53
  %v118 = vunpack.c.l.bf16 %v54
  %v119 = vunpack.c.l.bf16 %v55
  %v120 = vunpack.c.l.bf16 %v56
  %v121 = vunpack.c.l.bf16 %v57
  %v122 = vunpack.c.l.bf16 %v58
  %v123 = vunpack.c.l.bf16 %v59
  %v124 = vunpack.c.l.bf16 %v60
  %v125 = vunpack.c.l.bf16 %v61
  %v126 = vunpack.c.l.bf16 %v62
  %v127 = vunpack.c.l.bf16 %v63
  %v128 = vunpack.c.l.bf16 %v64
  %v129 = vunpack.c.l.bf16 %v65
  %v130 = vunpack.c.l.bf16 %v66
  %v131 = vunpack.c.l.bf16 %v67
  %v132 = vunpack.c.l.bf16 %v68
  %v133 = vunpack.c.l.bf16 %v69
  %v134 = vunpack.c.l.bf16 %v70
  %v135 = vunpack.c.l.bf16 %v71
  %v136 = vunpack.c.l.bf16 %v72
  %v137 = vunpack.c.l.bf16 %v73
  %v138 = vunpack.c.l.bf16 %v74
  %v139 = vunpack.c.l.bf16 %v75
  %v140 = vunpack.c.l.bf16 %v76
  %v141 = vunpack.c.l.bf16 %v77
  %v142 = vunpack.c.l.bf16 %v78
  %vm143 = vcmask 130048
  %144 = vst.msk [vmem:[#allocation2] sm:$0xff] %vm143, 0.0
  %145 = vst.msk [vmem:[#allocation2 + $0x8] sm:$0xff] %vm143, 0.0
  %146 = vst.msk [vmem:[#allocation2 + $0x10] sm:$0xff] %vm143, 0.0
  %vm147 = vcmask 122880
  %148 = vst.msk [vmem:[#allocation2 + $0x18] sm:$0x1] %vm147, 0.0
  %149 = vst.msk [vmem:[#allocation2 + $0x20] sm:$0xff] %vm143, 0.0
  %150 = vst.msk [vmem:[#allocation2 + $0x28] sm:$0xff] %vm143, 0.0
  %151 = vst.msk [vmem:[#allocation2 + $0x30] sm:$0xff] %vm143, 0.0
  %152 = vst.msk [vmem:[#allocation2 + $0x38] sm:$0x1] %vm147, 0.0
  %153 = vst.msk [vmem:[#allocation2 + $0x40] sm:$0xff] %vm143, 0.0
  %154 = vst.msk [vmem:[#allocation2 + $0x48] sm:$0xff] %vm143, 0.0
  %155 = vst.msk [vmem:[#allocation2 + $0x50] sm:$0xff] %vm143, 0.0
  %156 = vst.msk [vmem:[#allocation2 + $0x58] sm:$0x1] %vm147, 0.0
  %157 = vst.msk [vmem:[#allocation2 + $0x60] sm:$0xff] %vm143, 0.0
  %158 = vst.msk [vmem:[#allocation2 + $0x68] sm:$0xff] %vm143, 0.0
  %159 = vst.msk [vmem:[#allocation2 + $0x70] sm:$0xff] %vm143, 0.0
  %160 = vst.msk [vmem:[#allocation2 + $0x78] sm:$0x1] %vm147, 0.0
  %161 = vst.msk [vmem:[#allocation2 + $0x80] sm:$0xff] %vm143, 0.0
  %162 = vst.msk [vmem:[#allocation2 + $0x88] sm:$0xff] %vm143, 0.0
  %163 = vst.msk [vmem:[#allocation2 + $0x90] sm:$0xff] %vm143, 0.0
  %164 = vst.msk [vmem:[#allocation2 + $0x98] sm:$0x1] %vm147, 0.0
  %165 = vst.msk [vmem:[#allocation2 + $0xa0] sm:$0xff] %vm143, 0.0
  %166 = vst.msk [vmem:[#allocation2 + $0xa8] sm:$0xff] %vm143, 0.0
  %167 = vst.msk [vmem:[#allocation2 + $0xb0] sm:$0xff] %vm143, 0.0
  %168 = vst.msk [vmem:[#allocation2 + $0xb8] sm:$0x1] %vm147, 0.0
  %169 = vst.msk [vmem:[#allocation2 + $0xc0] sm:$0xff] %vm143, 0.0
  %170 = vst.msk [vmem:[#allocation2 + $0xc8] sm:$0xff] %vm143, 0.0
  %171 = vst.msk [vmem:[#allocation2 + $0xd0] sm:$0xff] %vm143, 0.0
  %172 = vst.msk [vmem:[#allocation2 + $0xd8] sm:$0x1] %vm147, 0.0
  %173 = vst.msk [vmem:[#allocation2 + $0xe0] sm:$0xff] %vm143, 0.0
  %174 = vst.msk [vmem:[#allocation2 + $0xe8] sm:$0xff] %vm143, 0.0
  %175 = vst.msk [vmem:[#allocation2 + $0xf0] sm:$0xff] %vm143, 0.0
  %176 = vst.msk [vmem:[#allocation2 + $0xf8] sm:$0x1] %vm147, 0.0
  %177 = vst.msk [vmem:[#allocation2 + $0x100] sm:$0xff] %vm143, 0.0
  %178 = vst.msk [vmem:[#allocation2 + $0x108] sm:$0xff] %vm143, 0.0
  %179 = vst.msk [vmem:[#allocation2 + $0x110] sm:$0xff] %vm143, 0.0
  %180 = vst.msk [vmem:[#allocation2 + $0x118] sm:$0x1] %vm147, 0.0
  %181 = vst.msk [vmem:[#allocation2 + $0x120] sm:$0xff] %vm143, 0.0
  %182 = vst.msk [vmem:[#allocation2 + $0x128] sm:$0xff] %vm143, 0.0
  %183 = vst.msk [vmem:[#allocation2 + $0x130] sm:$0xff] %vm143, 0.0
  %184 = vst.msk [vmem:[#allocation2 + $0x138] sm:$0x1] %vm147, 0.0
  %185 = vst.msk [vmem:[#allocation2 + $0x140] sm:$0xff] %vm143, 0.0
  %186 = vst.msk [vmem:[#allocation2 + $0x148] sm:$0xff] %vm143, 0.0
  %187 = vst.msk [vmem:[#allocation2 + $0x150] sm:$0xff] %vm143, 0.0
  %188 = vst.msk [vmem:[#allocation2 + $0x158] sm:$0x1] %vm147, 0.0
  %189 = vst.msk [vmem:[#allocation2 + $0x160] sm:$0xff] %vm143, 0.0
  %190 = vst.msk [vmem:[#allocation2 + $0x168] sm:$0xff] %vm143, 0.0
  %191 = vst.msk [vmem:[#allocation2 + $0x170] sm:$0xff] %vm143, 0.0
  %192 = vst.msk [vmem:[#allocation2 + $0x178] sm:$0x1] %vm147, 0.0
  %193 = vst.msk [vmem:[#allocation2 + $0x180] sm:$0xff] %vm143, 0.0
  %194 = vst.msk [vmem:[#allocation2 + $0x188] sm:$0xff] %vm143, 0.0
  %195 = vst.msk [vmem:[#allocation2 + $0x190] sm:$0xff] %vm143, 0.0
  %196 = vst.msk [vmem:[#allocation2 + $0x198] sm:$0x1] %vm147, 0.0
  %197 = vst.msk [vmem:[#allocation2 + $0x1a0] sm:$0xff] %vm143, 0.0
  %198 = vst.msk [vmem:[#allocation2 + $0x1a8] sm:$0xff] %vm143, 0.0
  %199 = vst.msk [vmem:[#allocation2 + $0x1b0] sm:$0xff] %vm143, 0.0
  %200 = vst.msk [vmem:[#allocation2 + $0x1b8] sm:$0x1] %vm147, 0.0
  %201 = vst.msk [vmem:[#allocation2 + $0x1c0] sm:$0xff] %vm143, 0.0
  %202 = vst.msk [vmem:[#allocation2 + $0x1c8] sm:$0xff] %vm143, 0.0
  %203 = vst.msk [vmem:[#allocation2 + $0x1d0] sm:$0xff] %vm143, 0.0
  %204 = vst.msk [vmem:[#allocation2 + $0x1d8] sm:$0x1] %vm147, 0.0
  %205 = vst.msk [vmem:[#allocation2 + $0x1e0] sm:$0xff] %vm143, 0.0
  %206 = vst.msk [vmem:[#allocation2 + $0x1e8] sm:$0xff] %vm143, 0.0
  %207 = vst.msk [vmem:[#allocation2 + $0x1f0] sm:$0xff] %vm143, 0.0
  %208 = vst.msk [vmem:[#allocation2 + $0x1f8] sm:$0x1] %vm147, 0.0
  %209 = vst.msk [vmem:[#allocation2 + $0x200] sm:$0xff] %vm143, 0.0
  %210 = vst.msk [vmem:[#allocation2 + $0x208] sm:$0xff] %vm143, 0.0
  %211 = vst.msk [vmem:[#allocation2 + $0x210] sm:$0xff] %vm143, 0.0
  %212 = vst.msk [vmem:[#allocation2 + $0x218] sm:$0x1] %vm147, 0.0
  %213 = vst.msk [vmem:[#allocation2 + $0x220] sm:$0xff] %vm143, 0.0
  %214 = vst.msk [vmem:[#allocation2 + $0x228] sm:$0xff] %vm143, 0.0
  %215 = vst.msk [vmem:[#allocation2 + $0x230] sm:$0xff] %vm143, 0.0
  %216 = vst.msk [vmem:[#allocation2 + $0x238] sm:$0x1] %vm147, 0.0
  %217 = vst.msk [vmem:[#allocation2 + $0x240] sm:$0xff] %vm143, 0.0
  %218 = vst.msk [vmem:[#allocation2 + $0x248] sm:$0xff] %vm143, 0.0
  %219 = vst.msk [vmem:[#allocation2 + $0x250] sm:$0xff] %vm143, 0.0
  %220 = vst.msk [vmem:[#allocation2 + $0x258] sm:$0x1] %vm147, 0.0
  %221 = vst.msk [vmem:[#allocation2 + $0x260] sm:$0xff] %vm143, 0.0
  %222 = vst.msk [vmem:[#allocation2 + $0x268] sm:$0xff] %vm143, 0.0
  %223 = vst.msk [vmem:[#allocation2 + $0x270] sm:$0xff] %vm143, 0.0
  %224 = vst.msk [vmem:[#allocation2 + $0x278] sm:$0x1] %vm147, 0.0
  %225 = vst.msk [vmem:[#allocation2 + $0x280] sm:$0xff] %vm143, 0.0
  %226 = vst.msk [vmem:[#allocation2 + $0x288] sm:$0xff] %vm143, 0.0
  %227 = vst.msk [vmem:[#allocation2 + $0x290] sm:$0xff] %vm143, 0.0
  %228 = vst.msk [vmem:[#allocation2 + $0x298] sm:$0x1] %vm147, 0.0
  %229 = vst.msk [vmem:[#allocation2 + $0x2a0] sm:$0xff] %vm143, 0.0
  %230 = vst.msk [vmem:[#allocation2 + $0x2a8] sm:$0xff] %vm143, 0.0
  %231 = vst.msk [vmem:[#allocation2 + $0x2b0] sm:$0xff] %vm143, 0.0
  %232 = vst.msk [vmem:[#allocation2 + $0x2b8] sm:$0x1] %vm147, 0.0
  %233 = vst.msk [vmem:[#allocation2 + $0x2c0] sm:$0xff] %vm143, 0.0
  %234 = vst.msk [vmem:[#allocation2 + $0x2c8] sm:$0xff] %vm143, 0.0
  %235 = vst.msk [vmem:[#allocation2 + $0x2d0] sm:$0xff] %vm143, 0.0
  %236 = vst.msk [vmem:[#allocation2 + $0x2d8] sm:$0x1] %vm147, 0.0
  %237 = vst.msk [vmem:[#allocation2 + $0x2e0] sm:$0xff] %vm143, 0.0
  %238 = vst.msk [vmem:[#allocation2 + $0x2e8] sm:$0xff] %vm143, 0.0
  %239 = vst.msk [vmem:[#allocation2 + $0x2f0] sm:$0xff] %vm143, 0.0
  %240 = vst.msk [vmem:[#allocation2 + $0x2f8] sm:$0x1] %vm147, 0.0
  %241 = vst.msk [vmem:[#allocation2 + $0x300] sm:$0xff] %vm143, 0.0
  %242 = vst.msk [vmem:[#allocation2 + $0x308] sm:$0xff] %vm143, 0.0
  %243 = vst.msk [vmem:[#allocation2 + $0x310] sm:$0xff] %vm143, 0.0
  %244 = vst.msk [vmem:[#allocation2 + $0x318] sm:$0x1] %vm147, 0.0
  %245 = vst.msk [vmem:[#allocation2 + $0x320] sm:$0xff] %vm143, 0.0
  %246 = vst.msk [vmem:[#allocation2 + $0x328] sm:$0xff] %vm143, 0.0
  %247 = vst.msk [vmem:[#allocation2 + $0x330] sm:$0xff] %vm143, 0.0
  %248 = vst.msk [vmem:[#allocation2 + $0x338] sm:$0x1] %vm147, 0.0
  %249 = vst.msk [vmem:[#allocation2 + $0x340] sm:$0xff] %vm143, 0.0
  %250 = vst.msk [vmem:[#allocation2 + $0x348] sm:$0xff] %vm143, 0.0
  %251 = vst.msk [vmem:[#allocation2 + $0x350] sm:$0xff] %vm143, 0.0
  %252 = vst.msk [vmem:[#allocation2 + $0x358] sm:$0x1] %vm147, 0.0
  %253 = vst.msk [vmem:[#allocation2 + $0x360] sm:$0xff] %vm143, 0.0
  %254 = vst.msk [vmem:[#allocation2 + $0x368] sm:$0xff] %vm143, 0.0
  %255 = vst.msk [vmem:[#allocation2 + $0x370] sm:$0xff] %vm143, 0.0
  %256 = vst.msk [vmem:[#allocation2 + $0x378] sm:$0x1] %vm147, 0.0
  %257 = vst.msk [vmem:[#allocation2 + $0x380] sm:$0xff] %vm143, 0.0
  %258 = vst.msk [vmem:[#allocation2 + $0x388] sm:$0xff] %vm143, 0.0
  %259 = vst.msk [vmem:[#allocation2 + $0x390] sm:$0xff] %vm143, 0.0
  %260 = vst.msk [vmem:[#allocation2 + $0x398] sm:$0x1] %vm147, 0.0
  %261 = vst.msk [vmem:[#allocation2 + $0x3a0] sm:$0xff] %vm143, 0.0
  %262 = vst.msk [vmem:[#allocation2 + $0x3a8] sm:$0xff] %vm143, 0.0
  %263 = vst.msk [vmem:[#allocation2 + $0x3b0] sm:$0xff] %vm143, 0.0
  %264 = vst.msk [vmem:[#allocation2 + $0x3b8] sm:$0x1] %vm147, 0.0
  %265 = vst.msk [vmem:[#allocation2 + $0x3c0] sm:$0xff] %vm143, 0.0
  %266 = vst.msk [vmem:[#allocation2 + $0x3c8] sm:$0xff] %vm143, 0.0
  %267 = vst.msk [vmem:[#allocation2 + $0x3d0] sm:$0xff] %vm143, 0.0
  %268 = vst.msk [vmem:[#allocation2 + $0x3d8] sm:$0x1] %vm147, 0.0
  %269 = vst.msk [vmem:[#allocation2 + $0x3e0] sm:$0xff] %vm143, 0.0
  %270 = vst.msk [vmem:[#allocation2 + $0x3e8] sm:$0xff] %vm143, 0.0
  %271 = vst.msk [vmem:[#allocation2 + $0x3f0] sm:$0xff] %vm143, 0.0
  %272 = vst.msk [vmem:[#allocation2 + $0x3f8] sm:$0x1] %vm147, 0.0
  %273 = vst.msk [vmem:[#allocation2 + $0x400] sm:$0xff] %vm143, 0.0
  %274 = vst.msk [vmem:[#allocation2 + $0x408] sm:$0xff] %vm143, 0.0
  %275 = vst.msk [vmem:[#allocation2 + $0x410] sm:$0xff] %vm143, 0.0
  %276 = vst.msk [vmem:[#allocation2 + $0x418] sm:$0x1] %vm147, 0.0
  %277 = vst.msk [vmem:[#allocation2 + $0x420] sm:$0xff] %vm143, 0.0
  %278 = vst.msk [vmem:[#allocation2 + $0x428] sm:$0xff] %vm143, 0.0
  %279 = vst.msk [vmem:[#allocation2 + $0x430] sm:$0xff] %vm143, 0.0
  %280 = vst.msk [vmem:[#allocation2 + $0x438] sm:$0x1] %vm147, 0.0
  %281 = vst.msk [vmem:[#allocation2 + $0x440] sm:$0xff] %vm143, 0.0
  %282 = vst.msk [vmem:[#allocation2 + $0x448] sm:$0xff] %vm143, 0.0
  %283 = vst.msk [vmem:[#allocation2 + $0x450] sm:$0xff] %vm143, 0.0
  %284 = vst.msk [vmem:[#allocation2 + $0x458] sm:$0x1] %vm147, 0.0
  %285 = vst.msk [vmem:[#allocation2 + $0x460] sm:$0xff] %vm143, 0.0
  %286 = vst.msk [vmem:[#allocation2 + $0x468] sm:$0xff] %vm143, 0.0
  %287 = vst.msk [vmem:[#allocation2 + $0x470] sm:$0xff] %vm143, 0.0
  %288 = vst.msk [vmem:[#allocation2 + $0x478] sm:$0x1] %vm147, 0.0
  %s289 = scalar_lea.vmem [#allocation2], 32
  %290 = vst.msk [vmem:[%s289 + $0x8] sm:$0xff] %vm143, %v79
  %291 = vst.msk [vmem:[%s289 + $0x10] sm:$0xff] %vm143, %v80
  %292 = vst.msk [vmem:[%s289 + $0x28] sm:$0xff] %vm143, %v81
  %293 = vst.msk [vmem:[%s289 + $0x30] sm:$0xff] %vm143, %v82
  %294 = vst.msk [vmem:[%s289 + $0x48] sm:$0xff] %vm143, %v83
  %295 = vst.msk [vmem:[%s289 + $0x50] sm:$0xff] %vm143, %v84
  %296 = vst.msk [vmem:[%s289 + $0x68] sm:$0xff] %vm143, %v85
  %297 = vst.msk [vmem:[%s289 + $0x70] sm:$0xff] %vm143, %v86
  %298 = vst.msk [vmem:[%s289 + $0x88] sm:$0xff] %vm143, %v87
  %299 = vst.msk [vmem:[%s289 + $0x90] sm:$0xff] %vm143, %v88
  %300 = vst.msk [vmem:[%s289 + $0xa8] sm:$0xff] %vm143, %v89
  %301 = vst.msk [vmem:[%s289 + $0xb0] sm:$0xff] %vm143, %v90
  %302 = vst.msk [vmem:[%s289 + $0xc8] sm:$0xff] %vm143, %v91
  %303 = vst.msk [vmem:[%s289 + $0xd0] sm:$0xff] %vm143, %v92
  %304 = vst.msk [vmem:[%s289 + $0xe8] sm:$0xff] %vm143, %v93
  %305 = vst.msk [vmem:[%s289 + $0xf0] sm:$0xff] %vm143, %v94
  %306 = vst.msk [vmem:[%s289 + $0x108] sm:$0xff] %vm143, %v95
  %307 = vst.msk [vmem:[%s289 + $0x110] sm:$0xff] %vm143, %v96
  %308 = vst.msk [vmem:[%s289 + $0x128] sm:$0xff] %vm143, %v97
  %309 = vst.msk [vmem:[%s289 + $0x130] sm:$0xff] %vm143, %v98
  %310 = vst.msk [vmem:[%s289 + $0x148] sm:$0xff] %vm143, %v99
  %311 = vst.msk [vmem:[%s289 + $0x150] sm:$0xff] %vm143, %v100
  %312 = vst.msk [vmem:[%s289 + $0x168] sm:$0xff] %vm143, %v101
  %313 = vst.msk [vmem:[%s289 + $0x170] sm:$0xff] %vm143, %v102
  %314 = vst.msk [vmem:[%s289 + $0x188] sm:$0xff] %vm143, %v103
  %315 = vst.msk [vmem:[%s289 + $0x190] sm:$0xff] %vm143, %v104
  %316 = vst.msk [vmem:[%s289 + $0x1a8] sm:$0xff] %vm143, %v105
  %317 = vst.msk [vmem:[%s289 + $0x1b0] sm:$0xff] %vm143, %v106
  %318 = vst.msk [vmem:[%s289 + $0x1c8] sm:$0xff] %vm143, %v107
  %319 = vst.msk [vmem:[%s289 + $0x1d0] sm:$0xff] %vm143, %v108
  %320 = vst.msk [vmem:[%s289 + $0x1e8] sm:$0xff] %vm143, %v109
  %321 = vst.msk [vmem:[%s289 + $0x1f0] sm:$0xff] %vm143, %v110
  %322 = vst.msk [vmem:[%s289 + $0x248] sm:$0xff] %vm143, %v111
  %323 = vst.msk [vmem:[%s289 + $0x250] sm:$0xff] %vm143, %v112
  %324 = vst.msk [vmem:[%s289 + $0x268] sm:$0xff] %vm143, %v113
  %325 = vst.msk [vmem:[%s289 + $0x270] sm:$0xff] %vm143, %v114
  %326 = vst.msk [vmem:[%s289 + $0x288] sm:$0xff] %vm143, %v115
  %327 = vst.msk [vmem:[%s289 + $0x290] sm:$0xff] %vm143, %v116
  %328 = vst.msk [vmem:[%s289 + $0x2a8] sm:$0xff] %vm143, %v117
  %329 = vst.msk [vmem:[%s289 + $0x2b0] sm:$0xff] %vm143, %v118
  %330 = vst.msk [vmem:[%s289 + $0x2c8] sm:$0xff] %vm143, %v119
  %331 = vst.msk [vmem:[%s289 + $0x2d0] sm:$0xff] %vm143, %v120
  %332 = vst.msk [vmem:[%s289 + $0x2e8] sm:$0xff] %vm143, %v121
  %333 = vst.msk [vmem:[%s289 + $0x2f0] sm:$0xff] %vm143, %v122
  %334 = vst.msk [vmem:[%s289 + $0x308] sm:$0xff] %vm143, %v123
  %335 = vst.msk [vmem:[%s289 + $0x310] sm:$0xff] %vm143, %v124
  %336 = vst.msk [vmem:[%s289 + $0x328] sm:$0xff] %vm143, %v125
  %337 = vst.msk [vmem:[%s289 + $0x330] sm:$0xff] %vm143, %v126
  %338 = vst.msk [vmem:[%s289 + $0x348] sm:$0xff] %vm143, %v127
  %339 = vst.msk [vmem:[%s289 + $0x350] sm:$0xff] %vm143, %v128
  %340 = vst.msk [vmem:[%s289 + $0x368] sm:$0xff] %vm143, %v129
  %341 = vst.msk [vmem:[%s289 + $0x370] sm:$0xff] %vm143, %v130
  %342 = vst.msk [vmem:[%s289 + $0x388] sm:$0xff] %vm143, %v131
  %343 = vst.msk [vmem:[%s289 + $0x390] sm:$0xff] %vm143, %v132
  %344 = vst.msk [vmem:[%s289 + $0x3a8] sm:$0xff] %vm143, %v133
  %345 = vst.msk [vmem:[%s289 + $0x3b0] sm:$0xff] %vm143, %v134
  %346 = vst.msk [vmem:[%s289 + $0x3c8] sm:$0xff] %vm143, %v135
  %347 = vst.msk [vmem:[%s289 + $0x3d0] sm:$0xff] %vm143, %v136
  %348 = vst.msk [vmem:[%s289 + $0x3e8] sm:$0xff] %vm143, %v137
  %349 = vst.msk [vmem:[%s289 + $0x3f0] sm:$0xff] %vm143, %v138
  %350 = vst.msk [vmem:[%s289 + $0x408] sm:$0xff] %vm143, %v139
  %351 = vst.msk [vmem:[%s289 + $0x410] sm:$0xff] %vm143, %v140
  %352 = vst.msk [vmem:[%s289 + $0x428] sm:$0xff] %vm143, %v141
  %353 = vst.msk [vmem:[%s289 + $0x430] sm:$0xff] %vm143, %v142
  %v354 = vld [vmem:[#allocation2] sm:$0xff]
  %v355 = vld [vmem:[#allocation2 + $0x8] sm:$0xff]
  %v356 = vld [vmem:[#allocation2 + $0x10] sm:$0xff]
  %v357 = vld [vmem:[#allocation2 + $0x18] sm:$0x1]
  %v358 = vld [vmem:[#allocation2 + $0x20] sm:$0xff]
  %v359 = vld [vmem:[#allocation2 + $0x28] sm:$0xff]
  %v360 = vld [vmem:[#allocation2 + $0x30] sm:$0xff]
  %v361 = vld [vmem:[#allocation2 + $0x38] sm:$0x1]
  %v362 = vld [vmem:[#allocation2 + $0x40] sm:$0xff]
  %v363 = vld [vmem:[#allocation2 + $0x48] sm:$0xff]
  %v364 = vld [vmem:[#allocation2 + $0x50] sm:$0xff]
  %v365 = vld [vmem:[#allocation2 + $0x58] sm:$0x1]
  %v366 = vld [vmem:[#allocation2 + $0x60] sm:$0xff]
  %v367 = vld [vmem:[#allocation2 + $0x68] sm:$0xff]
  %v368 = vld [vmem:[#allocation2 + $0x70] sm:$0xff]
  %v369 = vld [vmem:[#allocation2 + $0x78] sm:$0x1]
  %v370 = vld [vmem:[#allocation2 + $0x80] sm:$0xff]
  %v371 = vld [vmem:[#allocation2 + $0x88] sm:$0xff]
  %v372 = vld [vmem:[#allocation2 + $0x90] sm:$0xff]
  %v373 = vld [vmem:[#allocation2 + $0x98] sm:$0x1]
  %v374 = vld [vmem:[#allocation2 + $0xa0] sm:$0xff]
  %v375 = vld [vmem:[#allocation2 + $0xa8] sm:$0xff]
  %v376 = vld [vmem:[#allocation2 + $0xb0] sm:$0xff]
  %v377 = vld [vmem:[#allocation2 + $0xb8] sm:$0x1]
  %v378 = vld [vmem:[#allocation2 + $0xc0] sm:$0xff]
  %v379 = vld [vmem:[#allocation2 + $0xc8] sm:$0xff]
  %v380 = vld [vmem:[#allocation2 + $0xd0] sm:$0xff]
  %v381 = vld [vmem:[#allocation2 + $0xd8] sm:$0x1]
  %v382 = vld [vmem:[#allocation2 + $0xe0] sm:$0xff]
  %v383 = vld [vmem:[#allocation2 + $0xe8] sm:$0xff]
  %v384 = vld [vmem:[#allocation2 + $0xf0] sm:$0xff]
  %v385 = vld [vmem:[#allocation2 + $0xf8] sm:$0x1]
  %v386 = vld [vmem:[#allocation2 + $0x100] sm:$0xff]
  %v387 = vld [vmem:[#allocation2 + $0x108] sm:$0xff]
  %v388 = vld [vmem:[#allocation2 + $0x110] sm:$0xff]
  %v389 = vld [vmem:[#allocation2 + $0x118] sm:$0x1]
  %v390 = vld [vmem:[#allocation2 + $0x120] sm:$0xff]
  %v391 = vld [vmem:[#allocation2 + $0x128] sm:$0xff]
  %v392 = vld [vmem:[#allocation2 + $0x130] sm:$0xff]
  %v393 = vld [vmem:[#allocation2 + $0x138] sm:$0x1]
  %v394 = vld [vmem:[#allocation2 + $0x140] sm:$0xff]
  %v395 = vld [vmem:[#allocation2 + $0x148] sm:$0xff]
  %v396 = vld [vmem:[#allocation2 + $0x150] sm:$0xff]
  %v397 = vld [vmem:[#allocation2 + $0x158] sm:$0x1]
  %v398 = vld [vmem:[#allocation2 + $0x160] sm:$0xff]
  %v399 = vld [vmem:[#allocation2 + $0x168] sm:$0xff]
  %v400 = vld [vmem:[#allocation2 + $0x170] sm:$0xff]
  %v401 = vld [vmem:[#allocation2 + $0x178] sm:$0x1]
  %v402 = vld [vmem:[#allocation2 + $0x180] sm:$0xff]
  %v403 = vld [vmem:[#allocation2 + $0x188] sm:$0xff]
  %v404 = vld [vmem:[#allocation2 + $0x190] sm:$0xff]
  %v405 = vld [vmem:[#allocation2 + $0x198] sm:$0x1]
  %v406 = vld [vmem:[#allocation2 + $0x1a0] sm:$0xff]
  %v407 = vld [vmem:[#allocation2 + $0x1a8] sm:$0xff]
  %v408 = vld [vmem:[#allocation2 + $0x1b0] sm:$0xff]
  %v409 = vld [vmem:[#allocation2 + $0x1b8] sm:$0x1]
  %v410 = vld [vmem:[#allocation2 + $0x1c0] sm:$0xff]
  %v411 = vld [vmem:[#allocation2 + $0x1c8] sm:$0xff]
  %v412 = vld [vmem:[#allocation2 + $0x1d0] sm:$0xff]
  %v413 = vld [vmem:[#allocation2 + $0x1d8] sm:$0x1]
  %v414 = vld [vmem:[#allocation2 + $0x1e0] sm:$0xff]
  %v415 = vld [vmem:[#allocation2 + $0x1e8] sm:$0xff]
  %v416 = vld [vmem:[#allocation2 + $0x1f0] sm:$0xff]
  %v417 = vld [vmem:[#allocation2 + $0x1f8] sm:$0x1]
  %v418 = vld [vmem:[#allocation2 + $0x200] sm:$0xff]
  %v419 = vld [vmem:[#allocation2 + $0x208] sm:$0xff]
  %v420 = vld [vmem:[#allocation2 + $0x210] sm:$0xff]
  %v421 = vld [vmem:[#allocation2 + $0x218] sm:$0x1]
  %v422 = vld [vmem:[#allocation2 + $0x220] sm:$0xff]
  %v423 = vld [vmem:[#allocation2 + $0x228] sm:$0xff]
  %v424 = vld [vmem:[#allocation2 + $0x230] sm:$0xff]
  %v425 = vld [vmem:[#allocation2 + $0x238] sm:$0x1]
  %v426 = vld [vmem:[#allocation2 + $0x240] sm:$0xff]
  %v427 = vld [vmem:[#allocation2 + $0x248] sm:$0xff]
  %v428 = vld [vmem:[#allocation2 + $0x250] sm:$0xff]
  %v429 = vld [vmem:[#allocation2 + $0x258] sm:$0x1]
  %v430 = vld [vmem:[#allocation2 + $0x260] sm:$0xff]
  %v431 = vld [vmem:[#allocation2 + $0x268] sm:$0xff]
  %v432 = vld [vmem:[#allocation2 + $0x270] sm:$0xff]
  %v433 = vld [vmem:[#allocation2 + $0x278] sm:$0x1]
  %v434 = vld [vmem:[#allocation2 + $0x280] sm:$0xff]
  %v435 = vld [vmem:[#allocation2 + $0x288] sm:$0xff]
  %v436 = vld [vmem:[#allocation2 + $0x290] sm:$0xff]
  %v437 = vld [vmem:[#allocation2 + $0x298] sm:$0x1]
  %v438 = vld [vmem:[#allocation2 + $0x2a0] sm:$0xff]
  %v439 = vld [vmem:[#allocation2 + $0x2a8] sm:$0xff]
  %v440 = vld [vmem:[#allocation2 + $0x2b0] sm:$0xff]
  %v441 = vld [vmem:[#allocation2 + $0x2b8] sm:$0x1]
  %v442 = vld [vmem:[#allocation2 + $0x2c0] sm:$0xff]
  %v443 = vld [vmem:[#allocation2 + $0x2c8] sm:$0xff]
  %v444 = vld [vmem:[#allocation2 + $0x2d0] sm:$0xff]
  %v445 = vld [vmem:[#allocation2 + $0x2d8] sm:$0x1]
  %v446 = vld [vmem:[#allocation2 + $0x2e0] sm:$0xff]
  %v447 = vld [vmem:[#allocation2 + $0x2e8] sm:$0xff]
  %v448 = vld [vmem:[#allocation2 + $0x2f0] sm:$0xff]
  %v449 = vld [vmem:[#allocation2 + $0x2f8] sm:$0x1]
  %v450 = vld [vmem:[#allocation2 + $0x300] sm:$0xff]
  %v451 = vld [vmem:[#allocation2 + $0x308] sm:$0xff]
  %v452 = vld [vmem:[#allocation2 + $0x310] sm:$0xff]
  %v453 = vld [vmem:[#allocation2 + $0x318] sm:$0x1]
  %v454 = vld [vmem:[#allocation2 + $0x320] sm:$0xff]
  %v455 = vld [vmem:[#allocation2 + $0x328] sm:$0xff]
  %v456 = vld [vmem:[#allocation2 + $0x330] sm:$0xff]
  %v457 = vld [vmem:[#allocation2 + $0x338] sm:$0x1]
  %v458 = vld [vmem:[#allocation2 + $0x340] sm:$0xff]
  %v459 = vld [vmem:[#allocation2 + $0x348] sm:$0xff]
  %v460 = vld [vmem:[#allocation2 + $0x350] sm:$0xff]
  %v461 = vld [vmem:[#allocation2 + $0x358] sm:$0x1]
  %v462 = vld [vmem:[#allocation2 + $0x360] sm:$0xff]
  %v463 = vld [vmem:[#allocation2 + $0x368] sm:$0xff]
  %v464 = vld [vmem:[#allocation2 + $0x370] sm:$0xff]
  %v465 = vld [vmem:[#allocation2 + $0x378] sm:$0x1]
  %v466 = vld [vmem:[#allocation2 + $0x380] sm:$0xff]
  %v467 = vld [vmem:[#allocation2 + $0x388] sm:$0xff]
  %v468 = vld [vmem:[#allocation2 + $0x390] sm:$0xff]
  %v469 = vld [vmem:[#allocation2 + $0x398] sm:$0x1]
  %v470 = vld [vmem:[#allocation2 + $0x3a0] sm:$0xff]
  %v471 = vld [vmem:[#allocation2 + $0x3a8] sm:$0xff]
  %v472 = vld [vmem:[#allocation2 + $0x3b0] sm:$0xff]
  %v473 = vld [vmem:[#allocation2 + $0x3b8] sm:$0x1]
  %v474 = vld [vmem:[#allocation2 + $0x3c0] sm:$0xff]
  %v475 = vld [vmem:[#allocation2 + $0x3c8] sm:$0xff]
  %v476 = vld [vmem:[#allocation2 + $0x3d0] sm:$0xff]
  %v477 = vld [vmem:[#allocation2 + $0x3d8] sm:$0x1]
  %v478 = vld [vmem:[#allocation2 + $0x3e0] sm:$0xff]
  %v479 = vld [vmem:[#allocation2 + $0x3e8] sm:$0xff]
  %v480 = vld [vmem:[#allocation2 + $0x3f0] sm:$0xff]
  %v481 = vld [vmem:[#allocation2 + $0x3f8] sm:$0x1]
  %v482 = vld [vmem:[#allocation2 + $0x400] sm:$0xff]
  %v483 = vld [vmem:[#allocation2 + $0x408] sm:$0xff]
  %v484 = vld [vmem:[#allocation2 + $0x410] sm:$0xff]
  %v485 = vld [vmem:[#allocation2 + $0x418] sm:$0x1]
  %v486 = vld [vmem:[#allocation2 + $0x420] sm:$0xff]
  %v487 = vld [vmem:[#allocation2 + $0x428] sm:$0xff]
  %v488 = vld [vmem:[#allocation2 + $0x430] sm:$0xff]
  %v489 = vld [vmem:[#allocation2 + $0x438] sm:$0x1]
  %v490 = vld [vmem:[#allocation2 + $0x440] sm:$0xff]
  %v491 = vld [vmem:[#allocation2 + $0x448] sm:$0xff]
  %v492 = vld [vmem:[#allocation2 + $0x450] sm:$0xff]
  %v493 = vld [vmem:[#allocation2 + $0x458] sm:$0x1]
  %v494 = vld [vmem:[#allocation2 + $0x460] sm:$0xff]
  %v495 = vld [vmem:[#allocation2 + $0x468] sm:$0xff]
  %v496 = vld [vmem:[#allocation2 + $0x470] sm:$0xff]
  %v497 = vld [vmem:[#allocation2 + $0x478] sm:$0x1]
  %vm594 = vcmask 1040384
  %v595 = vrot.slane %v354, 7
  %v596 = vrot.slane %v355, 7
  %v597 = vsel %vm594, %v595, %v596
  %v598 = vrot.slane %v356, 7
  %v599 = vsel %vm594, %v596, %v598
  %v600 = vrot.slane %v358, 7
  %v601 = vrot.slane %v359, 7
  %v602 = vsel %vm594, %v600, %v601
  %v603 = vrot.slane %v360, 7
  %v604 = vsel %vm594, %v601, %v603
  %v605 = vrot.slane %v362, 7
  %v606 = vrot.slane %v363, 7
  %v607 = vsel %vm594, %v605, %v606
  %v608 = vrot.slane %v364, 7
  %v609 = vsel %vm594, %v606, %v608
  %v610 = vrot.slane %v366, 7
  %v611 = vrot.slane %v367, 7
  %v612 = vsel %vm594, %v610, %v611
  %v613 = vrot.slane %v368, 7
  %v614 = vsel %vm594, %v611, %v613
  %v615 = vrot.slane %v370, 7
  %v616 = vrot.slane %v371, 7
  %v617 = vsel %vm594, %v615, %v616
  %v618 = vrot.slane %v372, 7
  %v619 = vsel %vm594, %v616, %v618
  %v620 = vrot.slane %v374, 7
  %v621 = vrot.slane %v375, 7
  %v622 = vsel %vm594, %v620, %v621
  %v623 = vrot.slane %v376, 7
  %v624 = vsel %vm594, %v621, %v623
  %v625 = vrot.slane %v378, 7
  %v626 = vrot.slane %v379, 7
  %v627 = vsel %vm594, %v625, %v626
  %v628 = vrot.slane %v380, 7
  %v629 = vsel %vm594, %v626, %v628
  %v630 = vrot.slane %v382, 7
  %v631 = vrot.slane %v383, 7
  %v632 = vsel %vm594, %v630, %v631
  %v633 = vrot.slane %v384, 7
  %v634 = vsel %vm594, %v631, %v633
  %v635 = vrot.slane %v386, 7
  %v636 = vrot.slane %v387, 7
  %v637 = vsel %vm594, %v635, %v636
  %v638 = vrot.slane %v388, 7
  %v639 = vsel %vm594, %v636, %v638
  %v640 = vrot.slane %v390, 7
  %v641 = vrot.slane %v391, 7
  %v642 = vsel %vm594, %v640, %v641
  %v643 = vrot.slane %v392, 7
  %v644 = vsel %vm594, %v641, %v643
  %v645 = vrot.slane %v394, 7
  %v646 = vrot.slane %v395, 7
  %v647 = vsel %vm594, %v645, %v646
  %v648 = vrot.slane %v396, 7
  %v649 = vsel %vm594, %v646, %v648
  %v650 = vrot.slane %v398, 7
  %v651 = vrot.slane %v399, 7
  %v652 = vsel %vm594, %v650, %v651
  %v653 = vrot.slane %v400, 7
  %v654 = vsel %vm594, %v651, %v653
  %v655 = vrot.slane %v402, 7
  %v656 = vrot.slane %v403, 7
  %v657 = vsel %vm594, %v655, %v656
  %v658 = vrot.slane %v404, 7
  %v659 = vsel %vm594, %v656, %v658
  %v660 = vrot.slane %v406, 7
  %v661 = vrot.slane %v407, 7
  %v662 = vsel %vm594, %v660, %v661
  %v663 = vrot.slane %v408, 7
  %v664 = vsel %vm594, %v661, %v663
  %v665 = vrot.slane %v410, 7
  %v666 = vrot.slane %v411, 7
  %v667 = vsel %vm594, %v665, %v666
  %v668 = vrot.slane %v412, 7
  %v669 = vsel %vm594, %v666, %v668
  %v670 = vrot.slane %v414, 7
  %v671 = vrot.slane %v415, 7
  %v672 = vsel %vm594, %v670, %v671
  %v673 = vrot.slane %v416, 7
  %v674 = vsel %vm594, %v671, %v673
  %v675 = vrot.slane %v426, 7
  %v676 = vrot.slane %v427, 7
  %v677 = vsel %vm594, %v675, %v676
  %v678 = vrot.slane %v428, 7
  %v679 = vsel %vm594, %v676, %v678
  %v680 = vrot.slane %v430, 7
  %v681 = vrot.slane %v431, 7
  %v682 = vsel %vm594, %v680, %v681
  %v683 = vrot.slane %v432, 7
  %v684 = vsel %vm594, %v681, %v683
  %v685 = vrot.slane %v434, 7
  %v686 = vrot.slane %v435, 7
  %v687 = vsel %vm594, %v685, %v686
  %v688 = vrot.slane %v436, 7
  %v689 = vsel %vm594, %v686, %v688
  %v690 = vrot.slane %v438, 7
  %v691 = vrot.slane %v439, 7
  %v692 = vsel %vm594, %v690, %v691
  %v693 = vrot.slane %v440, 7
  %v694 = vsel %vm594, %v691, %v693
  %v695 = vrot.slane %v442, 7
  %v696 = vrot.slane %v443, 7
  %v697 = vsel %vm594, %v695, %v696
  %v698 = vrot.slane %v444, 7
  %v699 = vsel %vm594, %v696, %v698
  %v700 = vrot.slane %v446, 7
  %v701 = vrot.slane %v447, 7
  %v702 = vsel %vm594, %v700, %v701
  %v703 = vrot.slane %v448, 7
  %v704 = vsel %vm594, %v701, %v703
  %v705 = vrot.slane %v450, 7
  %v706 = vrot.slane %v451, 7
  %v707 = vsel %vm594, %v705, %v706
  %v708 = vrot.slane %v452, 7
  %v709 = vsel %vm594, %v706, %v708
  %v710 = vrot.slane %v454, 7
  %v711 = vrot.slane %v455, 7
  %v712 = vsel %vm594, %v710, %v711
  %v713 = vrot.slane %v456, 7
  %v714 = vsel %vm594, %v711, %v713
  %v715 = vrot.slane %v458, 7
  %v716 = vrot.slane %v459, 7
  %v717 = vsel %vm594, %v715, %v716
  %v718 = vrot.slane %v460, 7
  %v719 = vsel %vm594, %v716, %v718
  %v720 = vrot.slane %v462, 7
  %v721 = vrot.slane %v463, 7
  %v722 = vsel %vm594, %v720, %v721
  %v723 = vrot.slane %v464, 7
  %v724 = vsel %vm594, %v721, %v723
  %v725 = vrot.slane %v466, 7
  %v726 = vrot.slane %v467, 7
  %v727 = vsel %vm594, %v725, %v726
  %v728 = vrot.slane %v468, 7
  %v729 = vsel %vm594, %v726, %v728
  %v730 = vrot.slane %v470, 7
  %v731 = vrot.slane %v471, 7
  %v732 = vsel %vm594, %v730, %v731
  %v733 = vrot.slane %v472, 7
  %v734 = vsel %vm594, %v731, %v733
  %v735 = vrot.slane %v474, 7
  %v736 = vrot.slane %v475, 7
  %v737 = vsel %vm594, %v735, %v736
  %v738 = vrot.slane %v476, 7
  %v739 = vsel %vm594, %v736, %v738
  %v740 = vrot.slane %v478, 7
  %v741 = vrot.slane %v479, 7
  %v742 = vsel %vm594, %v740, %v741
  %v743 = vrot.slane %v480, 7
  %v744 = vsel %vm594, %v741, %v743
  %v745 = vrot.slane %v482, 7
  %v746 = vrot.slane %v483, 7
  %v747 = vsel %vm594, %v745, %v746
  %v748 = vrot.slane %v484, 7
  %v749 = vsel %vm594, %v746, %v748
  %v750 = vrot.slane %v486, 7
  %v751 = vrot.slane %v487, 7
  %v752 = vsel %vm594, %v750, %v751
  %v753 = vrot.slane %v488, 7
  %v754 = vsel %vm594, %v751, %v753
  %vm851 = vcmask 1046528
  %v852 = vrot.slane %v355, 1
  %v853 = vrot.slane %v356, 1
  %v854 = vsel %vm851, %v852, %v853
  %v855 = vrot.slane %v357, 1
  %v856 = vsel %vm851, %v853, %v855
  %v857 = vrot.slane %v359, 1
  %v858 = vrot.slane %v360, 1
  %v859 = vsel %vm851, %v857, %v858
  %v860 = vrot.slane %v361, 1
  %v861 = vsel %vm851, %v858, %v860
  %v862 = vrot.slane %v363, 1
  %v863 = vrot.slane %v364, 1
  %v864 = vsel %vm851, %v862, %v863
  %v865 = vrot.slane %v365, 1
  %v866 = vsel %vm851, %v863, %v865
  %v867 = vrot.slane %v367, 1
  %v868 = vrot.slane %v368, 1
  %v869 = vsel %vm851, %v867, %v868
  %v870 = vrot.slane %v369, 1
  %v871 = vsel %vm851, %v868, %v870
  %v872 = vrot.slane %v371, 1
  %v873 = vrot.slane %v372, 1
  %v874 = vsel %vm851, %v872, %v873
  %v875 = vrot.slane %v373, 1
  %v876 = vsel %vm851, %v873, %v875
  %v877 = vrot.slane %v375, 1
  %v878 = vrot.slane %v376, 1
  %v879 = vsel %vm851, %v877, %v878
  %v880 = vrot.slane %v377, 1
  %v881 = vsel %vm851, %v878, %v880
  %v882 = vrot.slane %v379, 1
  %v883 = vrot.slane %v380, 1
  %v884 = vsel %vm851, %v882, %v883
  %v885 = vrot.slane %v381, 1
  %v886 = vsel %vm851, %v883, %v885
  %v887 = vrot.slane %v383, 1
  %v888 = vrot.slane %v384, 1
  %v889 = vsel %vm851, %v887, %v888
  %v890 = vrot.slane %v385, 1
  %v891 = vsel %vm851, %v888, %v890
  %v892 = vrot.slane %v387, 1
  %v893 = vrot.slane %v388, 1
  %v894 = vsel %vm851, %v892, %v893
  %v895 = vrot.slane %v389, 1
  %v896 = vsel %vm851, %v893, %v895
  %v897 = vrot.slane %v391, 1
  %v898 = vrot.slane %v392, 1
  %v899 = vsel %vm851, %v897, %v898
  %v900 = vrot.slane %v393, 1
  %v901 = vsel %vm851, %v898, %v900
  %v902 = vrot.slane %v395, 1
  %v903 = vrot.slane %v396, 1
  %v904 = vsel %vm851, %v902, %v903
  %v905 = vrot.slane %v397, 1
  %v906 = vsel %vm851, %v903, %v905
  %v907 = vrot.slane %v399, 1
  %v908 = vrot.slane %v400, 1
  %v909 = vsel %vm851, %v907, %v908
  %v910 = vrot.slane %v401, 1
  %v911 = vsel %vm851, %v908, %v910
  %v912 = vrot.slane %v403, 1
  %v913 = vrot.slane %v404, 1
  %v914 = vsel %vm851, %v912, %v913
  %v915 = vrot.slane %v405, 1
  %v916 = vsel %vm851, %v913, %v915
  %v917 = vrot.slane %v407, 1
  %v918 = vrot.slane %v408, 1
  %v919 = vsel %vm851, %v917, %v918
  %v920 = vrot.slane %v409, 1
  %v921 = vsel %vm851, %v918, %v920
  %v922 = vrot.slane %v411, 1
  %v923 = vrot.slane %v412, 1
  %v924 = vsel %vm851, %v922, %v923
  %v925 = vrot.slane %v413, 1
  %v926 = vsel %vm851, %v923, %v925
  %v927 = vrot.slane %v415, 1
  %v928 = vrot.slane %v416, 1
  %v929 = vsel %vm851, %v927, %v928
  %v930 = vrot.slane %v417, 1
  %v931 = vsel %vm851, %v928, %v930
  %v932 = vrot.slane %v427, 1
  %v933 = vrot.slane %v428, 1
  %v934 = vsel %vm851, %v932, %v933
  %v935 = vrot.slane %v429, 1
  %v936 = vsel %vm851, %v933, %v935
  %v937 = vrot.slane %v431, 1
  %v938 = vrot.slane %v432, 1
  %v939 = vsel %vm851, %v937, %v938
  %v940 = vrot.slane %v433, 1
  %v941 = vsel %vm851, %v938, %v940
  %v942 = vrot.slane %v435, 1
  %v943 = vrot.slane %v436, 1
  %v944 = vsel %vm851, %v942, %v943
  %v945 = vrot.slane %v437, 1
  %v946 = vsel %vm851, %v943, %v945
  %v947 = vrot.slane %v439, 1
  %v948 = vrot.slane %v440, 1
  %v949 = vsel %vm851, %v947, %v948
  %v950 = vrot.slane %v441, 1
  %v951 = vsel %vm851, %v948, %v950
  %v952 = vrot.slane %v443, 1
  %v953 = vrot.slane %v444, 1
  %v954 = vsel %vm851, %v952, %v953
  %v955 = vrot.slane %v445, 1
  %v956 = vsel %vm851, %v953, %v955
  %v957 = vrot.slane %v447, 1
  %v958 = vrot.slane %v448, 1
  %v959 = vsel %vm851, %v957, %v958
  %v960 = vrot.slane %v449, 1
  %v961 = vsel %vm851, %v958, %v960
  %v962 = vrot.slane %v451, 1
  %v963 = vrot.slane %v452, 1
  %v964 = vsel %vm851, %v962, %v963
  %v965 = vrot.slane %v453, 1
  %v966 = vsel %vm851, %v963, %v965
  %v967 = vrot.slane %v455, 1
  %v968 = vrot.slane %v456, 1
  %v969 = vsel %vm851, %v967, %v968
  %v970 = vrot.slane %v457, 1
  %v971 = vsel %vm851, %v968, %v970
  %v972 = vrot.slane %v459, 1
  %v973 = vrot.slane %v460, 1
  %v974 = vsel %vm851, %v972, %v973
  %v975 = vrot.slane %v461, 1
  %v976 = vsel %vm851, %v973, %v975
  %v977 = vrot.slane %v463, 1
  %v978 = vrot.slane %v464, 1
  %v979 = vsel %vm851, %v977, %v978
  %v980 = vrot.slane %v465, 1
  %v981 = vsel %vm851, %v978, %v980
  %v982 = vrot.slane %v467, 1
  %v983 = vrot.slane %v468, 1
  %v984 = vsel %vm851, %v982, %v983
  %v985 = vrot.slane %v469, 1
  %v986 = vsel %vm851, %v983, %v985
  %v987 = vrot.slane %v471, 1
  %v988 = vrot.slane %v472, 1
  %v989 = vsel %vm851, %v987, %v988
  %v990 = vrot.slane %v473, 1
  %v991 = vsel %vm851, %v988, %v990
  %v992 = vrot.slane %v475, 1
  %v993 = vrot.slane %v476, 1
  %v994 = vsel %vm851, %v992, %v993
  %v995 = vrot.slane %v477, 1
  %v996 = vsel %vm851, %v993, %v995
  %v997 = vrot.slane %v479, 1
  %v998 = vrot.slane %v480, 1
  %v999 = vsel %vm851, %v997, %v998
  %v1000 = vrot.slane %v481, 1
  %v1001 = vsel %vm851, %v998, %v1000
  %v1002 = vrot.slane %v483, 1
  %v1003 = vrot.slane %v484, 1
  %v1004 = vsel %vm851, %v1002, %v1003
  %v1005 = vrot.slane %v485, 1
  %v1006 = vsel %vm851, %v1003, %v1005
  %v1007 = vrot.slane %v487, 1
  %v1008 = vrot.slane %v488, 1
  %v1009 = vsel %vm851, %v1007, %v1008
  %v1010 = vrot.slane %v489, 1
  %v1011 = vsel %vm851, %v1008, %v1010
  %v1018 = vrot.slane %v418, 7
  %v1019 = vrot.slane %v419, 7
  %v1020 = vsel %vm594, %v1018, %v1019
  %v1021 = vrot.slane %v420, 7
  %v1022 = vsel %vm594, %v1019, %v1021
  %v1023 = vrot.slane %v490, 7
  %v1024 = vrot.slane %v491, 7
  %v1025 = vsel %vm594, %v1023, %v1024
  %v1026 = vrot.slane %v492, 7
  %v1027 = vsel %vm594, %v1024, %v1026
  %v1030 = vrot.slane %v419, 1
  %v1031 = vrot.slane %v420, 1
  %v1032 = vsel %vm851, %v1030, %v1031
  %v1033 = vrot.slane %v421, 1
  %v1034 = vsel %vm851, %v1031, %v1033
  %v1035 = vrot.slane %v491, 1
  %v1036 = vrot.slane %v492, 1
  %v1037 = vsel %vm851, %v1035, %v1036
  %v1038 = vrot.slane %v493, 1
  %v1039 = vsel %vm851, %v1036, %v1038
  %v1046 = vrot.slane %v422, 7
  %v1047 = vrot.slane %v423, 7
  %v1048 = vsel %vm594, %v1046, %v1047
  %v1049 = vrot.slane %v424, 7
  %v1050 = vsel %vm594, %v1047, %v1049
  %v1051 = vrot.slane %v494, 7
  %v1052 = vrot.slane %v495, 7
  %v1053 = vsel %vm594, %v1051, %v1052
  %v1054 = vrot.slane %v496, 7
  %v1055 = vsel %vm594, %v1052, %v1054
  %v1058 = vrot.slane %v423, 1
  %v1059 = vrot.slane %v424, 1
  %v1060 = vsel %vm851, %v1058, %v1059
  %v1061 = vrot.slane %v425, 1
  %v1062 = vsel %vm851, %v1059, %v1061
  %v1063 = vrot.slane %v495, 1
  %v1064 = vrot.slane %v496, 1
  %v1065 = vsel %vm851, %v1063, %v1064
  %v1066 = vrot.slane %v497, 1
  %v1067 = vsel %vm851, %v1064, %v1066
  %1132 = vrot.lane.b32.xlu0 %v355, 16
  %v1133 = vpop.permute.xlu0 %1132
  %1134 = vrot.lane.b32.xlu0 %v356, 16
  %v1135 = vpop.permute.xlu0 %1134
  %1136 = vrot.lane.b32.xlu0 %v359, 16
  %v1137 = vpop.permute.xlu0 %1136
  %1138 = vrot.lane.b32.xlu0 %v360, 16
  %v1139 = vpop.permute.xlu0 %1138
  %1140 = vrot.lane.b32.xlu0 %v363, 16
  %v1141 = vpop.permute.xlu0 %1140
  %1142 = vrot.lane.b32.xlu0 %v364, 16
  %v1143 = vpop.permute.xlu0 %1142
  %1144 = vrot.lane.b32.xlu0 %v367, 16
  %v1145 = vpop.permute.xlu0 %1144
  %1146 = vrot.lane.b32.xlu0 %v368, 16
  %v1147 = vpop.permute.xlu0 %1146
  %1148 = vrot.lane.b32.xlu0 %v371, 16
  %v1149 = vpop.permute.xlu0 %1148
  %1150 = vrot.lane.b32.xlu0 %v372, 16
  %v1151 = vpop.permute.xlu0 %1150
  %1152 = vrot.lane.b32.xlu0 %v375, 16
  %v1153 = vpop.permute.xlu0 %1152
  %1154 = vrot.lane.b32.xlu0 %v376, 16
  %v1155 = vpop.permute.xlu0 %1154
  %1156 = vrot.lane.b32.xlu0 %v379, 16
  %v1157 = vpop.permute.xlu0 %1156
  %1158 = vrot.lane.b32.xlu0 %v380, 16
  %v1159 = vpop.permute.xlu0 %1158
  %1160 = vrot.lane.b32.xlu0 %v383, 16
  %v1161 = vpop.permute.xlu0 %1160
  %1162 = vrot.lane.b32.xlu0 %v384, 16
  %v1163 = vpop.permute.xlu0 %1162
  %1164 = vrot.lane.b32.xlu0 %v387, 16
  %v1165 = vpop.permute.xlu0 %1164
  %1166 = vrot.lane.b32.xlu0 %v388, 16
  %v1167 = vpop.permute.xlu0 %1166
  %1168 = vrot.lane.b32.xlu0 %v391, 16
  %v1169 = vpop.permute.xlu0 %1168
  %1170 = vrot.lane.b32.xlu0 %v392, 16
  %v1171 = vpop.permute.xlu0 %1170
  %1172 = vrot.lane.b32.xlu0 %v395, 16
  %v1173 = vpop.permute.xlu0 %1172
  %1174 = vrot.lane.b32.xlu0 %v396, 16
  %v1175 = vpop.permute.xlu0 %1174
  %1176 = vrot.lane.b32.xlu0 %v399, 16
  %v1177 = vpop.permute.xlu0 %1176
  %1178 = vrot.lane.b32.xlu0 %v400, 16
  %v1179 = vpop.permute.xlu0 %1178
  %1180 = vrot.lane.b32.xlu0 %v403, 16
  %v1181 = vpop.permute.xlu0 %1180
  %1182 = vrot.lane.b32.xlu0 %v404, 16
  %v1183 = vpop.permute.xlu0 %1182
  %1184 = vrot.lane.b32.xlu0 %v407, 16
  %v1185 = vpop.permute.xlu0 %1184
  %1186 = vrot.lane.b32.xlu0 %v408, 16
  %v1187 = vpop.permute.xlu0 %1186
  %1188 = vrot.lane.b32.xlu0 %v411, 16
  %v1189 = vpop.permute.xlu0 %1188
  %1190 = vrot.lane.b32.xlu0 %v412, 16
  %v1191 = vpop.permute.xlu0 %1190
  %1192 = vrot.lane.b32.xlu0 %v415, 16
  %v1193 = vpop.permute.xlu0 %1192
  %1194 = vrot.lane.b32.xlu0 %v416, 16
  %v1195 = vpop.permute.xlu0 %1194
  %1196 = vrot.lane.b32.xlu0 %v427, 16
  %v1197 = vpop.permute.xlu0 %1196
  %1198 = vrot.lane.b32.xlu0 %v428, 16
  %v1199 = vpop.permute.xlu0 %1198
  %1200 = vrot.lane.b32.xlu0 %v431, 16
  %v1201 = vpop.permute.xlu0 %1200
  %1202 = vrot.lane.b32.xlu0 %v432, 16
  %v1203 = vpop.permute.xlu0 %1202
  %1204 = vrot.lane.b32.xlu0 %v435, 16
  %v1205 = vpop.permute.xlu0 %1204
  %1206 = vrot.lane.b32.xlu0 %v436, 16
  %v1207 = vpop.permute.xlu0 %1206
  %1208 = vrot.lane.b32.xlu0 %v439, 16
  %v1209 = vpop.permute.xlu0 %1208
  %1210 = vrot.lane.b32.xlu0 %v440, 16
  %v1211 = vpop.permute.xlu0 %1210
  %1212 = vrot.lane.b32.xlu0 %v443, 16
  %v1213 = vpop.permute.xlu0 %1212
  %1214 = vrot.lane.b32.xlu0 %v444, 16
  %v1215 = vpop.permute.xlu0 %1214
  %1216 = vrot.lane.b32.xlu0 %v447, 16
  %v1217 = vpop.permute.xlu0 %1216
  %1218 = vrot.lane.b32.xlu0 %v448, 16
  %v1219 = vpop.permute.xlu0 %1218
  %1220 = vrot.lane.b32.xlu0 %v451, 16
  %v1221 = vpop.permute.xlu0 %1220
  %1222 = vrot.lane.b32.xlu0 %v452, 16
  %v1223 = vpop.permute.xlu0 %1222
  %1224 = vrot.lane.b32.xlu0 %v455, 16
  %v1225 = vpop.permute.xlu0 %1224
  %1226 = vrot.lane.b32.xlu0 %v456, 16
  %v1227 = vpop.permute.xlu0 %1226
  %1228 = vrot.lane.b32.xlu0 %v459, 16
  %v1229 = vpop.permute.xlu0 %1228
  %1230 = vrot.lane.b32.xlu0 %v460, 16
  %v1231 = vpop.permute.xlu0 %1230
  %1232 = vrot.lane.b32.xlu0 %v463, 16
  %v1233 = vpop.permute.xlu0 %1232
  %1234 = vrot.lane.b32.xlu0 %v464, 16
  %v1235 = vpop.permute.xlu0 %1234
  %1236 = vrot.lane.b32.xlu0 %v467, 16
  %v1237 = vpop.permute.xlu0 %1236
  %1238 = vrot.lane.b32.xlu0 %v468, 16
  %v1239 = vpop.permute.xlu0 %1238
  %1240 = vrot.lane.b32.xlu0 %v471, 16
  %v1241 = vpop.permute.xlu0 %1240
  %1242 = vrot.lane.b32.xlu0 %v472, 16
  %v1243 = vpop.permute.xlu0 %1242
  %1244 = vrot.lane.b32.xlu0 %v475, 16
  %v1245 = vpop.permute.xlu0 %1244
  %1246 = vrot.lane.b32.xlu0 %v476, 16
  %v1247 = vpop.permute.xlu0 %1246
  %1248 = vrot.lane.b32.xlu0 %v479, 16
  %v1249 = vpop.permute.xlu0 %1248
  %1250 = vrot.lane.b32.xlu0 %v480, 16
  %v1251 = vpop.permute.xlu0 %1250
  %1252 = vrot.lane.b32.xlu0 %v483, 16
  %v1253 = vpop.permute.xlu0 %1252
  %1254 = vrot.lane.b32.xlu0 %v484, 16
  %v1255 = vpop.permute.xlu0 %1254
  %1256 = vrot.lane.b32.xlu0 %v487, 16
  %v1257 = vpop.permute.xlu0 %1256
  %1258 = vrot.lane.b32.xlu0 %v488, 16
  %v1259 = vpop.permute.xlu0 %1258
  %1324 = vrot.lane.b32.xlu0 %v854, 32
  %v1325 = vpop.permute.xlu0 %1324
  %1326 = vrot.lane.b32.xlu0 %v856, 32
  %v1327 = vpop.permute.xlu0 %1326
  %1328 = vrot.lane.b32.xlu0 %v859, 32
  %v1329 = vpop.permute.xlu0 %1328
  %1330 = vrot.lane.b32.xlu0 %v861, 32
  %v1331 = vpop.permute.xlu0 %1330
  %1332 = vrot.lane.b32.xlu0 %v864, 32
  %v1333 = vpop.permute.xlu0 %1332
  %1334 = vrot.lane.b32.xlu0 %v866, 32
  %v1335 = vpop.permute.xlu0 %1334
  %1336 = vrot.lane.b32.xlu0 %v869, 32
  %v1337 = vpop.permute.xlu0 %1336
  %1338 = vrot.lane.b32.xlu0 %v871, 32
  %v1339 = vpop.permute.xlu0 %1338
  %1340 = vrot.lane.b32.xlu0 %v874, 32
  %v1341 = vpop.permute.xlu0 %1340
  %1342 = vrot.lane.b32.xlu0 %v876, 32
  %v1343 = vpop.permute.xlu0 %1342
  %1344 = vrot.lane.b32.xlu0 %v879, 32
  %v1345 = vpop.permute.xlu0 %1344
  %1346 = vrot.lane.b32.xlu0 %v881, 32
  %v1347 = vpop.permute.xlu0 %1346
  %1348 = vrot.lane.b32.xlu0 %v884, 32
  %v1349 = vpop.permute.xlu0 %1348
  %1350 = vrot.lane.b32.xlu0 %v886, 32
  %v1351 = vpop.permute.xlu0 %1350
  %1352 = vrot.lane.b32.xlu0 %v889, 32
  %v1353 = vpop.permute.xlu0 %1352
  %1354 = vrot.lane.b32.xlu0 %v891, 32
  %v1355 = vpop.permute.xlu0 %1354
  %1356 = vrot.lane.b32.xlu0 %v894, 32
  %v1357 = vpop.permute.xlu0 %1356
  %1358 = vrot.lane.b32.xlu0 %v896, 32
  %v1359 = vpop.permute.xlu0 %1358
  %1360 = vrot.lane.b32.xlu0 %v899, 32
  %v1361 = vpop.permute.xlu0 %1360
  %1362 = vrot.lane.b32.xlu0 %v901, 32
  %v1363 = vpop.permute.xlu0 %1362
  %1364 = vrot.lane.b32.xlu0 %v904, 32
  %v1365 = vpop.permute.xlu0 %1364
  %1366 = vrot.lane.b32.xlu0 %v906, 32
  %v1367 = vpop.permute.xlu0 %1366
  %1368 = vrot.lane.b32.xlu0 %v909, 32
  %v1369 = vpop.permute.xlu0 %1368
  %1370 = vrot.lane.b32.xlu0 %v911, 32
  %v1371 = vpop.permute.xlu0 %1370
  %1372 = vrot.lane.b32.xlu0 %v914, 32
  %v1373 = vpop.permute.xlu0 %1372
  %1374 = vrot.lane.b32.xlu0 %v916, 32
  %v1375 = vpop.permute.xlu0 %1374
  %1376 = vrot.lane.b32.xlu0 %v919, 32
  %v1377 = vpop.permute.xlu0 %1376
  %1378 = vrot.lane.b32.xlu0 %v921, 32
  %v1379 = vpop.permute.xlu0 %1378
  %1380 = vrot.lane.b32.xlu0 %v924, 32
  %v1381 = vpop.permute.xlu0 %1380
  %1382 = vrot.lane.b32.xlu0 %v926, 32
  %v1383 = vpop.permute.xlu0 %1382
  %1384 = vrot.lane.b32.xlu0 %v929, 32
  %v1385 = vpop.permute.xlu0 %1384
  %1386 = vrot.lane.b32.xlu0 %v931, 32
  %v1387 = vpop.permute.xlu0 %1386
  %1388 = vrot.lane.b32.xlu0 %v934, 32
  %v1389 = vpop.permute.xlu0 %1388
  %1390 = vrot.lane.b32.xlu0 %v936, 32
  %v1391 = vpop.permute.xlu0 %1390
  %1392 = vrot.lane.b32.xlu0 %v939, 32
  %v1393 = vpop.permute.xlu0 %1392
  %1394 = vrot.lane.b32.xlu0 %v941, 32
  %v1395 = vpop.permute.xlu0 %1394
  %1396 = vrot.lane.b32.xlu0 %v944, 32
  %v1397 = vpop.permute.xlu0 %1396
  %1398 = vrot.lane.b32.xlu0 %v946, 32
  %v1399 = vpop.permute.xlu0 %1398
  %1400 = vrot.lane.b32.xlu0 %v949, 32
  %v1401 = vpop.permute.xlu0 %1400
  %1402 = vrot.lane.b32.xlu0 %v951, 32
  %v1403 = vpop.permute.xlu0 %1402
  %1404 = vrot.lane.b32.xlu0 %v954, 32
  %v1405 = vpop.permute.xlu0 %1404
  %1406 = vrot.lane.b32.xlu0 %v956, 32
  %v1407 = vpop.permute.xlu0 %1406
  %1408 = vrot.lane.b32.xlu0 %v959, 32
  %v1409 = vpop.permute.xlu0 %1408
  %1410 = vrot.lane.b32.xlu0 %v961, 32
  %v1411 = vpop.permute.xlu0 %1410
  %1412 = vrot.lane.b32.xlu0 %v964, 32
  %v1413 = vpop.permute.xlu0 %1412
  %1414 = vrot.lane.b32.xlu0 %v966, 32
  %v1415 = vpop.permute.xlu0 %1414
  %1416 = vrot.lane.b32.xlu0 %v969, 32
  %v1417 = vpop.permute.xlu0 %1416
  %1418 = vrot.lane.b32.xlu0 %v971, 32
  %v1419 = vpop.permute.xlu0 %1418
  %1420 = vrot.lane.b32.xlu0 %v974, 32
  %v1421 = vpop.permute.xlu0 %1420
  %1422 = vrot.lane.b32.xlu0 %v976, 32
  %v1423 = vpop.permute.xlu0 %1422
  %1424 = vrot.lane.b32.xlu0 %v979, 32
  %v1425 = vpop.permute.xlu0 %1424
  %1426 = vrot.lane.b32.xlu0 %v981, 32
  %v1427 = vpop.permute.xlu0 %1426
  %1428 = vrot.lane.b32.xlu0 %v984, 32
  %v1429 = vpop.permute.xlu0 %1428
  %1430 = vrot.lane.b32.xlu0 %v986, 32
  %v1431 = vpop.permute.xlu0 %1430
  %1432 = vrot.lane.b32.xlu0 %v989, 32
  %v1433 = vpop.permute.xlu0 %1432
  %1434 = vrot.lane.b32.xlu0 %v991, 32
  %v1435 = vpop.permute.xlu0 %1434
  %1436 = vrot.lane.b32.xlu0 %v994, 32
  %v1437 = vpop.permute.xlu0 %1436
  %1438 = vrot.lane.b32.xlu0 %v996, 32
  %v1439 = vpop.permute.xlu0 %1438
  %1440 = vrot.lane.b32.xlu0 %v999, 32
  %v1441 = vpop.permute.xlu0 %1440
  %1442 = vrot.lane.b32.xlu0 %v1001, 32
  %v1443 = vpop.permute.xlu0 %1442
  %1444 = vrot.lane.b32.xlu0 %v1004, 32
  %v1445 = vpop.permute.xlu0 %1444
  %1446 = vrot.lane.b32.xlu0 %v1006, 32
  %v1447 = vpop.permute.xlu0 %1446
  %1448 = vrot.lane.b32.xlu0 %v1009, 32
  %v1449 = vpop.permute.xlu0 %1448
  %1450 = vrot.lane.b32.xlu0 %v1011, 32
  %v1451 = vpop.permute.xlu0 %1450
  %1516 = vrot.lane.b32.xlu0 %v602, 48
  %v1517 = vpop.permute.xlu0 %1516
  %1518 = vrot.lane.b32.xlu0 %v604, 48
  %v1519 = vpop.permute.xlu0 %1518
  %1520 = vrot.lane.b32.xlu0 %v607, 48
  %v1521 = vpop.permute.xlu0 %1520
  %1522 = vrot.lane.b32.xlu0 %v609, 48
  %v1523 = vpop.permute.xlu0 %1522
  %1524 = vrot.lane.b32.xlu0 %v612, 48
  %v1525 = vpop.permute.xlu0 %1524
  %1526 = vrot.lane.b32.xlu0 %v614, 48
  %v1527 = vpop.permute.xlu0 %1526
  %1528 = vrot.lane.b32.xlu0 %v617, 48
  %v1529 = vpop.permute.xlu0 %1528
  %1530 = vrot.lane.b32.xlu0 %v619, 48
  %v1531 = vpop.permute.xlu0 %1530
  %1532 = vrot.lane.b32.xlu0 %v622, 48
  %v1533 = vpop.permute.xlu0 %1532
  %1534 = vrot.lane.b32.xlu0 %v624, 48
  %v1535 = vpop.permute.xlu0 %1534
  %1536 = vrot.lane.b32.xlu0 %v627, 48
  %v1537 = vpop.permute.xlu0 %1536
  %1538 = vrot.lane.b32.xlu0 %v629, 48
  %v1539 = vpop.permute.xlu0 %1538
  %1540 = vrot.lane.b32.xlu0 %v632, 48
  %v1541 = vpop.permute.xlu0 %1540
  %1542 = vrot.lane.b32.xlu0 %v634, 48
  %v1543 = vpop.permute.xlu0 %1542
  %1544 = vrot.lane.b32.xlu0 %v637, 48
  %v1545 = vpop.permute.xlu0 %1544
  %1546 = vrot.lane.b32.xlu0 %v639, 48
  %v1547 = vpop.permute.xlu0 %1546
  %1548 = vrot.lane.b32.xlu0 %v642, 48
  %v1549 = vpop.permute.xlu0 %1548
  %1550 = vrot.lane.b32.xlu0 %v644, 48
  %v1551 = vpop.permute.xlu0 %1550
  %1552 = vrot.lane.b32.xlu0 %v647, 48
  %v1553 = vpop.permute.xlu0 %1552
  %1554 = vrot.lane.b32.xlu0 %v649, 48
  %v1555 = vpop.permute.xlu0 %1554
  %1556 = vrot.lane.b32.xlu0 %v652, 48
  %v1557 = vpop.permute.xlu0 %1556
  %1558 = vrot.lane.b32.xlu0 %v654, 48
  %v1559 = vpop.permute.xlu0 %1558
  %1560 = vrot.lane.b32.xlu0 %v657, 48
  %v1561 = vpop.permute.xlu0 %1560
  %1562 = vrot.lane.b32.xlu0 %v659, 48
  %v1563 = vpop.permute.xlu0 %1562
  %1564 = vrot.lane.b32.xlu0 %v662, 48
  %v1565 = vpop.permute.xlu0 %1564
  %1566 = vrot.lane.b32.xlu0 %v664, 48
  %v1567 = vpop.permute.xlu0 %1566
  %1568 = vrot.lane.b32.xlu0 %v667, 48
  %v1569 = vpop.permute.xlu0 %1568
  %1570 = vrot.lane.b32.xlu0 %v669, 48
  %v1571 = vpop.permute.xlu0 %1570
  %1572 = vrot.lane.b32.xlu0 %v672, 48
  %v1573 = vpop.permute.xlu0 %1572
  %1574 = vrot.lane.b32.xlu0 %v674, 48
  %v1575 = vpop.permute.xlu0 %1574
  %1576 = vrot.lane.b32.xlu0 %v1020, 48
  %v1577 = vpop.permute.xlu0 %1576
  %1578 = vrot.lane.b32.xlu0 %v1022, 48
  %v1579 = vpop.permute.xlu0 %1578
  %1580 = vrot.lane.b32.xlu0 %v682, 48
  %v1581 = vpop.permute.xlu0 %1580
  %1582 = vrot.lane.b32.xlu0 %v684, 48
  %v1583 = vpop.permute.xlu0 %1582
  %1584 = vrot.lane.b32.xlu0 %v687, 48
  %v1585 = vpop.permute.xlu0 %1584
  %1586 = vrot.lane.b32.xlu0 %v689, 48
  %v1587 = vpop.permute.xlu0 %1586
  %1588 = vrot.lane.b32.xlu0 %v692, 48
  %v1589 = vpop.permute.xlu0 %1588
  %1590 = vrot.lane.b32.xlu0 %v694, 48
  %v1591 = vpop.permute.xlu0 %1590
  %1592 = vrot.lane.b32.xlu0 %v697, 48
  %v1593 = vpop.permute.xlu0 %1592
  %1594 = vrot.lane.b32.xlu0 %v699, 48
  %v1595 = vpop.permute.xlu0 %1594
  %1596 = vrot.lane.b32.xlu0 %v702, 48
  %v1597 = vpop.permute.xlu0 %1596
  %1598 = vrot.lane.b32.xlu0 %v704, 48
  %v1599 = vpop.permute.xlu0 %1598
  %1600 = vrot.lane.b32.xlu0 %v707, 48
  %v1601 = vpop.permute.xlu0 %1600
  %1602 = vrot.lane.b32.xlu0 %v709, 48
  %v1603 = vpop.permute.xlu0 %1602
  %1604 = vrot.lane.b32.xlu0 %v712, 48
  %v1605 = vpop.permute.xlu0 %1604
  %1606 = vrot.lane.b32.xlu0 %v714, 48
  %v1607 = vpop.permute.xlu0 %1606
  %1608 = vrot.lane.b32.xlu0 %v717, 48
  %v1609 = vpop.permute.xlu0 %1608
  %1610 = vrot.lane.b32.xlu0 %v719, 48
  %v1611 = vpop.permute.xlu0 %1610
  %1612 = vrot.lane.b32.xlu0 %v722, 48
  %v1613 = vpop.permute.xlu0 %1612
  %1614 = vrot.lane.b32.xlu0 %v724, 48
  %v1615 = vpop.permute.xlu0 %1614
  %1616 = vrot.lane.b32.xlu0 %v727, 48
  %v1617 = vpop.permute.xlu0 %1616
  %1618 = vrot.lane.b32.xlu0 %v729, 48
  %v1619 = vpop.permute.xlu0 %1618
  %1620 = vrot.lane.b32.xlu0 %v732, 48
  %v1621 = vpop.permute.xlu0 %1620
  %1622 = vrot.lane.b32.xlu0 %v734, 48
  %v1623 = vpop.permute.xlu0 %1622
  %1624 = vrot.lane.b32.xlu0 %v737, 48
  %v1625 = vpop.permute.xlu0 %1624
  %1626 = vrot.lane.b32.xlu0 %v739, 48
  %v1627 = vpop.permute.xlu0 %1626
  %1628 = vrot.lane.b32.xlu0 %v742, 48
  %v1629 = vpop.permute.xlu0 %1628
  %1630 = vrot.lane.b32.xlu0 %v744, 48
  %v1631 = vpop.permute.xlu0 %1630
  %1632 = vrot.lane.b32.xlu0 %v747, 48
  %v1633 = vpop.permute.xlu0 %1632
  %1634 = vrot.lane.b32.xlu0 %v749, 48
  %v1635 = vpop.permute.xlu0 %1634
  %1636 = vrot.lane.b32.xlu0 %v752, 48
  %v1637 = vpop.permute.xlu0 %1636
  %1638 = vrot.lane.b32.xlu0 %v754, 48
  %v1639 = vpop.permute.xlu0 %1638
  %1640 = vrot.lane.b32.xlu0 %v1025, 48
  %v1641 = vpop.permute.xlu0 %1640
  %1642 = vrot.lane.b32.xlu0 %v1027, 48
  %v1643 = vpop.permute.xlu0 %1642
  %1708 = vrot.lane.b32.xlu0 %v359, 64
  %v1709 = vpop.permute.xlu0 %1708
  %1710 = vrot.lane.b32.xlu0 %v360, 64
  %v1711 = vpop.permute.xlu0 %1710
  %1712 = vrot.lane.b32.xlu0 %v363, 64
  %v1713 = vpop.permute.xlu0 %1712
  %1714 = vrot.lane.b32.xlu0 %v364, 64
  %v1715 = vpop.permute.xlu0 %1714
  %1716 = vrot.lane.b32.xlu0 %v367, 64
  %v1717 = vpop.permute.xlu0 %1716
  %1718 = vrot.lane.b32.xlu0 %v368, 64
  %v1719 = vpop.permute.xlu0 %1718
  %1720 = vrot.lane.b32.xlu0 %v371, 64
  %v1721 = vpop.permute.xlu0 %1720
  %1722 = vrot.lane.b32.xlu0 %v372, 64
  %v1723 = vpop.permute.xlu0 %1722
  %1724 = vrot.lane.b32.xlu0 %v375, 64
  %v1725 = vpop.permute.xlu0 %1724
  %1726 = vrot.lane.b32.xlu0 %v376, 64
  %v1727 = vpop.permute.xlu0 %1726
  %1728 = vrot.lane.b32.xlu0 %v379, 64
  %v1729 = vpop.permute.xlu0 %1728
  %1730 = vrot.lane.b32.xlu0 %v380, 64
  %v1731 = vpop.permute.xlu0 %1730
  %1732 = vrot.lane.b32.xlu0 %v383, 64
  %v1733 = vpop.permute.xlu0 %1732
  %1734 = vrot.lane.b32.xlu0 %v384, 64
  %v1735 = vpop.permute.xlu0 %1734
  %1736 = vrot.lane.b32.xlu0 %v387, 64
  %v1737 = vpop.permute.xlu0 %1736
  %1738 = vrot.lane.b32.xlu0 %v388, 64
  %v1739 = vpop.permute.xlu0 %1738
  %1740 = vrot.lane.b32.xlu0 %v391, 64
  %v1741 = vpop.permute.xlu0 %1740
  %1742 = vrot.lane.b32.xlu0 %v392, 64
  %v1743 = vpop.permute.xlu0 %1742
  %1744 = vrot.lane.b32.xlu0 %v395, 64
  %v1745 = vpop.permute.xlu0 %1744
  %1746 = vrot.lane.b32.xlu0 %v396, 64
  %v1747 = vpop.permute.xlu0 %1746
  %1748 = vrot.lane.b32.xlu0 %v399, 64
  %v1749 = vpop.permute.xlu0 %1748
  %1750 = vrot.lane.b32.xlu0 %v400, 64
  %v1751 = vpop.permute.xlu0 %1750
  %1752 = vrot.lane.b32.xlu0 %v403, 64
  %v1753 = vpop.permute.xlu0 %1752
  %1754 = vrot.lane.b32.xlu0 %v404, 64
  %v1755 = vpop.permute.xlu0 %1754
  %1756 = vrot.lane.b32.xlu0 %v407, 64
  %v1757 = vpop.permute.xlu0 %1756
  %1758 = vrot.lane.b32.xlu0 %v408, 64
  %v1759 = vpop.permute.xlu0 %1758
  %1760 = vrot.lane.b32.xlu0 %v411, 64
  %v1761 = vpop.permute.xlu0 %1760
  %1762 = vrot.lane.b32.xlu0 %v412, 64
  %v1763 = vpop.permute.xlu0 %1762
  %1764 = vrot.lane.b32.xlu0 %v415, 64
  %v1765 = vpop.permute.xlu0 %1764
  %1766 = vrot.lane.b32.xlu0 %v416, 64
  %v1767 = vpop.permute.xlu0 %1766
  %1768 = vrot.lane.b32.xlu0 %v419, 64
  %v1769 = vpop.permute.xlu0 %1768
  %1770 = vrot.lane.b32.xlu0 %v420, 64
  %v1771 = vpop.permute.xlu0 %1770
  %1772 = vrot.lane.b32.xlu0 %v431, 64
  %v1773 = vpop.permute.xlu0 %1772
  %1774 = vrot.lane.b32.xlu0 %v432, 64
  %v1775 = vpop.permute.xlu0 %1774
  %1776 = vrot.lane.b32.xlu0 %v435, 64
  %v1777 = vpop.permute.xlu0 %1776
  %1778 = vrot.lane.b32.xlu0 %v436, 64
  %v1779 = vpop.permute.xlu0 %1778
  %1780 = vrot.lane.b32.xlu0 %v439, 64
  %v1781 = vpop.permute.xlu0 %1780
  %1782 = vrot.lane.b32.xlu0 %v440, 64
  %v1783 = vpop.permute.xlu0 %1782
  %1784 = vrot.lane.b32.xlu0 %v443, 64
  %v1785 = vpop.permute.xlu0 %1784
  %1786 = vrot.lane.b32.xlu0 %v444, 64
  %v1787 = vpop.permute.xlu0 %1786
  %1788 = vrot.lane.b32.xlu0 %v447, 64
  %v1789 = vpop.permute.xlu0 %1788
  %1790 = vrot.lane.b32.xlu0 %v448, 64
  %v1791 = vpop.permute.xlu0 %1790
  %1792 = vrot.lane.b32.xlu0 %v451, 64
  %v1793 = vpop.permute.xlu0 %1792
  %1794 = vrot.lane.b32.xlu0 %v452, 64
  %v1795 = vpop.permute.xlu0 %1794
  %1796 = vrot.lane.b32.xlu0 %v455, 64
  %v1797 = vpop.permute.xlu0 %1796
  %1798 = vrot.lane.b32.xlu0 %v456, 64
  %v1799 = vpop.permute.xlu0 %1798
  %1800 = vrot.lane.b32.xlu0 %v459, 64
  %v1801 = vpop.permute.xlu0 %1800
  %1802 = vrot.lane.b32.xlu0 %v460, 64
  %v1803 = vpop.permute.xlu0 %1802
  %1804 = vrot.lane.b32.xlu0 %v463, 64
  %v1805 = vpop.permute.xlu0 %1804
  %1806 = vrot.lane.b32.xlu0 %v464, 64
  %v1807 = vpop.permute.xlu0 %1806
  %1808 = vrot.lane.b32.xlu0 %v467, 64
  %v1809 = vpop.permute.xlu0 %1808
  %1810 = vrot.lane.b32.xlu0 %v468, 64
  %v1811 = vpop.permute.xlu0 %1810
  %1812 = vrot.lane.b32.xlu0 %v471, 64
  %v1813 = vpop.permute.xlu0 %1812
  %1814 = vrot.lane.b32.xlu0 %v472, 64
  %v1815 = vpop.permute.xlu0 %1814
  %1816 = vrot.lane.b32.xlu0 %v475, 64
  %v1817 = vpop.permute.xlu0 %1816
  %1818 = vrot.lane.b32.xlu0 %v476, 64
  %v1819 = vpop.permute.xlu0 %1818
  %1820 = vrot.lane.b32.xlu0 %v479, 64
  %v1821 = vpop.permute.xlu0 %1820
  %1822 = vrot.lane.b32.xlu0 %v480, 64
  %v1823 = vpop.permute.xlu0 %1822
  %1824 = vrot.lane.b32.xlu0 %v483, 64
  %v1825 = vpop.permute.xlu0 %1824
  %1826 = vrot.lane.b32.xlu0 %v484, 64
  %v1827 = vpop.permute.xlu0 %1826
  %1828 = vrot.lane.b32.xlu0 %v487, 64
  %v1829 = vpop.permute.xlu0 %1828
  %1830 = vrot.lane.b32.xlu0 %v488, 64
  %v1831 = vpop.permute.xlu0 %1830
  %1832 = vrot.lane.b32.xlu0 %v491, 64
  %v1833 = vpop.permute.xlu0 %1832
  %1834 = vrot.lane.b32.xlu0 %v492, 64
  %v1835 = vpop.permute.xlu0 %1834
  %1900 = vrot.lane.b32.xlu0 %v859, 80
  %v1901 = vpop.permute.xlu0 %1900
  %1902 = vrot.lane.b32.xlu0 %v861, 80
  %v1903 = vpop.permute.xlu0 %1902
  %1904 = vrot.lane.b32.xlu0 %v864, 80
  %v1905 = vpop.permute.xlu0 %1904
  %1906 = vrot.lane.b32.xlu0 %v866, 80
  %v1907 = vpop.permute.xlu0 %1906
  %1908 = vrot.lane.b32.xlu0 %v869, 80
  %v1909 = vpop.permute.xlu0 %1908
  %1910 = vrot.lane.b32.xlu0 %v871, 80
  %v1911 = vpop.permute.xlu0 %1910
  %1912 = vrot.lane.b32.xlu0 %v874, 80
  %v1913 = vpop.permute.xlu0 %1912
  %1914 = vrot.lane.b32.xlu0 %v876, 80
  %v1915 = vpop.permute.xlu0 %1914
  %1916 = vrot.lane.b32.xlu0 %v879, 80
  %v1917 = vpop.permute.xlu0 %1916
  %1918 = vrot.lane.b32.xlu0 %v881, 80
  %v1919 = vpop.permute.xlu0 %1918
  %1920 = vrot.lane.b32.xlu0 %v884, 80
  %v1921 = vpop.permute.xlu0 %1920
  %1922 = vrot.lane.b32.xlu0 %v886, 80
  %v1923 = vpop.permute.xlu0 %1922
  %1924 = vrot.lane.b32.xlu0 %v889, 80
  %v1925 = vpop.permute.xlu0 %1924
  %1926 = vrot.lane.b32.xlu0 %v891, 80
  %v1927 = vpop.permute.xlu0 %1926
  %1928 = vrot.lane.b32.xlu0 %v894, 80
  %v1929 = vpop.permute.xlu0 %1928
  %1930 = vrot.lane.b32.xlu0 %v896, 80
  %v1931 = vpop.permute.xlu0 %1930
  %1932 = vrot.lane.b32.xlu0 %v899, 80
  %v1933 = vpop.permute.xlu0 %1932
  %1934 = vrot.lane.b32.xlu0 %v901, 80
  %v1935 = vpop.permute.xlu0 %1934
  %1936 = vrot.lane.b32.xlu0 %v904, 80
  %v1937 = vpop.permute.xlu0 %1936
  %1938 = vrot.lane.b32.xlu0 %v906, 80
  %v1939 = vpop.permute.xlu0 %1938
  %1940 = vrot.lane.b32.xlu0 %v909, 80
  %v1941 = vpop.permute.xlu0 %1940
  %1942 = vrot.lane.b32.xlu0 %v911, 80
  %v1943 = vpop.permute.xlu0 %1942
  %1944 = vrot.lane.b32.xlu0 %v914, 80
  %v1945 = vpop.permute.xlu0 %1944
  %1946 = vrot.lane.b32.xlu0 %v916, 80
  %v1947 = vpop.permute.xlu0 %1946
  %1948 = vrot.lane.b32.xlu0 %v919, 80
  %v1949 = vpop.permute.xlu0 %1948
  %1950 = vrot.lane.b32.xlu0 %v921, 80
  %v1951 = vpop.permute.xlu0 %1950
  %1952 = vrot.lane.b32.xlu0 %v924, 80
  %v1953 = vpop.permute.xlu0 %1952
  %1954 = vrot.lane.b32.xlu0 %v926, 80
  %v1955 = vpop.permute.xlu0 %1954
  %1956 = vrot.lane.b32.xlu0 %v929, 80
  %v1957 = vpop.permute.xlu0 %1956
  %1958 = vrot.lane.b32.xlu0 %v931, 80
  %v1959 = vpop.permute.xlu0 %1958
  %1960 = vrot.lane.b32.xlu0 %v1032, 80
  %v1961 = vpop.permute.xlu0 %1960
  %1962 = vrot.lane.b32.xlu0 %v1034, 80
  %v1963 = vpop.permute.xlu0 %1962
  %1964 = vrot.lane.b32.xlu0 %v939, 80
  %v1965 = vpop.permute.xlu0 %1964
  %1966 = vrot.lane.b32.xlu0 %v941, 80
  %v1967 = vpop.permute.xlu0 %1966
  %1968 = vrot.lane.b32.xlu0 %v944, 80
  %v1969 = vpop.permute.xlu0 %1968
  %1970 = vrot.lane.b32.xlu0 %v946, 80
  %v1971 = vpop.permute.xlu0 %1970
  %1972 = vrot.lane.b32.xlu0 %v949, 80
  %v1973 = vpop.permute.xlu0 %1972
  %1974 = vrot.lane.b32.xlu0 %v951, 80
  %v1975 = vpop.permute.xlu0 %1974
  %1976 = vrot.lane.b32.xlu0 %v954, 80
  %v1977 = vpop.permute.xlu0 %1976
  %1978 = vrot.lane.b32.xlu0 %v956, 80
  %v1979 = vpop.permute.xlu0 %1978
  %1980 = vrot.lane.b32.xlu0 %v959, 80
  %v1981 = vpop.permute.xlu0 %1980
  %1982 = vrot.lane.b32.xlu0 %v961, 80
  %v1983 = vpop.permute.xlu0 %1982
  %1984 = vrot.lane.b32.xlu0 %v964, 80
  %v1985 = vpop.permute.xlu0 %1984
  %1986 = vrot.lane.b32.xlu0 %v966, 80
  %v1987 = vpop.permute.xlu0 %1986
  %1988 = vrot.lane.b32.xlu0 %v969, 80
  %v1989 = vpop.permute.xlu0 %1988
  %1990 = vrot.lane.b32.xlu0 %v971, 80
  %v1991 = vpop.permute.xlu0 %1990
  %1992 = vrot.lane.b32.xlu0 %v974, 80
  %v1993 = vpop.permute.xlu0 %1992
  %1994 = vrot.lane.b32.xlu0 %v976, 80
  %v1995 = vpop.permute.xlu0 %1994
  %1996 = vrot.lane.b32.xlu0 %v979, 80
  %v1997 = vpop.permute.xlu0 %1996
  %1998 = vrot.lane.b32.xlu0 %v981, 80
  %v1999 = vpop.permute.xlu0 %1998
  %2000 = vrot.lane.b32.xlu0 %v984, 80
  %v2001 = vpop.permute.xlu0 %2000
  %2002 = vrot.lane.b32.xlu0 %v986, 80
  %v2003 = vpop.permute.xlu0 %2002
  %2004 = vrot.lane.b32.xlu0 %v989, 80
  %v2005 = vpop.permute.xlu0 %2004
  %2006 = vrot.lane.b32.xlu0 %v991, 80
  %v2007 = vpop.permute.xlu0 %2006
  %2008 = vrot.lane.b32.xlu0 %v994, 80
  %v2009 = vpop.permute.xlu0 %2008
  %2010 = vrot.lane.b32.xlu0 %v996, 80
  %v2011 = vpop.permute.xlu0 %2010
  %2012 = vrot.lane.b32.xlu0 %v999, 80
  %v2013 = vpop.permute.xlu0 %2012
  %2014 = vrot.lane.b32.xlu0 %v1001, 80
  %v2015 = vpop.permute.xlu0 %2014
  %2016 = vrot.lane.b32.xlu0 %v1004, 80
  %v2017 = vpop.permute.xlu0 %2016
  %2018 = vrot.lane.b32.xlu0 %v1006, 80
  %v2019 = vpop.permute.xlu0 %2018
  %2020 = vrot.lane.b32.xlu0 %v1009, 80
  %v2021 = vpop.permute.xlu0 %2020
  %2022 = vrot.lane.b32.xlu0 %v1011, 80
  %v2023 = vpop.permute.xlu0 %2022
  %2024 = vrot.lane.b32.xlu0 %v1037, 80
  %v2025 = vpop.permute.xlu0 %2024
  %2026 = vrot.lane.b32.xlu0 %v1039, 80
  %v2027 = vpop.permute.xlu0 %2026
  %2092 = vrot.lane.b32.xlu0 %v607, 96
  %v2093 = vpop.permute.xlu0 %2092
  %2094 = vrot.lane.b32.xlu0 %v609, 96
  %v2095 = vpop.permute.xlu0 %2094
  %2096 = vrot.lane.b32.xlu0 %v612, 96
  %v2097 = vpop.permute.xlu0 %2096
  %2098 = vrot.lane.b32.xlu0 %v614, 96
  %v2099 = vpop.permute.xlu0 %2098
  %2100 = vrot.lane.b32.xlu0 %v617, 96
  %v2101 = vpop.permute.xlu0 %2100
  %2102 = vrot.lane.b32.xlu0 %v619, 96
  %v2103 = vpop.permute.xlu0 %2102
  %2104 = vrot.lane.b32.xlu0 %v622, 96
  %v2105 = vpop.permute.xlu0 %2104
  %2106 = vrot.lane.b32.xlu0 %v624, 96
  %v2107 = vpop.permute.xlu0 %2106
  %2108 = vrot.lane.b32.xlu0 %v627, 96
  %v2109 = vpop.permute.xlu0 %2108
  %2110 = vrot.lane.b32.xlu0 %v629, 96
  %v2111 = vpop.permute.xlu0 %2110
  %2112 = vrot.lane.b32.xlu0 %v632, 96
  %v2113 = vpop.permute.xlu0 %2112
  %2114 = vrot.lane.b32.xlu0 %v634, 96
  %v2115 = vpop.permute.xlu0 %2114
  %2116 = vrot.lane.b32.xlu0 %v637, 96
  %v2117 = vpop.permute.xlu0 %2116
  %2118 = vrot.lane.b32.xlu0 %v639, 96
  %v2119 = vpop.permute.xlu0 %2118
  %2120 = vrot.lane.b32.xlu0 %v642, 96
  %v2121 = vpop.permute.xlu0 %2120
  %2122 = vrot.lane.b32.xlu0 %v644, 96
  %v2123 = vpop.permute.xlu0 %2122
  %2124 = vrot.lane.b32.xlu0 %v647, 96
  %v2125 = vpop.permute.xlu0 %2124
  %2126 = vrot.lane.b32.xlu0 %v649, 96
  %v2127 = vpop.permute.xlu0 %2126
  %2128 = vrot.lane.b32.xlu0 %v652, 96
  %v2129 = vpop.permute.xlu0 %2128
  %2130 = vrot.lane.b32.xlu0 %v654, 96
  %v2131 = vpop.permute.xlu0 %2130
  %2132 = vrot.lane.b32.xlu0 %v657, 96
  %v2133 = vpop.permute.xlu0 %2132
  %2134 = vrot.lane.b32.xlu0 %v659, 96
  %v2135 = vpop.permute.xlu0 %2134
  %2136 = vrot.lane.b32.xlu0 %v662, 96
  %v2137 = vpop.permute.xlu0 %2136
  %2138 = vrot.lane.b32.xlu0 %v664, 96
  %v2139 = vpop.permute.xlu0 %2138
  %2140 = vrot.lane.b32.xlu0 %v667, 96
  %v2141 = vpop.permute.xlu0 %2140
  %2142 = vrot.lane.b32.xlu0 %v669, 96
  %v2143 = vpop.permute.xlu0 %2142
  %2144 = vrot.lane.b32.xlu0 %v672, 96
  %v2145 = vpop.permute.xlu0 %2144
  %2146 = vrot.lane.b32.xlu0 %v674, 96
  %v2147 = vpop.permute.xlu0 %2146
  %2148 = vrot.lane.b32.xlu0 %v1020, 96
  %v2149 = vpop.permute.xlu0 %2148
  %2150 = vrot.lane.b32.xlu0 %v1022, 96
  %v2151 = vpop.permute.xlu0 %2150
  %2152 = vrot.lane.b32.xlu0 %v1048, 96
  %v2153 = vpop.permute.xlu0 %2152
  %2154 = vrot.lane.b32.xlu0 %v1050, 96
  %v2155 = vpop.permute.xlu0 %2154
  %2156 = vrot.lane.b32.xlu0 %v687, 96
  %v2157 = vpop.permute.xlu0 %2156
  %2158 = vrot.lane.b32.xlu0 %v689, 96
  %v2159 = vpop.permute.xlu0 %2158
  %2160 = vrot.lane.b32.xlu0 %v692, 96
  %v2161 = vpop.permute.xlu0 %2160
  %2162 = vrot.lane.b32.xlu0 %v694, 96
  %v2163 = vpop.permute.xlu0 %2162
  %2164 = vrot.lane.b32.xlu0 %v697, 96
  %v2165 = vpop.permute.xlu0 %2164
  %2166 = vrot.lane.b32.xlu0 %v699, 96
  %v2167 = vpop.permute.xlu0 %2166
  %2168 = vrot.lane.b32.xlu0 %v702, 96
  %v2169 = vpop.permute.xlu0 %2168
  %2170 = vrot.lane.b32.xlu0 %v704, 96
  %v2171 = vpop.permute.xlu0 %2170
  %2172 = vrot.lane.b32.xlu0 %v707, 96
  %v2173 = vpop.permute.xlu0 %2172
  %2174 = vrot.lane.b32.xlu0 %v709, 96
  %v2175 = vpop.permute.xlu0 %2174
  %2176 = vrot.lane.b32.xlu0 %v712, 96
  %v2177 = vpop.permute.xlu0 %2176
  %2178 = vrot.lane.b32.xlu0 %v714, 96
  %v2179 = vpop.permute.xlu0 %2178
  %2180 = vrot.lane.b32.xlu0 %v717, 96
  %v2181 = vpop.permute.xlu0 %2180
  %2182 = vrot.lane.b32.xlu0 %v719, 96
  %v2183 = vpop.permute.xlu0 %2182
  %2184 = vrot.lane.b32.xlu0 %v722, 96
  %v2185 = vpop.permute.xlu0 %2184
  %2186 = vrot.lane.b32.xlu0 %v724, 96
  %v2187 = vpop.permute.xlu0 %2186
  %2188 = vrot.lane.b32.xlu0 %v727, 96
  %v2189 = vpop.permute.xlu0 %2188
  %2190 = vrot.lane.b32.xlu0 %v729, 96
  %v2191 = vpop.permute.xlu0 %2190
  %2192 = vrot.lane.b32.xlu0 %v732, 96
  %v2193 = vpop.permute.xlu0 %2192
  %2194 = vrot.lane.b32.xlu0 %v734, 96
  %v2195 = vpop.permute.xlu0 %2194
  %2196 = vrot.lane.b32.xlu0 %v737, 96
  %v2197 = vpop.permute.xlu0 %2196
  %2198 = vrot.lane.b32.xlu0 %v739, 96
  %v2199 = vpop.permute.xlu0 %2198
  %2200 = vrot.lane.b32.xlu0 %v742, 96
  %v2201 = vpop.permute.xlu0 %2200
  %2202 = vrot.lane.b32.xlu0 %v744, 96
  %v2203 = vpop.permute.xlu0 %2202
  %2204 = vrot.lane.b32.xlu0 %v747, 96
  %v2205 = vpop.permute.xlu0 %2204
  %2206 = vrot.lane.b32.xlu0 %v749, 96
  %v2207 = vpop.permute.xlu0 %2206
  %2208 = vrot.lane.b32.xlu0 %v752, 96
  %v2209 = vpop.permute.xlu0 %2208
  %2210 = vrot.lane.b32.xlu0 %v754, 96
  %v2211 = vpop.permute.xlu0 %2210
  %2212 = vrot.lane.b32.xlu0 %v1025, 96
  %v2213 = vpop.permute.xlu0 %2212
  %2214 = vrot.lane.b32.xlu0 %v1027, 96
  %v2215 = vpop.permute.xlu0 %2214
  %2216 = vrot.lane.b32.xlu0 %v1053, 96
  %v2217 = vpop.permute.xlu0 %2216
  %2218 = vrot.lane.b32.xlu0 %v1055, 96
  %v2219 = vpop.permute.xlu0 %2218
  %2284 = vrot.lane.b32.xlu0 %v363, 112
  %v2285 = vpop.permute.xlu0 %2284
  %2286 = vrot.lane.b32.xlu0 %v364, 112
  %v2287 = vpop.permute.xlu0 %2286
  %2288 = vrot.lane.b32.xlu0 %v367, 112
  %v2289 = vpop.permute.xlu0 %2288
  %2290 = vrot.lane.b32.xlu0 %v368, 112
  %v2291 = vpop.permute.xlu0 %2290
  %2292 = vrot.lane.b32.xlu0 %v371, 112
  %v2293 = vpop.permute.xlu0 %2292
  %2294 = vrot.lane.b32.xlu0 %v372, 112
  %v2295 = vpop.permute.xlu0 %2294
  %2296 = vrot.lane.b32.xlu0 %v375, 112
  %v2297 = vpop.permute.xlu0 %2296
  %2298 = vrot.lane.b32.xlu0 %v376, 112
  %v2299 = vpop.permute.xlu0 %2298
  %2300 = vrot.lane.b32.xlu0 %v379, 112
  %v2301 = vpop.permute.xlu0 %2300
  %2302 = vrot.lane.b32.xlu0 %v380, 112
  %v2303 = vpop.permute.xlu0 %2302
  %2304 = vrot.lane.b32.xlu0 %v383, 112
  %v2305 = vpop.permute.xlu0 %2304
  %2306 = vrot.lane.b32.xlu0 %v384, 112
  %v2307 = vpop.permute.xlu0 %2306
  %2308 = vrot.lane.b32.xlu0 %v387, 112
  %v2309 = vpop.permute.xlu0 %2308
  %2310 = vrot.lane.b32.xlu0 %v388, 112
  %v2311 = vpop.permute.xlu0 %2310
  %2312 = vrot.lane.b32.xlu0 %v391, 112
  %v2313 = vpop.permute.xlu0 %2312
  %2314 = vrot.lane.b32.xlu0 %v392, 112
  %v2315 = vpop.permute.xlu0 %2314
  %2316 = vrot.lane.b32.xlu0 %v395, 112
  %v2317 = vpop.permute.xlu0 %2316
  %2318 = vrot.lane.b32.xlu0 %v396, 112
  %v2319 = vpop.permute.xlu0 %2318
  %2320 = vrot.lane.b32.xlu0 %v399, 112
  %v2321 = vpop.permute.xlu0 %2320
  %2322 = vrot.lane.b32.xlu0 %v400, 112
  %v2323 = vpop.permute.xlu0 %2322
  %2324 = vrot.lane.b32.xlu0 %v403, 112
  %v2325 = vpop.permute.xlu0 %2324
  %2326 = vrot.lane.b32.xlu0 %v404, 112
  %v2327 = vpop.permute.xlu0 %2326
  %2328 = vrot.lane.b32.xlu0 %v407, 112
  %v2329 = vpop.permute.xlu0 %2328
  %2330 = vrot.lane.b32.xlu0 %v408, 112
  %v2331 = vpop.permute.xlu0 %2330
  %2332 = vrot.lane.b32.xlu0 %v411, 112
  %v2333 = vpop.permute.xlu0 %2332
  %2334 = vrot.lane.b32.xlu0 %v412, 112
  %v2335 = vpop.permute.xlu0 %2334
  %2336 = vrot.lane.b32.xlu0 %v415, 112
  %v2337 = vpop.permute.xlu0 %2336
  %2338 = vrot.lane.b32.xlu0 %v416, 112
  %v2339 = vpop.permute.xlu0 %2338
  %2340 = vrot.lane.b32.xlu0 %v419, 112
  %v2341 = vpop.permute.xlu0 %2340
  %2342 = vrot.lane.b32.xlu0 %v420, 112
  %v2343 = vpop.permute.xlu0 %2342
  %2344 = vrot.lane.b32.xlu0 %v423, 112
  %v2345 = vpop.permute.xlu0 %2344
  %2346 = vrot.lane.b32.xlu0 %v424, 112
  %v2347 = vpop.permute.xlu0 %2346
  %2348 = vrot.lane.b32.xlu0 %v435, 112
  %v2349 = vpop.permute.xlu0 %2348
  %2350 = vrot.lane.b32.xlu0 %v436, 112
  %v2351 = vpop.permute.xlu0 %2350
  %2352 = vrot.lane.b32.xlu0 %v439, 112
  %v2353 = vpop.permute.xlu0 %2352
  %2354 = vrot.lane.b32.xlu0 %v440, 112
  %v2355 = vpop.permute.xlu0 %2354
  %2356 = vrot.lane.b32.xlu0 %v443, 112
  %v2357 = vpop.permute.xlu0 %2356
  %2358 = vrot.lane.b32.xlu0 %v444, 112
  %v2359 = vpop.permute.xlu0 %2358
  %2360 = vrot.lane.b32.xlu0 %v447, 112
  %v2361 = vpop.permute.xlu0 %2360
  %2362 = vrot.lane.b32.xlu0 %v448, 112
  %v2363 = vpop.permute.xlu0 %2362
  %2364 = vrot.lane.b32.xlu0 %v451, 112
  %v2365 = vpop.permute.xlu0 %2364
  %2366 = vrot.lane.b32.xlu0 %v452, 112
  %v2367 = vpop.permute.xlu0 %2366
  %2368 = vrot.lane.b32.xlu0 %v455, 112
  %v2369 = vpop.permute.xlu0 %2368
  %2370 = vrot.lane.b32.xlu0 %v456, 112
  %v2371 = vpop.permute.xlu0 %2370
  %2372 = vrot.lane.b32.xlu0 %v459, 112
  %v2373 = vpop.permute.xlu0 %2372
  %2374 = vrot.lane.b32.xlu0 %v460, 112
  %v2375 = vpop.permute.xlu0 %2374
  %2376 = vrot.lane.b32.xlu0 %v463, 112
  %v2377 = vpop.permute.xlu0 %2376
  %2378 = vrot.lane.b32.xlu0 %v464, 112
  %v2379 = vpop.permute.xlu0 %2378
  %2380 = vrot.lane.b32.xlu0 %v467, 112
  %v2381 = vpop.permute.xlu0 %2380
  %2382 = vrot.lane.b32.xlu0 %v468, 112
  %v2383 = vpop.permute.xlu0 %2382
  %2384 = vrot.lane.b32.xlu0 %v471, 112
  %v2385 = vpop.permute.xlu0 %2384
  %2386 = vrot.lane.b32.xlu0 %v472, 112
  %v2387 = vpop.permute.xlu0 %2386
  %2388 = vrot.lane.b32.xlu0 %v475, 112
  %v2389 = vpop.permute.xlu0 %2388
  %2390 = vrot.lane.b32.xlu0 %v476, 112
  %v2391 = vpop.permute.xlu0 %2390
  %2392 = vrot.lane.b32.xlu0 %v479, 112
  %v2393 = vpop.permute.xlu0 %2392
  %2394 = vrot.lane.b32.xlu0 %v480, 112
  %v2395 = vpop.permute.xlu0 %2394
  %2396 = vrot.lane.b32.xlu0 %v483, 112
  %v2397 = vpop.permute.xlu0 %2396
  %2398 = vrot.lane.b32.xlu0 %v484, 112
  %v2399 = vpop.permute.xlu0 %2398
  %2400 = vrot.lane.b32.xlu0 %v487, 112
  %v2401 = vpop.permute.xlu0 %2400
  %2402 = vrot.lane.b32.xlu0 %v488, 112
  %v2403 = vpop.permute.xlu0 %2402
  %2404 = vrot.lane.b32.xlu0 %v491, 112
  %v2405 = vpop.permute.xlu0 %2404
  %2406 = vrot.lane.b32.xlu0 %v492, 112
  %v2407 = vpop.permute.xlu0 %2406
  %2408 = vrot.lane.b32.xlu0 %v495, 112
  %v2409 = vpop.permute.xlu0 %2408
  %2410 = vrot.lane.b32.xlu0 %v496, 112
  %v2411 = vpop.permute.xlu0 %2410
  %v2476 = vsel %vm143, %v597, %v1133
  %v2477 = vsel %vm143, %v599, %v1135
  %v2478 = vsel %vm143, %v602, %v1137
  %v2479 = vsel %vm143, %v604, %v1139
  %v2480 = vsel %vm143, %v607, %v1141
  %v2481 = vsel %vm143, %v609, %v1143
  %v2482 = vsel %vm143, %v612, %v1145
  %v2483 = vsel %vm143, %v614, %v1147
  %v2484 = vsel %vm143, %v617, %v1149
  %v2485 = vsel %vm143, %v619, %v1151
  %v2486 = vsel %vm143, %v622, %v1153
  %v2487 = vsel %vm143, %v624, %v1155
  %v2488 = vsel %vm143, %v627, %v1157
  %v2489 = vsel %vm143, %v629, %v1159
  %v2490 = vsel %vm143, %v632, %v1161
  %v2491 = vsel %vm143, %v634, %v1163
  %v2492 = vsel %vm143, %v637, %v1165
  %v2493 = vsel %vm143, %v639, %v1167
  %v2494 = vsel %vm143, %v642, %v1169
  %v2495 = vsel %vm143, %v644, %v1171
  %v2496 = vsel %vm143, %v647, %v1173
  %v2497 = vsel %vm143, %v649, %v1175
  %v2498 = vsel %vm143, %v652, %v1177
  %v2499 = vsel %vm143, %v654, %v1179
  %v2500 = vsel %vm143, %v657, %v1181
  %v2501 = vsel %vm143, %v659, %v1183
  %v2502 = vsel %vm143, %v662, %v1185
  %v2503 = vsel %vm143, %v664, %v1187
  %v2504 = vsel %vm143, %v667, %v1189
  %v2505 = vsel %vm143, %v669, %v1191
  %v2506 = vsel %vm143, %v672, %v1193
  %v2507 = vsel %vm143, %v674, %v1195
  %v2508 = vsel %vm143, %v677, %v1197
  %v2509 = vsel %vm143, %v679, %v1199
  %v2510 = vsel %vm143, %v682, %v1201
  %v2511 = vsel %vm143, %v684, %v1203
  %v2512 = vsel %vm143, %v687, %v1205
  %v2513 = vsel %vm143, %v689, %v1207
  %v2514 = vsel %vm143, %v692, %v1209
  %v2515 = vsel %vm143, %v694, %v1211
  %v2516 = vsel %vm143, %v697, %v1213
  %v2517 = vsel %vm143, %v699, %v1215
  %v2518 = vsel %vm143, %v702, %v1217
  %v2519 = vsel %vm143, %v704, %v1219
  %v2520 = vsel %vm143, %v707, %v1221
  %v2521 = vsel %vm143, %v709, %v1223
  %v2522 = vsel %vm143, %v712, %v1225
  %v2523 = vsel %vm143, %v714, %v1227
  %v2524 = vsel %vm143, %v717, %v1229
  %v2525 = vsel %vm143, %v719, %v1231
  %v2526 = vsel %vm143, %v722, %v1233
  %v2527 = vsel %vm143, %v724, %v1235
  %v2528 = vsel %vm143, %v727, %v1237
  %v2529 = vsel %vm143, %v729, %v1239
  %v2530 = vsel %vm143, %v732, %v1241
  %v2531 = vsel %vm143, %v734, %v1243
  %v2532 = vsel %vm143, %v737, %v1245
  %v2533 = vsel %vm143, %v739, %v1247
  %v2534 = vsel %vm143, %v742, %v1249
  %v2535 = vsel %vm143, %v744, %v1251
  %v2536 = vsel %vm143, %v747, %v1253
  %v2537 = vsel %vm143, %v749, %v1255
  %v2538 = vsel %vm143, %v752, %v1257
  %v2539 = vsel %vm143, %v754, %v1259
  %vm2540 = vcmask 261120
  %v2541 = vsel %vm2540, %v2476, %v1325
  %v2542 = vsel %vm2540, %v2477, %v1327
  %v2543 = vsel %vm2540, %v2478, %v1329
  %v2544 = vsel %vm2540, %v2479, %v1331
  %v2545 = vsel %vm2540, %v2480, %v1333
  %v2546 = vsel %vm2540, %v2481, %v1335
  %v2547 = vsel %vm2540, %v2482, %v1337
  %v2548 = vsel %vm2540, %v2483, %v1339
  %v2549 = vsel %vm2540, %v2484, %v1341
  %v2550 = vsel %vm2540, %v2485, %v1343
  %v2551 = vsel %vm2540, %v2486, %v1345
  %v2552 = vsel %vm2540, %v2487, %v1347
  %v2553 = vsel %vm2540, %v2488, %v1349
  %v2554 = vsel %vm2540, %v2489, %v1351
  %v2555 = vsel %vm2540, %v2490, %v1353
  %v2556 = vsel %vm2540, %v2491, %v1355
  %v2557 = vsel %vm2540, %v2492, %v1357
  %v2558 = vsel %vm2540, %v2493, %v1359
  %v2559 = vsel %vm2540, %v2494, %v1361
  %v2560 = vsel %vm2540, %v2495, %v1363
  %v2561 = vsel %vm2540, %v2496, %v1365
  %v2562 = vsel %vm2540, %v2497, %v1367
  %v2563 = vsel %vm2540, %v2498, %v1369
  %v2564 = vsel %vm2540, %v2499, %v1371
  %v2565 = vsel %vm2540, %v2500, %v1373
  %v2566 = vsel %vm2540, %v2501, %v1375
  %v2567 = vsel %vm2540, %v2502, %v1377
  %v2568 = vsel %vm2540, %v2503, %v1379
  %v2569 = vsel %vm2540, %v2504, %v1381
  %v2570 = vsel %vm2540, %v2505, %v1383
  %v2571 = vsel %vm2540, %v2506, %v1385
  %v2572 = vsel %vm2540, %v2507, %v1387
  %v2573 = vsel %vm2540, %v2508, %v1389
  %v2574 = vsel %vm2540, %v2509, %v1391
  %v2575 = vsel %vm2540, %v2510, %v1393
  %v2576 = vsel %vm2540, %v2511, %v1395
  %v2577 = vsel %vm2540, %v2512, %v1397
  %v2578 = vsel %vm2540, %v2513, %v1399
  %v2579 = vsel %vm2540, %v2514, %v1401
  %v2580 = vsel %vm2540, %v2515, %v1403
  %v2581 = vsel %vm2540, %v2516, %v1405
  %v2582 = vsel %vm2540, %v2517, %v1407
  %v2583 = vsel %vm2540, %v2518, %v1409
  %v2584 = vsel %vm2540, %v2519, %v1411
  %v2585 = vsel %vm2540, %v2520, %v1413
  %v2586 = vsel %vm2540, %v2521, %v1415
  %v2587 = vsel %vm2540, %v2522, %v1417
  %v2588 = vsel %vm2540, %v2523, %v1419
  %v2589 = vsel %vm2540, %v2524, %v1421
  %v2590 = vsel %vm2540, %v2525, %v1423
  %v2591 = vsel %vm2540, %v2526, %v1425
  %v2592 = vsel %vm2540, %v2527, %v1427
  %v2593 = vsel %vm2540, %v2528, %v1429
  %v2594 = vsel %vm2540, %v2529, %v1431
  %v2595 = vsel %vm2540, %v2530, %v1433
  %v2596 = vsel %vm2540, %v2531, %v1435
  %v2597 = vsel %vm2540, %v2532, %v1437
  %v2598 = vsel %vm2540, %v2533, %v1439
  %v2599 = vsel %vm2540, %v2534, %v1441
  %v2600 = vsel %vm2540, %v2535, %v1443
  %v2601 = vsel %vm2540, %v2536, %v1445
  %v2602 = vsel %vm2540, %v2537, %v1447
  %v2603 = vsel %vm2540, %v2538, %v1449
  %v2604 = vsel %vm2540, %v2539, %v1451
  %vm2605 = vcmask 392192
  %v2606 = vsel %vm2605, %v2541, %v1517
  %v2607 = vsel %vm2605, %v2542, %v1519
  %v2608 = vsel %vm2605, %v2543, %v1521
  %v2609 = vsel %vm2605, %v2544, %v1523
  %v2610 = vsel %vm2605, %v2545, %v1525
  %v2611 = vsel %vm2605, %v2546, %v1527
  %v2612 = vsel %vm2605, %v2547, %v1529
  %v2613 = vsel %vm2605, %v2548, %v1531
  %v2614 = vsel %vm2605, %v2549, %v1533
  %v2615 = vsel %vm2605, %v2550, %v1535
  %v2616 = vsel %vm2605, %v2551, %v1537
  %v2617 = vsel %vm2605, %v2552, %v1539
  %v2618 = vsel %vm2605, %v2553, %v1541
  %v2619 = vsel %vm2605, %v2554, %v1543
  %v2620 = vsel %vm2605, %v2555, %v1545
  %v2621 = vsel %vm2605, %v2556, %v1547
  %v2622 = vsel %vm2605, %v2557, %v1549
  %v2623 = vsel %vm2605, %v2558, %v1551
  %v2624 = vsel %vm2605, %v2559, %v1553
  %v2625 = vsel %vm2605, %v2560, %v1555
  %v2626 = vsel %vm2605, %v2561, %v1557
  %v2627 = vsel %vm2605, %v2562, %v1559
  %v2628 = vsel %vm2605, %v2563, %v1561
  %v2629 = vsel %vm2605, %v2564, %v1563
  %v2630 = vsel %vm2605, %v2565, %v1565
  %v2631 = vsel %vm2605, %v2566, %v1567
  %v2632 = vsel %vm2605, %v2567, %v1569
  %v2633 = vsel %vm2605, %v2568, %v1571
  %v2634 = vsel %vm2605, %v2569, %v1573
  %v2635 = vsel %vm2605, %v2570, %v1575
  %v2636 = vsel %vm2605, %v2571, %v1577
  %v2637 = vsel %vm2605, %v2572, %v1579
  %v2638 = vsel %vm2605, %v2573, %v1581
  %v2639 = vsel %vm2605, %v2574, %v1583
  %v2640 = vsel %vm2605, %v2575, %v1585
  %v2641 = vsel %vm2605, %v2576, %v1587
  %v2642 = vsel %vm2605, %v2577, %v1589
  %v2643 = vsel %vm2605, %v2578, %v1591
  %v2644 = vsel %vm2605, %v2579, %v1593
  %v2645 = vsel %vm2605, %v2580, %v1595
  %v2646 = vsel %vm2605, %v2581, %v1597
  %v2647 = vsel %vm2605, %v2582, %v1599
  %v2648 = vsel %vm2605, %v2583, %v1601
  %v2649 = vsel %vm2605, %v2584, %v1603
  %v2650 = vsel %vm2605, %v2585, %v1605
  %v2651 = vsel %vm2605, %v2586, %v1607
  %v2652 = vsel %vm2605, %v2587, %v1609
  %v2653 = vsel %vm2605, %v2588, %v1611
  %v2654 = vsel %vm2605, %v2589, %v1613
  %v2655 = vsel %vm2605, %v2590, %v1615
  %v2656 = vsel %vm2605, %v2591, %v1617
  %v2657 = vsel %vm2605, %v2592, %v1619
  %v2658 = vsel %vm2605, %v2593, %v1621
  %v2659 = vsel %vm2605, %v2594, %v1623
  %v2660 = vsel %vm2605, %v2595, %v1625
  %v2661 = vsel %vm2605, %v2596, %v1627
  %v2662 = vsel %vm2605, %v2597, %v1629
  %v2663 = vsel %vm2605, %v2598, %v1631
  %v2664 = vsel %vm2605, %v2599, %v1633
  %v2665 = vsel %vm2605, %v2600, %v1635
  %v2666 = vsel %vm2605, %v2601, %v1637
  %v2667 = vsel %vm2605, %v2602, %v1639
  %v2668 = vsel %vm2605, %v2603, %v1641
  %v2669 = vsel %vm2605, %v2604, %v1643
  %vm2670 = vcmask 523264
  %v2671 = vsel %vm2670, %v2606, %v1709
  %v2672 = vsel %vm2670, %v2607, %v1711
  %v2673 = vsel %vm2670, %v2608, %v1713
  %v2674 = vsel %vm2670, %v2609, %v1715
  %v2675 = vsel %vm2670, %v2610, %v1717
  %v2676 = vsel %vm2670, %v2611, %v1719
  %v2677 = vsel %vm2670, %v2612, %v1721
  %v2678 = vsel %vm2670, %v2613, %v1723
  %v2679 = vsel %vm2670, %v2614, %v1725
  %v2680 = vsel %vm2670, %v2615, %v1727
  %v2681 = vsel %vm2670, %v2616, %v1729
  %v2682 = vsel %vm2670, %v2617, %v1731
  %v2683 = vsel %vm2670, %v2618, %v1733
  %v2684 = vsel %vm2670, %v2619, %v1735
  %v2685 = vsel %vm2670, %v2620, %v1737
  %v2686 = vsel %vm2670, %v2621, %v1739
  %v2687 = vsel %vm2670, %v2622, %v1741
  %v2688 = vsel %vm2670, %v2623, %v1743
  %v2689 = vsel %vm2670, %v2624, %v1745
  %v2690 = vsel %vm2670, %v2625, %v1747
  %v2691 = vsel %vm2670, %v2626, %v1749
  %v2692 = vsel %vm2670, %v2627, %v1751
  %v2693 = vsel %vm2670, %v2628, %v1753
  %v2694 = vsel %vm2670, %v2629, %v1755
  %v2695 = vsel %vm2670, %v2630, %v1757
  %v2696 = vsel %vm2670, %v2631, %v1759
  %v2697 = vsel %vm2670, %v2632, %v1761
  %v2698 = vsel %vm2670, %v2633, %v1763
  %v2699 = vsel %vm2670, %v2634, %v1765
  %v2700 = vsel %vm2670, %v2635, %v1767
  %v2701 = vsel %vm2670, %v2636, %v1769
  %v2702 = vsel %vm2670, %v2637, %v1771
  %v2703 = vsel %vm2670, %v2638, %v1773
  %v2704 = vsel %vm2670, %v2639, %v1775
  %v2705 = vsel %vm2670, %v2640, %v1777
  %v2706 = vsel %vm2670, %v2641, %v1779
  %v2707 = vsel %vm2670, %v2642, %v1781
  %v2708 = vsel %vm2670, %v2643, %v1783
  %v2709 = vsel %vm2670, %v2644, %v1785
  %v2710 = vsel %vm2670, %v2645, %v1787
  %v2711 = vsel %vm2670, %v2646, %v1789
  %v2712 = vsel %vm2670, %v2647, %v1791
  %v2713 = vsel %vm2670, %v2648, %v1793
  %v2714 = vsel %vm2670, %v2649, %v1795
  %v2715 = vsel %vm2670, %v2650, %v1797
  %v2716 = vsel %vm2670, %v2651, %v1799
  %v2717 = vsel %vm2670, %v2652, %v1801
  %v2718 = vsel %vm2670, %v2653, %v1803
  %v2719 = vsel %vm2670, %v2654, %v1805
  %v2720 = vsel %vm2670, %v2655, %v1807
  %v2721 = vsel %vm2670, %v2656, %v1809
  %v2722 = vsel %vm2670, %v2657, %v1811
  %v2723 = vsel %vm2670, %v2658, %v1813
  %v2724 = vsel %vm2670, %v2659, %v1815
  %v2725 = vsel %vm2670, %v2660, %v1817
  %v2726 = vsel %vm2670, %v2661, %v1819
  %v2727 = vsel %vm2670, %v2662, %v1821
  %v2728 = vsel %vm2670, %v2663, %v1823
  %v2729 = vsel %vm2670, %v2664, %v1825
  %v2730 = vsel %vm2670, %v2665, %v1827
  %v2731 = vsel %vm2670, %v2666, %v1829
  %v2732 = vsel %vm2670, %v2667, %v1831
  %v2733 = vsel %vm2670, %v2668, %v1833
  %v2734 = vsel %vm2670, %v2669, %v1835
  %vm2735 = vcmask 654336
  %v2736 = vsel %vm2735, %v2671, %v1901
  %v2737 = vsel %vm2735, %v2672, %v1903
  %v2738 = vsel %vm2735, %v2673, %v1905
  %v2739 = vsel %vm2735, %v2674, %v1907
  %v2740 = vsel %vm2735, %v2675, %v1909
  %v2741 = vsel %vm2735, %v2676, %v1911
  %v2742 = vsel %vm2735, %v2677, %v1913
  %v2743 = vsel %vm2735, %v2678, %v1915
  %v2744 = vsel %vm2735, %v2679, %v1917
  %v2745 = vsel %vm2735, %v2680, %v1919
  %v2746 = vsel %vm2735, %v2681, %v1921
  %v2747 = vsel %vm2735, %v2682, %v1923
  %v2748 = vsel %vm2735, %v2683, %v1925
  %v2749 = vsel %vm2735, %v2684, %v1927
  %v2750 = vsel %vm2735, %v2685, %v1929
  %v2751 = vsel %vm2735, %v2686, %v1931
  %v2752 = vsel %vm2735, %v2687, %v1933
  %v2753 = vsel %vm2735, %v2688, %v1935
  %v2754 = vsel %vm2735, %v2689, %v1937
  %v2755 = vsel %vm2735, %v2690, %v1939
  %v2756 = vsel %vm2735, %v2691, %v1941
  %v2757 = vsel %vm2735, %v2692, %v1943
  %v2758 = vsel %vm2735, %v2693, %v1945
  %v2759 = vsel %vm2735, %v2694, %v1947
  %v2760 = vsel %vm2735, %v2695, %v1949
  %v2761 = vsel %vm2735, %v2696, %v1951
  %v2762 = vsel %vm2735, %v2697, %v1953
  %v2763 = vsel %vm2735, %v2698, %v1955
  %v2764 = vsel %vm2735, %v2699, %v1957
  %v2765 = vsel %vm2735, %v2700, %v1959
  %v2766 = vsel %vm2735, %v2701, %v1961
  %v2767 = vsel %vm2735, %v2702, %v1963
  %v2768 = vsel %vm2735, %v2703, %v1965
  %v2769 = vsel %vm2735, %v2704, %v1967
  %v2770 = vsel %vm2735, %v2705, %v1969
  %v2771 = vsel %vm2735, %v2706, %v1971
  %v2772 = vsel %vm2735, %v2707, %v1973
  %v2773 = vsel %vm2735, %v2708, %v1975
  %v2774 = vsel %vm2735, %v2709, %v1977
  %v2775 = vsel %vm2735, %v2710, %v1979
  %v2776 = vsel %vm2735, %v2711, %v1981
  %v2777 = vsel %vm2735, %v2712, %v1983
  %v2778 = vsel %vm2735, %v2713, %v1985
  %v2779 = vsel %vm2735, %v2714, %v1987
  %v2780 = vsel %vm2735, %v2715, %v1989
  %v2781 = vsel %vm2735, %v2716, %v1991
  %v2782 = vsel %vm2735, %v2717, %v1993
  %v2783 = vsel %vm2735, %v2718, %v1995
  %v2784 = vsel %vm2735, %v2719, %v1997
  %v2785 = vsel %vm2735, %v2720, %v1999
  %v2786 = vsel %vm2735, %v2721, %v2001
  %v2787 = vsel %vm2735, %v2722, %v2003
  %v2788 = vsel %vm2735, %v2723, %v2005
  %v2789 = vsel %vm2735, %v2724, %v2007
  %v2790 = vsel %vm2735, %v2725, %v2009
  %v2791 = vsel %vm2735, %v2726, %v2011
  %v2792 = vsel %vm2735, %v2727, %v2013
  %v2793 = vsel %vm2735, %v2728, %v2015
  %v2794 = vsel %vm2735, %v2729, %v2017
  %v2795 = vsel %vm2735, %v2730, %v2019
  %v2796 = vsel %vm2735, %v2731, %v2021
  %v2797 = vsel %vm2735, %v2732, %v2023
  %v2798 = vsel %vm2735, %v2733, %v2025
  %v2799 = vsel %vm2735, %v2734, %v2027
  %vm2800 = vcmask 785408
  %v2801 = vsel %vm2800, %v2736, %v2093
  %v2802 = vsel %vm2800, %v2737, %v2095
  %v2803 = vsel %vm2800, %v2738, %v2097
  %v2804 = vsel %vm2800, %v2739, %v2099
  %v2805 = vsel %vm2800, %v2740, %v2101
  %v2806 = vsel %vm2800, %v2741, %v2103
  %v2807 = vsel %vm2800, %v2742, %v2105
  %v2808 = vsel %vm2800, %v2743, %v2107
  %v2809 = vsel %vm2800, %v2744, %v2109
  %v2810 = vsel %vm2800, %v2745, %v2111
  %v2811 = vsel %vm2800, %v2746, %v2113
  %v2812 = vsel %vm2800, %v2747, %v2115
  %v2813 = vsel %vm2800, %v2748, %v2117
  %v2814 = vsel %vm2800, %v2749, %v2119
  %v2815 = vsel %vm2800, %v2750, %v2121
  %v2816 = vsel %vm2800, %v2751, %v2123
  %v2817 = vsel %vm2800, %v2752, %v2125
  %v2818 = vsel %vm2800, %v2753, %v2127
  %v2819 = vsel %vm2800, %v2754, %v2129
  %v2820 = vsel %vm2800, %v2755, %v2131
  %v2821 = vsel %vm2800, %v2756, %v2133
  %v2822 = vsel %vm2800, %v2757, %v2135
  %v2823 = vsel %vm2800, %v2758, %v2137
  %v2824 = vsel %vm2800, %v2759, %v2139
  %v2825 = vsel %vm2800, %v2760, %v2141
  %v2826 = vsel %vm2800, %v2761, %v2143
  %v2827 = vsel %vm2800, %v2762, %v2145
  %v2828 = vsel %vm2800, %v2763, %v2147
  %v2829 = vsel %vm2800, %v2764, %v2149
  %v2830 = vsel %vm2800, %v2765, %v2151
  %v2831 = vsel %vm2800, %v2766, %v2153
  %v2832 = vsel %vm2800, %v2767, %v2155
  %v2833 = vsel %vm2800, %v2768, %v2157
  %v2834 = vsel %vm2800, %v2769, %v2159
  %v2835 = vsel %vm2800, %v2770, %v2161
  %v2836 = vsel %vm2800, %v2771, %v2163
  %v2837 = vsel %vm2800, %v2772, %v2165
  %v2838 = vsel %vm2800, %v2773, %v2167
  %v2839 = vsel %vm2800, %v2774, %v2169
  %v2840 = vsel %vm2800, %v2775, %v2171
  %v2841 = vsel %vm2800, %v2776, %v2173
  %v2842 = vsel %vm2800, %v2777, %v2175
  %v2843 = vsel %vm2800, %v2778, %v2177
  %v2844 = vsel %vm2800, %v2779, %v2179
  %v2845 = vsel %vm2800, %v2780, %v2181
  %v2846 = vsel %vm2800, %v2781, %v2183
  %v2847 = vsel %vm2800, %v2782, %v2185
  %v2848 = vsel %vm2800, %v2783, %v2187
  %v2849 = vsel %vm2800, %v2784, %v2189
  %v2850 = vsel %vm2800, %v2785, %v2191
  %v2851 = vsel %vm2800, %v2786, %v2193
  %v2852 = vsel %vm2800, %v2787, %v2195
  %v2853 = vsel %vm2800, %v2788, %v2197
  %v2854 = vsel %vm2800, %v2789, %v2199
  %v2855 = vsel %vm2800, %v2790, %v2201
  %v2856 = vsel %vm2800, %v2791, %v2203
  %v2857 = vsel %vm2800, %v2792, %v2205
  %v2858 = vsel %vm2800, %v2793, %v2207
  %v2859 = vsel %vm2800, %v2794, %v2209
  %v2860 = vsel %vm2800, %v2795, %v2211
  %v2861 = vsel %vm2800, %v2796, %v2213
  %v2862 = vsel %vm2800, %v2797, %v2215
  %v2863 = vsel %vm2800, %v2798, %v2217
  %v2864 = vsel %vm2800, %v2799, %v2219
  %vm2865 = vcmask 916480
  %v2866 = vsel %vm2865, %v2801, %v2285
  %v2867 = vsel %vm2865, %v2802, %v2287
  %v2868 = vsel %vm2865, %v2803, %v2289
  %v2869 = vsel %vm2865, %v2804, %v2291
  %v2870 = vsel %vm2865, %v2805, %v2293
  %v2871 = vsel %vm2865, %v2806, %v2295
  %v2872 = vsel %vm2865, %v2807, %v2297
  %v2873 = vsel %vm2865, %v2808, %v2299
  %v2874 = vsel %vm2865, %v2809, %v2301
  %v2875 = vsel %vm2865, %v2810, %v2303
  %v2876 = vsel %vm2865, %v2811, %v2305
  %v2877 = vsel %vm2865, %v2812, %v2307
  %v2878 = vsel %vm2865, %v2813, %v2309
  %v2879 = vsel %vm2865, %v2814, %v2311
  %v2880 = vsel %vm2865, %v2815, %v2313
  %v2881 = vsel %vm2865, %v2816, %v2315
  %v2882 = vsel %vm2865, %v2817, %v2317
  %v2883 = vsel %vm2865, %v2818, %v2319
  %v2884 = vsel %vm2865, %v2819, %v2321
  %v2885 = vsel %vm2865, %v2820, %v2323
  %v2886 = vsel %vm2865, %v2821, %v2325
  %v2887 = vsel %vm2865, %v2822, %v2327
  %v2888 = vsel %vm2865, %v2823, %v2329
  %v2889 = vsel %vm2865, %v2824, %v2331
  %v2890 = vsel %vm2865, %v2825, %v2333
  %v2891 = vsel %vm2865, %v2826, %v2335
  %v2892 = vsel %vm2865, %v2827, %v2337
  %v2893 = vsel %vm2865, %v2828, %v2339
  %v2894 = vsel %vm2865, %v2829, %v2341
  %v2895 = vsel %vm2865, %v2830, %v2343
  %v2896 = vsel %vm2865, %v2831, %v2345
  %v2897 = vsel %vm2865, %v2832, %v2347
  %v2898 = vsel %vm2865, %v2833, %v2349
  %v2899 = vsel %vm2865, %v2834, %v2351
  %v2900 = vsel %vm2865, %v2835, %v2353
  %v2901 = vsel %vm2865, %v2836, %v2355
  %v2902 = vsel %vm2865, %v2837, %v2357
  %v2903 = vsel %vm2865, %v2838, %v2359
  %v2904 = vsel %vm2865, %v2839, %v2361
  %v2905 = vsel %vm2865, %v2840, %v2363
  %v2906 = vsel %vm2865, %v2841, %v2365
  %v2907 = vsel %vm2865, %v2842, %v2367
  %v2908 = vsel %vm2865, %v2843, %v2369
  %v2909 = vsel %vm2865, %v2844, %v2371
  %v2910 = vsel %vm2865, %v2845, %v2373
  %v2911 = vsel %vm2865, %v2846, %v2375
  %v2912 = vsel %vm2865, %v2847, %v2377
  %v2913 = vsel %vm2865, %v2848, %v2379
  %v2914 = vsel %vm2865, %v2849, %v2381
  %v2915 = vsel %vm2865, %v2850, %v2383
  %v2916 = vsel %vm2865, %v2851, %v2385
  %v2917 = vsel %vm2865, %v2852, %v2387
  %v2918 = vsel %vm2865, %v2853, %v2389
  %v2919 = vsel %vm2865, %v2854, %v2391
  %v2920 = vsel %vm2865, %v2855, %v2393
  %v2921 = vsel %vm2865, %v2856, %v2395
  %v2922 = vsel %vm2865, %v2857, %v2397
  %v2923 = vsel %vm2865, %v2858, %v2399
  %v2924 = vsel %vm2865, %v2859, %v2401
  %v2925 = vsel %vm2865, %v2860, %v2403
  %v2926 = vsel %vm2865, %v2861, %v2405
  %v2927 = vsel %vm2865, %v2862, %v2407
  %v2928 = vsel %vm2865, %v2863, %v2409
  %v2929 = vsel %vm2865, %v2864, %v2411
  %v2930 = vpack.c.bf16 %v2867, %v2866
  %v2931 = vpack.c.bf16 %v866, %v864
  %v2932 = vpack.c.bf16 %v2869, %v2868
  %v2933 = vpack.c.bf16 %v871, %v869
  %v2934 = vpack.c.bf16 %v2871, %v2870
  %v2935 = vpack.c.bf16 %v876, %v874
  %v2936 = vpack.c.bf16 %v2873, %v2872
  %v2937 = vpack.c.bf16 %v881, %v879
  %v2938 = vpack.c.bf16 %v2875, %v2874
  %v2939 = vpack.c.bf16 %v886, %v884
  %v2940 = vpack.c.bf16 %v2877, %v2876
  %v2941 = vpack.c.bf16 %v891, %v889
  %v2942 = vpack.c.bf16 %v2879, %v2878
  %v2943 = vpack.c.bf16 %v896, %v894
  %v2944 = vpack.c.bf16 %v2881, %v2880
  %v2945 = vpack.c.bf16 %v901, %v899
  %v2946 = vpack.c.bf16 %v2883, %v2882
  %v2947 = vpack.c.bf16 %v906, %v904
  %v2948 = vpack.c.bf16 %v2885, %v2884
  %v2949 = vpack.c.bf16 %v911, %v909
  %v2950 = vpack.c.bf16 %v2887, %v2886
  %v2951 = vpack.c.bf16 %v916, %v914
  %v2952 = vpack.c.bf16 %v2889, %v2888
  %v2953 = vpack.c.bf16 %v921, %v919
  %v2954 = vpack.c.bf16 %v2891, %v2890
  %v2955 = vpack.c.bf16 %v926, %v924
  %v2956 = vpack.c.bf16 %v2893, %v2892
  %v2957 = vpack.c.bf16 %v931, %v929
  %v2958 = vpack.c.bf16 %v2895, %v2894
  %v2959 = vpack.c.bf16 %v1034, %v1032
  %v2960 = vpack.c.bf16 %v2897, %v2896
  %v2961 = vpack.c.bf16 %v1062, %v1060
  %v2962 = vpack.c.bf16 %v2899, %v2898
  %v2963 = vpack.c.bf16 %v946, %v944
  %v2964 = vpack.c.bf16 %v2901, %v2900
  %v2965 = vpack.c.bf16 %v951, %v949
  %v2966 = vpack.c.bf16 %v2903, %v2902
  %v2967 = vpack.c.bf16 %v956, %v954
  %v2968 = vpack.c.bf16 %v2905, %v2904
  %v2969 = vpack.c.bf16 %v961, %v959
  %v2970 = vpack.c.bf16 %v2907, %v2906
  %v2971 = vpack.c.bf16 %v966, %v964
  %v2972 = vpack.c.bf16 %v2909, %v2908
  %v2973 = vpack.c.bf16 %v971, %v969
  %v2974 = vpack.c.bf16 %v2911, %v2910
  %v2975 = vpack.c.bf16 %v976, %v974
  %v2976 = vpack.c.bf16 %v2913, %v2912
  %v2977 = vpack.c.bf16 %v981, %v979
  %v2978 = vpack.c.bf16 %v2915, %v2914
  %v2979 = vpack.c.bf16 %v986, %v984
  %v2980 = vpack.c.bf16 %v2917, %v2916
  %v2981 = vpack.c.bf16 %v991, %v989
  %v2982 = vpack.c.bf16 %v2919, %v2918
  %v2983 = vpack.c.bf16 %v996, %v994
  %v2984 = vpack.c.bf16 %v2921, %v2920
  %v2985 = vpack.c.bf16 %v1001, %v999
  %v2986 = vpack.c.bf16 %v2923, %v2922
  %v2987 = vpack.c.bf16 %v1006, %v1004
  %v2988 = vpack.c.bf16 %v2925, %v2924
  %v2989 = vpack.c.bf16 %v1011, %v1009
  %v2990 = vpack.c.bf16 %v2927, %v2926
  %v2991 = vpack.c.bf16 %v1039, %v1037
  %v2992 = vpack.c.bf16 %v2929, %v2928
  %v2993 = vpack.c.bf16 %v1067, %v1065
  %v2994 = vld [vmem:[%s1] sm:$0xf]
  %v2995 = vld [vmem:[%s1 + $0x4] sm:$0xf]
  %v2996 = vld [vmem:[%s1 + $0x8] sm:$0xf]
  %v2997 = vld [vmem:[%s1 + $0xc] sm:$0xf]
  %v2998 = vld [vmem:[%s1 + $0x10] sm:$0xf]
  %v2999 = vld [vmem:[%s1 + $0x14] sm:$0xf]
  %v3000 = vld [vmem:[%s1 + $0x18] sm:$0xf]
  %v3001 = vld [vmem:[%s1 + $0x1c] sm:$0xf]
  %v3002 = vld [vmem:[%s1 + $0x20] sm:$0xf]
  %v3003 = vld [vmem:[%s1 + $0x24] sm:$0xf]
  %v3004 = vld [vmem:[%s1 + $0x28] sm:$0xf]
  %v3005 = vld [vmem:[%s1 + $0x2c] sm:$0xf]
  %v3006 = vld [vmem:[%s1 + $0x30] sm:$0xf]
  %v3007 = vld [vmem:[%s1 + $0x34] sm:$0xf]
  %v3008 = vld [vmem:[%s1 + $0x38] sm:$0xf]
  %v3009 = vld [vmem:[%s1 + $0x3c] sm:$0xf]
  %v3010 = vld [vmem:[%s1 + $0x40] sm:$0xf]
  %v3011 = vld [vmem:[%s1 + $0x44] sm:$0xf]
  %v3012 = vld [vmem:[%s2] sm:$0x1]
  %v3014 = vlaneseq
  %v3015 = vshrl.u32 %v3014, 7
  %v3016 = vsub.s32 0, %v3015
  %v3017 = vrot.slane %v3012, %v3016
  %v3037 = vunpack.c.l.b16 %v2994
  %v3038 = vunpack.c.l.b16 %v2995
  %v3039 = vunpack.c.l.b16 %v2996
  %v3040 = vunpack.c.l.b16 %v2997
  %v3041 = vunpack.c.l.b16 %v2998
  %v3042 = vunpack.c.l.b16 %v2999
  %v3043 = vunpack.c.l.b16 %v3000
  %v3044 = vunpack.c.l.b16 %v3001
  %v3045 = vunpack.c.l.b16 %v3002
  %v3046 = vunpack.c.l.b16 %v3003
  %v3047 = vunpack.c.l.b16 %v3004
  %v3048 = vunpack.c.l.b16 %v3005
  %v3049 = vunpack.c.l.b16 %v3006
  %v3050 = vunpack.c.l.b16 %v3007
  %v3051 = vunpack.c.l.b16 %v3008
  %v3052 = vunpack.c.l.b16 %v3009
  %v3053 = vunpack.c.l.b16 %v3010
  %v3054 = vunpack.c.l.b16 %v3011
  %v3055 = vpack.c.b16 %v3038, %v3037
  %v3056 = vpack.c.b16 %v3040, %v3039
  %v3057 = vpack.c.b16 %v3042, %v3041
  %v3058 = vpack.c.b16 %v3044, %v3043
  %v3059 = vpack.c.b16 %v3046, %v3045
  %v3060 = vpack.c.b16 %v3048, %v3047
  %v3061 = vpack.c.b16 %v3050, %v3049
  %v3062 = vpack.c.b16 %v3052, %v3051
  %v3063 = vpack.c.b16 %v3054, %v3053
  %v3074 = vsel %vm143, %v2931, 0
  %v3077 = vsel %vm143, %v2933, 0
  %v3080 = vsel %vm143, %v2935, 0
  %v3083 = vsel %vm143, %v2937, 0
  %v3086 = vsel %vm143, %v2939, 0
  %v3089 = vsel %vm143, %v2941, 0
  %v3092 = vsel %vm143, %v2943, 0
  %v3095 = vsel %vm143, %v2945, 0
  %v3098 = vsel %vm143, %v2947, 0
  %v3101 = vsel %vm143, %v2949, 0
  %v3104 = vsel %vm143, %v2951, 0
  %v3107 = vsel %vm143, %v2953, 0
  %v3110 = vsel %vm143, %v2955, 0
  %v3113 = vsel %vm143, %v2957, 0
  %v3116 = vsel %vm143, %v2959, 0
  %v3119 = vsel %vm143, %v2961, 0
  %v3122 = vsel %vm143, %v2963, 0
  %v3125 = vsel %vm143, %v2965, 0
  %v3128 = vsel %vm143, %v2967, 0
  %v3131 = vsel %vm143, %v2969, 0
  %v3134 = vsel %vm143, %v2971, 0
  %v3137 = vsel %vm143, %v2973, 0
  %v3140 = vsel %vm143, %v2975, 0
  %v3143 = vsel %vm143, %v2977, 0
  %v3146 = vsel %vm143, %v2979, 0
  %v3149 = vsel %vm143, %v2981, 0
  %v3152 = vsel %vm143, %v2983, 0
  %v3155 = vsel %vm143, %v2985, 0
  %v3158 = vsel %vm143, %v2987, 0
  %v3161 = vsel %vm143, %v2989, 0
  %v3164 = vsel %vm143, %v2991, 0
  %v3167 = vsel %vm143, %v2993, 0
  %3169 = vmatprep.subr.bf16.mxu0 0
  %3170 = vmatpush1.bf16.msra.mxu0 %v3055
  %3171 = vmatprep.subr.bf16.mxu0 0
  %3172 = vmatpush1.bf16.msra.mxu0 %v3056
  %3173 = vmatprep.subr.bf16.mxu0 0
  %3174 = vmatpush1.bf16.msra.mxu0 %v3057
  %3175 = vmatprep.subr.bf16.mxu0 0
  %3176 = vmatpush1.bf16.msra.mxu0 %v3058
  %3177 = vmatprep.subr.bf16.mxu0 0
  %3178 = vmatpush1.bf16.msra.mxu0 %v3059
  %3179 = vmatprep.subr.bf16.mxu0 0
  %3180 = vmatpush1.bf16.msra.mxu0 %v3060
  %3181 = vmatprep.subr.bf16.mxu0 0
  %3182 = vmatpush1.bf16.msra.mxu0 %v3061
  %3183 = vmatprep.subr.bf16.mxu0 0
  %3184 = vmatpush1.bf16.msra.mxu0 %v3062
  %3185 = vmatprep.subr.bf16.mxu0 0
  %3186 = vmatpush1.bf16.msra.mxu0 %v3063
  %3187 = vmatprep.subr.bf16.mxu0 0
  %3188 = vmatpush1.bf16.msra.mxu0 0
  %3189 = vmatprep.subr.bf16.mxu0 0
  %3190 = vmatpush1.bf16.msra.mxu0 0
  %3191 = vmatprep.subr.bf16.mxu0 0
  %3192 = vmatpush1.bf16.msra.mxu0 0
  %3193 = vmatprep.subr.bf16.mxu0 0
  %3194 = vmatpush1.bf16.msra.mxu0 0
  %3195 = vmatprep.subr.bf16.mxu0 0
  %3196 = vmatpush1.bf16.msra.mxu0 0
  %3197 = vmatprep.subr.bf16.mxu0 0
  %3198 = vmatpush1.bf16.msra.mxu0 0
  %3199 = vmatprep.subr.bf16.mxu0 0
  %3200 = vmatpush1.bf16.msra.mxu0 0
  %3201 = vmatprep.mubr.bf16.mxu0 %v3074
  %3202 = vmatmul.mubr.bf16.gmra.mrb[0].mxu0 %v2930
  %v3203 = vpop.f32.mrb[0].mxu0
  %v3204 = vadd.f32 %v3017, %v3203
  %v3205 = vpop.f32.mrb[0].mxu0
  %v3206 = vpop.f32.mrb[0].mxu0
  %v3207 = vadd.f32 %v3017, %v3206
  %v3208 = vpop.f32.mrb[0].mxu0
  %3209 = vmatprep.mubr.bf16.mxu0 %v3077
  %3210 = vmatmul.mubr.bf16.gmra.mrb[0].mxu0 %v2932
  %v3211 = vpop.f32.mrb[0].mxu0
  %v3212 = vadd.f32 %v3017, %v3211
  %v3213 = vpop.f32.mrb[0].mxu0
  %v3214 = vpop.f32.mrb[0].mxu0
  %v3215 = vadd.f32 %v3017, %v3214
  %v3216 = vpop.f32.mrb[0].mxu0
  %3217 = vmatprep.mubr.bf16.mxu0 %v3080
  %3218 = vmatmul.mubr.bf16.gmra.mrb[0].mxu0 %v2934
  %v3219 = vpop.f32.mrb[0].mxu0
  %v3220 = vadd.f32 %v3017, %v3219
  %v3221 = vpop.f32.mrb[0].mxu0
  %v3222 = vpop.f32.mrb[0].mxu0
  %v3223 = vadd.f32 %v3017, %v3222
  %v3224 = vpop.f32.mrb[0].mxu0
  %3225 = vmatprep.mubr.bf16.mxu0 %v3083
  %3226 = vmatmul.mubr.bf16.gmra.mrb[0].mxu0 %v2936
  %v3227 = vpop.f32.mrb[0].mxu0
  %v3228 = vadd.f32 %v3017, %v3227
  %v3229 = vpop.f32.mrb[0].mxu0
  %v3230 = vpop.f32.mrb[0].mxu0
  %v3231 = vadd.f32 %v3017, %v3230
  %v3232 = vpop.f32.mrb[0].mxu0
  %3233 = vmatprep.mubr.bf16.mxu0 %v3086
  %3234 = vmatmul.mubr.bf16.gmra.mrb[0].mxu0 %v2938
  %v3235 = vpop.f32.mrb[0].mxu0
  %v3236 = vadd.f32 %v3017, %v3235
  %v3237 = vpop.f32.mrb[0].mxu0
  %v3238 = vpop.f32.mrb[0].mxu0
  %v3239 = vadd.f32 %v3017, %v3238
  %v3240 = vpop.f32.mrb[0].mxu0
  %3241 = vmatprep.mubr.bf16.mxu0 %v3089
  %3242 = vmatmul.mubr.bf16.gmra.mrb[0].mxu0 %v2940
  %v3243 = vpop.f32.mrb[0].mxu0
  %v3244 = vadd.f32 %v3017, %v3243
  %v3245 = vpop.f32.mrb[0].mxu0
  %v3246 = vpop.f32.mrb[0].mxu0
  %v3247 = vadd.f32 %v3017, %v3246
  %v3248 = vpop.f32.mrb[0].mxu0
  %3249 = vmatprep.mubr.bf16.mxu0 %v3092
  %3250 = vmatmul.mubr.bf16.gmra.mrb[0].mxu0 %v2942
  %v3251 = vpop.f32.mrb[0].mxu0
  %v3252 = vadd.f32 %v3017, %v3251
  %v3253 = vpop.f32.mrb[0].mxu0
  %v3254 = vpop.f32.mrb[0].mxu0
  %v3255 = vadd.f32 %v3017, %v3254
  %v3256 = vpop.f32.mrb[0].mxu0
  %3257 = vmatprep.mubr.bf16.mxu0 %v3095
  %3258 = vmatmul.mubr.bf16.gmra.mrb[0].mxu0 %v2944
  %v3259 = vpop.f32.mrb[0].mxu0
  %v3260 = vadd.f32 %v3017, %v3259
  %v3261 = vpop.f32.mrb[0].mxu0
  %v3262 = vpop.f32.mrb[0].mxu0
  %v3263 = vadd.f32 %v3017, %v3262
  %v3264 = vpop.f32.mrb[0].mxu0
  %3265 = vmatprep.mubr.bf16.mxu0 %v3098
  %3266 = vmatmul.mubr.bf16.gmra.mrb[0].mxu0 %v2946
  %v3267 = vpop.f32.mrb[0].mxu0
  %v3268 = vadd.f32 %v3017, %v3267
  %v3269 = vpop.f32.mrb[0].mxu0
  %v3270 = vpop.f32.mrb[0].mxu0
  %v3271 = vadd.f32 %v3017, %v3270
  %v3272 = vpop.f32.mrb[0].mxu0
  %3273 = vmatprep.mubr.bf16.mxu0 %v3101
  %3274 = vmatmul.mubr.bf16.gmra.mrb[0].mxu0 %v2948
  %v3275 = vpop.f32.mrb[0].mxu0
  %v3276 = vadd.f32 %v3017, %v3275
  %v3277 = vpop.f32.mrb[0].mxu0
  %v3278 = vpop.f32.mrb[0].mxu0
  %v3279 = vadd.f32 %v3017, %v3278
  %v3280 = vpop.f32.mrb[0].mxu0
  %3281 = vmatprep.mubr.bf16.mxu0 %v3104
  %3282 = vmatmul.mubr.bf16.gmra.mrb[0].mxu0 %v2950
  %v3283 = vpop.f32.mrb[0].mxu0
  %v3284 = vadd.f32 %v3017, %v3283
  %v3285 = vpop.f32.mrb[0].mxu0
  %v3286 = vpop.f32.mrb[0].mxu0
  %v3287 = vadd.f32 %v3017, %v3286
  %v3288 = vpop.f32.mrb[0].mxu0
  %3289 = vmatprep.mubr.bf16.mxu0 %v3107
  %3290 = vmatmul.mubr.bf16.gmra.mrb[0].mxu0 %v2952
  %v3291 = vpop.f32.mrb[0].mxu0
  %v3292 = vadd.f32 %v3017, %v3291
  %v3293 = vpop.f32.mrb[0].mxu0
  %v3294 = vpop.f32.mrb[0].mxu0
  %v3295 = vadd.f32 %v3017, %v3294
  %v3296 = vpop.f32.mrb[0].mxu0
  %3297 = vmatprep.mubr.bf16.mxu0 %v3110
  %3298 = vmatmul.mubr.bf16.gmra.mrb[0].mxu0 %v2954
  %v3299 = vpop.f32.mrb[0].mxu0
  %v3300 = vadd.f32 %v3017, %v3299
  %v3301 = vpop.f32.mrb[0].mxu0
  %v3302 = vpop.f32.mrb[0].mxu0
  %v3303 = vadd.f32 %v3017, %v3302
  %v3304 = vpop.f32.mrb[0].mxu0
  %3305 = vmatprep.mubr.bf16.mxu0 %v3113
  %3306 = vmatmul.mubr.bf16.gmra.mrb[0].mxu0 %v2956
  %v3307 = vpop.f32.mrb[0].mxu0
  %v3308 = vadd.f32 %v3017, %v3307
  %v3309 = vpop.f32.mrb[0].mxu0
  %v3310 = vpop.f32.mrb[0].mxu0
  %v3311 = vadd.f32 %v3017, %v3310
  %v3312 = vpop.f32.mrb[0].mxu0
  %3313 = vmatprep.mubr.bf16.mxu0 %v3116
  %3314 = vmatmul.mubr.bf16.gmra.mrb[0].mxu0 %v2958
  %v3315 = vpop.f32.mrb[0].mxu0
  %v3316 = vadd.f32 %v3017, %v3315
  %v3317 = vpop.f32.mrb[0].mxu0
  %v3318 = vpop.f32.mrb[0].mxu0
  %v3319 = vadd.f32 %v3017, %v3318
  %v3320 = vpop.f32.mrb[0].mxu0
  %3321 = vmatprep.mubr.bf16.mxu0 %v3119
  %3322 = vmatmul.mubr.bf16.gmra.mrb[0].mxu0 %v2960
  %v3323 = vpop.f32.mrb[0].mxu0
  %v3324 = vadd.f32 %v3017, %v3323
  %v3325 = vpop.f32.mrb[0].mxu0
  %v3326 = vpop.f32.mrb[0].mxu0
  %v3327 = vadd.f32 %v3017, %v3326
  %v3328 = vpop.f32.mrb[0].mxu0
  %3329 = vmatprep.mubr.bf16.mxu0 %v3122
  %3330 = vmatmul.mubr.bf16.gmra.mrb[0].mxu0 %v2962
  %v3331 = vpop.f32.mrb[0].mxu0
  %v3332 = vadd.f32 %v3017, %v3331
  %v3333 = vpop.f32.mrb[0].mxu0
  %v3334 = vpop.f32.mrb[0].mxu0
  %v3335 = vadd.f32 %v3017, %v3334
  %v3336 = vpop.f32.mrb[0].mxu0
  %3337 = vmatprep.mubr.bf16.mxu0 %v3125
  %3338 = vmatmul.mubr.bf16.gmra.mrb[0].mxu0 %v2964
  %v3339 = vpop.f32.mrb[0].mxu0
  %v3340 = vadd.f32 %v3017, %v3339
  %v3341 = vpop.f32.mrb[0].mxu0
  %v3342 = vpop.f32.mrb[0].mxu0
  %v3343 = vadd.f32 %v3017, %v3342
  %v3344 = vpop.f32.mrb[0].mxu0
  %3345 = vmatprep.mubr.bf16.mxu0 %v3128
  %3346 = vmatmul.mubr.bf16.gmra.mrb[0].mxu0 %v2966
  %v3347 = vpop.f32.mrb[0].mxu0
  %v3348 = vadd.f32 %v3017, %v3347
  %v3349 = vpop.f32.mrb[0].mxu0
  %v3350 = vpop.f32.mrb[0].mxu0
  %v3351 = vadd.f32 %v3017, %v3350
  %v3352 = vpop.f32.mrb[0].mxu0
  %3353 = vmatprep.mubr.bf16.mxu0 %v3131
  %3354 = vmatmul.mubr.bf16.gmra.mrb[0].mxu0 %v2968
  %v3355 = vpop.f32.mrb[0].mxu0
  %v3356 = vadd.f32 %v3017, %v3355
  %v3357 = vpop.f32.mrb[0].mxu0
  %v3358 = vpop.f32.mrb[0].mxu0
  %v3359 = vadd.f32 %v3017, %v3358
  %v3360 = vpop.f32.mrb[0].mxu0
  %3361 = vmatprep.mubr.bf16.mxu0 %v3134
  %3362 = vmatmul.mubr.bf16.gmra.mrb[0].mxu0 %v2970
  %v3363 = vpop.f32.mrb[0].mxu0
  %v3364 = vadd.f32 %v3017, %v3363
  %v3365 = vpop.f32.mrb[0].mxu0
  %v3366 = vpop.f32.mrb[0].mxu0
  %v3367 = vadd.f32 %v3017, %v3366
  %v3368 = vpop.f32.mrb[0].mxu0
  %3369 = vmatprep.mubr.bf16.mxu0 %v3137
  %3370 = vmatmul.mubr.bf16.gmra.mrb[0].mxu0 %v2972
  %v3371 = vpop.f32.mrb[0].mxu0
  %v3372 = vadd.f32 %v3017, %v3371
  %v3373 = vpop.f32.mrb[0].mxu0
  %v3374 = vpop.f32.mrb[0].mxu0
  %v3375 = vadd.f32 %v3017, %v3374
  %v3376 = vpop.f32.mrb[0].mxu0
  %3377 = vmatprep.mubr.bf16.mxu0 %v3140
  %3378 = vmatmul.mubr.bf16.gmra.mrb[0].mxu0 %v2974
  %v3379 = vpop.f32.mrb[0].mxu0
  %v3380 = vadd.f32 %v3017, %v3379
  %v3381 = vpop.f32.mrb[0].mxu0
  %v3382 = vpop.f32.mrb[0].mxu0
  %v3383 = vadd.f32 %v3017, %v3382
  %v3384 = vpop.f32.mrb[0].mxu0
  %3385 = vmatprep.mubr.bf16.mxu0 %v3143
  %3386 = vmatmul.mubr.bf16.gmra.mrb[0].mxu0 %v2976
  %v3387 = vpop.f32.mrb[0].mxu0
  %v3388 = vadd.f32 %v3017, %v3387
  %v3389 = vpop.f32.mrb[0].mxu0
  %v3390 = vpop.f32.mrb[0].mxu0
  %v3391 = vadd.f32 %v3017, %v3390
  %v3392 = vpop.f32.mrb[0].mxu0
  %3393 = vmatprep.mubr.bf16.mxu0 %v3146
  %3394 = vmatmul.mubr.bf16.gmra.mrb[0].mxu0 %v2978
  %v3395 = vpop.f32.mrb[0].mxu0
  %v3396 = vadd.f32 %v3017, %v3395
  %v3397 = vpop.f32.mrb[0].mxu0
  %v3398 = vpop.f32.mrb[0].mxu0
  %v3399 = vadd.f32 %v3017, %v3398
  %v3400 = vpop.f32.mrb[0].mxu0
  %3401 = vmatprep.mubr.bf16.mxu0 %v3149
  %3402 = vmatmul.mubr.bf16.gmra.mrb[0].mxu0 %v2980
  %v3403 = vpop.f32.mrb[0].mxu0
  %v3404 = vadd.f32 %v3017, %v3403
  %v3405 = vpop.f32.mrb[0].mxu0
  %v3406 = vpop.f32.mrb[0].mxu0
  %v3407 = vadd.f32 %v3017, %v3406
  %v3408 = vpop.f32.mrb[0].mxu0
  %3409 = vmatprep.mubr.bf16.mxu0 %v3152
  %3410 = vmatmul.mubr.bf16.gmra.mrb[0].mxu0 %v2982
  %v3411 = vpop.f32.mrb[0].mxu0
  %v3412 = vadd.f32 %v3017, %v3411
  %v3413 = vpop.f32.mrb[0].mxu0
  %v3414 = vpop.f32.mrb[0].mxu0
  %v3415 = vadd.f32 %v3017, %v3414
  %v3416 = vpop.f32.mrb[0].mxu0
  %3417 = vmatprep.mubr.bf16.mxu0 %v3155
  %3418 = vmatmul.mubr.bf16.gmra.mrb[0].mxu0 %v2984
  %v3419 = vpop.f32.mrb[0].mxu0
  %v3420 = vadd.f32 %v3017, %v3419
  %v3421 = vpop.f32.mrb[0].mxu0
  %v3422 = vpop.f32.mrb[0].mxu0
  %v3423 = vadd.f32 %v3017, %v3422
  %v3424 = vpop.f32.mrb[0].mxu0
  %3425 = vmatprep.mubr.bf16.mxu0 %v3158
  %3426 = vmatmul.mubr.bf16.gmra.mrb[0].mxu0 %v2986
  %v3427 = vpop.f32.mrb[0].mxu0
  %v3428 = vadd.f32 %v3017, %v3427
  %v3429 = vpop.f32.mrb[0].mxu0
  %v3430 = vpop.f32.mrb[0].mxu0
  %v3431 = vadd.f32 %v3017, %v3430
  %v3432 = vpop.f32.mrb[0].mxu0
  %3433 = vmatprep.mubr.bf16.mxu0 %v3161
  %3434 = vmatmul.mubr.bf16.gmra.mrb[0].mxu0 %v2988
  %v3435 = vpop.f32.mrb[0].mxu0
  %v3436 = vadd.f32 %v3017, %v3435
  %v3437 = vpop.f32.mrb[0].mxu0
  %v3438 = vpop.f32.mrb[0].mxu0
  %v3439 = vadd.f32 %v3017, %v3438
  %v3440 = vpop.f32.mrb[0].mxu0
  %3441 = vmatprep.mubr.bf16.mxu0 %v3164
  %3442 = vmatmul.mubr.bf16.gmra.mrb[0].mxu0 %v2990
  %v3443 = vpop.f32.mrb[0].mxu0
  %v3444 = vadd.f32 %v3017, %v3443
  %v3445 = vpop.f32.mrb[0].mxu0
  %v3446 = vpop.f32.mrb[0].mxu0
  %v3447 = vadd.f32 %v3017, %v3446
  %v3448 = vpop.f32.mrb[0].mxu0
  %3449 = vmatprep.mubr.bf16.mxu0 %v3167
  %3450 = vmatmul.mubr.bf16.gmra.mrb[0].mxu0 %v2992
  %v3451 = vpop.f32.mrb[0].mxu0
  %v3452 = vadd.f32 %v3017, %v3451
  %v3453 = vpop.f32.mrb[0].mxu0
  %v3454 = vpop.f32.mrb[0].mxu0
  %v3455 = vadd.f32 %v3017, %v3454
  %v3456 = vpop.f32.mrb[0].mxu0
  %3457 = vdwg.mxu0
  %v3458 = vpack.c.bf16 %v3207, %v3204
  %v3459 = vpack.c.bf16 %v3215, %v3212
  %v3460 = vpack.c.bf16 %v3223, %v3220
  %v3461 = vpack.c.bf16 %v3231, %v3228
  %v3462 = vpack.c.bf16 %v3239, %v3236
  %v3463 = vpack.c.bf16 %v3247, %v3244
  %v3464 = vpack.c.bf16 %v3255, %v3252
  %v3465 = vpack.c.bf16 %v3263, %v3260
  %v3466 = vpack.c.bf16 %v3271, %v3268
  %v3467 = vpack.c.bf16 %v3279, %v3276
  %v3468 = vpack.c.bf16 %v3287, %v3284
  %v3469 = vpack.c.bf16 %v3295, %v3292
  %v3470 = vpack.c.bf16 %v3303, %v3300
  %v3471 = vpack.c.bf16 %v3311, %v3308
  %v3472 = vpack.c.bf16 %v3319, %v3316
  %v3473 = vpack.c.bf16 %v3327, %v3324
  %v3474 = vpack.c.bf16 %v3335, %v3332
  %v3475 = vpack.c.bf16 %v3343, %v3340
  %v3476 = vpack.c.bf16 %v3351, %v3348
  %v3477 = vpack.c.bf16 %v3359, %v3356
  %v3478 = vpack.c.bf16 %v3367, %v3364
  %v3479 = vpack.c.bf16 %v3375, %v3372
  %v3480 = vpack.c.bf16 %v3383, %v3380
  %v3481 = vpack.c.bf16 %v3391, %v3388
  %v3482 = vpack.c.bf16 %v3399, %v3396
  %v3483 = vpack.c.bf16 %v3407, %v3404
  %v3484 = vpack.c.bf16 %v3415, %v3412
  %v3485 = vpack.c.bf16 %v3423, %v3420
  %v3486 = vpack.c.bf16 %v3431, %v3428
  %v3487 = vpack.c.bf16 %v3439, %v3436
  %v3488 = vpack.c.bf16 %v3447, %v3444
  %v3489 = vpack.c.bf16 %v3455, %v3452
  %v3522 = vunpack.c.l.b16 %v3458
  %v3523 = vunpack.c.h.b16 %v3458
  %v3524 = vunpack.c.l.b16 %v3459
  %v3525 = vunpack.c.h.b16 %v3459
  %v3526 = vunpack.c.l.b16 %v3460
  %v3527 = vunpack.c.h.b16 %v3460
  %v3528 = vunpack.c.l.b16 %v3461
  %v3529 = vunpack.c.h.b16 %v3461
  %v3530 = vunpack.c.l.b16 %v3462
  %v3531 = vunpack.c.h.b16 %v3462
  %v3532 = vunpack.c.l.b16 %v3463
  %v3533 = vunpack.c.h.b16 %v3463
  %v3534 = vunpack.c.l.b16 %v3464
  %v3535 = vunpack.c.h.b16 %v3464
  %v3536 = vunpack.c.l.b16 %v3465
  %v3537 = vunpack.c.h.b16 %v3465
  %v3538 = vunpack.c.l.b16 %v3466
  %v3539 = vunpack.c.h.b16 %v3466
  %v3540 = vunpack.c.l.b16 %v3467
  %v3541 = vunpack.c.h.b16 %v3467
  %v3542 = vunpack.c.l.b16 %v3468
  %v3543 = vunpack.c.h.b16 %v3468
  %v3544 = vunpack.c.l.b16 %v3469
  %v3545 = vunpack.c.h.b16 %v3469
  %v3546 = vunpack.c.l.b16 %v3470
  %v3547 = vunpack.c.h.b16 %v3470
  %v3548 = vunpack.c.l.b16 %v3471
  %v3549 = vunpack.c.h.b16 %v3471
  %v3550 = vunpack.c.l.b16 %v3472
  %v3551 = vunpack.c.h.b16 %v3472
  %v3552 = vunpack.c.l.b16 %v3473
  %v3553 = vunpack.c.h.b16 %v3473
  %v3554 = vunpack.c.l.b16 %v3474
  %v3555 = vunpack.c.h.b16 %v3474
  %v3556 = vunpack.c.l.b16 %v3475
  %v3557 = vunpack.c.h.b16 %v3475
  %v3558 = vunpack.c.l.b16 %v3476
  %v3559 = vunpack.c.h.b16 %v3476
  %v3560 = vunpack.c.l.b16 %v3477
  %v3561 = vunpack.c.h.b16 %v3477
  %v3562 = vunpack.c.l.b16 %v3478
  %v3563 = vunpack.c.h.b16 %v3478
  %v3564 = vunpack.c.l.b16 %v3479
  %v3565 = vunpack.c.h.b16 %v3479
  %v3566 = vunpack.c.l.b16 %v3480
  %v3567 = vunpack.c.h.b16 %v3480
  %v3568 = vunpack.c.l.b16 %v3481
  %v3569 = vunpack.c.h.b16 %v3481
  %v3570 = vunpack.c.l.b16 %v3482
  %v3571 = vunpack.c.h.b16 %v3482
  %v3572 = vunpack.c.l.b16 %v3483
  %v3573 = vunpack.c.h.b16 %v3483
  %v3574 = vunpack.c.l.b16 %v3484
  %v3575 = vunpack.c.h.b16 %v3484
  %v3576 = vunpack.c.l.b16 %v3485
  %v3577 = vunpack.c.h.b16 %v3485
  %v3578 = vunpack.c.l.b16 %v3486
  %v3579 = vunpack.c.h.b16 %v3486
  %v3580 = vunpack.c.l.b16 %v3487
  %v3581 = vunpack.c.h.b16 %v3487
  %v3582 = vunpack.c.l.b16 %v3488
  %v3583 = vunpack.c.h.b16 %v3488
  %v3584 = vunpack.c.l.b16 %v3489
  %v3585 = vunpack.c.h.b16 %v3489
  %v3586 = vpack.c.b16 %v3522, %v3522
  %v3587 = vpack.c.b16 %v3523, %v3523
  %v3588 = vpack.c.b16 %v3524, %v3524
  %v3589 = vpack.c.b16 %v3525, %v3525
  %v3590 = vpack.c.b16 %v3526, %v3526
  %v3591 = vpack.c.b16 %v3527, %v3527
  %v3592 = vpack.c.b16 %v3528, %v3528
  %v3593 = vpack.c.b16 %v3529, %v3529
  %v3594 = vpack.c.b16 %v3530, %v3530
  %v3595 = vpack.c.b16 %v3531, %v3531
  %v3596 = vpack.c.b16 %v3532, %v3532
  %v3597 = vpack.c.b16 %v3533, %v3533
  %v3598 = vpack.c.b16 %v3534, %v3534
  %v3599 = vpack.c.b16 %v3535, %v3535
  %v3600 = vpack.c.b16 %v3536, %v3536
  %v3601 = vpack.c.b16 %v3537, %v3537
  %v3602 = vpack.c.b16 %v3538, %v3538
  %v3603 = vpack.c.b16 %v3539, %v3539
  %v3604 = vpack.c.b16 %v3540, %v3540
  %v3605 = vpack.c.b16 %v3541, %v3541
  %v3606 = vpack.c.b16 %v3542, %v3542
  %v3607 = vpack.c.b16 %v3543, %v3543
  %v3608 = vpack.c.b16 %v3544, %v3544
  %v3609 = vpack.c.b16 %v3545, %v3545
  %v3610 = vpack.c.b16 %v3546, %v3546
  %v3611 = vpack.c.b16 %v3547, %v3547
  %v3612 = vpack.c.b16 %v3548, %v3548
  %v3613 = vpack.c.b16 %v3549, %v3549
  %v3614 = vpack.c.b16 %v3550, %v3550
  %v3615 = vpack.c.b16 %v3551, %v3551
  %v3616 = vpack.c.b16 %v3552, %v3552
  %v3617 = vpack.c.b16 %v3553, %v3553
  %v3618 = vpack.c.b16 %v3554, %v3554
  %v3619 = vpack.c.b16 %v3555, %v3555
  %v3620 = vpack.c.b16 %v3556, %v3556
  %v3621 = vpack.c.b16 %v3557, %v3557
  %v3622 = vpack.c.b16 %v3558, %v3558
  %v3623 = vpack.c.b16 %v3559, %v3559
  %v3624 = vpack.c.b16 %v3560, %v3560
  %v3625 = vpack.c.b16 %v3561, %v3561
  %v3626 = vpack.c.b16 %v3562, %v3562
  %v3627 = vpack.c.b16 %v3563, %v3563
  %v3628 = vpack.c.b16 %v3564, %v3564
  %v3629 = vpack.c.b16 %v3565, %v3565
  %v3630 = vpack.c.b16 %v3566, %v3566
  %v3631 = vpack.c.b16 %v3567, %v3567
  %v3632 = vpack.c.b16 %v3568, %v3568
  %v3633 = vpack.c.b16 %v3569, %v3569
  %v3634 = vpack.c.b16 %v3570, %v3570
  %v3635 = vpack.c.b16 %v3571, %v3571
  %v3636 = vpack.c.b16 %v3572, %v3572
  %v3637 = vpack.c.b16 %v3573, %v3573
  %v3638 = vpack.c.b16 %v3574, %v3574
  %v3639 = vpack.c.b16 %v3575, %v3575
  %v3640 = vpack.c.b16 %v3576, %v3576
  %v3641 = vpack.c.b16 %v3577, %v3577
  %v3642 = vpack.c.b16 %v3578, %v3578
  %v3643 = vpack.c.b16 %v3579, %v3579
  %v3644 = vpack.c.b16 %v3580, %v3580
  %v3645 = vpack.c.b16 %v3581, %v3581
  %v3646 = vpack.c.b16 %v3582, %v3582
  %v3647 = vpack.c.b16 %v3583, %v3583
  %v3648 = vpack.c.b16 %v3584, %v3584
  %v3649 = vpack.c.b16 %v3585, %v3585
  %vm3714 = vcmask 19456
  %3715 = vst.msk [vmem:[%s3] sm:$0xf] %vm3714, %v3586
  %3716 = vst.msk [vmem:[%s3 + $0x4] sm:$0xf] %vm3714, %v3587
  %3717 = vst.msk [vmem:[%s3 + $0x8] sm:$0xf] %vm3714, %v3588
  %3718 = vst.msk [vmem:[%s3 + $0xc] sm:$0xf] %vm3714, %v3589
  %3719 = vst.msk [vmem:[%s3 + $0x10] sm:$0xf] %vm3714, %v3590
  %3720 = vst.msk [vmem:[%s3 + $0x14] sm:$0xf] %vm3714, %v3591
  %3721 = vst.msk [vmem:[%s3 + $0x18] sm:$0xf] %vm3714, %v3592
  %3722 = vst.msk [vmem:[%s3 + $0x1c] sm:$0xf] %vm3714, %v3593
  %3723 = vst.msk [vmem:[%s3 + $0x20] sm:$0xf] %vm3714, %v3594
  %3724 = vst.msk [vmem:[%s3 + $0x24] sm:$0xf] %vm3714, %v3595
  %3725 = vst.msk [vmem:[%s3 + $0x28] sm:$0xf] %vm3714, %v3596
  %3726 = vst.msk [vmem:[%s3 + $0x2c] sm:$0xf] %vm3714, %v3597
  %3727 = vst.msk [vmem:[%s3 + $0x30] sm:$0xf] %vm3714, %v3598
  %3728 = vst.msk [vmem:[%s3 + $0x34] sm:$0xf] %vm3714, %v3599
  %3729 = vst.msk [vmem:[%s3 + $0x38] sm:$0xf] %vm3714, %v3600
  %3730 = vst.msk [vmem:[%s3 + $0x3c] sm:$0xf] %vm3714, %v3601
  %3731 = vst.msk [vmem:[%s3 + $0x40] sm:$0xf] %vm3714, %v3602
  %3732 = vst.msk [vmem:[%s3 + $0x44] sm:$0xf] %vm3714, %v3603
  %3733 = vst.msk [vmem:[%s3 + $0x48] sm:$0xf] %vm3714, %v3604
  %3734 = vst.msk [vmem:[%s3 + $0x4c] sm:$0xf] %vm3714, %v3605
  %3735 = vst.msk [vmem:[%s3 + $0x50] sm:$0xf] %vm3714, %v3606
  %3736 = vst.msk [vmem:[%s3 + $0x54] sm:$0xf] %vm3714, %v3607
  %3737 = vst.msk [vmem:[%s3 + $0x58] sm:$0xf] %vm3714, %v3608
  %3738 = vst.msk [vmem:[%s3 + $0x5c] sm:$0xf] %vm3714, %v3609
  %3739 = vst.msk [vmem:[%s3 + $0x60] sm:$0xf] %vm3714, %v3610
  %3740 = vst.msk [vmem:[%s3 + $0x64] sm:$0xf] %vm3714, %v3611
  %3741 = vst.msk [vmem:[%s3 + $0x68] sm:$0xf] %vm3714, %v3612
  %3742 = vst.msk [vmem:[%s3 + $0x6c] sm:$0xf] %vm3714, %v3613
  %3743 = vst.msk [vmem:[%s3 + $0x70] sm:$0xf] %vm3714, %v3614
  %3744 = vst.msk [vmem:[%s3 + $0x74] sm:$0xf] %vm3714, %v3615
  %3745 = vst.msk [vmem:[%s3 + $0x78] sm:$0xf] %vm3714, %v3616
  %3746 = vst.msk [vmem:[%s3 + $0x7c] sm:$0xf] %vm3714, %v3617
  %3747 = vst.msk [vmem:[%s3 + $0x80] sm:$0xf] %vm3714, %v3618
  %3748 = vst.msk [vmem:[%s3 + $0x84] sm:$0xf] %vm3714, %v3619
  %3749 = vst.msk [vmem:[%s3 + $0x88] sm:$0xf] %vm3714, %v3620
  %3750 = vst.msk [vmem:[%s3 + $0x8c] sm:$0xf] %vm3714, %v3621
  %3751 = vst.msk [vmem:[%s3 + $0x90] sm:$0xf] %vm3714, %v3622
  %3752 = vst.msk [vmem:[%s3 + $0x94] sm:$0xf] %vm3714, %v3623
  %3753 = vst.msk [vmem:[%s3 + $0x98] sm:$0xf] %vm3714, %v3624
  %3754 = vst.msk [vmem:[%s3 + $0x9c] sm:$0xf] %vm3714, %v3625
  %3755 = vst.msk [vmem:[%s3 + $0xa0] sm:$0xf] %vm3714, %v3626
  %3756 = vst.msk [vmem:[%s3 + $0xa4] sm:$0xf] %vm3714, %v3627
  %3757 = vst.msk [vmem:[%s3 + $0xa8] sm:$0xf] %vm3714, %v3628
  %3758 = vst.msk [vmem:[%s3 + $0xac] sm:$0xf] %vm3714, %v3629
  %3759 = vst.msk [vmem:[%s3 + $0xb0] sm:$0xf] %vm3714, %v3630
  %3760 = vst.msk [vmem:[%s3 + $0xb4] sm:$0xf] %vm3714, %v3631
  %3761 = vst.msk [vmem:[%s3 + $0xb8] sm:$0xf] %vm3714, %v3632
  %3762 = vst.msk [vmem:[%s3 + $0xbc] sm:$0xf] %vm3714, %v3633
  %3763 = vst.msk [vmem:[%s3 + $0xc0] sm:$0xf] %vm3714, %v3634
  %3764 = vst.msk [vmem:[%s3 + $0xc4] sm:$0xf] %vm3714, %v3635
  %3765 = vst.msk [vmem:[%s3 + $0xc8] sm:$0xf] %vm3714, %v3636
  %3766 = vst.msk [vmem:[%s3 + $0xcc] sm:$0xf] %vm3714, %v3637
  %3767 = vst.msk [vmem:[%s3 + $0xd0] sm:$0xf] %vm3714, %v3638
  %3768 = vst.msk [vmem:[%s3 + $0xd4] sm:$0xf] %vm3714, %v3639
  %3769 = vst.msk [vmem:[%s3 + $0xd8] sm:$0xf] %vm3714, %v3640
  %3770 = vst.msk [vmem:[%s3 + $0xdc] sm:$0xf] %vm3714, %v3641
  %3771 = vst.msk [vmem:[%s3 + $0xe0] sm:$0xf] %vm3714, %v3642
  %3772 = vst.msk [vmem:[%s3 + $0xe4] sm:$0xf] %vm3714, %v3643
  %3773 = vst.msk [vmem:[%s3 + $0xe8] sm:$0xf] %vm3714, %v3644
  %3774 = vst.msk [vmem:[%s3 + $0xec] sm:$0xf] %vm3714, %v3645
  %3775 = vst.msk [vmem:[%s3 + $0xf0] sm:$0xf] %vm3714, %v3646
  %3776 = vst.msk [vmem:[%s3 + $0xf4] sm:$0xf] %vm3714, %v3647
  %3777 = vst.msk [vmem:[%s3 + $0xf8] sm:$0xf] %vm3714, %v3648
  %3778 = vst.msk [vmem:[%s3 + $0xfc] sm:$0xf] %vm3714, %v3649
  // Predicated region
  $region14: #{drsenmk_forward.10} parent=0 // pred_check
    _
  $region15: #{drsenmk_forward.10} parent=0 // pred_check_branch
    %3780 = sbr.rel (0) target = $region17
  $region16: #{drsenmk_forward.10} parent=0 // pred_region
    _
  $region17: #{drsenmk_forward.10} parent=0 // pred_fallthru
    _
  // Predicated region
  $region18: #{drsenmk_forward.10} parent=0 // pred_check
    _
  $region19: #{drsenmk_forward.10} parent=0 // pred_check_branch
    %3782 = sbr.rel (0) target = $region21
  $region20: #{drsenmk_forward.10} parent=0 // pred_region
    _
  $region21: #{drsenmk_forward.10} parent=0 // pred_fallthru
    _

// kernel: drsenmk_forward.15
$region0: #{drsenmk_forward.15}
  #allocation0 [shape = 'u32[]', space=smem, size = 0x4, offset = 0x4, fixed_abs, tag = 'smem constant byte address 0x4 - core index']
  #allocation1 [shape = 'u32[144,128]{1,0:T(1,128)}', space=vmem, size = 0x12000, scoped, tag = 'internal scratch']
  #allocation2 [shape = 'f32[2,18,25,16]{3,2,1,0:T(8,128)}', space=vmem, size = 0x90000, scoped, tag = 'scratch operand']
  %s0 = inlined_call_operand.vmem [shape: bf16[2,16,16,16], index: 0, kind: input, shape index: {}]
  %s1 = inlined_call_operand.vmem [shape: bf16[144,3], index: 1, kind: input, shape index: {}]
  %s2 = inlined_call_operand.vmem [shape: f32[1,3], index: 2, kind: input, shape index: {}]
  %s3 = inlined_call_operand.vmem [shape: bf16[2,16,16,3], index: 3, kind: input, shape index: {}]
  %s4 = inlined_call_operand.vmem [shape: bf16[2,16,16,3], index: 4, kind: output, shape index: {}]
  %s5 = sld [smem:[#allocation0]]
  $region26: #{drsenmk_forward.15} parent=0
    _
  %s7 = ssub.s32 1, %s5
  %s8 = scalar_select 0, %s7, %s5
  // Predicated region
  $region2: #{drsenmk_forward.15} parent=0 // pred_check
    _
  $region3: #{drsenmk_forward.15} parent=0 // pred_check_branch
    %10 = sbr.rel (0) target = $region5
  $region4: #{drsenmk_forward.15} parent=0 // pred_region
    _
  $region5: #{drsenmk_forward.15} parent=0 // pred_fallthru
    _
  // Predicated region
  $region6: #{drsenmk_forward.15} parent=0 // pred_check
    _
  $region7: #{drsenmk_forward.15} parent=0 // pred_check_branch
    %12 = sbr.rel (0) target = $region9
  $region8: #{drsenmk_forward.15} parent=0 // pred_region
    _
  $region9: #{drsenmk_forward.15} parent=0 // pred_fallthru
    _
  // Predicated region
  $region10: #{drsenmk_forward.15} parent=0 // pred_check
    _
  $region11: #{drsenmk_forward.15} parent=0 // pred_check_branch
    %14 = sbr.rel (0) target = $region13
  $region12: #{drsenmk_forward.15} parent=0 // pred_region
    _
  $region13: #{drsenmk_forward.15} parent=0 // pred_fallthru
    _
  // Predicated region
  $region14: #{drsenmk_forward.15} parent=0 // pred_check
    _
  $region15: #{drsenmk_forward.15} parent=0 // pred_check_branch
    %16 = sbr.rel (0) target = $region17
  $region16: #{drsenmk_forward.15} parent=0 // pred_region
    _
  $region17: #{drsenmk_forward.15} parent=0 // pred_fallthru
    _
  %v18 = vld [vmem:[%s0] sm:$0xf]
  %v19 = vld [vmem:[%s0 + $0x4] sm:$0xf]
  %v20 = vld [vmem:[%s0 + $0x8] sm:$0xf]
  %v21 = vld [vmem:[%s0 + $0xc] sm:$0xf]
  %v22 = vld [vmem:[%s0 + $0x10] sm:$0xf]
  %v23 = vld [vmem:[%s0 + $0x14] sm:$0xf]
  %v24 = vld [vmem:[%s0 + $0x18] sm:$0xf]
  %v25 = vld [vmem:[%s0 + $0x1c] sm:$0xf]
  %v26 = vld [vmem:[%s0 + $0x20] sm:$0xf]
  %v27 = vld [vmem:[%s0 + $0x24] sm:$0xf]
  %v28 = vld [vmem:[%s0 + $0x28] sm:$0xf]
  %v29 = vld [vmem:[%s0 + $0x2c] sm:$0xf]
  %v30 = vld [vmem:[%s0 + $0x30] sm:$0xf]
  %v31 = vld [vmem:[%s0 + $0x34] sm:$0xf]
  %v32 = vld [vmem:[%s0 + $0x38] sm:$0xf]
  %v33 = vld [vmem:[%s0 + $0x3c] sm:$0xf]
  %v34 = vld [vmem:[%s0 + $0x40] sm:$0xf]
  %v35 = vld [vmem:[%s0 + $0x44] sm:$0xf]
  %v36 = vld [vmem:[%s0 + $0x48] sm:$0xf]
  %v37 = vld [vmem:[%s0 + $0x4c] sm:$0xf]
  %v38 = vld [vmem:[%s0 + $0x50] sm:$0xf]
  %v39 = vld [vmem:[%s0 + $0x54] sm:$0xf]
  %v40 = vld [vmem:[%s0 + $0x58] sm:$0xf]
  %v41 = vld [vmem:[%s0 + $0x5c] sm:$0xf]
  %v42 = vld [vmem:[%s0 + $0x60] sm:$0xf]
  %v43 = vld [vmem:[%s0 + $0x64] sm:$0xf]
  %v44 = vld [vmem:[%s0 + $0x68] sm:$0xf]
  %v45 = vld [vmem:[%s0 + $0x6c] sm:$0xf]
  %v46 = vld [vmem:[%s0 + $0x70] sm:$0xf]
  %v47 = vld [vmem:[%s0 + $0x74] sm:$0xf]
  %v48 = vld [vmem:[%s0 + $0x78] sm:$0xf]
  %v49 = vld [vmem:[%s0 + $0x7c] sm:$0xf]
  %v50 = vld [vmem:[%s0 + $0x80] sm:$0xf]
  %v51 = vld [vmem:[%s0 + $0x84] sm:$0xf]
  %v52 = vld [vmem:[%s0 + $0x88] sm:$0xf]
  %v53 = vld [vmem:[%s0 + $0x8c] sm:$0xf]
  %v54 = vld [vmem:[%s0 + $0x90] sm:$0xf]
  %v55 = vld [vmem:[%s0 + $0x94] sm:$0xf]
  %v56 = vld [vmem:[%s0 + $0x98] sm:$0xf]
  %v57 = vld [vmem:[%s0 + $0x9c] sm:$0xf]
  %v58 = vld [vmem:[%s0 + $0xa0] sm:$0xf]
  %v59 = vld [vmem:[%s0 + $0xa4] sm:$0xf]
  %v60 = vld [vmem:[%s0 + $0xa8] sm:$0xf]
  %v61 = vld [vmem:[%s0 + $0xac] sm:$0xf]
  %v62 = vld [vmem:[%s0 + $0xb0] sm:$0xf]
  %v63 = vld [vmem:[%s0 + $0xb4] sm:$0xf]
  %v64 = vld [vmem:[%s0 + $0xb8] sm:$0xf]
  %v65 = vld [vmem:[%s0 + $0xbc] sm:$0xf]
  %v66 = vld [vmem:[%s0 + $0xc0] sm:$0xf]
  %v67 = vld [vmem:[%s0 + $0xc4] sm:$0xf]
  %v68 = vld [vmem:[%s0 + $0xc8] sm:$0xf]
  %v69 = vld [vmem:[%s0 + $0xcc] sm:$0xf]
  %v70 = vld [vmem:[%s0 + $0xd0] sm:$0xf]
  %v71 = vld [vmem:[%s0 + $0xd4] sm:$0xf]
  %v72 = vld [vmem:[%s0 + $0xd8] sm:$0xf]
  %v73 = vld [vmem:[%s0 + $0xdc] sm:$0xf]
  %v74 = vld [vmem:[%s0 + $0xe0] sm:$0xf]
  %v75 = vld [vmem:[%s0 + $0xe4] sm:$0xf]
  %v76 = vld [vmem:[%s0 + $0xe8] sm:$0xf]
  %v77 = vld [vmem:[%s0 + $0xec] sm:$0xf]
  %v78 = vld [vmem:[%s0 + $0xf0] sm:$0xf]
  %v79 = vld [vmem:[%s0 + $0xf4] sm:$0xf]
  %v80 = vld [vmem:[%s0 + $0xf8] sm:$0xf]
  %v81 = vld [vmem:[%s0 + $0xfc] sm:$0xf]
  %v82 = vunpack.c.l.bf16 %v18
  %v83 = vunpack.c.l.bf16 %v19
  %v84 = vunpack.c.l.bf16 %v20
  %v85 = vunpack.c.l.bf16 %v21
  %v86 = vunpack.c.l.bf16 %v22
  %v87 = vunpack.c.l.bf16 %v23
  %v88 = vunpack.c.l.bf16 %v24
  %v89 = vunpack.c.l.bf16 %v25
  %v90 = vunpack.c.l.bf16 %v26
  %v91 = vunpack.c.l.bf16 %v27
  %v92 = vunpack.c.l.bf16 %v28
  %v93 = vunpack.c.l.bf16 %v29
  %v94 = vunpack.c.l.bf16 %v30
  %v95 = vunpack.c.l.bf16 %v31
  %v96 = vunpack.c.l.bf16 %v32
  %v97 = vunpack.c.l.bf16 %v33
  %v98 = vunpack.c.l.bf16 %v34
  %v99 = vunpack.c.l.bf16 %v35
  %v100 = vunpack.c.l.bf16 %v36
  %v101 = vunpack.c.l.bf16 %v37
  %v102 = vunpack.c.l.bf16 %v38
  %v103 = vunpack.c.l.bf16 %v39
  %v104 = vunpack.c.l.bf16 %v40
  %v105 = vunpack.c.l.bf16 %v41
  %v106 = vunpack.c.l.bf16 %v42
  %v107 = vunpack.c.l.bf16 %v43
  %v108 = vunpack.c.l.bf16 %v44
  %v109 = vunpack.c.l.bf16 %v45
  %v110 = vunpack.c.l.bf16 %v46
  %v111 = vunpack.c.l.bf16 %v47
  %v112 = vunpack.c.l.bf16 %v48
  %v113 = vunpack.c.l.bf16 %v49
  %v114 = vunpack.c.l.bf16 %v50
  %v115 = vunpack.c.l.bf16 %v51
  %v116 = vunpack.c.l.bf16 %v52
  %v117 = vunpack.c.l.bf16 %v53
  %v118 = vunpack.c.l.bf16 %v54
  %v119 = vunpack.c.l.bf16 %v55
  %v120 = vunpack.c.l.bf16 %v56
  %v121 = vunpack.c.l.bf16 %v57
  %v122 = vunpack.c.l.bf16 %v58
  %v123 = vunpack.c.l.bf16 %v59
  %v124 = vunpack.c.l.bf16 %v60
  %v125 = vunpack.c.l.bf16 %v61
  %v126 = vunpack.c.l.bf16 %v62
  %v127 = vunpack.c.l.bf16 %v63
  %v128 = vunpack.c.l.bf16 %v64
  %v129 = vunpack.c.l.bf16 %v65
  %v130 = vunpack.c.l.bf16 %v66
  %v131 = vunpack.c.l.bf16 %v67
  %v132 = vunpack.c.l.bf16 %v68
  %v133 = vunpack.c.l.bf16 %v69
  %v134 = vunpack.c.l.bf16 %v70
  %v135 = vunpack.c.l.bf16 %v71
  %v136 = vunpack.c.l.bf16 %v72
  %v137 = vunpack.c.l.bf16 %v73
  %v138 = vunpack.c.l.bf16 %v74
  %v139 = vunpack.c.l.bf16 %v75
  %v140 = vunpack.c.l.bf16 %v76
  %v141 = vunpack.c.l.bf16 %v77
  %v142 = vunpack.c.l.bf16 %v78
  %v143 = vunpack.c.l.bf16 %v79
  %v144 = vunpack.c.l.bf16 %v80
  %v145 = vunpack.c.l.bf16 %v81
  %vm146 = vcmask 130048
  %147 = vst.msk [vmem:[#allocation2] sm:$0xff] %vm146, 0.0
  %148 = vst.msk [vmem:[#allocation2 + $0x8] sm:$0xff] %vm146, 0.0
  %149 = vst.msk [vmem:[#allocation2 + $0x10] sm:$0xff] %vm146, 0.0
  %vm150 = vcmask 122880
  %151 = vst.msk [vmem:[#allocation2 + $0x18] sm:$0x1] %vm150, 0.0
  %152 = vst.msk [vmem:[#allocation2 + $0x20] sm:$0xff] %vm146, 0.0
  %153 = vst.msk [vmem:[#allocation2 + $0x28] sm:$0xff] %vm146, 0.0
  %154 = vst.msk [vmem:[#allocation2 + $0x30] sm:$0xff] %vm146, 0.0
  %155 = vst.msk [vmem:[#allocation2 + $0x38] sm:$0x1] %vm150, 0.0
  %156 = vst.msk [vmem:[#allocation2 + $0x40] sm:$0xff] %vm146, 0.0
  %157 = vst.msk [vmem:[#allocation2 + $0x48] sm:$0xff] %vm146, 0.0
  %158 = vst.msk [vmem:[#allocation2 + $0x50] sm:$0xff] %vm146, 0.0
  %159 = vst.msk [vmem:[#allocation2 + $0x58] sm:$0x1] %vm150, 0.0
  %160 = vst.msk [vmem:[#allocation2 + $0x60] sm:$0xff] %vm146, 0.0
  %161 = vst.msk [vmem:[#allocation2 + $0x68] sm:$0xff] %vm146, 0.0
  %162 = vst.msk [vmem:[#allocation2 + $0x70] sm:$0xff] %vm146, 0.0
  %163 = vst.msk [vmem:[#allocation2 + $0x78] sm:$0x1] %vm150, 0.0
  %164 = vst.msk [vmem:[#allocation2 + $0x80] sm:$0xff] %vm146, 0.0
  %165 = vst.msk [vmem:[#allocation2 + $0x88] sm:$0xff] %vm146, 0.0
  %166 = vst.msk [vmem:[#allocation2 + $0x90] sm:$0xff] %vm146, 0.0
  %167 = vst.msk [vmem:[#allocation2 + $0x98] sm:$0x1] %vm150, 0.0
  %168 = vst.msk [vmem:[#allocation2 + $0xa0] sm:$0xff] %vm146, 0.0
  %169 = vst.msk [vmem:[#allocation2 + $0xa8] sm:$0xff] %vm146, 0.0
  %170 = vst.msk [vmem:[#allocation2 + $0xb0] sm:$0xff] %vm146, 0.0
  %171 = vst.msk [vmem:[#allocation2 + $0xb8] sm:$0x1] %vm150, 0.0
  %172 = vst.msk [vmem:[#allocation2 + $0xc0] sm:$0xff] %vm146, 0.0
  %173 = vst.msk [vmem:[#allocation2 + $0xc8] sm:$0xff] %vm146, 0.0
  %174 = vst.msk [vmem:[#allocation2 + $0xd0] sm:$0xff] %vm146, 0.0
  %175 = vst.msk [vmem:[#allocation2 + $0xd8] sm:$0x1] %vm150, 0.0
  %176 = vst.msk [vmem:[#allocation2 + $0xe0] sm:$0xff] %vm146, 0.0
  %177 = vst.msk [vmem:[#allocation2 + $0xe8] sm:$0xff] %vm146, 0.0
  %178 = vst.msk [vmem:[#allocation2 + $0xf0] sm:$0xff] %vm146, 0.0
  %179 = vst.msk [vmem:[#allocation2 + $0xf8] sm:$0x1] %vm150, 0.0
  %180 = vst.msk [vmem:[#allocation2 + $0x100] sm:$0xff] %vm146, 0.0
  %181 = vst.msk [vmem:[#allocation2 + $0x108] sm:$0xff] %vm146, 0.0
  %182 = vst.msk [vmem:[#allocation2 + $0x110] sm:$0xff] %vm146, 0.0
  %183 = vst.msk [vmem:[#allocation2 + $0x118] sm:$0x1] %vm150, 0.0
  %184 = vst.msk [vmem:[#allocation2 + $0x120] sm:$0xff] %vm146, 0.0
  %185 = vst.msk [vmem:[#allocation2 + $0x128] sm:$0xff] %vm146, 0.0
  %186 = vst.msk [vmem:[#allocation2 + $0x130] sm:$0xff] %vm146, 0.0
  %187 = vst.msk [vmem:[#allocation2 + $0x138] sm:$0x1] %vm150, 0.0
  %188 = vst.msk [vmem:[#allocation2 + $0x140] sm:$0xff] %vm146, 0.0
  %189 = vst.msk [vmem:[#allocation2 + $0x148] sm:$0xff] %vm146, 0.0
  %190 = vst.msk [vmem:[#allocation2 + $0x150] sm:$0xff] %vm146, 0.0
  %191 = vst.msk [vmem:[#allocation2 + $0x158] sm:$0x1] %vm150, 0.0
  %192 = vst.msk [vmem:[#allocation2 + $0x160] sm:$0xff] %vm146, 0.0
  %193 = vst.msk [vmem:[#allocation2 + $0x168] sm:$0xff] %vm146, 0.0
  %194 = vst.msk [vmem:[#allocation2 + $0x170] sm:$0xff] %vm146, 0.0
  %195 = vst.msk [vmem:[#allocation2 + $0x178] sm:$0x1] %vm150, 0.0
  %196 = vst.msk [vmem:[#allocation2 + $0x180] sm:$0xff] %vm146, 0.0
  %197 = vst.msk [vmem:[#allocation2 + $0x188] sm:$0xff] %vm146, 0.0
  %198 = vst.msk [vmem:[#allocation2 + $0x190] sm:$0xff] %vm146, 0.0
  %199 = vst.msk [vmem:[#allocation2 + $0x198] sm:$0x1] %vm150, 0.0
  %200 = vst.msk [vmem:[#allocation2 + $0x1a0] sm:$0xff] %vm146, 0.0
  %201 = vst.msk [vmem:[#allocation2 + $0x1a8] sm:$0xff] %vm146, 0.0
  %202 = vst.msk [vmem:[#allocation2 + $0x1b0] sm:$0xff] %vm146, 0.0
  %203 = vst.msk [vmem:[#allocation2 + $0x1b8] sm:$0x1] %vm150, 0.0
  %204 = vst.msk [vmem:[#allocation2 + $0x1c0] sm:$0xff] %vm146, 0.0
  %205 = vst.msk [vmem:[#allocation2 + $0x1c8] sm:$0xff] %vm146, 0.0
  %206 = vst.msk [vmem:[#allocation2 + $0x1d0] sm:$0xff] %vm146, 0.0
  %207 = vst.msk [vmem:[#allocation2 + $0x1d8] sm:$0x1] %vm150, 0.0
  %208 = vst.msk [vmem:[#allocation2 + $0x1e0] sm:$0xff] %vm146, 0.0
  %209 = vst.msk [vmem:[#allocation2 + $0x1e8] sm:$0xff] %vm146, 0.0
  %210 = vst.msk [vmem:[#allocation2 + $0x1f0] sm:$0xff] %vm146, 0.0
  %211 = vst.msk [vmem:[#allocation2 + $0x1f8] sm:$0x1] %vm150, 0.0
  %212 = vst.msk [vmem:[#allocation2 + $0x200] sm:$0xff] %vm146, 0.0
  %213 = vst.msk [vmem:[#allocation2 + $0x208] sm:$0xff] %vm146, 0.0
  %214 = vst.msk [vmem:[#allocation2 + $0x210] sm:$0xff] %vm146, 0.0
  %215 = vst.msk [vmem:[#allocation2 + $0x218] sm:$0x1] %vm150, 0.0
  %216 = vst.msk [vmem:[#allocation2 + $0x220] sm:$0xff] %vm146, 0.0
  %217 = vst.msk [vmem:[#allocation2 + $0x228] sm:$0xff] %vm146, 0.0
  %218 = vst.msk [vmem:[#allocation2 + $0x230] sm:$0xff] %vm146, 0.0
  %219 = vst.msk [vmem:[#allocation2 + $0x238] sm:$0x1] %vm150, 0.0
  %220 = vst.msk [vmem:[#allocation2 + $0x240] sm:$0xff] %vm146, 0.0
  %221 = vst.msk [vmem:[#allocation2 + $0x248] sm:$0xff] %vm146, 0.0
  %222 = vst.msk [vmem:[#allocation2 + $0x250] sm:$0xff] %vm146, 0.0
  %223 = vst.msk [vmem:[#allocation2 + $0x258] sm:$0x1] %vm150, 0.0
  %224 = vst.msk [vmem:[#allocation2 + $0x260] sm:$0xff] %vm146, 0.0
  %225 = vst.msk [vmem:[#allocation2 + $0x268] sm:$0xff] %vm146, 0.0
  %226 = vst.msk [vmem:[#allocation2 + $0x270] sm:$0xff] %vm146, 0.0
  %227 = vst.msk [vmem:[#allocation2 + $0x278] sm:$0x1] %vm150, 0.0
  %228 = vst.msk [vmem:[#allocation2 + $0x280] sm:$0xff] %vm146, 0.0
  %229 = vst.msk [vmem:[#allocation2 + $0x288] sm:$0xff] %vm146, 0.0
  %230 = vst.msk [vmem:[#allocation2 + $0x290] sm:$0xff] %vm146, 0.0
  %231 = vst.msk [vmem:[#allocation2 + $0x298] sm:$0x1] %vm150, 0.0
  %232 = vst.msk [vmem:[#allocation2 + $0x2a0] sm:$0xff] %vm146, 0.0
  %233 = vst.msk [vmem:[#allocation2 + $0x2a8] sm:$0xff] %vm146, 0.0
  %234 = vst.msk [vmem:[#allocation2 + $0x2b0] sm:$0xff] %vm146, 0.0
  %235 = vst.msk [vmem:[#allocation2 + $0x2b8] sm:$0x1] %vm150, 0.0
  %236 = vst.msk [vmem:[#allocation2 + $0x2c0] sm:$0xff] %vm146, 0.0
  %237 = vst.msk [vmem:[#allocation2 + $0x2c8] sm:$0xff] %vm146, 0.0
  %238 = vst.msk [vmem:[#allocation2 + $0x2d0] sm:$0xff] %vm146, 0.0
  %239 = vst.msk [vmem:[#allocation2 + $0x2d8] sm:$0x1] %vm150, 0.0
  %240 = vst.msk [vmem:[#allocation2 + $0x2e0] sm:$0xff] %vm146, 0.0
  %241 = vst.msk [vmem:[#allocation2 + $0x2e8] sm:$0xff] %vm146, 0.0
  %242 = vst.msk [vmem:[#allocation2 + $0x2f0] sm:$0xff] %vm146, 0.0
  %243 = vst.msk [vmem:[#allocation2 + $0x2f8] sm:$0x1] %vm150, 0.0
  %244 = vst.msk [vmem:[#allocation2 + $0x300] sm:$0xff] %vm146, 0.0
  %245 = vst.msk [vmem:[#allocation2 + $0x308] sm:$0xff] %vm146, 0.0
  %246 = vst.msk [vmem:[#allocation2 + $0x310] sm:$0xff] %vm146, 0.0
  %247 = vst.msk [vmem:[#allocation2 + $0x318] sm:$0x1] %vm150, 0.0
  %248 = vst.msk [vmem:[#allocation2 + $0x320] sm:$0xff] %vm146, 0.0
  %249 = vst.msk [vmem:[#allocation2 + $0x328] sm:$0xff] %vm146, 0.0
  %250 = vst.msk [vmem:[#allocation2 + $0x330] sm:$0xff] %vm146, 0.0
  %251 = vst.msk [vmem:[#allocation2 + $0x338] sm:$0x1] %vm150, 0.0
  %252 = vst.msk [vmem:[#allocation2 + $0x340] sm:$0xff] %vm146, 0.0
  %253 = vst.msk [vmem:[#allocation2 + $0x348] sm:$0xff] %vm146, 0.0
  %254 = vst.msk [vmem:[#allocation2 + $0x350] sm:$0xff] %vm146, 0.0
  %255 = vst.msk [vmem:[#allocation2 + $0x358] sm:$0x1] %vm150, 0.0
  %256 = vst.msk [vmem:[#allocation2 + $0x360] sm:$0xff] %vm146, 0.0
  %257 = vst.msk [vmem:[#allocation2 + $0x368] sm:$0xff] %vm146, 0.0
  %258 = vst.msk [vmem:[#allocation2 + $0x370] sm:$0xff] %vm146, 0.0
  %259 = vst.msk [vmem:[#allocation2 + $0x378] sm:$0x1] %vm150, 0.0
  %260 = vst.msk [vmem:[#allocation2 + $0x380] sm:$0xff] %vm146, 0.0
  %261 = vst.msk [vmem:[#allocation2 + $0x388] sm:$0xff] %vm146, 0.0
  %262 = vst.msk [vmem:[#allocation2 + $0x390] sm:$0xff] %vm146, 0.0
  %263 = vst.msk [vmem:[#allocation2 + $0x398] sm:$0x1] %vm150, 0.0
  %264 = vst.msk [vmem:[#allocation2 + $0x3a0] sm:$0xff] %vm146, 0.0
  %265 = vst.msk [vmem:[#allocation2 + $0x3a8] sm:$0xff] %vm146, 0.0
  %266 = vst.msk [vmem:[#allocation2 + $0x3b0] sm:$0xff] %vm146, 0.0
  %267 = vst.msk [vmem:[#allocation2 + $0x3b8] sm:$0x1] %vm150, 0.0
  %268 = vst.msk [vmem:[#allocation2 + $0x3c0] sm:$0xff] %vm146, 0.0
  %269 = vst.msk [vmem:[#allocation2 + $0x3c8] sm:$0xff] %vm146, 0.0
  %270 = vst.msk [vmem:[#allocation2 + $0x3d0] sm:$0xff] %vm146, 0.0
  %271 = vst.msk [vmem:[#allocation2 + $0x3d8] sm:$0x1] %vm150, 0.0
  %272 = vst.msk [vmem:[#allocation2 + $0x3e0] sm:$0xff] %vm146, 0.0
  %273 = vst.msk [vmem:[#allocation2 + $0x3e8] sm:$0xff] %vm146, 0.0
  %274 = vst.msk [vmem:[#allocation2 + $0x3f0] sm:$0xff] %vm146, 0.0
  %275 = vst.msk [vmem:[#allocation2 + $0x3f8] sm:$0x1] %vm150, 0.0
  %276 = vst.msk [vmem:[#allocation2 + $0x400] sm:$0xff] %vm146, 0.0
  %277 = vst.msk [vmem:[#allocation2 + $0x408] sm:$0xff] %vm146, 0.0
  %278 = vst.msk [vmem:[#allocation2 + $0x410] sm:$0xff] %vm146, 0.0
  %279 = vst.msk [vmem:[#allocation2 + $0x418] sm:$0x1] %vm150, 0.0
  %280 = vst.msk [vmem:[#allocation2 + $0x420] sm:$0xff] %vm146, 0.0
  %281 = vst.msk [vmem:[#allocation2 + $0x428] sm:$0xff] %vm146, 0.0
  %282 = vst.msk [vmem:[#allocation2 + $0x430] sm:$0xff] %vm146, 0.0
  %283 = vst.msk [vmem:[#allocation2 + $0x438] sm:$0x1] %vm150, 0.0
  %284 = vst.msk [vmem:[#allocation2 + $0x440] sm:$0xff] %vm146, 0.0
  %285 = vst.msk [vmem:[#allocation2 + $0x448] sm:$0xff] %vm146, 0.0
  %286 = vst.msk [vmem:[#allocation2 + $0x450] sm:$0xff] %vm146, 0.0
  %287 = vst.msk [vmem:[#allocation2 + $0x458] sm:$0x1] %vm150, 0.0
  %288 = vst.msk [vmem:[#allocation2 + $0x460] sm:$0xff] %vm146, 0.0
  %289 = vst.msk [vmem:[#allocation2 + $0x468] sm:$0xff] %vm146, 0.0
  %290 = vst.msk [vmem:[#allocation2 + $0x470] sm:$0xff] %vm146, 0.0
  %291 = vst.msk [vmem:[#allocation2 + $0x478] sm:$0x1] %vm150, 0.0
  %s292 = scalar_lea.vmem [#allocation2], 32
  %293 = vst.msk [vmem:[%s292 + $0x8] sm:$0xff] %vm146, %v82
  %294 = vst.msk [vmem:[%s292 + $0x10] sm:$0xff] %vm146, %v83
  %295 = vst.msk [vmem:[%s292 + $0x28] sm:$0xff] %vm146, %v84
  %296 = vst.msk [vmem:[%s292 + $0x30] sm:$0xff] %vm146, %v85
  %297 = vst.msk [vmem:[%s292 + $0x48] sm:$0xff] %vm146, %v86
  %298 = vst.msk [vmem:[%s292 + $0x50] sm:$0xff] %vm146, %v87
  %299 = vst.msk [vmem:[%s292 + $0x68] sm:$0xff] %vm146, %v88
  %300 = vst.msk [vmem:[%s292 + $0x70] sm:$0xff] %vm146, %v89
  %301 = vst.msk [vmem:[%s292 + $0x88] sm:$0xff] %vm146, %v90
  %302 = vst.msk [vmem:[%s292 + $0x90] sm:$0xff] %vm146, %v91
  %303 = vst.msk [vmem:[%s292 + $0xa8] sm:$0xff] %vm146, %v92
  %304 = vst.msk [vmem:[%s292 + $0xb0] sm:$0xff] %vm146, %v93
  %305 = vst.msk [vmem:[%s292 + $0xc8] sm:$0xff] %vm146, %v94
  %306 = vst.msk [vmem:[%s292 + $0xd0] sm:$0xff] %vm146, %v95
  %307 = vst.msk [vmem:[%s292 + $0xe8] sm:$0xff] %vm146, %v96
  %308 = vst.msk [vmem:[%s292 + $0xf0] sm:$0xff] %vm146, %v97
  %309 = vst.msk [vmem:[%s292 + $0x108] sm:$0xff] %vm146, %v98
  %310 = vst.msk [vmem:[%s292 + $0x110] sm:$0xff] %vm146, %v99
  %311 = vst.msk [vmem:[%s292 + $0x128] sm:$0xff] %vm146, %v100
  %312 = vst.msk [vmem:[%s292 + $0x130] sm:$0xff] %vm146, %v101
  %313 = vst.msk [vmem:[%s292 + $0x148] sm:$0xff] %vm146, %v102
  %314 = vst.msk [vmem:[%s292 + $0x150] sm:$0xff] %vm146, %v103
  %315 = vst.msk [vmem:[%s292 + $0x168] sm:$0xff] %vm146, %v104
  %316 = vst.msk [vmem:[%s292 + $0x170] sm:$0xff] %vm146, %v105
  %317 = vst.msk [vmem:[%s292 + $0x188] sm:$0xff] %vm146, %v106
  %318 = vst.msk [vmem:[%s292 + $0x190] sm:$0xff] %vm146, %v107
  %319 = vst.msk [vmem:[%s292 + $0x1a8] sm:$0xff] %vm146, %v108
  %320 = vst.msk [vmem:[%s292 + $0x1b0] sm:$0xff] %vm146, %v109
  %321 = vst.msk [vmem:[%s292 + $0x1c8] sm:$0xff] %vm146, %v110
  %322 = vst.msk [vmem:[%s292 + $0x1d0] sm:$0xff] %vm146, %v111
  %323 = vst.msk [vmem:[%s292 + $0x1e8] sm:$0xff] %vm146, %v112
  %324 = vst.msk [vmem:[%s292 + $0x1f0] sm:$0xff] %vm146, %v113
  %325 = vst.msk [vmem:[%s292 + $0x248] sm:$0xff] %vm146, %v114
  %326 = vst.msk [vmem:[%s292 + $0x250] sm:$0xff] %vm146, %v115
  %327 = vst.msk [vmem:[%s292 + $0x268] sm:$0xff] %vm146, %v116
  %328 = vst.msk [vmem:[%s292 + $0x270] sm:$0xff] %vm146, %v117
  %329 = vst.msk [vmem:[%s292 + $0x288] sm:$0xff] %vm146, %v118
  %330 = vst.msk [vmem:[%s292 + $0x290] sm:$0xff] %vm146, %v119
  %331 = vst.msk [vmem:[%s292 + $0x2a8] sm:$0xff] %vm146, %v120
  %332 = vst.msk [vmem:[%s292 + $0x2b0] sm:$0xff] %vm146, %v121
  %333 = vst.msk [vmem:[%s292 + $0x2c8] sm:$0xff] %vm146, %v122
  %334 = vst.msk [vmem:[%s292 + $0x2d0] sm:$0xff] %vm146, %v123
  %335 = vst.msk [vmem:[%s292 + $0x2e8] sm:$0xff] %vm146, %v124
  %336 = vst.msk [vmem:[%s292 + $0x2f0] sm:$0xff] %vm146, %v125
  %337 = vst.msk [vmem:[%s292 + $0x308] sm:$0xff] %vm146, %v126
  %338 = vst.msk [vmem:[%s292 + $0x310] sm:$0xff] %vm146, %v127
  %339 = vst.msk [vmem:[%s292 + $0x328] sm:$0xff] %vm146, %v128
  %340 = vst.msk [vmem:[%s292 + $0x330] sm:$0xff] %vm146, %v129
  %341 = vst.msk [vmem:[%s292 + $0x348] sm:$0xff] %vm146, %v130
  %342 = vst.msk [vmem:[%s292 + $0x350] sm:$0xff] %vm146, %v131
  %343 = vst.msk [vmem:[%s292 + $0x368] sm:$0xff] %vm146, %v132
  %344 = vst.msk [vmem:[%s292 + $0x370] sm:$0xff] %vm146, %v133
  %345 = vst.msk [vmem:[%s292 + $0x388] sm:$0xff] %vm146, %v134
  %346 = vst.msk [vmem:[%s292 + $0x390] sm:$0xff] %vm146, %v135
  %347 = vst.msk [vmem:[%s292 + $0x3a8] sm:$0xff] %vm146, %v136
  %348 = vst.msk [vmem:[%s292 + $0x3b0] sm:$0xff] %vm146, %v137
  %349 = vst.msk [vmem:[%s292 + $0x3c8] sm:$0xff] %vm146, %v138
  %350 = vst.msk [vmem:[%s292 + $0x3d0] sm:$0xff] %vm146, %v139
  %351 = vst.msk [vmem:[%s292 + $0x3e8] sm:$0xff] %vm146, %v140
  %352 = vst.msk [vmem:[%s292 + $0x3f0] sm:$0xff] %vm146, %v141
  %353 = vst.msk [vmem:[%s292 + $0x408] sm:$0xff] %vm146, %v142
  %354 = vst.msk [vmem:[%s292 + $0x410] sm:$0xff] %vm146, %v143
  %355 = vst.msk [vmem:[%s292 + $0x428] sm:$0xff] %vm146, %v144
  %356 = vst.msk [vmem:[%s292 + $0x430] sm:$0xff] %vm146, %v145
  %v357 = vld [vmem:[#allocation2] sm:$0xff]
  %v358 = vld [vmem:[#allocation2 + $0x8] sm:$0xff]
  %v359 = vld [vmem:[#allocation2 + $0x10] sm:$0xff]
  %v360 = vld [vmem:[#allocation2 + $0x18] sm:$0x1]
  %v361 = vld [vmem:[#allocation2 + $0x20] sm:$0xff]
  %v362 = vld [vmem:[#allocation2 + $0x28] sm:$0xff]
  %v363 = vld [vmem:[#allocation2 + $0x30] sm:$0xff]
  %v364 = vld [vmem:[#allocation2 + $0x38] sm:$0x1]
  %v365 = vld [vmem:[#allocation2 + $0x40] sm:$0xff]
  %v366 = vld [vmem:[#allocation2 + $0x48] sm:$0xff]
  %v367 = vld [vmem:[#allocation2 + $0x50] sm:$0xff]
  %v368 = vld [vmem:[#allocation2 + $0x58] sm:$0x1]
  %v369 = vld [vmem:[#allocation2 + $0x60] sm:$0xff]
  %v370 = vld [vmem:[#allocation2 + $0x68] sm:$0xff]
  %v371 = vld [vmem:[#allocation2 + $0x70] sm:$0xff]
  %v372 = vld [vmem:[#allocation2 + $0x78] sm:$0x1]
  %v373 = vld [vmem:[#allocation2 + $0x80] sm:$0xff]
  %v374 = vld [vmem:[#allocation2 + $0x88] sm:$0xff]
  %v375 = vld [vmem:[#allocation2 + $0x90] sm:$0xff]
  %v376 = vld [vmem:[#allocation2 + $0x98] sm:$0x1]
  %v377 = vld [vmem:[#allocation2 + $0xa0] sm:$0xff]
  %v378 = vld [vmem:[#allocation2 + $0xa8] sm:$0xff]
  %v379 = vld [vmem:[#allocation2 + $0xb0] sm:$0xff]
  %v380 = vld [vmem:[#allocation2 + $0xb8] sm:$0x1]
  %v381 = vld [vmem:[#allocation2 + $0xc0] sm:$0xff]
  %v382 = vld [vmem:[#allocation2 + $0xc8] sm:$0xff]
  %v383 = vld [vmem:[#allocation2 + $0xd0] sm:$0xff]
  %v384 = vld [vmem:[#allocation2 + $0xd8] sm:$0x1]
  %v385 = vld [vmem:[#allocation2 + $0xe0] sm:$0xff]
  %v386 = vld [vmem:[#allocation2 + $0xe8] sm:$0xff]
  %v387 = vld [vmem:[#allocation2 + $0xf0] sm:$0xff]
  %v388 = vld [vmem:[#allocation2 + $0xf8] sm:$0x1]
  %v389 = vld [vmem:[#allocation2 + $0x100] sm:$0xff]
  %v390 = vld [vmem:[#allocation2 + $0x108] sm:$0xff]
  %v391 = vld [vmem:[#allocation2 + $0x110] sm:$0xff]
  %v392 = vld [vmem:[#allocation2 + $0x118] sm:$0x1]
  %v393 = vld [vmem:[#allocation2 + $0x120] sm:$0xff]
  %v394 = vld [vmem:[#allocation2 + $0x128] sm:$0xff]
  %v395 = vld [vmem:[#allocation2 + $0x130] sm:$0xff]
  %v396 = vld [vmem:[#allocation2 + $0x138] sm:$0x1]
  %v397 = vld [vmem:[#allocation2 + $0x140] sm:$0xff]
  %v398 = vld [vmem:[#allocation2 + $0x148] sm:$0xff]
  %v399 = vld [vmem:[#allocation2 + $0x150] sm:$0xff]
  %v400 = vld [vmem:[#allocation2 + $0x158] sm:$0x1]
  %v401 = vld [vmem:[#allocation2 + $0x160] sm:$0xff]
  %v402 = vld [vmem:[#allocation2 + $0x168] sm:$0xff]
  %v403 = vld [vmem:[#allocation2 + $0x170] sm:$0xff]
  %v404 = vld [vmem:[#allocation2 + $0x178] sm:$0x1]
  %v405 = vld [vmem:[#allocation2 + $0x180] sm:$0xff]
  %v406 = vld [vmem:[#allocation2 + $0x188] sm:$0xff]
  %v407 = vld [vmem:[#allocation2 + $0x190] sm:$0xff]
  %v408 = vld [vmem:[#allocation2 + $0x198] sm:$0x1]
  %v409 = vld [vmem:[#allocation2 + $0x1a0] sm:$0xff]
  %v410 = vld [vmem:[#allocation2 + $0x1a8] sm:$0xff]
  %v411 = vld [vmem:[#allocation2 + $0x1b0] sm:$0xff]
  %v412 = vld [vmem:[#allocation2 + $0x1b8] sm:$0x1]
  %v413 = vld [vmem:[#allocation2 + $0x1c0] sm:$0xff]
  %v414 = vld [vmem:[#allocation2 + $0x1c8] sm:$0xff]
  %v415 = vld [vmem:[#allocation2 + $0x1d0] sm:$0xff]
  %v416 = vld [vmem:[#allocation2 + $0x1d8] sm:$0x1]
  %v417 = vld [vmem:[#allocation2 + $0x1e0] sm:$0xff]
  %v418 = vld [vmem:[#allocation2 + $0x1e8] sm:$0xff]
  %v419 = vld [vmem:[#allocation2 + $0x1f0] sm:$0xff]
  %v420 = vld [vmem:[#allocation2 + $0x1f8] sm:$0x1]
  %v421 = vld [vmem:[#allocation2 + $0x200] sm:$0xff]
  %v422 = vld [vmem:[#allocation2 + $0x208] sm:$0xff]
  %v423 = vld [vmem:[#allocation2 + $0x210] sm:$0xff]
  %v424 = vld [vmem:[#allocation2 + $0x218] sm:$0x1]
  %v425 = vld [vmem:[#allocation2 + $0x220] sm:$0xff]
  %v426 = vld [vmem:[#allocation2 + $0x228] sm:$0xff]
  %v427 = vld [vmem:[#allocation2 + $0x230] sm:$0xff]
  %v428 = vld [vmem:[#allocation2 + $0x238] sm:$0x1]
  %v429 = vld [vmem:[#allocation2 + $0x240] sm:$0xff]
  %v430 = vld [vmem:[#allocation2 + $0x248] sm:$0xff]
  %v431 = vld [vmem:[#allocation2 + $0x250] sm:$0xff]
  %v432 = vld [vmem:[#allocation2 + $0x258] sm:$0x1]
  %v433 = vld [vmem:[#allocation2 + $0x260] sm:$0xff]
  %v434 = vld [vmem:[#allocation2 + $0x268] sm:$0xff]
  %v435 = vld [vmem:[#allocation2 + $0x270] sm:$0xff]
  %v436 = vld [vmem:[#allocation2 + $0x278] sm:$0x1]
  %v437 = vld [vmem:[#allocation2 + $0x280] sm:$0xff]
  %v438 = vld [vmem:[#allocation2 + $0x288] sm:$0xff]
  %v439 = vld [vmem:[#allocation2 + $0x290] sm:$0xff]
  %v440 = vld [vmem:[#allocation2 + $0x298] sm:$0x1]
  %v441 = vld [vmem:[#allocation2 + $0x2a0] sm:$0xff]
  %v442 = vld [vmem:[#allocation2 + $0x2a8] sm:$0xff]
  %v443 = vld [vmem:[#allocation2 + $0x2b0] sm:$0xff]
  %v444 = vld [vmem:[#allocation2 + $0x2b8] sm:$0x1]
  %v445 = vld [vmem:[#allocation2 + $0x2c0] sm:$0xff]
  %v446 = vld [vmem:[#allocation2 + $0x2c8] sm:$0xff]
  %v447 = vld [vmem:[#allocation2 + $0x2d0] sm:$0xff]
  %v448 = vld [vmem:[#allocation2 + $0x2d8] sm:$0x1]
  %v449 = vld [vmem:[#allocation2 + $0x2e0] sm:$0xff]
  %v450 = vld [vmem:[#allocation2 + $0x2e8] sm:$0xff]
  %v451 = vld [vmem:[#allocation2 + $0x2f0] sm:$0xff]
  %v452 = vld [vmem:[#allocation2 + $0x2f8] sm:$0x1]
  %v453 = vld [vmem:[#allocation2 + $0x300] sm:$0xff]
  %v454 = vld [vmem:[#allocation2 + $0x308] sm:$0xff]
  %v455 = vld [vmem:[#allocation2 + $0x310] sm:$0xff]
  %v456 = vld [vmem:[#allocation2 + $0x318] sm:$0x1]
  %v457 = vld [vmem:[#allocation2 + $0x320] sm:$0xff]
  %v458 = vld [vmem:[#allocation2 + $0x328] sm:$0xff]
  %v459 = vld [vmem:[#allocation2 + $0x330] sm:$0xff]
  %v460 = vld [vmem:[#allocation2 + $0x338] sm:$0x1]
  %v461 = vld [vmem:[#allocation2 + $0x340] sm:$0xff]
  %v462 = vld [vmem:[#allocation2 + $0x348] sm:$0xff]
  %v463 = vld [vmem:[#allocation2 + $0x350] sm:$0xff]
  %v464 = vld [vmem:[#allocation2 + $0x358] sm:$0x1]
  %v465 = vld [vmem:[#allocation2 + $0x360] sm:$0xff]
  %v466 = vld [vmem:[#allocation2 + $0x368] sm:$0xff]
  %v467 = vld [vmem:[#allocation2 + $0x370] sm:$0xff]
  %v468 = vld [vmem:[#allocation2 + $0x378] sm:$0x1]
  %v469 = vld [vmem:[#allocation2 + $0x380] sm:$0xff]
  %v470 = vld [vmem:[#allocation2 + $0x388] sm:$0xff]
  %v471 = vld [vmem:[#allocation2 + $0x390] sm:$0xff]
  %v472 = vld [vmem:[#allocation2 + $0x398] sm:$0x1]
  %v473 = vld [vmem:[#allocation2 + $0x3a0] sm:$0xff]
  %v474 = vld [vmem:[#allocation2 + $0x3a8] sm:$0xff]
  %v475 = vld [vmem:[#allocation2 + $0x3b0] sm:$0xff]
  %v476 = vld [vmem:[#allocation2 + $0x3b8] sm:$0x1]
  %v477 = vld [vmem:[#allocation2 + $0x3c0] sm:$0xff]
  %v478 = vld [vmem:[#allocation2 + $0x3c8] sm:$0xff]
  %v479 = vld [vmem:[#allocation2 + $0x3d0] sm:$0xff]
  %v480 = vld [vmem:[#allocation2 + $0x3d8] sm:$0x1]
  %v481 = vld [vmem:[#allocation2 + $0x3e0] sm:$0xff]
  %v482 = vld [vmem:[#allocation2 + $0x3e8] sm:$0xff]
  %v483 = vld [vmem:[#allocation2 + $0x3f0] sm:$0xff]
  %v484 = vld [vmem:[#allocation2 + $0x3f8] sm:$0x1]
  %v485 = vld [vmem:[#allocation2 + $0x400] sm:$0xff]
  %v486 = vld [vmem:[#allocation2 + $0x408] sm:$0xff]
  %v487 = vld [vmem:[#allocation2 + $0x410] sm:$0xff]
  %v488 = vld [vmem:[#allocation2 + $0x418] sm:$0x1]
  %v489 = vld [vmem:[#allocation2 + $0x420] sm:$0xff]
  %v490 = vld [vmem:[#allocation2 + $0x428] sm:$0xff]
  %v491 = vld [vmem:[#allocation2 + $0x430] sm:$0xff]
  %v492 = vld [vmem:[#allocation2 + $0x438] sm:$0x1]
  %v493 = vld [vmem:[#allocation2 + $0x440] sm:$0xff]
  %v494 = vld [vmem:[#allocation2 + $0x448] sm:$0xff]
  %v495 = vld [vmem:[#allocation2 + $0x450] sm:$0xff]
  %v496 = vld [vmem:[#allocation2 + $0x458] sm:$0x1]
  %v497 = vld [vmem:[#allocation2 + $0x460] sm:$0xff]
  %v498 = vld [vmem:[#allocation2 + $0x468] sm:$0xff]
  %v499 = vld [vmem:[#allocation2 + $0x470] sm:$0xff]
  %v500 = vld [vmem:[#allocation2 + $0x478] sm:$0x1]
  %vm597 = vcmask 1040384
  %v598 = vrot.slane %v357, 7
  %v599 = vrot.slane %v358, 7
  %v600 = vsel %vm597, %v598, %v599
  %v601 = vrot.slane %v359, 7
  %v602 = vsel %vm597, %v599, %v601
  %v603 = vrot.slane %v361, 7
  %v604 = vrot.slane %v362, 7
  %v605 = vsel %vm597, %v603, %v604
  %v606 = vrot.slane %v363, 7
  %v607 = vsel %vm597, %v604, %v606
  %v608 = vrot.slane %v365, 7
  %v609 = vrot.slane %v366, 7
  %v610 = vsel %vm597, %v608, %v609
  %v611 = vrot.slane %v367, 7
  %v612 = vsel %vm597, %v609, %v611
  %v613 = vrot.slane %v369, 7
  %v614 = vrot.slane %v370, 7
  %v615 = vsel %vm597, %v613, %v614
  %v616 = vrot.slane %v371, 7
  %v617 = vsel %vm597, %v614, %v616
  %v618 = vrot.slane %v373, 7
  %v619 = vrot.slane %v374, 7
  %v620 = vsel %vm597, %v618, %v619
  %v621 = vrot.slane %v375, 7
  %v622 = vsel %vm597, %v619, %v621
  %v623 = vrot.slane %v377, 7
  %v624 = vrot.slane %v378, 7
  %v625 = vsel %vm597, %v623, %v624
  %v626 = vrot.slane %v379, 7
  %v627 = vsel %vm597, %v624, %v626
  %v628 = vrot.slane %v381, 7
  %v629 = vrot.slane %v382, 7
  %v630 = vsel %vm597, %v628, %v629
  %v631 = vrot.slane %v383, 7
  %v632 = vsel %vm597, %v629, %v631
  %v633 = vrot.slane %v385, 7
  %v634 = vrot.slane %v386, 7
  %v635 = vsel %vm597, %v633, %v634
  %v636 = vrot.slane %v387, 7
  %v637 = vsel %vm597, %v634, %v636
  %v638 = vrot.slane %v389, 7
  %v639 = vrot.slane %v390, 7
  %v640 = vsel %vm597, %v638, %v639
  %v641 = vrot.slane %v391, 7
  %v642 = vsel %vm597, %v639, %v641
  %v643 = vrot.slane %v393, 7
  %v644 = vrot.slane %v394, 7
  %v645 = vsel %vm597, %v643, %v644
  %v646 = vrot.slane %v395, 7
  %v647 = vsel %vm597, %v644, %v646
  %v648 = vrot.slane %v397, 7
  %v649 = vrot.slane %v398, 7
  %v650 = vsel %vm597, %v648, %v649
  %v651 = vrot.slane %v399, 7
  %v652 = vsel %vm597, %v649, %v651
  %v653 = vrot.slane %v401, 7
  %v654 = vrot.slane %v402, 7
  %v655 = vsel %vm597, %v653, %v654
  %v656 = vrot.slane %v403, 7
  %v657 = vsel %vm597, %v654, %v656
  %v658 = vrot.slane %v405, 7
  %v659 = vrot.slane %v406, 7
  %v660 = vsel %vm597, %v658, %v659
  %v661 = vrot.slane %v407, 7
  %v662 = vsel %vm597, %v659, %v661
  %v663 = vrot.slane %v409, 7
  %v664 = vrot.slane %v410, 7
  %v665 = vsel %vm597, %v663, %v664
  %v666 = vrot.slane %v411, 7
  %v667 = vsel %vm597, %v664, %v666
  %v668 = vrot.slane %v413, 7
  %v669 = vrot.slane %v414, 7
  %v670 = vsel %vm597, %v668, %v669
  %v671 = vrot.slane %v415, 7
  %v672 = vsel %vm597, %v669, %v671
  %v673 = vrot.slane %v417, 7
  %v674 = vrot.slane %v418, 7
  %v675 = vsel %vm597, %v673, %v674
  %v676 = vrot.slane %v419, 7
  %v677 = vsel %vm597, %v674, %v676
  %v678 = vrot.slane %v429, 7
  %v679 = vrot.slane %v430, 7
  %v680 = vsel %vm597, %v678, %v679
  %v681 = vrot.slane %v431, 7
  %v682 = vsel %vm597, %v679, %v681
  %v683 = vrot.slane %v433, 7
  %v684 = vrot.slane %v434, 7
  %v685 = vsel %vm597, %v683, %v684
  %v686 = vrot.slane %v435, 7
  %v687 = vsel %vm597, %v684, %v686
  %v688 = vrot.slane %v437, 7
  %v689 = vrot.slane %v438, 7
  %v690 = vsel %vm597, %v688, %v689
  %v691 = vrot.slane %v439, 7
  %v692 = vsel %vm597, %v689, %v691
  %v693 = vrot.slane %v441, 7
  %v694 = vrot.slane %v442, 7
  %v695 = vsel %vm597, %v693, %v694
  %v696 = vrot.slane %v443, 7
  %v697 = vsel %vm597, %v694, %v696
  %v698 = vrot.slane %v445, 7
  %v699 = vrot.slane %v446, 7
  %v700 = vsel %vm597, %v698, %v699
  %v701 = vrot.slane %v447, 7
  %v702 = vsel %vm597, %v699, %v701
  %v703 = vrot.slane %v449, 7
  %v704 = vrot.slane %v450, 7
  %v705 = vsel %vm597, %v703, %v704
  %v706 = vrot.slane %v451, 7
  %v707 = vsel %vm597, %v704, %v706
  %v708 = vrot.slane %v453, 7
  %v709 = vrot.slane %v454, 7
  %v710 = vsel %vm597, %v708, %v709
  %v711 = vrot.slane %v455, 7
  %v712 = vsel %vm597, %v709, %v711
  %v713 = vrot.slane %v457, 7
  %v714 = vrot.slane %v458, 7
  %v715 = vsel %vm597, %v713, %v714
  %v716 = vrot.slane %v459, 7
  %v717 = vsel %vm597, %v714, %v716
  %v718 = vrot.slane %v461, 7
  %v719 = vrot.slane %v462, 7
  %v720 = vsel %vm597, %v718, %v719
  %v721 = vrot.slane %v463, 7
  %v722 = vsel %vm597, %v719, %v721
  %v723 = vrot.slane %v465, 7
  %v724 = vrot.slane %v466, 7
  %v725 = vsel %vm597, %v723, %v724
  %v726 = vrot.slane %v467, 7
  %v727 = vsel %vm597, %v724, %v726
  %v728 = vrot.slane %v469, 7
  %v729 = vrot.slane %v470, 7
  %v730 = vsel %vm597, %v728, %v729
  %v731 = vrot.slane %v471, 7
  %v732 = vsel %vm597, %v729, %v731
  %v733 = vrot.slane %v473, 7
  %v734 = vrot.slane %v474, 7
  %v735 = vsel %vm597, %v733, %v734
  %v736 = vrot.slane %v475, 7
  %v737 = vsel %vm597, %v734, %v736
  %v738 = vrot.slane %v477, 7
  %v739 = vrot.slane %v478, 7
  %v740 = vsel %vm597, %v738, %v739
  %v741 = vrot.slane %v479, 7
  %v742 = vsel %vm597, %v739, %v741
  %v743 = vrot.slane %v481, 7
  %v744 = vrot.slane %v482, 7
  %v745 = vsel %vm597, %v743, %v744
  %v746 = vrot.slane %v483, 7
  %v747 = vsel %vm597, %v744, %v746
  %v748 = vrot.slane %v485, 7
  %v749 = vrot.slane %v486, 7
  %v750 = vsel %vm597, %v748, %v749
  %v751 = vrot.slane %v487, 7
  %v752 = vsel %vm597, %v749, %v751
  %v753 = vrot.slane %v489, 7
  %v754 = vrot.slane %v490, 7
  %v755 = vsel %vm597, %v753, %v754
  %v756 = vrot.slane %v491, 7
  %v757 = vsel %vm597, %v754, %v756
  %vm854 = vcmask 1046528
  %v855 = vrot.slane %v358, 1
  %v856 = vrot.slane %v359, 1
  %v857 = vsel %vm854, %v855, %v856
  %v858 = vrot.slane %v360, 1
  %v859 = vsel %vm854, %v856, %v858
  %v860 = vrot.slane %v362, 1
  %v861 = vrot.slane %v363, 1
  %v862 = vsel %vm854, %v860, %v861
  %v863 = vrot.slane %v364, 1
  %v864 = vsel %vm854, %v861, %v863
  %v865 = vrot.slane %v366, 1
  %v866 = vrot.slane %v367, 1
  %v867 = vsel %vm854, %v865, %v866
  %v868 = vrot.slane %v368, 1
  %v869 = vsel %vm854, %v866, %v868
  %v870 = vrot.slane %v370, 1
  %v871 = vrot.slane %v371, 1
  %v872 = vsel %vm854, %v870, %v871
  %v873 = vrot.slane %v372, 1
  %v874 = vsel %vm854, %v871, %v873
  %v875 = vrot.slane %v374, 1
  %v876 = vrot.slane %v375, 1
  %v877 = vsel %vm854, %v875, %v876
  %v878 = vrot.slane %v376, 1
  %v879 = vsel %vm854, %v876, %v878
  %v880 = vrot.slane %v378, 1
  %v881 = vrot.slane %v379, 1
  %v882 = vsel %vm854, %v880, %v881
  %v883 = vrot.slane %v380, 1
  %v884 = vsel %vm854, %v881, %v883
  %v885 = vrot.slane %v382, 1
  %v886 = vrot.slane %v383, 1
  %v887 = vsel %vm854, %v885, %v886
  %v888 = vrot.slane %v384, 1
  %v889 = vsel %vm854, %v886, %v888
  %v890 = vrot.slane %v386, 1
  %v891 = vrot.slane %v387, 1
  %v892 = vsel %vm854, %v890, %v891
  %v893 = vrot.slane %v388, 1
  %v894 = vsel %vm854, %v891, %v893
  %v895 = vrot.slane %v390, 1
  %v896 = vrot.slane %v391, 1
  %v897 = vsel %vm854, %v895, %v896
  %v898 = vrot.slane %v392, 1
  %v899 = vsel %vm854, %v896, %v898
  %v900 = vrot.slane %v394, 1
  %v901 = vrot.slane %v395, 1
  %v902 = vsel %vm854, %v900, %v901
  %v903 = vrot.slane %v396, 1
  %v904 = vsel %vm854, %v901, %v903
  %v905 = vrot.slane %v398, 1
  %v906 = vrot.slane %v399, 1
  %v907 = vsel %vm854, %v905, %v906
  %v908 = vrot.slane %v400, 1
  %v909 = vsel %vm854, %v906, %v908
  %v910 = vrot.slane %v402, 1
  %v911 = vrot.slane %v403, 1
  %v912 = vsel %vm854, %v910, %v911
  %v913 = vrot.slane %v404, 1
  %v914 = vsel %vm854, %v911, %v913
  %v915 = vrot.slane %v406, 1
  %v916 = vrot.slane %v407, 1
  %v917 = vsel %vm854, %v915, %v916
  %v918 = vrot.slane %v408, 1
  %v919 = vsel %vm854, %v916, %v918
  %v920 = vrot.slane %v410, 1
  %v921 = vrot.slane %v411, 1
  %v922 = vsel %vm854, %v920, %v921
  %v923 = vrot.slane %v412, 1
  %v924 = vsel %vm854, %v921, %v923
  %v925 = vrot.slane %v414, 1
  %v926 = vrot.slane %v415, 1
  %v927 = vsel %vm854, %v925, %v926
  %v928 = vrot.slane %v416, 1
  %v929 = vsel %vm854, %v926, %v928
  %v930 = vrot.slane %v418, 1
  %v931 = vrot.slane %v419, 1
  %v932 = vsel %vm854, %v930, %v931
  %v933 = vrot.slane %v420, 1
  %v934 = vsel %vm854, %v931, %v933
  %v935 = vrot.slane %v430, 1
  %v936 = vrot.slane %v431, 1
  %v937 = vsel %vm854, %v935, %v936
  %v938 = vrot.slane %v432, 1
  %v939 = vsel %vm854, %v936, %v938
  %v940 = vrot.slane %v434, 1
  %v941 = vrot.slane %v435, 1
  %v942 = vsel %vm854, %v940, %v941
  %v943 = vrot.slane %v436, 1
  %v944 = vsel %vm854, %v941, %v943
  %v945 = vrot.slane %v438, 1
  %v946 = vrot.slane %v439, 1
  %v947 = vsel %vm854, %v945, %v946
  %v948 = vrot.slane %v440, 1
  %v949 = vsel %vm854, %v946, %v948
  %v950 = vrot.slane %v442, 1
  %v951 = vrot.slane %v443, 1
  %v952 = vsel %vm854, %v950, %v951
  %v953 = vrot.slane %v444, 1
  %v954 = vsel %vm854, %v951, %v953
  %v955 = vrot.slane %v446, 1
  %v956 = vrot.slane %v447, 1
  %v957 = vsel %vm854, %v955, %v956
  %v958 = vrot.slane %v448, 1
  %v959 = vsel %vm854, %v956, %v958
  %v960 = vrot.slane %v450, 1
  %v961 = vrot.slane %v451, 1
  %v962 = vsel %vm854, %v960, %v961
  %v963 = vrot.slane %v452, 1
  %v964 = vsel %vm854, %v961, %v963
  %v965 = vrot.slane %v454, 1
  %v966 = vrot.slane %v455, 1
  %v967 = vsel %vm854, %v965, %v966
  %v968 = vrot.slane %v456, 1
  %v969 = vsel %vm854, %v966, %v968
  %v970 = vrot.slane %v458, 1
  %v971 = vrot.slane %v459, 1
  %v972 = vsel %vm854, %v970, %v971
  %v973 = vrot.slane %v460, 1
  %v974 = vsel %vm854, %v971, %v973
  %v975 = vrot.slane %v462, 1
  %v976 = vrot.slane %v463, 1
  %v977 = vsel %vm854, %v975, %v976
  %v978 = vrot.slane %v464, 1
  %v979 = vsel %vm854, %v976, %v978
  %v980 = vrot.slane %v466, 1
  %v981 = vrot.slane %v467, 1
  %v982 = vsel %vm854, %v980, %v981
  %v983 = vrot.slane %v468, 1
  %v984 = vsel %vm854, %v981, %v983
  %v985 = vrot.slane %v470, 1
  %v986 = vrot.slane %v471, 1
  %v987 = vsel %vm854, %v985, %v986
  %v988 = vrot.slane %v472, 1
  %v989 = vsel %vm854, %v986, %v988
  %v990 = vrot.slane %v474, 1
  %v991 = vrot.slane %v475, 1
  %v992 = vsel %vm854, %v990, %v991
  %v993 = vrot.slane %v476, 1
  %v994 = vsel %vm854, %v991, %v993
  %v995 = vrot.slane %v478, 1
  %v996 = vrot.slane %v479, 1
  %v997 = vsel %vm854, %v995, %v996
  %v998 = vrot.slane %v480, 1
  %v999 = vsel %vm854, %v996, %v998
  %v1000 = vrot.slane %v482, 1
  %v1001 = vrot.slane %v483, 1
  %v1002 = vsel %vm854, %v1000, %v1001
  %v1003 = vrot.slane %v484, 1
  %v1004 = vsel %vm854, %v1001, %v1003
  %v1005 = vrot.slane %v486, 1
  %v1006 = vrot.slane %v487, 1
  %v1007 = vsel %vm854, %v1005, %v1006
  %v1008 = vrot.slane %v488, 1
  %v1009 = vsel %vm854, %v1006, %v1008
  %v1010 = vrot.slane %v490, 1
  %v1011 = vrot.slane %v491, 1
  %v1012 = vsel %vm854, %v1010, %v1011
  %v1013 = vrot.slane %v492, 1
  %v1014 = vsel %vm854, %v1011, %v1013
  %v1021 = vrot.slane %v421, 7
  %v1022 = vrot.slane %v422, 7
  %v1023 = vsel %vm597, %v1021, %v1022
  %v1024 = vrot.slane %v423, 7
  %v1025 = vsel %vm597, %v1022, %v1024
  %v1026 = vrot.slane %v493, 7
  %v1027 = vrot.slane %v494, 7
  %v1028 = vsel %vm597, %v1026, %v1027
  %v1029 = vrot.slane %v495, 7
  %v1030 = vsel %vm597, %v1027, %v1029
  %v1033 = vrot.slane %v422, 1
  %v1034 = vrot.slane %v423, 1
  %v1035 = vsel %vm854, %v1033, %v1034
  %v1036 = vrot.slane %v424, 1
  %v1037 = vsel %vm854, %v1034, %v1036
  %v1038 = vrot.slane %v494, 1
  %v1039 = vrot.slane %v495, 1
  %v1040 = vsel %vm854, %v1038, %v1039
  %v1041 = vrot.slane %v496, 1
  %v1042 = vsel %vm854, %v1039, %v1041
  %v1049 = vrot.slane %v425, 7
  %v1050 = vrot.slane %v426, 7
  %v1051 = vsel %vm597, %v1049, %v1050
  %v1052 = vrot.slane %v427, 7
  %v1053 = vsel %vm597, %v1050, %v1052
  %v1054 = vrot.slane %v497, 7
  %v1055 = vrot.slane %v498, 7
  %v1056 = vsel %vm597, %v1054, %v1055
  %v1057 = vrot.slane %v499, 7
  %v1058 = vsel %vm597, %v1055, %v1057
  %v1061 = vrot.slane %v426, 1
  %v1062 = vrot.slane %v427, 1
  %v1063 = vsel %vm854, %v1061, %v1062
  %v1064 = vrot.slane %v428, 1
  %v1065 = vsel %vm854, %v1062, %v1064
  %v1066 = vrot.slane %v498, 1
  %v1067 = vrot.slane %v499, 1
  %v1068 = vsel %vm854, %v1066, %v1067
  %v1069 = vrot.slane %v500, 1
  %v1070 = vsel %vm854, %v1067, %v1069
  %1135 = vrot.lane.b32.xlu0 %v358, 16
  %v1136 = vpop.permute.xlu0 %1135
  %1137 = vrot.lane.b32.xlu0 %v359, 16
  %v1138 = vpop.permute.xlu0 %1137
  %1139 = vrot.lane.b32.xlu0 %v362, 16
  %v1140 = vpop.permute.xlu0 %1139
  %1141 = vrot.lane.b32.xlu0 %v363, 16
  %v1142 = vpop.permute.xlu0 %1141
  %1143 = vrot.lane.b32.xlu0 %v366, 16
  %v1144 = vpop.permute.xlu0 %1143
  %1145 = vrot.lane.b32.xlu0 %v367, 16
  %v1146 = vpop.permute.xlu0 %1145
  %1147 = vrot.lane.b32.xlu0 %v370, 16
  %v1148 = vpop.permute.xlu0 %1147
  %1149 = vrot.lane.b32.xlu0 %v371, 16
  %v1150 = vpop.permute.xlu0 %1149
  %1151 = vrot.lane.b32.xlu0 %v374, 16
  %v1152 = vpop.permute.xlu0 %1151
  %1153 = vrot.lane.b32.xlu0 %v375, 16
  %v1154 = vpop.permute.xlu0 %1153
  %1155 = vrot.lane.b32.xlu0 %v378, 16
  %v1156 = vpop.permute.xlu0 %1155
  %1157 = vrot.lane.b32.xlu0 %v379, 16
  %v1158 = vpop.permute.xlu0 %1157
  %1159 = vrot.lane.b32.xlu0 %v382, 16
  %v1160 = vpop.permute.xlu0 %1159
  %1161 = vrot.lane.b32.xlu0 %v383, 16
  %v1162 = vpop.permute.xlu0 %1161
  %1163 = vrot.lane.b32.xlu0 %v386, 16
  %v1164 = vpop.permute.xlu0 %1163
  %1165 = vrot.lane.b32.xlu0 %v387, 16
  %v1166 = vpop.permute.xlu0 %1165
  %1167 = vrot.lane.b32.xlu0 %v390, 16
  %v1168 = vpop.permute.xlu0 %1167
  %1169 = vrot.lane.b32.xlu0 %v391, 16
  %v1170 = vpop.permute.xlu0 %1169
  %1171 = vrot.lane.b32.xlu0 %v394, 16
  %v1172 = vpop.permute.xlu0 %1171
  %1173 = vrot.lane.b32.xlu0 %v395, 16
  %v1174 = vpop.permute.xlu0 %1173
  %1175 = vrot.lane.b32.xlu0 %v398, 16
  %v1176 = vpop.permute.xlu0 %1175
  %1177 = vrot.lane.b32.xlu0 %v399, 16
  %v1178 = vpop.permute.xlu0 %1177
  %1179 = vrot.lane.b32.xlu0 %v402, 16
  %v1180 = vpop.permute.xlu0 %1179
  %1181 = vrot.lane.b32.xlu0 %v403, 16
  %v1182 = vpop.permute.xlu0 %1181
  %1183 = vrot.lane.b32.xlu0 %v406, 16
  %v1184 = vpop.permute.xlu0 %1183
  %1185 = vrot.lane.b32.xlu0 %v407, 16
  %v1186 = vpop.permute.xlu0 %1185
  %1187 = vrot.lane.b32.xlu0 %v410, 16
  %v1188 = vpop.permute.xlu0 %1187
  %1189 = vrot.lane.b32.xlu0 %v411, 16
  %v1190 = vpop.permute.xlu0 %1189
  %1191 = vrot.lane.b32.xlu0 %v414, 16
  %v1192 = vpop.permute.xlu0 %1191
  %1193 = vrot.lane.b32.xlu0 %v415, 16
  %v1194 = vpop.permute.xlu0 %1193
  %1195 = vrot.lane.b32.xlu0 %v418, 16
  %v1196 = vpop.permute.xlu0 %1195
  %1197 = vrot.lane.b32.xlu0 %v419, 16
  %v1198 = vpop.permute.xlu0 %1197
  %1199 = vrot.lane.b32.xlu0 %v430, 16
  %v1200 = vpop.permute.xlu0 %1199
  %1201 = vrot.lane.b32.xlu0 %v431, 16
  %v1202 = vpop.permute.xlu0 %1201
  %1203 = vrot.lane.b32.xlu0 %v434, 16
  %v1204 = vpop.permute.xlu0 %1203
  %1205 = vrot.lane.b32.xlu0 %v435, 16
  %v1206 = vpop.permute.xlu0 %1205
  %1207 = vrot.lane.b32.xlu0 %v438, 16
  %v1208 = vpop.permute.xlu0 %1207
  %1209 = vrot.lane.b32.xlu0 %v439, 16
  %v1210 = vpop.permute.xlu0 %1209
  %1211 = vrot.lane.b32.xlu0 %v442, 16
  %v1212 = vpop.permute.xlu0 %1211
  %1213 = vrot.lane.b32.xlu0 %v443, 16
  %v1214 = vpop.permute.xlu0 %1213
  %1215 = vrot.lane.b32.xlu0 %v446, 16
  %v1216 = vpop.permute.xlu0 %1215
  %1217 = vrot.lane.b32.xlu0 %v447, 16
  %v1218 = vpop.permute.xlu0 %1217
  %1219 = vrot.lane.b32.xlu0 %v450, 16
  %v1220 = vpop.permute.xlu0 %1219
  %1221 = vrot.lane.b32.xlu0 %v451, 16
  %v1222 = vpop.permute.xlu0 %1221
  %1223 = vrot.lane.b32.xlu0 %v454, 16
  %v1224 = vpop.permute.xlu0 %1223
  %1225 = vrot.lane.b32.xlu0 %v455, 16
  %v1226 = vpop.permute.xlu0 %1225
  %1227 = vrot.lane.b32.xlu0 %v458, 16
  %v1228 = vpop.permute.xlu0 %1227
  %1229 = vrot.lane.b32.xlu0 %v459, 16
  %v1230 = vpop.permute.xlu0 %1229
  %1231 = vrot.lane.b32.xlu0 %v462, 16
  %v1232 = vpop.permute.xlu0 %1231
  %1233 = vrot.lane.b32.xlu0 %v463, 16
  %v1234 = vpop.permute.xlu0 %1233
  %1235 = vrot.lane.b32.xlu0 %v466, 16
  %v1236 = vpop.permute.xlu0 %1235
  %1237 = vrot.lane.b32.xlu0 %v467, 16
  %v1238 = vpop.permute.xlu0 %1237
  %1239 = vrot.lane.b32.xlu0 %v470, 16
  %v1240 = vpop.permute.xlu0 %1239
  %1241 = vrot.lane.b32.xlu0 %v471, 16
  %v1242 = vpop.permute.xlu0 %1241
  %1243 = vrot.lane.b32.xlu0 %v474, 16
  %v1244 = vpop.permute.xlu0 %1243
  %1245 = vrot.lane.b32.xlu0 %v475, 16
  %v1246 = vpop.permute.xlu0 %1245
  %1247 = vrot.lane.b32.xlu0 %v478, 16
  %v1248 = vpop.permute.xlu0 %1247
  %1249 = vrot.lane.b32.xlu0 %v479, 16
  %v1250 = vpop.permute.xlu0 %1249
  %1251 = vrot.lane.b32.xlu0 %v482, 16
  %v1252 = vpop.permute.xlu0 %1251
  %1253 = vrot.lane.b32.xlu0 %v483, 16
  %v1254 = vpop.permute.xlu0 %1253
  %1255 = vrot.lane.b32.xlu0 %v486, 16
  %v1256 = vpop.permute.xlu0 %1255
  %1257 = vrot.lane.b32.xlu0 %v487, 16
  %v1258 = vpop.permute.xlu0 %1257
  %1259 = vrot.lane.b32.xlu0 %v490, 16
  %v1260 = vpop.permute.xlu0 %1259
  %1261 = vrot.lane.b32.xlu0 %v491, 16
  %v1262 = vpop.permute.xlu0 %1261
  %1327 = vrot.lane.b32.xlu0 %v857, 32
  %v1328 = vpop.permute.xlu0 %1327
  %1329 = vrot.lane.b32.xlu0 %v859, 32
  %v1330 = vpop.permute.xlu0 %1329
  %1331 = vrot.lane.b32.xlu0 %v862, 32
  %v1332 = vpop.permute.xlu0 %1331
  %1333 = vrot.lane.b32.xlu0 %v864, 32
  %v1334 = vpop.permute.xlu0 %1333
  %1335 = vrot.lane.b32.xlu0 %v867, 32
  %v1336 = vpop.permute.xlu0 %1335
  %1337 = vrot.lane.b32.xlu0 %v869, 32
  %v1338 = vpop.permute.xlu0 %1337
  %1339 = vrot.lane.b32.xlu0 %v872, 32
  %v1340 = vpop.permute.xlu0 %1339
  %1341 = vrot.lane.b32.xlu0 %v874, 32
  %v1342 = vpop.permute.xlu0 %1341
  %1343 = vrot.lane.b32.xlu0 %v877, 32
  %v1344 = vpop.permute.xlu0 %1343
  %1345 = vrot.lane.b32.xlu0 %v879, 32
  %v1346 = vpop.permute.xlu0 %1345
  %1347 = vrot.lane.b32.xlu0 %v882, 32
  %v1348 = vpop.permute.xlu0 %1347
  %1349 = vrot.lane.b32.xlu0 %v884, 32
  %v1350 = vpop.permute.xlu0 %1349
  %1351 = vrot.lane.b32.xlu0 %v887, 32
  %v1352 = vpop.permute.xlu0 %1351
  %1353 = vrot.lane.b32.xlu0 %v889, 32
  %v1354 = vpop.permute.xlu0 %1353
  %1355 = vrot.lane.b32.xlu0 %v892, 32
  %v1356 = vpop.permute.xlu0 %1355
  %1357 = vrot.lane.b32.xlu0 %v894, 32
  %v1358 = vpop.permute.xlu0 %1357
  %1359 = vrot.lane.b32.xlu0 %v897, 32
  %v1360 = vpop.permute.xlu0 %1359
  %1361 = vrot.lane.b32.xlu0 %v899, 32
  %v1362 = vpop.permute.xlu0 %1361
  %1363 = vrot.lane.b32.xlu0 %v902, 32
  %v1364 = vpop.permute.xlu0 %1363
  %1365 = vrot.lane.b32.xlu0 %v904, 32
  %v1366 = vpop.permute.xlu0 %1365
  %1367 = vrot.lane.b32.xlu0 %v907, 32
  %v1368 = vpop.permute.xlu0 %1367
  %1369 = vrot.lane.b32.xlu0 %v909, 32
  %v1370 = vpop.permute.xlu0 %1369
  %1371 = vrot.lane.b32.xlu0 %v912, 32
  %v1372 = vpop.permute.xlu0 %1371
  %1373 = vrot.lane.b32.xlu0 %v914, 32
  %v1374 = vpop.permute.xlu0 %1373
  %1375 = vrot.lane.b32.xlu0 %v917, 32
  %v1376 = vpop.permute.xlu0 %1375
  %1377 = vrot.lane.b32.xlu0 %v919, 32
  %v1378 = vpop.permute.xlu0 %1377
  %1379 = vrot.lane.b32.xlu0 %v922, 32
  %v1380 = vpop.permute.xlu0 %1379
  %1381 = vrot.lane.b32.xlu0 %v924, 32
  %v1382 = vpop.permute.xlu0 %1381
  %1383 = vrot.lane.b32.xlu0 %v927, 32
  %v1384 = vpop.permute.xlu0 %1383
  %1385 = vrot.lane.b32.xlu0 %v929, 32
  %v1386 = vpop.permute.xlu0 %1385
  %1387 = vrot.lane.b32.xlu0 %v932, 32
  %v1388 = vpop.permute.xlu0 %1387
  %1389 = vrot.lane.b32.xlu0 %v934, 32
  %v1390 = vpop.permute.xlu0 %1389
  %1391 = vrot.lane.b32.xlu0 %v937, 32
  %v1392 = vpop.permute.xlu0 %1391
  %1393 = vrot.lane.b32.xlu0 %v939, 32
  %v1394 = vpop.permute.xlu0 %1393
  %1395 = vrot.lane.b32.xlu0 %v942, 32
  %v1396 = vpop.permute.xlu0 %1395
  %1397 = vrot.lane.b32.xlu0 %v944, 32
  %v1398 = vpop.permute.xlu0 %1397
  %1399 = vrot.lane.b32.xlu0 %v947, 32
  %v1400 = vpop.permute.xlu0 %1399
  %1401 = vrot.lane.b32.xlu0 %v949, 32
  %v1402 = vpop.permute.xlu0 %1401
  %1403 = vrot.lane.b32.xlu0 %v952, 32
  %v1404 = vpop.permute.xlu0 %1403
  %1405 = vrot.lane.b32.xlu0 %v954, 32
  %v1406 = vpop.permute.xlu0 %1405
  %1407 = vrot.lane.b32.xlu0 %v957, 32
  %v1408 = vpop.permute.xlu0 %1407
  %1409 = vrot.lane.b32.xlu0 %v959, 32
  %v1410 = vpop.permute.xlu0 %1409
  %1411 = vrot.lane.b32.xlu0 %v962, 32
  %v1412 = vpop.permute.xlu0 %1411
  %1413 = vrot.lane.b32.xlu0 %v964, 32
  %v1414 = vpop.permute.xlu0 %1413
  %1415 = vrot.lane.b32.xlu0 %v967, 32
  %v1416 = vpop.permute.xlu0 %1415
  %1417 = vrot.lane.b32.xlu0 %v969, 32
  %v1418 = vpop.permute.xlu0 %1417
  %1419 = vrot.lane.b32.xlu0 %v972, 32
  %v1420 = vpop.permute.xlu0 %1419
  %1421 = vrot.lane.b32.xlu0 %v974, 32
  %v1422 = vpop.permute.xlu0 %1421
  %1423 = vrot.lane.b32.xlu0 %v977, 32
  %v1424 = vpop.permute.xlu0 %1423
  %1425 = vrot.lane.b32.xlu0 %v979, 32
  %v1426 = vpop.permute.xlu0 %1425
  %1427 = vrot.lane.b32.xlu0 %v982, 32
  %v1428 = vpop.permute.xlu0 %1427
  %1429 = vrot.lane.b32.xlu0 %v984, 32
  %v1430 = vpop.permute.xlu0 %1429
  %1431 = vrot.lane.b32.xlu0 %v987, 32
  %v1432 = vpop.permute.xlu0 %1431
  %1433 = vrot.lane.b32.xlu0 %v989, 32
  %v1434 = vpop.permute.xlu0 %1433
  %1435 = vrot.lane.b32.xlu0 %v992, 32
  %v1436 = vpop.permute.xlu0 %1435
  %1437 = vrot.lane.b32.xlu0 %v994, 32
  %v1438 = vpop.permute.xlu0 %1437
  %1439 = vrot.lane.b32.xlu0 %v997, 32
  %v1440 = vpop.permute.xlu0 %1439
  %1441 = vrot.lane.b32.xlu0 %v999, 32
  %v1442 = vpop.permute.xlu0 %1441
  %1443 = vrot.lane.b32.xlu0 %v1002, 32
  %v1444 = vpop.permute.xlu0 %1443
  %1445 = vrot.lane.b32.xlu0 %v1004, 32
  %v1446 = vpop.permute.xlu0 %1445
  %1447 = vrot.lane.b32.xlu0 %v1007, 32
  %v1448 = vpop.permute.xlu0 %1447
  %1449 = vrot.lane.b32.xlu0 %v1009, 32
  %v1450 = vpop.permute.xlu0 %1449
  %1451 = vrot.lane.b32.xlu0 %v1012, 32
  %v1452 = vpop.permute.xlu0 %1451
  %1453 = vrot.lane.b32.xlu0 %v1014, 32
  %v1454 = vpop.permute.xlu0 %1453
  %1519 = vrot.lane.b32.xlu0 %v605, 48
  %v1520 = vpop.permute.xlu0 %1519
  %1521 = vrot.lane.b32.xlu0 %v607, 48
  %v1522 = vpop.permute.xlu0 %1521
  %1523 = vrot.lane.b32.xlu0 %v610, 48
  %v1524 = vpop.permute.xlu0 %1523
  %1525 = vrot.lane.b32.xlu0 %v612, 48
  %v1526 = vpop.permute.xlu0 %1525
  %1527 = vrot.lane.b32.xlu0 %v615, 48
  %v1528 = vpop.permute.xlu0 %1527
  %1529 = vrot.lane.b32.xlu0 %v617, 48
  %v1530 = vpop.permute.xlu0 %1529
  %1531 = vrot.lane.b32.xlu0 %v620, 48
  %v1532 = vpop.permute.xlu0 %1531
  %1533 = vrot.lane.b32.xlu0 %v622, 48
  %v1534 = vpop.permute.xlu0 %1533
  %1535 = vrot.lane.b32.xlu0 %v625, 48
  %v1536 = vpop.permute.xlu0 %1535
  %1537 = vrot.lane.b32.xlu0 %v627, 48
  %v1538 = vpop.permute.xlu0 %1537
  %1539 = vrot.lane.b32.xlu0 %v630, 48
  %v1540 = vpop.permute.xlu0 %1539
  %1541 = vrot.lane.b32.xlu0 %v632, 48
  %v1542 = vpop.permute.xlu0 %1541
  %1543 = vrot.lane.b32.xlu0 %v635, 48
  %v1544 = vpop.permute.xlu0 %1543
  %1545 = vrot.lane.b32.xlu0 %v637, 48
  %v1546 = vpop.permute.xlu0 %1545
  %1547 = vrot.lane.b32.xlu0 %v640, 48
  %v1548 = vpop.permute.xlu0 %1547
  %1549 = vrot.lane.b32.xlu0 %v642, 48
  %v1550 = vpop.permute.xlu0 %1549
  %1551 = vrot.lane.b32.xlu0 %v645, 48
  %v1552 = vpop.permute.xlu0 %1551
  %1553 = vrot.lane.b32.xlu0 %v647, 48
  %v1554 = vpop.permute.xlu0 %1553
  %1555 = vrot.lane.b32.xlu0 %v650, 48
  %v1556 = vpop.permute.xlu0 %1555
  %1557 = vrot.lane.b32.xlu0 %v652, 48
  %v1558 = vpop.permute.xlu0 %1557
  %1559 = vrot.lane.b32.xlu0 %v655, 48
  %v1560 = vpop.permute.xlu0 %1559
  %1561 = vrot.lane.b32.xlu0 %v657, 48
  %v1562 = vpop.permute.xlu0 %1561
  %1563 = vrot.lane.b32.xlu0 %v660, 48
  %v1564 = vpop.permute.xlu0 %1563
  %1565 = vrot.lane.b32.xlu0 %v662, 48
  %v1566 = vpop.permute.xlu0 %1565
  %1567 = vrot.lane.b32.xlu0 %v665, 48
  %v1568 = vpop.permute.xlu0 %1567
  %1569 = vrot.lane.b32.xlu0 %v667, 48
  %v1570 = vpop.permute.xlu0 %1569
  %1571 = vrot.lane.b32.xlu0 %v670, 48
  %v1572 = vpop.permute.xlu0 %1571
  %1573 = vrot.lane.b32.xlu0 %v672, 48
  %v1574 = vpop.permute.xlu0 %1573
  %1575 = vrot.lane.b32.xlu0 %v675, 48
  %v1576 = vpop.permute.xlu0 %1575
  %1577 = vrot.lane.b32.xlu0 %v677, 48
  %v1578 = vpop.permute.xlu0 %1577
  %1579 = vrot.lane.b32.xlu0 %v1023, 48
  %v1580 = vpop.permute.xlu0 %1579
  %1581 = vrot.lane.b32.xlu0 %v1025, 48
  %v1582 = vpop.permute.xlu0 %1581
  %1583 = vrot.lane.b32.xlu0 %v685, 48
  %v1584 = vpop.permute.xlu0 %1583
  %1585 = vrot.lane.b32.xlu0 %v687, 48
  %v1586 = vpop.permute.xlu0 %1585
  %1587 = vrot.lane.b32.xlu0 %v690, 48
  %v1588 = vpop.permute.xlu0 %1587
  %1589 = vrot.lane.b32.xlu0 %v692, 48
  %v1590 = vpop.permute.xlu0 %1589
  %1591 = vrot.lane.b32.xlu0 %v695, 48
  %v1592 = vpop.permute.xlu0 %1591
  %1593 = vrot.lane.b32.xlu0 %v697, 48
  %v1594 = vpop.permute.xlu0 %1593
  %1595 = vrot.lane.b32.xlu0 %v700, 48
  %v1596 = vpop.permute.xlu0 %1595
  %1597 = vrot.lane.b32.xlu0 %v702, 48
  %v1598 = vpop.permute.xlu0 %1597
  %1599 = vrot.lane.b32.xlu0 %v705, 48
  %v1600 = vpop.permute.xlu0 %1599
  %1601 = vrot.lane.b32.xlu0 %v707, 48
  %v1602 = vpop.permute.xlu0 %1601
  %1603 = vrot.lane.b32.xlu0 %v710, 48
  %v1604 = vpop.permute.xlu0 %1603
  %1605 = vrot.lane.b32.xlu0 %v712, 48
  %v1606 = vpop.permute.xlu0 %1605
  %1607 = vrot.lane.b32.xlu0 %v715, 48
  %v1608 = vpop.permute.xlu0 %1607
  %1609 = vrot.lane.b32.xlu0 %v717, 48
  %v1610 = vpop.permute.xlu0 %1609
  %1611 = vrot.lane.b32.xlu0 %v720, 48
  %v1612 = vpop.permute.xlu0 %1611
  %1613 = vrot.lane.b32.xlu0 %v722, 48
  %v1614 = vpop.permute.xlu0 %1613
  %1615 = vrot.lane.b32.xlu0 %v725, 48
  %v1616 = vpop.permute.xlu0 %1615
  %1617 = vrot.lane.b32.xlu0 %v727, 48
  %v1618 = vpop.permute.xlu0 %1617
  %1619 = vrot.lane.b32.xlu0 %v730, 48
  %v1620 = vpop.permute.xlu0 %1619
  %1621 = vrot.lane.b32.xlu0 %v732, 48
  %v1622 = vpop.permute.xlu0 %1621
  %1623 = vrot.lane.b32.xlu0 %v735, 48
  %v1624 = vpop.permute.xlu0 %1623
  %1625 = vrot.lane.b32.xlu0 %v737, 48
  %v1626 = vpop.permute.xlu0 %1625
  %1627 = vrot.lane.b32.xlu0 %v740, 48
  %v1628 = vpop.permute.xlu0 %1627
  %1629 = vrot.lane.b32.xlu0 %v742, 48
  %v1630 = vpop.permute.xlu0 %1629
  %1631 = vrot.lane.b32.xlu0 %v745, 48
  %v1632 = vpop.permute.xlu0 %1631
  %1633 = vrot.lane.b32.xlu0 %v747, 48
  %v1634 = vpop.permute.xlu0 %1633
  %1635 = vrot.lane.b32.xlu0 %v750, 48
  %v1636 = vpop.permute.xlu0 %1635
  %1637 = vrot.lane.b32.xlu0 %v752, 48
  %v1638 = vpop.permute.xlu0 %1637
  %1639 = vrot.lane.b32.xlu0 %v755, 48
  %v1640 = vpop.permute.xlu0 %1639
  %1641 = vrot.lane.b32.xlu0 %v757, 48
  %v1642 = vpop.permute.xlu0 %1641
  %1643 = vrot.lane.b32.xlu0 %v1028, 48
  %v1644 = vpop.permute.xlu0 %1643
  %1645 = vrot.lane.b32.xlu0 %v1030, 48
  %v1646 = vpop.permute.xlu0 %1645
  %1711 = vrot.lane.b32.xlu0 %v362, 64
  %v1712 = vpop.permute.xlu0 %1711
  %1713 = vrot.lane.b32.xlu0 %v363, 64
  %v1714 = vpop.permute.xlu0 %1713
  %1715 = vrot.lane.b32.xlu0 %v366, 64
  %v1716 = vpop.permute.xlu0 %1715
  %1717 = vrot.lane.b32.xlu0 %v367, 64
  %v1718 = vpop.permute.xlu0 %1717
  %1719 = vrot.lane.b32.xlu0 %v370, 64
  %v1720 = vpop.permute.xlu0 %1719
  %1721 = vrot.lane.b32.xlu0 %v371, 64
  %v1722 = vpop.permute.xlu0 %1721
  %1723 = vrot.lane.b32.xlu0 %v374, 64
  %v1724 = vpop.permute.xlu0 %1723
  %1725 = vrot.lane.b32.xlu0 %v375, 64
  %v1726 = vpop.permute.xlu0 %1725
  %1727 = vrot.lane.b32.xlu0 %v378, 64
  %v1728 = vpop.permute.xlu0 %1727
  %1729 = vrot.lane.b32.xlu0 %v379, 64
  %v1730 = vpop.permute.xlu0 %1729
  %1731 = vrot.lane.b32.xlu0 %v382, 64
  %v1732 = vpop.permute.xlu0 %1731
  %1733 = vrot.lane.b32.xlu0 %v383, 64
  %v1734 = vpop.permute.xlu0 %1733
  %1735 = vrot.lane.b32.xlu0 %v386, 64
  %v1736 = vpop.permute.xlu0 %1735
  %1737 = vrot.lane.b32.xlu0 %v387, 64
  %v1738 = vpop.permute.xlu0 %1737
  %1739 = vrot.lane.b32.xlu0 %v390, 64
  %v1740 = vpop.permute.xlu0 %1739
  %1741 = vrot.lane.b32.xlu0 %v391, 64
  %v1742 = vpop.permute.xlu0 %1741
  %1743 = vrot.lane.b32.xlu0 %v394, 64
  %v1744 = vpop.permute.xlu0 %1743
  %1745 = vrot.lane.b32.xlu0 %v395, 64
  %v1746 = vpop.permute.xlu0 %1745
  %1747 = vrot.lane.b32.xlu0 %v398, 64
  %v1748 = vpop.permute.xlu0 %1747
  %1749 = vrot.lane.b32.xlu0 %v399, 64
  %v1750 = vpop.permute.xlu0 %1749
  %1751 = vrot.lane.b32.xlu0 %v402, 64
  %v1752 = vpop.permute.xlu0 %1751
  %1753 = vrot.lane.b32.xlu0 %v403, 64
  %v1754 = vpop.permute.xlu0 %1753
  %1755 = vrot.lane.b32.xlu0 %v406, 64
  %v1756 = vpop.permute.xlu0 %1755
  %1757 = vrot.lane.b32.xlu0 %v407, 64
  %v1758 = vpop.permute.xlu0 %1757
  %1759 = vrot.lane.b32.xlu0 %v410, 64
  %v1760 = vpop.permute.xlu0 %1759
  %1761 = vrot.lane.b32.xlu0 %v411, 64
  %v1762 = vpop.permute.xlu0 %1761
  %1763 = vrot.lane.b32.xlu0 %v414, 64
  %v1764 = vpop.permute.xlu0 %1763
  %1765 = vrot.lane.b32.xlu0 %v415, 64
  %v1766 = vpop.permute.xlu0 %1765
  %1767 = vrot.lane.b32.xlu0 %v418, 64
  %v1768 = vpop.permute.xlu0 %1767
  %1769 = vrot.lane.b32.xlu0 %v419, 64
  %v1770 = vpop.permute.xlu0 %1769
  %1771 = vrot.lane.b32.xlu0 %v422, 64
  %v1772 = vpop.permute.xlu0 %1771
  %1773 = vrot.lane.b32.xlu0 %v423, 64
  %v1774 = vpop.permute.xlu0 %1773
  %1775 = vrot.lane.b32.xlu0 %v434, 64
  %v1776 = vpop.permute.xlu0 %1775
  %1777 = vrot.lane.b32.xlu0 %v435, 64
  %v1778 = vpop.permute.xlu0 %1777
  %1779 = vrot.lane.b32.xlu0 %v438, 64
  %v1780 = vpop.permute.xlu0 %1779
  %1781 = vrot.lane.b32.xlu0 %v439, 64
  %v1782 = vpop.permute.xlu0 %1781
  %1783 = vrot.lane.b32.xlu0 %v442, 64
  %v1784 = vpop.permute.xlu0 %1783
  %1785 = vrot.lane.b32.xlu0 %v443, 64
  %v1786 = vpop.permute.xlu0 %1785
  %1787 = vrot.lane.b32.xlu0 %v446, 64
  %v1788 = vpop.permute.xlu0 %1787
  %1789 = vrot.lane.b32.xlu0 %v447, 64
  %v1790 = vpop.permute.xlu0 %1789
  %1791 = vrot.lane.b32.xlu0 %v450, 64
  %v1792 = vpop.permute.xlu0 %1791
  %1793 = vrot.lane.b32.xlu0 %v451, 64
  %v1794 = vpop.permute.xlu0 %1793
  %1795 = vrot.lane.b32.xlu0 %v454, 64
  %v1796 = vpop.permute.xlu0 %1795
  %1797 = vrot.lane.b32.xlu0 %v455, 64
  %v1798 = vpop.permute.xlu0 %1797
  %1799 = vrot.lane.b32.xlu0 %v458, 64
  %v1800 = vpop.permute.xlu0 %1799
  %1801 = vrot.lane.b32.xlu0 %v459, 64
  %v1802 = vpop.permute.xlu0 %1801
  %1803 = vrot.lane.b32.xlu0 %v462, 64
  %v1804 = vpop.permute.xlu0 %1803
  %1805 = vrot.lane.b32.xlu0 %v463, 64
  %v1806 = vpop.permute.xlu0 %1805
  %1807 = vrot.lane.b32.xlu0 %v466, 64
  %v1808 = vpop.permute.xlu0 %1807
  %1809 = vrot.lane.b32.xlu0 %v467, 64
  %v1810 = vpop.permute.xlu0 %1809
  %1811 = vrot.lane.b32.xlu0 %v470, 64
  %v1812 = vpop.permute.xlu0 %1811
  %1813 = vrot.lane.b32.xlu0 %v471, 64
  %v1814 = vpop.permute.xlu0 %1813
  %1815 = vrot.lane.b32.xlu0 %v474, 64
  %v1816 = vpop.permute.xlu0 %1815
  %1817 = vrot.lane.b32.xlu0 %v475, 64
  %v1818 = vpop.permute.xlu0 %1817
  %1819 = vrot.lane.b32.xlu0 %v478, 64
  %v1820 = vpop.permute.xlu0 %1819
  %1821 = vrot.lane.b32.xlu0 %v479, 64
  %v1822 = vpop.permute.xlu0 %1821
  %1823 = vrot.lane.b32.xlu0 %v482, 64
  %v1824 = vpop.permute.xlu0 %1823
  %1825 = vrot.lane.b32.xlu0 %v483, 64
  %v1826 = vpop.permute.xlu0 %1825
  %1827 = vrot.lane.b32.xlu0 %v486, 64
  %v1828 = vpop.permute.xlu0 %1827
  %1829 = vrot.lane.b32.xlu0 %v487, 64
  %v1830 = vpop.permute.xlu0 %1829
  %1831 = vrot.lane.b32.xlu0 %v490, 64
  %v1832 = vpop.permute.xlu0 %1831
  %1833 = vrot.lane.b32.xlu0 %v491, 64
  %v1834 = vpop.permute.xlu0 %1833
  %1835 = vrot.lane.b32.xlu0 %v494, 64
  %v1836 = vpop.permute.xlu0 %1835
  %1837 = vrot.lane.b32.xlu0 %v495, 64
  %v1838 = vpop.permute.xlu0 %1837
  %1903 = vrot.lane.b32.xlu0 %v862, 80
  %v1904 = vpop.permute.xlu0 %1903
  %1905 = vrot.lane.b32.xlu0 %v864, 80
  %v1906 = vpop.permute.xlu0 %1905
  %1907 = vrot.lane.b32.xlu0 %v867, 80
  %v1908 = vpop.permute.xlu0 %1907
  %1909 = vrot.lane.b32.xlu0 %v869, 80
  %v1910 = vpop.permute.xlu0 %1909
  %1911 = vrot.lane.b32.xlu0 %v872, 80
  %v1912 = vpop.permute.xlu0 %1911
  %1913 = vrot.lane.b32.xlu0 %v874, 80
  %v1914 = vpop.permute.xlu0 %1913
  %1915 = vrot.lane.b32.xlu0 %v877, 80
  %v1916 = vpop.permute.xlu0 %1915
  %1917 = vrot.lane.b32.xlu0 %v879, 80
  %v1918 = vpop.permute.xlu0 %1917
  %1919 = vrot.lane.b32.xlu0 %v882, 80
  %v1920 = vpop.permute.xlu0 %1919
  %1921 = vrot.lane.b32.xlu0 %v884, 80
  %v1922 = vpop.permute.xlu0 %1921
  %1923 = vrot.lane.b32.xlu0 %v887, 80
  %v1924 = vpop.permute.xlu0 %1923
  %1925 = vrot.lane.b32.xlu0 %v889, 80
  %v1926 = vpop.permute.xlu0 %1925
  %1927 = vrot.lane.b32.xlu0 %v892, 80
  %v1928 = vpop.permute.xlu0 %1927
  %1929 = vrot.lane.b32.xlu0 %v894, 80
  %v1930 = vpop.permute.xlu0 %1929
  %1931 = vrot.lane.b32.xlu0 %v897, 80
  %v1932 = vpop.permute.xlu0 %1931
  %1933 = vrot.lane.b32.xlu0 %v899, 80
  %v1934 = vpop.permute.xlu0 %1933
  %1935 = vrot.lane.b32.xlu0 %v902, 80
  %v1936 = vpop.permute.xlu0 %1935
  %1937 = vrot.lane.b32.xlu0 %v904, 80
  %v1938 = vpop.permute.xlu0 %1937
  %1939 = vrot.lane.b32.xlu0 %v907, 80
  %v1940 = vpop.permute.xlu0 %1939
  %1941 = vrot.lane.b32.xlu0 %v909, 80
  %v1942 = vpop.permute.xlu0 %1941
  %1943 = vrot.lane.b32.xlu0 %v912, 80
  %v1944 = vpop.permute.xlu0 %1943
  %1945 = vrot.lane.b32.xlu0 %v914, 80
  %v1946 = vpop.permute.xlu0 %1945
  %1947 = vrot.lane.b32.xlu0 %v917, 80
  %v1948 = vpop.permute.xlu0 %1947
  %1949 = vrot.lane.b32.xlu0 %v919, 80
  %v1950 = vpop.permute.xlu0 %1949
  %1951 = vrot.lane.b32.xlu0 %v922, 80
  %v1952 = vpop.permute.xlu0 %1951
  %1953 = vrot.lane.b32.xlu0 %v924, 80
  %v1954 = vpop.permute.xlu0 %1953
  %1955 = vrot.lane.b32.xlu0 %v927, 80
  %v1956 = vpop.permute.xlu0 %1955
  %1957 = vrot.lane.b32.xlu0 %v929, 80
  %v1958 = vpop.permute.xlu0 %1957
  %1959 = vrot.lane.b32.xlu0 %v932, 80
  %v1960 = vpop.permute.xlu0 %1959
  %1961 = vrot.lane.b32.xlu0 %v934, 80
  %v1962 = vpop.permute.xlu0 %1961
  %1963 = vrot.lane.b32.xlu0 %v1035, 80
  %v1964 = vpop.permute.xlu0 %1963
  %1965 = vrot.lane.b32.xlu0 %v1037, 80
  %v1966 = vpop.permute.xlu0 %1965
  %1967 = vrot.lane.b32.xlu0 %v942, 80
  %v1968 = vpop.permute.xlu0 %1967
  %1969 = vrot.lane.b32.xlu0 %v944, 80
  %v1970 = vpop.permute.xlu0 %1969
  %1971 = vrot.lane.b32.xlu0 %v947, 80
  %v1972 = vpop.permute.xlu0 %1971
  %1973 = vrot.lane.b32.xlu0 %v949, 80
  %v1974 = vpop.permute.xlu0 %1973
  %1975 = vrot.lane.b32.xlu0 %v952, 80
  %v1976 = vpop.permute.xlu0 %1975
  %1977 = vrot.lane.b32.xlu0 %v954, 80
  %v1978 = vpop.permute.xlu0 %1977
  %1979 = vrot.lane.b32.xlu0 %v957, 80
  %v1980 = vpop.permute.xlu0 %1979
  %1981 = vrot.lane.b32.xlu0 %v959, 80
  %v1982 = vpop.permute.xlu0 %1981
  %1983 = vrot.lane.b32.xlu0 %v962, 80
  %v1984 = vpop.permute.xlu0 %1983
  %1985 = vrot.lane.b32.xlu0 %v964, 80
  %v1986 = vpop.permute.xlu0 %1985
  %1987 = vrot.lane.b32.xlu0 %v967, 80
  %v1988 = vpop.permute.xlu0 %1987
  %1989 = vrot.lane.b32.xlu0 %v969, 80
  %v1990 = vpop.permute.xlu0 %1989
  %1991 = vrot.lane.b32.xlu0 %v972, 80
  %v1992 = vpop.permute.xlu0 %1991
  %1993 = vrot.lane.b32.xlu0 %v974, 80
  %v1994 = vpop.permute.xlu0 %1993
  %1995 = vrot.lane.b32.xlu0 %v977, 80
  %v1996 = vpop.permute.xlu0 %1995
  %1997 = vrot.lane.b32.xlu0 %v979, 80
  %v1998 = vpop.permute.xlu0 %1997
  %1999 = vrot.lane.b32.xlu0 %v982, 80
  %v2000 = vpop.permute.xlu0 %1999
  %2001 = vrot.lane.b32.xlu0 %v984, 80
  %v2002 = vpop.permute.xlu0 %2001
  %2003 = vrot.lane.b32.xlu0 %v987, 80
  %v2004 = vpop.permute.xlu0 %2003
  %2005 = vrot.lane.b32.xlu0 %v989, 80
  %v2006 = vpop.permute.xlu0 %2005
  %2007 = vrot.lane.b32.xlu0 %v992, 80
  %v2008 = vpop.permute.xlu0 %2007
  %2009 = vrot.lane.b32.xlu0 %v994, 80
  %v2010 = vpop.permute.xlu0 %2009
  %2011 = vrot.lane.b32.xlu0 %v997, 80
  %v2012 = vpop.permute.xlu0 %2011
  %2013 = vrot.lane.b32.xlu0 %v999, 80
  %v2014 = vpop.permute.xlu0 %2013
  %2015 = vrot.lane.b32.xlu0 %v1002, 80
  %v2016 = vpop.permute.xlu0 %2015
  %2017 = vrot.lane.b32.xlu0 %v1004, 80
  %v2018 = vpop.permute.xlu0 %2017
  %2019 = vrot.lane.b32.xlu0 %v1007, 80
  %v2020 = vpop.permute.xlu0 %2019
  %2021 = vrot.lane.b32.xlu0 %v1009, 80
  %v2022 = vpop.permute.xlu0 %2021
  %2023 = vrot.lane.b32.xlu0 %v1012, 80
  %v2024 = vpop.permute.xlu0 %2023
  %2025 = vrot.lane.b32.xlu0 %v1014, 80
  %v2026 = vpop.permute.xlu0 %2025
  %2027 = vrot.lane.b32.xlu0 %v1040, 80
  %v2028 = vpop.permute.xlu0 %2027
  %2029 = vrot.lane.b32.xlu0 %v1042, 80
  %v2030 = vpop.permute.xlu0 %2029
  %2095 = vrot.lane.b32.xlu0 %v610, 96
  %v2096 = vpop.permute.xlu0 %2095
  %2097 = vrot.lane.b32.xlu0 %v612, 96
  %v2098 = vpop.permute.xlu0 %2097
  %2099 = vrot.lane.b32.xlu0 %v615, 96
  %v2100 = vpop.permute.xlu0 %2099
  %2101 = vrot.lane.b32.xlu0 %v617, 96
  %v2102 = vpop.permute.xlu0 %2101
  %2103 = vrot.lane.b32.xlu0 %v620, 96
  %v2104 = vpop.permute.xlu0 %2103
  %2105 = vrot.lane.b32.xlu0 %v622, 96
  %v2106 = vpop.permute.xlu0 %2105
  %2107 = vrot.lane.b32.xlu0 %v625, 96
  %v2108 = vpop.permute.xlu0 %2107
  %2109 = vrot.lane.b32.xlu0 %v627, 96
  %v2110 = vpop.permute.xlu0 %2109
  %2111 = vrot.lane.b32.xlu0 %v630, 96
  %v2112 = vpop.permute.xlu0 %2111
  %2113 = vrot.lane.b32.xlu0 %v632, 96
  %v2114 = vpop.permute.xlu0 %2113
  %2115 = vrot.lane.b32.xlu0 %v635, 96
  %v2116 = vpop.permute.xlu0 %2115
  %2117 = vrot.lane.b32.xlu0 %v637, 96
  %v2118 = vpop.permute.xlu0 %2117
  %2119 = vrot.lane.b32.xlu0 %v640, 96
  %v2120 = vpop.permute.xlu0 %2119
  %2121 = vrot.lane.b32.xlu0 %v642, 96
  %v2122 = vpop.permute.xlu0 %2121
  %2123 = vrot.lane.b32.xlu0 %v645, 96
  %v2124 = vpop.permute.xlu0 %2123
  %2125 = vrot.lane.b32.xlu0 %v647, 96
  %v2126 = vpop.permute.xlu0 %2125
  %2127 = vrot.lane.b32.xlu0 %v650, 96
  %v2128 = vpop.permute.xlu0 %2127
  %2129 = vrot.lane.b32.xlu0 %v652, 96
  %v2130 = vpop.permute.xlu0 %2129
  %2131 = vrot.lane.b32.xlu0 %v655, 96
  %v2132 = vpop.permute.xlu0 %2131
  %2133 = vrot.lane.b32.xlu0 %v657, 96
  %v2134 = vpop.permute.xlu0 %2133
  %2135 = vrot.lane.b32.xlu0 %v660, 96
  %v2136 = vpop.permute.xlu0 %2135
  %2137 = vrot.lane.b32.xlu0 %v662, 96
  %v2138 = vpop.permute.xlu0 %2137
  %2139 = vrot.lane.b32.xlu0 %v665, 96
  %v2140 = vpop.permute.xlu0 %2139
  %2141 = vrot.lane.b32.xlu0 %v667, 96
  %v2142 = vpop.permute.xlu0 %2141
  %2143 = vrot.lane.b32.xlu0 %v670, 96
  %v2144 = vpop.permute.xlu0 %2143
  %2145 = vrot.lane.b32.xlu0 %v672, 96
  %v2146 = vpop.permute.xlu0 %2145
  %2147 = vrot.lane.b32.xlu0 %v675, 96
  %v2148 = vpop.permute.xlu0 %2147
  %2149 = vrot.lane.b32.xlu0 %v677, 96
  %v2150 = vpop.permute.xlu0 %2149
  %2151 = vrot.lane.b32.xlu0 %v1023, 96
  %v2152 = vpop.permute.xlu0 %2151
  %2153 = vrot.lane.b32.xlu0 %v1025, 96
  %v2154 = vpop.permute.xlu0 %2153
  %2155 = vrot.lane.b32.xlu0 %v1051, 96
  %v2156 = vpop.permute.xlu0 %2155
  %2157 = vrot.lane.b32.xlu0 %v1053, 96
  %v2158 = vpop.permute.xlu0 %2157
  %2159 = vrot.lane.b32.xlu0 %v690, 96
  %v2160 = vpop.permute.xlu0 %2159
  %2161 = vrot.lane.b32.xlu0 %v692, 96
  %v2162 = vpop.permute.xlu0 %2161
  %2163 = vrot.lane.b32.xlu0 %v695, 96
  %v2164 = vpop.permute.xlu0 %2163
  %2165 = vrot.lane.b32.xlu0 %v697, 96
  %v2166 = vpop.permute.xlu0 %2165
  %2167 = vrot.lane.b32.xlu0 %v700, 96
  %v2168 = vpop.permute.xlu0 %2167
  %2169 = vrot.lane.b32.xlu0 %v702, 96
  %v2170 = vpop.permute.xlu0 %2169
  %2171 = vrot.lane.b32.xlu0 %v705, 96
  %v2172 = vpop.permute.xlu0 %2171
  %2173 = vrot.lane.b32.xlu0 %v707, 96
  %v2174 = vpop.permute.xlu0 %2173
  %2175 = vrot.lane.b32.xlu0 %v710, 96
  %v2176 = vpop.permute.xlu0 %2175
  %2177 = vrot.lane.b32.xlu0 %v712, 96
  %v2178 = vpop.permute.xlu0 %2177
  %2179 = vrot.lane.b32.xlu0 %v715, 96
  %v2180 = vpop.permute.xlu0 %2179
  %2181 = vrot.lane.b32.xlu0 %v717, 96
  %v2182 = vpop.permute.xlu0 %2181
  %2183 = vrot.lane.b32.xlu0 %v720, 96
  %v2184 = vpop.permute.xlu0 %2183
  %2185 = vrot.lane.b32.xlu0 %v722, 96
  %v2186 = vpop.permute.xlu0 %2185
  %2187 = vrot.lane.b32.xlu0 %v725, 96
  %v2188 = vpop.permute.xlu0 %2187
  %2189 = vrot.lane.b32.xlu0 %v727, 96
  %v2190 = vpop.permute.xlu0 %2189
  %2191 = vrot.lane.b32.xlu0 %v730, 96
  %v2192 = vpop.permute.xlu0 %2191
  %2193 = vrot.lane.b32.xlu0 %v732, 96
  %v2194 = vpop.permute.xlu0 %2193
  %2195 = vrot.lane.b32.xlu0 %v735, 96
  %v2196 = vpop.permute.xlu0 %2195
  %2197 = vrot.lane.b32.xlu0 %v737, 96
  %v2198 = vpop.permute.xlu0 %2197
  %2199 = vrot.lane.b32.xlu0 %v740, 96
  %v2200 = vpop.permute.xlu0 %2199
  %2201 = vrot.lane.b32.xlu0 %v742, 96
  %v2202 = vpop.permute.xlu0 %2201
  %2203 = vrot.lane.b32.xlu0 %v745, 96
  %v2204 = vpop.permute.xlu0 %2203
  %2205 = vrot.lane.b32.xlu0 %v747, 96
  %v2206 = vpop.permute.xlu0 %2205
  %2207 = vrot.lane.b32.xlu0 %v750, 96
  %v2208 = vpop.permute.xlu0 %2207
  %2209 = vrot.lane.b32.xlu0 %v752, 96
  %v2210 = vpop.permute.xlu0 %2209
  %2211 = vrot.lane.b32.xlu0 %v755, 96
  %v2212 = vpop.permute.xlu0 %2211
  %2213 = vrot.lane.b32.xlu0 %v757, 96
  %v2214 = vpop.permute.xlu0 %2213
  %2215 = vrot.lane.b32.xlu0 %v1028, 96
  %v2216 = vpop.permute.xlu0 %2215
  %2217 = vrot.lane.b32.xlu0 %v1030, 96
  %v2218 = vpop.permute.xlu0 %2217
  %2219 = vrot.lane.b32.xlu0 %v1056, 96
  %v2220 = vpop.permute.xlu0 %2219
  %2221 = vrot.lane.b32.xlu0 %v1058, 96
  %v2222 = vpop.permute.xlu0 %2221
  %2287 = vrot.lane.b32.xlu0 %v366, 112
  %v2288 = vpop.permute.xlu0 %2287
  %2289 = vrot.lane.b32.xlu0 %v367, 112
  %v2290 = vpop.permute.xlu0 %2289
  %2291 = vrot.lane.b32.xlu0 %v370, 112
  %v2292 = vpop.permute.xlu0 %2291
  %2293 = vrot.lane.b32.xlu0 %v371, 112
  %v2294 = vpop.permute.xlu0 %2293
  %2295 = vrot.lane.b32.xlu0 %v374, 112
  %v2296 = vpop.permute.xlu0 %2295
  %2297 = vrot.lane.b32.xlu0 %v375, 112
  %v2298 = vpop.permute.xlu0 %2297
  %2299 = vrot.lane.b32.xlu0 %v378, 112
  %v2300 = vpop.permute.xlu0 %2299
  %2301 = vrot.lane.b32.xlu0 %v379, 112
  %v2302 = vpop.permute.xlu0 %2301
  %2303 = vrot.lane.b32.xlu0 %v382, 112
  %v2304 = vpop.permute.xlu0 %2303
  %2305 = vrot.lane.b32.xlu0 %v383, 112
  %v2306 = vpop.permute.xlu0 %2305
  %2307 = vrot.lane.b32.xlu0 %v386, 112
  %v2308 = vpop.permute.xlu0 %2307
  %2309 = vrot.lane.b32.xlu0 %v387, 112
  %v2310 = vpop.permute.xlu0 %2309
  %2311 = vrot.lane.b32.xlu0 %v390, 112
  %v2312 = vpop.permute.xlu0 %2311
  %2313 = vrot.lane.b32.xlu0 %v391, 112
  %v2314 = vpop.permute.xlu0 %2313
  %2315 = vrot.lane.b32.xlu0 %v394, 112
  %v2316 = vpop.permute.xlu0 %2315
  %2317 = vrot.lane.b32.xlu0 %v395, 112
  %v2318 = vpop.permute.xlu0 %2317
  %2319 = vrot.lane.b32.xlu0 %v398, 112
  %v2320 = vpop.permute.xlu0 %2319
  %2321 = vrot.lane.b32.xlu0 %v399, 112
  %v2322 = vpop.permute.xlu0 %2321
  %2323 = vrot.lane.b32.xlu0 %v402, 112
  %v2324 = vpop.permute.xlu0 %2323
  %2325 = vrot.lane.b32.xlu0 %v403, 112
  %v2326 = vpop.permute.xlu0 %2325
  %2327 = vrot.lane.b32.xlu0 %v406, 112
  %v2328 = vpop.permute.xlu0 %2327
  %2329 = vrot.lane.b32.xlu0 %v407, 112
  %v2330 = vpop.permute.xlu0 %2329
  %2331 = vrot.lane.b32.xlu0 %v410, 112
  %v2332 = vpop.permute.xlu0 %2331
  %2333 = vrot.lane.b32.xlu0 %v411, 112
  %v2334 = vpop.permute.xlu0 %2333
  %2335 = vrot.lane.b32.xlu0 %v414, 112
  %v2336 = vpop.permute.xlu0 %2335
  %2337 = vrot.lane.b32.xlu0 %v415, 112
  %v2338 = vpop.permute.xlu0 %2337
  %2339 = vrot.lane.b32.xlu0 %v418, 112
  %v2340 = vpop.permute.xlu0 %2339
  %2341 = vrot.lane.b32.xlu0 %v419, 112
  %v2342 = vpop.permute.xlu0 %2341
  %2343 = vrot.lane.b32.xlu0 %v422, 112
  %v2344 = vpop.permute.xlu0 %2343
  %2345 = vrot.lane.b32.xlu0 %v423, 112
  %v2346 = vpop.permute.xlu0 %2345
  %2347 = vrot.lane.b32.xlu0 %v426, 112
  %v2348 = vpop.permute.xlu0 %2347
  %2349 = vrot.lane.b32.xlu0 %v427, 112
  %v2350 = vpop.permute.xlu0 %2349
  %2351 = vrot.lane.b32.xlu0 %v438, 112
  %v2352 = vpop.permute.xlu0 %2351
  %2353 = vrot.lane.b32.xlu0 %v439, 112
  %v2354 = vpop.permute.xlu0 %2353
  %2355 = vrot.lane.b32.xlu0 %v442, 112
  %v2356 = vpop.permute.xlu0 %2355
  %2357 = vrot.lane.b32.xlu0 %v443, 112
  %v2358 = vpop.permute.xlu0 %2357
  %2359 = vrot.lane.b32.xlu0 %v446, 112
  %v2360 = vpop.permute.xlu0 %2359
  %2361 = vrot.lane.b32.xlu0 %v447, 112
  %v2362 = vpop.permute.xlu0 %2361
  %2363 = vrot.lane.b32.xlu0 %v450, 112
  %v2364 = vpop.permute.xlu0 %2363
  %2365 = vrot.lane.b32.xlu0 %v451, 112
  %v2366 = vpop.permute.xlu0 %2365
  %2367 = vrot.lane.b32.xlu0 %v454, 112
  %v2368 = vpop.permute.xlu0 %2367
  %2369 = vrot.lane.b32.xlu0 %v455, 112
  %v2370 = vpop.permute.xlu0 %2369
  %2371 = vrot.lane.b32.xlu0 %v458, 112
  %v2372 = vpop.permute.xlu0 %2371
  %2373 = vrot.lane.b32.xlu0 %v459, 112
  %v2374 = vpop.permute.xlu0 %2373
  %2375 = vrot.lane.b32.xlu0 %v462, 112
  %v2376 = vpop.permute.xlu0 %2375
  %2377 = vrot.lane.b32.xlu0 %v463, 112
  %v2378 = vpop.permute.xlu0 %2377
  %2379 = vrot.lane.b32.xlu0 %v466, 112
  %v2380 = vpop.permute.xlu0 %2379
  %2381 = vrot.lane.b32.xlu0 %v467, 112
  %v2382 = vpop.permute.xlu0 %2381
  %2383 = vrot.lane.b32.xlu0 %v470, 112
  %v2384 = vpop.permute.xlu0 %2383
  %2385 = vrot.lane.b32.xlu0 %v471, 112
  %v2386 = vpop.permute.xlu0 %2385
  %2387 = vrot.lane.b32.xlu0 %v474, 112
  %v2388 = vpop.permute.xlu0 %2387
  %2389 = vrot.lane.b32.xlu0 %v475, 112
  %v2390 = vpop.permute.xlu0 %2389
  %2391 = vrot.lane.b32.xlu0 %v478, 112
  %v2392 = vpop.permute.xlu0 %2391
  %2393 = vrot.lane.b32.xlu0 %v479, 112
  %v2394 = vpop.permute.xlu0 %2393
  %2395 = vrot.lane.b32.xlu0 %v482, 112
  %v2396 = vpop.permute.xlu0 %2395
  %2397 = vrot.lane.b32.xlu0 %v483, 112
  %v2398 = vpop.permute.xlu0 %2397
  %2399 = vrot.lane.b32.xlu0 %v486, 112
  %v2400 = vpop.permute.xlu0 %2399
  %2401 = vrot.lane.b32.xlu0 %v487, 112
  %v2402 = vpop.permute.xlu0 %2401
  %2403 = vrot.lane.b32.xlu0 %v490, 112
  %v2404 = vpop.permute.xlu0 %2403
  %2405 = vrot.lane.b32.xlu0 %v491, 112
  %v2406 = vpop.permute.xlu0 %2405
  %2407 = vrot.lane.b32.xlu0 %v494, 112
  %v2408 = vpop.permute.xlu0 %2407
  %2409 = vrot.lane.b32.xlu0 %v495, 112
  %v2410 = vpop.permute.xlu0 %2409
  %2411 = vrot.lane.b32.xlu0 %v498, 112
  %v2412 = vpop.permute.xlu0 %2411
  %2413 = vrot.lane.b32.xlu0 %v499, 112
  %v2414 = vpop.permute.xlu0 %2413
  %v2479 = vsel %vm146, %v600, %v1136
  %v2480 = vsel %vm146, %v602, %v1138
  %v2481 = vsel %vm146, %v605, %v1140
  %v2482 = vsel %vm146, %v607, %v1142
  %v2483 = vsel %vm146, %v610, %v1144
  %v2484 = vsel %vm146, %v612, %v1146
  %v2485 = vsel %vm146, %v615, %v1148
  %v2486 = vsel %vm146, %v617, %v1150
  %v2487 = vsel %vm146, %v620, %v1152
  %v2488 = vsel %vm146, %v622, %v1154
  %v2489 = vsel %vm146, %v625, %v1156
  %v2490 = vsel %vm146, %v627, %v1158
  %v2491 = vsel %vm146, %v630, %v1160
  %v2492 = vsel %vm146, %v632, %v1162
  %v2493 = vsel %vm146, %v635, %v1164
  %v2494 = vsel %vm146, %v637, %v1166
  %v2495 = vsel %vm146, %v640, %v1168
  %v2496 = vsel %vm146, %v642, %v1170
  %v2497 = vsel %vm146, %v645, %v1172
  %v2498 = vsel %vm146, %v647, %v1174
  %v2499 = vsel %vm146, %v650, %v1176
  %v2500 = vsel %vm146, %v652, %v1178
  %v2501 = vsel %vm146, %v655, %v1180
  %v2502 = vsel %vm146, %v657, %v1182
  %v2503 = vsel %vm146, %v660, %v1184
  %v2504 = vsel %vm146, %v662, %v1186
  %v2505 = vsel %vm146, %v665, %v1188
  %v2506 = vsel %vm146, %v667, %v1190
  %v2507 = vsel %vm146, %v670, %v1192
  %v2508 = vsel %vm146, %v672, %v1194
  %v2509 = vsel %vm146, %v675, %v1196
  %v2510 = vsel %vm146, %v677, %v1198
  %v2511 = vsel %vm146, %v680, %v1200
  %v2512 = vsel %vm146, %v682, %v1202
  %v2513 = vsel %vm146, %v685, %v1204
  %v2514 = vsel %vm146, %v687, %v1206
  %v2515 = vsel %vm146, %v690, %v1208
  %v2516 = vsel %vm146, %v692, %v1210
  %v2517 = vsel %vm146, %v695, %v1212
  %v2518 = vsel %vm146, %v697, %v1214
  %v2519 = vsel %vm146, %v700, %v1216
  %v2520 = vsel %vm146, %v702, %v1218
  %v2521 = vsel %vm146, %v705, %v1220
  %v2522 = vsel %vm146, %v707, %v1222
  %v2523 = vsel %vm146, %v710, %v1224
  %v2524 = vsel %vm146, %v712, %v1226
  %v2525 = vsel %vm146, %v715, %v1228
  %v2526 = vsel %vm146, %v717, %v1230
  %v2527 = vsel %vm146, %v720, %v1232
  %v2528 = vsel %vm146, %v722, %v1234
  %v2529 = vsel %vm146, %v725, %v1236
  %v2530 = vsel %vm146, %v727, %v1238
  %v2531 = vsel %vm146, %v730, %v1240
  %v2532 = vsel %vm146, %v732, %v1242
  %v2533 = vsel %vm146, %v735, %v1244
  %v2534 = vsel %vm146, %v737, %v1246
  %v2535 = vsel %vm146, %v740, %v1248
  %v2536 = vsel %vm146, %v742, %v1250
  %v2537 = vsel %vm146, %v745, %v1252
  %v2538 = vsel %vm146, %v747, %v1254
  %v2539 = vsel %vm146, %v750, %v1256
  %v2540 = vsel %vm146, %v752, %v1258
  %v2541 = vsel %vm146, %v755, %v1260
  %v2542 = vsel %vm146, %v757, %v1262
  %vm2543 = vcmask 261120
  %v2544 = vsel %vm2543, %v2479, %v1328
  %v2545 = vsel %vm2543, %v2480, %v1330
  %v2546 = vsel %vm2543, %v2481, %v1332
  %v2547 = vsel %vm2543, %v2482, %v1334
  %v2548 = vsel %vm2543, %v2483, %v1336
  %v2549 = vsel %vm2543, %v2484, %v1338
  %v2550 = vsel %vm2543, %v2485, %v1340
  %v2551 = vsel %vm2543, %v2486, %v1342
  %v2552 = vsel %vm2543, %v2487, %v1344
  %v2553 = vsel %vm2543, %v2488, %v1346
  %v2554 = vsel %vm2543, %v2489, %v1348
  %v2555 = vsel %vm2543, %v2490, %v1350
  %v2556 = vsel %vm2543, %v2491, %v1352
  %v2557 = vsel %vm2543, %v2492, %v1354
  %v2558 = vsel %vm2543, %v2493, %v1356
  %v2559 = vsel %vm2543, %v2494, %v1358
  %v2560 = vsel %vm2543, %v2495, %v1360
  %v2561 = vsel %vm2543, %v2496, %v1362
  %v2562 = vsel %vm2543, %v2497, %v1364
  %v2563 = vsel %vm2543, %v2498, %v1366
  %v2564 = vsel %vm2543, %v2499, %v1368
  %v2565 = vsel %vm2543, %v2500, %v1370
  %v2566 = vsel %vm2543, %v2501, %v1372
  %v2567 = vsel %vm2543, %v2502, %v1374
  %v2568 = vsel %vm2543, %v2503, %v1376
  %v2569 = vsel %vm2543, %v2504, %v1378
  %v2570 = vsel %vm2543, %v2505, %v1380
  %v2571 = vsel %vm2543, %v2506, %v1382
  %v2572 = vsel %vm2543, %v2507, %v1384
  %v2573 = vsel %vm2543, %v2508, %v1386
  %v2574 = vsel %vm2543, %v2509, %v1388
  %v2575 = vsel %vm2543, %v2510, %v1390
  %v2576 = vsel %vm2543, %v2511, %v1392
  %v2577 = vsel %vm2543, %v2512, %v1394
  %v2578 = vsel %vm2543, %v2513, %v1396
  %v2579 = vsel %vm2543, %v2514, %v1398
  %v2580 = vsel %vm2543, %v2515, %v1400
  %v2581 = vsel %vm2543, %v2516, %v1402
  %v2582 = vsel %vm2543, %v2517, %v1404
  %v2583 = vsel %vm2543, %v2518, %v1406
  %v2584 = vsel %vm2543, %v2519, %v1408
  %v2585 = vsel %vm2543, %v2520, %v1410
  %v2586 = vsel %vm2543, %v2521, %v1412
  %v2587 = vsel %vm2543, %v2522, %v1414
  %v2588 = vsel %vm2543, %v2523, %v1416
  %v2589 = vsel %vm2543, %v2524, %v1418
  %v2590 = vsel %vm2543, %v2525, %v1420
  %v2591 = vsel %vm2543, %v2526, %v1422
  %v2592 = vsel %vm2543, %v2527, %v1424
  %v2593 = vsel %vm2543, %v2528, %v1426
  %v2594 = vsel %vm2543, %v2529, %v1428
  %v2595 = vsel %vm2543, %v2530, %v1430
  %v2596 = vsel %vm2543, %v2531, %v1432
  %v2597 = vsel %vm2543, %v2532, %v1434
  %v2598 = vsel %vm2543, %v2533, %v1436
  %v2599 = vsel %vm2543, %v2534, %v1438
  %v2600 = vsel %vm2543, %v2535, %v1440
  %v2601 = vsel %vm2543, %v2536, %v1442
  %v2602 = vsel %vm2543, %v2537, %v1444
  %v2603 = vsel %vm2543, %v2538, %v1446
  %v2604 = vsel %vm2543, %v2539, %v1448
  %v2605 = vsel %vm2543, %v2540, %v1450
  %v2606 = vsel %vm2543, %v2541, %v1452
  %v2607 = vsel %vm2543, %v2542, %v1454
  %vm2608 = vcmask 392192
  %v2609 = vsel %vm2608, %v2544, %v1520
  %v2610 = vsel %vm2608, %v2545, %v1522
  %v2611 = vsel %vm2608, %v2546, %v1524
  %v2612 = vsel %vm2608, %v2547, %v1526
  %v2613 = vsel %vm2608, %v2548, %v1528
  %v2614 = vsel %vm2608, %v2549, %v1530
  %v2615 = vsel %vm2608, %v2550, %v1532
  %v2616 = vsel %vm2608, %v2551, %v1534
  %v2617 = vsel %vm2608, %v2552, %v1536
  %v2618 = vsel %vm2608, %v2553, %v1538
  %v2619 = vsel %vm2608, %v2554, %v1540
  %v2620 = vsel %vm2608, %v2555, %v1542
  %v2621 = vsel %vm2608, %v2556, %v1544
  %v2622 = vsel %vm2608, %v2557, %v1546
  %v2623 = vsel %vm2608, %v2558, %v1548
  %v2624 = vsel %vm2608, %v2559, %v1550
  %v2625 = vsel %vm2608, %v2560, %v1552
  %v2626 = vsel %vm2608, %v2561, %v1554
  %v2627 = vsel %vm2608, %v2562, %v1556
  %v2628 = vsel %vm2608, %v2563, %v1558
  %v2629 = vsel %vm2608, %v2564, %v1560
  %v2630 = vsel %vm2608, %v2565, %v1562
  %v2631 = vsel %vm2608, %v2566, %v1564
  %v2632 = vsel %vm2608, %v2567, %v1566
  %v2633 = vsel %vm2608, %v2568, %v1568
  %v2634 = vsel %vm2608, %v2569, %v1570
  %v2635 = vsel %vm2608, %v2570, %v1572
  %v2636 = vsel %vm2608, %v2571, %v1574
  %v2637 = vsel %vm2608, %v2572, %v1576
  %v2638 = vsel %vm2608, %v2573, %v1578
  %v2639 = vsel %vm2608, %v2574, %v1580
  %v2640 = vsel %vm2608, %v2575, %v1582
  %v2641 = vsel %vm2608, %v2576, %v1584
  %v2642 = vsel %vm2608, %v2577, %v1586
  %v2643 = vsel %vm2608, %v2578, %v1588
  %v2644 = vsel %vm2608, %v2579, %v1590
  %v2645 = vsel %vm2608, %v2580, %v1592
  %v2646 = vsel %vm2608, %v2581, %v1594
  %v2647 = vsel %vm2608, %v2582, %v1596
  %v2648 = vsel %vm2608, %v2583, %v1598
  %v2649 = vsel %vm2608, %v2584, %v1600
  %v2650 = vsel %vm2608, %v2585, %v1602
  %v2651 = vsel %vm2608, %v2586, %v1604
  %v2652 = vsel %vm2608, %v2587, %v1606
  %v2653 = vsel %vm2608, %v2588, %v1608
  %v2654 = vsel %vm2608, %v2589, %v1610
  %v2655 = vsel %vm2608, %v2590, %v1612
  %v2656 = vsel %vm2608, %v2591, %v1614
  %v2657 = vsel %vm2608, %v2592, %v1616
  %v2658 = vsel %vm2608, %v2593, %v1618
  %v2659 = vsel %vm2608, %v2594, %v1620
  %v2660 = vsel %vm2608, %v2595, %v1622
  %v2661 = vsel %vm2608, %v2596, %v1624
  %v2662 = vsel %vm2608, %v2597, %v1626
  %v2663 = vsel %vm2608, %v2598, %v1628
  %v2664 = vsel %vm2608, %v2599, %v1630
  %v2665 = vsel %vm2608, %v2600, %v1632
  %v2666 = vsel %vm2608, %v2601, %v1634
  %v2667 = vsel %vm2608, %v2602, %v1636
  %v2668 = vsel %vm2608, %v2603, %v1638
  %v2669 = vsel %vm2608, %v2604, %v1640
  %v2670 = vsel %vm2608, %v2605, %v1642
  %v2671 = vsel %vm2608, %v2606, %v1644
  %v2672 = vsel %vm2608, %v2607, %v1646
  %vm2673 = vcmask 523264
  %v2674 = vsel %vm2673, %v2609, %v1712
  %v2675 = vsel %vm2673, %v2610, %v1714
  %v2676 = vsel %vm2673, %v2611, %v1716
  %v2677 = vsel %vm2673, %v2612, %v1718
  %v2678 = vsel %vm2673, %v2613, %v1720
  %v2679 = vsel %vm2673, %v2614, %v1722
  %v2680 = vsel %vm2673, %v2615, %v1724
  %v2681 = vsel %vm2673, %v2616, %v1726
  %v2682 = vsel %vm2673, %v2617, %v1728
  %v2683 = vsel %vm2673, %v2618, %v1730
  %v2684 = vsel %vm2673, %v2619, %v1732
  %v2685 = vsel %vm2673, %v2620, %v1734
  %v2686 = vsel %vm2673, %v2621, %v1736
  %v2687 = vsel %vm2673, %v2622, %v1738
  %v2688 = vsel %vm2673, %v2623, %v1740
  %v2689 = vsel %vm2673, %v2624, %v1742
  %v2690 = vsel %vm2673, %v2625, %v1744
  %v2691 = vsel %vm2673, %v2626, %v1746
  %v2692 = vsel %vm2673, %v2627, %v1748
  %v2693 = vsel %vm2673, %v2628, %v1750
  %v2694 = vsel %vm2673, %v2629, %v1752
  %v2695 = vsel %vm2673, %v2630, %v1754
  %v2696 = vsel %vm2673, %v2631, %v1756
  %v2697 = vsel %vm2673, %v2632, %v1758
  %v2698 = vsel %vm2673, %v2633, %v1760
  %v2699 = vsel %vm2673, %v2634, %v1762
  %v2700 = vsel %vm2673, %v2635, %v1764
  %v2701 = vsel %vm2673, %v2636, %v1766
  %v2702 = vsel %vm2673, %v2637, %v1768
  %v2703 = vsel %vm2673, %v2638, %v1770
  %v2704 = vsel %vm2673, %v2639, %v1772
  %v2705 = vsel %vm2673, %v2640, %v1774
  %v2706 = vsel %vm2673, %v2641, %v1776
  %v2707 = vsel %vm2673, %v2642, %v1778
  %v2708 = vsel %vm2673, %v2643, %v1780
  %v2709 = vsel %vm2673, %v2644, %v1782
  %v2710 = vsel %vm2673, %v2645, %v1784
  %v2711 = vsel %vm2673, %v2646, %v1786
  %v2712 = vsel %vm2673, %v2647, %v1788
  %v2713 = vsel %vm2673, %v2648, %v1790
  %v2714 = vsel %vm2673, %v2649, %v1792
  %v2715 = vsel %vm2673, %v2650, %v1794
  %v2716 = vsel %vm2673, %v2651, %v1796
  %v2717 = vsel %vm2673, %v2652, %v1798
  %v2718 = vsel %vm2673, %v2653, %v1800
  %v2719 = vsel %vm2673, %v2654, %v1802
  %v2720 = vsel %vm2673, %v2655, %v1804
  %v2721 = vsel %vm2673, %v2656, %v1806
  %v2722 = vsel %vm2673, %v2657, %v1808
  %v2723 = vsel %vm2673, %v2658, %v1810
  %v2724 = vsel %vm2673, %v2659, %v1812
  %v2725 = vsel %vm2673, %v2660, %v1814
  %v2726 = vsel %vm2673, %v2661, %v1816
  %v2727 = vsel %vm2673, %v2662, %v1818
  %v2728 = vsel %vm2673, %v2663, %v1820
  %v2729 = vsel %vm2673, %v2664, %v1822
  %v2730 = vsel %vm2673, %v2665, %v1824
  %v2731 = vsel %vm2673, %v2666, %v1826
  %v2732 = vsel %vm2673, %v2667, %v1828
  %v2733 = vsel %vm2673, %v2668, %v1830
  %v2734 = vsel %vm2673, %v2669, %v1832
  %v2735 = vsel %vm2673, %v2670, %v1834
  %v2736 = vsel %vm2673, %v2671, %v1836
  %v2737 = vsel %vm2673, %v2672, %v1838
  %vm2738 = vcmask 654336
  %v2739 = vsel %vm2738, %v2674, %v1904
  %v2740 = vsel %vm2738, %v2675, %v1906
  %v2741 = vsel %vm2738, %v2676, %v1908
  %v2742 = vsel %vm2738, %v2677, %v1910
  %v2743 = vsel %vm2738, %v2678, %v1912
  %v2744 = vsel %vm2738, %v2679, %v1914
  %v2745 = vsel %vm2738, %v2680, %v1916
  %v2746 = vsel %vm2738, %v2681, %v1918
  %v2747 = vsel %vm2738, %v2682, %v1920
  %v2748 = vsel %vm2738, %v2683, %v1922
  %v2749 = vsel %vm2738, %v2684, %v1924
  %v2750 = vsel %vm2738, %v2685, %v1926
  %v2751 = vsel %vm2738, %v2686, %v1928
  %v2752 = vsel %vm2738, %v2687, %v1930
  %v2753 = vsel %vm2738, %v2688, %v1932
  %v2754 = vsel %vm2738, %v2689, %v1934
  %v2755 = vsel %vm2738, %v2690, %v1936
  %v2756 = vsel %vm2738, %v2691, %v1938
  %v2757 = vsel %vm2738, %v2692, %v1940
  %v2758 = vsel %vm2738, %v2693, %v1942
  %v2759 = vsel %vm2738, %v2694, %v1944
  %v2760 = vsel %vm2738, %v2695, %v1946
  %v2761 = vsel %vm2738, %v2696, %v1948
  %v2762 = vsel %vm2738, %v2697, %v1950
  %v2763 = vsel %vm2738, %v2698, %v1952
  %v2764 = vsel %vm2738, %v2699, %v1954
  %v2765 = vsel %vm2738, %v2700, %v1956
  %v2766 = vsel %vm2738, %v2701, %v1958
  %v2767 = vsel %vm2738, %v2702, %v1960
  %v2768 = vsel %vm2738, %v2703, %v1962
  %v2769 = vsel %vm2738, %v2704, %v1964
  %v2770 = vsel %vm2738, %v2705, %v1966
  %v2771 = vsel %vm2738, %v2706, %v1968
  %v2772 = vsel %vm2738, %v2707, %v1970
  %v2773 = vsel %vm2738, %v2708, %v1972
  %v2774 = vsel %vm2738, %v2709, %v1974
  %v2775 = vsel %vm2738, %v2710, %v1976
  %v2776 = vsel %vm2738, %v2711, %v1978
  %v2777 = vsel %vm2738, %v2712, %v1980
  %v2778 = vsel %vm2738, %v2713, %v1982
  %v2779 = vsel %vm2738, %v2714, %v1984
  %v2780 = vsel %vm2738, %v2715, %v1986
  %v2781 = vsel %vm2738, %v2716, %v1988
  %v2782 = vsel %vm2738, %v2717, %v1990
  %v2783 = vsel %vm2738, %v2718, %v1992
  %v2784 = vsel %vm2738, %v2719, %v1994
  %v2785 = vsel %vm2738, %v2720, %v1996
  %v2786 = vsel %vm2738, %v2721, %v1998
  %v2787 = vsel %vm2738, %v2722, %v2000
  %v2788 = vsel %vm2738, %v2723, %v2002
  %v2789 = vsel %vm2738, %v2724, %v2004
  %v2790 = vsel %vm2738, %v2725, %v2006
  %v2791 = vsel %vm2738, %v2726, %v2008
  %v2792 = vsel %vm2738, %v2727, %v2010
  %v2793 = vsel %vm2738, %v2728, %v2012
  %v2794 = vsel %vm2738, %v2729, %v2014
  %v2795 = vsel %vm2738, %v2730, %v2016
  %v2796 = vsel %vm2738, %v2731, %v2018
  %v2797 = vsel %vm2738, %v2732, %v2020
  %v2798 = vsel %vm2738, %v2733, %v2022
  %v2799 = vsel %vm2738, %v2734, %v2024
  %v2800 = vsel %vm2738, %v2735, %v2026
  %v2801 = vsel %vm2738, %v2736, %v2028
  %v2802 = vsel %vm2738, %v2737, %v2030
  %vm2803 = vcmask 785408
  %v2804 = vsel %vm2803, %v2739, %v2096
  %v2805 = vsel %vm2803, %v2740, %v2098
  %v2806 = vsel %vm2803, %v2741, %v2100
  %v2807 = vsel %vm2803, %v2742, %v2102
  %v2808 = vsel %vm2803, %v2743, %v2104
  %v2809 = vsel %vm2803, %v2744, %v2106
  %v2810 = vsel %vm2803, %v2745, %v2108
  %v2811 = vsel %vm2803, %v2746, %v2110
  %v2812 = vsel %vm2803, %v2747, %v2112
  %v2813 = vsel %vm2803, %v2748, %v2114
  %v2814 = vsel %vm2803, %v2749, %v2116
  %v2815 = vsel %vm2803, %v2750, %v2118
  %v2816 = vsel %vm2803, %v2751, %v2120
  %v2817 = vsel %vm2803, %v2752, %v2122
  %v2818 = vsel %vm2803, %v2753, %v2124
  %v2819 = vsel %vm2803, %v2754, %v2126
  %v2820 = vsel %vm2803, %v2755, %v2128
  %v2821 = vsel %vm2803, %v2756, %v2130
  %v2822 = vsel %vm2803, %v2757, %v2132
  %v2823 = vsel %vm2803, %v2758, %v2134
  %v2824 = vsel %vm2803, %v2759, %v2136
  %v2825 = vsel %vm2803, %v2760, %v2138
  %v2826 = vsel %vm2803, %v2761, %v2140
  %v2827 = vsel %vm2803, %v2762, %v2142
  %v2828 = vsel %vm2803, %v2763, %v2144
  %v2829 = vsel %vm2803, %v2764, %v2146
  %v2830 = vsel %vm2803, %v2765, %v2148
  %v2831 = vsel %vm2803, %v2766, %v2150
  %v2832 = vsel %vm2803, %v2767, %v2152
  %v2833 = vsel %vm2803, %v2768, %v2154
  %v2834 = vsel %vm2803, %v2769, %v2156
  %v2835 = vsel %vm2803, %v2770, %v2158
  %v2836 = vsel %vm2803, %v2771, %v2160
  %v2837 = vsel %vm2803, %v2772, %v2162
  %v2838 = vsel %vm2803, %v2773, %v2164
  %v2839 = vsel %vm2803, %v2774, %v2166
  %v2840 = vsel %vm2803, %v2775, %v2168
  %v2841 = vsel %vm2803, %v2776, %v2170
  %v2842 = vsel %vm2803, %v2777, %v2172
  %v2843 = vsel %vm2803, %v2778, %v2174
  %v2844 = vsel %vm2803, %v2779, %v2176
  %v2845 = vsel %vm2803, %v2780, %v2178
  %v2846 = vsel %vm2803, %v2781, %v2180
  %v2847 = vsel %vm2803, %v2782, %v2182
  %v2848 = vsel %vm2803, %v2783, %v2184
  %v2849 = vsel %vm2803, %v2784, %v2186
  %v2850 = vsel %vm2803, %v2785, %v2188
  %v2851 = vsel %vm2803, %v2786, %v2190
  %v2852 = vsel %vm2803, %v2787, %v2192
  %v2853 = vsel %vm2803, %v2788, %v2194
  %v2854 = vsel %vm2803, %v2789, %v2196
  %v2855 = vsel %vm2803, %v2790, %v2198
  %v2856 = vsel %vm2803, %v2791, %v2200
  %v2857 = vsel %vm2803, %v2792, %v2202
  %v2858 = vsel %vm2803, %v2793, %v2204
  %v2859 = vsel %vm2803, %v2794, %v2206
  %v2860 = vsel %vm2803, %v2795, %v2208
  %v2861 = vsel %vm2803, %v2796, %v2210
  %v2862 = vsel %vm2803, %v2797, %v2212
  %v2863 = vsel %vm2803, %v2798, %v2214
  %v2864 = vsel %vm2803, %v2799, %v2216
  %v2865 = vsel %vm2803, %v2800, %v2218
  %v2866 = vsel %vm2803, %v2801, %v2220
  %v2867 = vsel %vm2803, %v2802, %v2222
  %vm2868 = vcmask 916480
  %v2869 = vsel %vm2868, %v2804, %v2288
  %v2870 = vsel %vm2868, %v2805, %v2290
  %v2871 = vsel %vm2868, %v2806, %v2292
  %v2872 = vsel %vm2868, %v2807, %v2294
  %v2873 = vsel %vm2868, %v2808, %v2296
  %v2874 = vsel %vm2868, %v2809, %v2298
  %v2875 = vsel %vm2868, %v2810, %v2300
  %v2876 = vsel %vm2868, %v2811, %v2302
  %v2877 = vsel %vm2868, %v2812, %v2304
  %v2878 = vsel %vm2868, %v2813, %v2306
  %v2879 = vsel %vm2868, %v2814, %v2308
  %v2880 = vsel %vm2868, %v2815, %v2310
  %v2881 = vsel %vm2868, %v2816, %v2312
  %v2882 = vsel %vm2868, %v2817, %v2314
  %v2883 = vsel %vm2868, %v2818, %v2316
  %v2884 = vsel %vm2868, %v2819, %v2318
  %v2885 = vsel %vm2868, %v2820, %v2320
  %v2886 = vsel %vm2868, %v2821, %v2322
  %v2887 = vsel %vm2868, %v2822, %v2324
  %v2888 = vsel %vm2868, %v2823, %v2326
  %v2889 = vsel %vm2868, %v2824, %v2328
  %v2890 = vsel %vm2868, %v2825, %v2330
  %v2891 = vsel %vm2868, %v2826, %v2332
  %v2892 = vsel %vm2868, %v2827, %v2334
  %v2893 = vsel %vm2868, %v2828, %v2336
  %v2894 = vsel %vm2868, %v2829, %v2338
  %v2895 = vsel %vm2868, %v2830, %v2340
  %v2896 = vsel %vm2868, %v2831, %v2342
  %v2897 = vsel %vm2868, %v2832, %v2344
  %v2898 = vsel %vm2868, %v2833, %v2346
  %v2899 = vsel %vm2868, %v2834, %v2348
  %v2900 = vsel %vm2868, %v2835, %v2350
  %v2901 = vsel %vm2868, %v2836, %v2352
  %v2902 = vsel %vm2868, %v2837, %v2354
  %v2903 = vsel %vm2868, %v2838, %v2356
  %v2904 = vsel %vm2868, %v2839, %v2358
  %v2905 = vsel %vm2868, %v2840, %v2360
  %v2906 = vsel %vm2868, %v2841, %v2362
  %v2907 = vsel %vm2868, %v2842, %v2364
  %v2908 = vsel %vm2868, %v2843, %v2366
  %v2909 = vsel %vm2868, %v2844, %v2368
  %v2910 = vsel %vm2868, %v2845, %v2370
  %v2911 = vsel %vm2868, %v2846, %v2372
  %v2912 = vsel %vm2868, %v2847, %v2374
  %v2913 = vsel %vm2868, %v2848, %v2376
  %v2914 = vsel %vm2868, %v2849, %v2378
  %v2915 = vsel %vm2868, %v2850, %v2380
  %v2916 = vsel %vm2868, %v2851, %v2382
  %v2917 = vsel %vm2868, %v2852, %v2384
  %v2918 = vsel %vm2868, %v2853, %v2386
  %v2919 = vsel %vm2868, %v2854, %v2388
  %v2920 = vsel %vm2868, %v2855, %v2390
  %v2921 = vsel %vm2868, %v2856, %v2392
  %v2922 = vsel %vm2868, %v2857, %v2394
  %v2923 = vsel %vm2868, %v2858, %v2396
  %v2924 = vsel %vm2868, %v2859, %v2398
  %v2925 = vsel %vm2868, %v2860, %v2400
  %v2926 = vsel %vm2868, %v2861, %v2402
  %v2927 = vsel %vm2868, %v2862, %v2404
  %v2928 = vsel %vm2868, %v2863, %v2406
  %v2929 = vsel %vm2868, %v2864, %v2408
  %v2930 = vsel %vm2868, %v2865, %v2410
  %v2931 = vsel %vm2868, %v2866, %v2412
  %v2932 = vsel %vm2868, %v2867, %v2414
  %v2933 = vpack.c.bf16 %v2870, %v2869
  %v2934 = vpack.c.bf16 %v869, %v867
  %v2935 = vpack.c.bf16 %v2872, %v2871
  %v2936 = vpack.c.bf16 %v874, %v872
  %v2937 = vpack.c.bf16 %v2874, %v2873
  %v2938 = vpack.c.bf16 %v879, %v877
  %v2939 = vpack.c.bf16 %v2876, %v2875
  %v2940 = vpack.c.bf16 %v884, %v882
  %v2941 = vpack.c.bf16 %v2878, %v2877
  %v2942 = vpack.c.bf16 %v889, %v887
  %v2943 = vpack.c.bf16 %v2880, %v2879
  %v2944 = vpack.c.bf16 %v894, %v892
  %v2945 = vpack.c.bf16 %v2882, %v2881
  %v2946 = vpack.c.bf16 %v899, %v897
  %v2947 = vpack.c.bf16 %v2884, %v2883
  %v2948 = vpack.c.bf16 %v904, %v902
  %v2949 = vpack.c.bf16 %v2886, %v2885
  %v2950 = vpack.c.bf16 %v909, %v907
  %v2951 = vpack.c.bf16 %v2888, %v2887
  %v2952 = vpack.c.bf16 %v914, %v912
  %v2953 = vpack.c.bf16 %v2890, %v2889
  %v2954 = vpack.c.bf16 %v919, %v917
  %v2955 = vpack.c.bf16 %v2892, %v2891
  %v2956 = vpack.c.bf16 %v924, %v922
  %v2957 = vpack.c.bf16 %v2894, %v2893
  %v2958 = vpack.c.bf16 %v929, %v927
  %v2959 = vpack.c.bf16 %v2896, %v2895
  %v2960 = vpack.c.bf16 %v934, %v932
  %v2961 = vpack.c.bf16 %v2898, %v2897
  %v2962 = vpack.c.bf16 %v1037, %v1035
  %v2963 = vpack.c.bf16 %v2900, %v2899
  %v2964 = vpack.c.bf16 %v1065, %v1063
  %v2965 = vpack.c.bf16 %v2902, %v2901
  %v2966 = vpack.c.bf16 %v949, %v947
  %v2967 = vpack.c.bf16 %v2904, %v2903
  %v2968 = vpack.c.bf16 %v954, %v952
  %v2969 = vpack.c.bf16 %v2906, %v2905
  %v2970 = vpack.c.bf16 %v959, %v957
  %v2971 = vpack.c.bf16 %v2908, %v2907
  %v2972 = vpack.c.bf16 %v964, %v962
  %v2973 = vpack.c.bf16 %v2910, %v2909
  %v2974 = vpack.c.bf16 %v969, %v967
  %v2975 = vpack.c.bf16 %v2912, %v2911
  %v2976 = vpack.c.bf16 %v974, %v972
  %v2977 = vpack.c.bf16 %v2914, %v2913
  %v2978 = vpack.c.bf16 %v979, %v977
  %v2979 = vpack.c.bf16 %v2916, %v2915
  %v2980 = vpack.c.bf16 %v984, %v982
  %v2981 = vpack.c.bf16 %v2918, %v2917
  %v2982 = vpack.c.bf16 %v989, %v987
  %v2983 = vpack.c.bf16 %v2920, %v2919
  %v2984 = vpack.c.bf16 %v994, %v992
  %v2985 = vpack.c.bf16 %v2922, %v2921
  %v2986 = vpack.c.bf16 %v999, %v997
  %v2987 = vpack.c.bf16 %v2924, %v2923
  %v2988 = vpack.c.bf16 %v1004, %v1002
  %v2989 = vpack.c.bf16 %v2926, %v2925
  %v2990 = vpack.c.bf16 %v1009, %v1007
  %v2991 = vpack.c.bf16 %v2928, %v2927
  %v2992 = vpack.c.bf16 %v1014, %v1012
  %v2993 = vpack.c.bf16 %v2930, %v2929
  %v2994 = vpack.c.bf16 %v1042, %v1040
  %v2995 = vpack.c.bf16 %v2932, %v2931
  %v2996 = vpack.c.bf16 %v1070, %v1068
  %v2997 = vld [vmem:[%s1] sm:$0xf]
  %v2998 = vld [vmem:[%s1 + $0x4] sm:$0xf]
  %v2999 = vld [vmem:[%s1 + $0x8] sm:$0xf]
  %v3000 = vld [vmem:[%s1 + $0xc] sm:$0xf]
  %v3001 = vld [vmem:[%s1 + $0x10] sm:$0xf]
  %v3002 = vld [vmem:[%s1 + $0x14] sm:$0xf]
  %v3003 = vld [vmem:[%s1 + $0x18] sm:$0xf]
  %v3004 = vld [vmem:[%s1 + $0x1c] sm:$0xf]
  %v3005 = vld [vmem:[%s1 + $0x20] sm:$0xf]
  %v3006 = vld [vmem:[%s1 + $0x24] sm:$0xf]
  %v3007 = vld [vmem:[%s1 + $0x28] sm:$0xf]
  %v3008 = vld [vmem:[%s1 + $0x2c] sm:$0xf]
  %v3009 = vld [vmem:[%s1 + $0x30] sm:$0xf]
  %v3010 = vld [vmem:[%s1 + $0x34] sm:$0xf]
  %v3011 = vld [vmem:[%s1 + $0x38] sm:$0xf]
  %v3012 = vld [vmem:[%s1 + $0x3c] sm:$0xf]
  %v3013 = vld [vmem:[%s1 + $0x40] sm:$0xf]
  %v3014 = vld [vmem:[%s1 + $0x44] sm:$0xf]
  %v3015 = vld [vmem:[%s2] sm:$0x1]
  %v3017 = vlaneseq
  %v3018 = vshrl.u32 %v3017, 7
  %v3019 = vsub.s32 0, %v3018
  %v3020 = vrot.slane %v3015, %v3019
  %v3040 = vunpack.c.l.b16 %v2997
  %v3041 = vunpack.c.l.b16 %v2998
  %v3042 = vunpack.c.l.b16 %v2999
  %v3043 = vunpack.c.l.b16 %v3000
  %v3044 = vunpack.c.l.b16 %v3001
  %v3045 = vunpack.c.l.b16 %v3002
  %v3046 = vunpack.c.l.b16 %v3003
  %v3047 = vunpack.c.l.b16 %v3004
  %v3048 = vunpack.c.l.b16 %v3005
  %v3049 = vunpack.c.l.b16 %v3006
  %v3050 = vunpack.c.l.b16 %v3007
  %v3051 = vunpack.c.l.b16 %v3008
  %v3052 = vunpack.c.l.b16 %v3009
  %v3053 = vunpack.c.l.b16 %v3010
  %v3054 = vunpack.c.l.b16 %v3011
  %v3055 = vunpack.c.l.b16 %v3012
  %v3056 = vunpack.c.l.b16 %v3013
  %v3057 = vunpack.c.l.b16 %v3014
  %v3058 = vpack.c.b16 %v3041, %v3040
  %v3059 = vpack.c.b16 %v3043, %v3042
  %v3060 = vpack.c.b16 %v3045, %v3044
  %v3061 = vpack.c.b16 %v3047, %v3046
  %v3062 = vpack.c.b16 %v3049, %v3048
  %v3063 = vpack.c.b16 %v3051, %v3050
  %v3064 = vpack.c.b16 %v3053, %v3052
  %v3065 = vpack.c.b16 %v3055, %v3054
  %v3066 = vpack.c.b16 %v3057, %v3056
  %v3077 = vsel %vm146, %v2934, 0
  %v3080 = vsel %vm146, %v2936, 0
  %v3083 = vsel %vm146, %v2938, 0
  %v3086 = vsel %vm146, %v2940, 0
  %v3089 = vsel %vm146, %v2942, 0
  %v3092 = vsel %vm146, %v2944, 0
  %v3095 = vsel %vm146, %v2946, 0
  %v3098 = vsel %vm146, %v2948, 0
  %v3101 = vsel %vm146, %v2950, 0
  %v3104 = vsel %vm146, %v2952, 0
  %v3107 = vsel %vm146, %v2954, 0
  %v3110 = vsel %vm146, %v2956, 0
  %v3113 = vsel %vm146, %v2958, 0
  %v3116 = vsel %vm146, %v2960, 0
  %v3119 = vsel %vm146, %v2962, 0
  %v3122 = vsel %vm146, %v2964, 0
  %v3125 = vsel %vm146, %v2966, 0
  %v3128 = vsel %vm146, %v2968, 0
  %v3131 = vsel %vm146, %v2970, 0
  %v3134 = vsel %vm146, %v2972, 0
  %v3137 = vsel %vm146, %v2974, 0
  %v3140 = vsel %vm146, %v2976, 0
  %v3143 = vsel %vm146, %v2978, 0
  %v3146 = vsel %vm146, %v2980, 0
  %v3149 = vsel %vm146, %v2982, 0
  %v3152 = vsel %vm146, %v2984, 0
  %v3155 = vsel %vm146, %v2986, 0
  %v3158 = vsel %vm146, %v2988, 0
  %v3161 = vsel %vm146, %v2990, 0
  %v3164 = vsel %vm146, %v2992, 0
  %v3167 = vsel %vm146, %v2994, 0
  %v3170 = vsel %vm146, %v2996, 0
  %3172 = vmatprep.subr.bf16.mxu0 0
  %3173 = vmatpush1.bf16.msra.mxu0 %v3058
  %3174 = vmatprep.subr.bf16.mxu0 0
  %3175 = vmatpush1.bf16.msra.mxu0 %v3059
  %3176 = vmatprep.subr.bf16.mxu0 0
  %3177 = vmatpush1.bf16.msra.mxu0 %v3060
  %3178 = vmatprep.subr.bf16.mxu0 0
  %3179 = vmatpush1.bf16.msra.mxu0 %v3061
  %3180 = vmatprep.subr.bf16.mxu0 0
  %3181 = vmatpush1.bf16.msra.mxu0 %v3062
  %3182 = vmatprep.subr.bf16.mxu0 0
  %3183 = vmatpush1.bf16.msra.mxu0 %v3063
  %3184 = vmatprep.subr.bf16.mxu0 0
  %3185 = vmatpush1.bf16.msra.mxu0 %v3064
  %3186 = vmatprep.subr.bf16.mxu0 0
  %3187 = vmatpush1.bf16.msra.mxu0 %v3065
  %3188 = vmatprep.subr.bf16.mxu0 0
  %3189 = vmatpush1.bf16.msra.mxu0 %v3066
  %3190 = vmatprep.subr.bf16.mxu0 0
  %3191 = vmatpush1.bf16.msra.mxu0 0
  %3192 = vmatprep.subr.bf16.mxu0 0
  %3193 = vmatpush1.bf16.msra.mxu0 0
  %3194 = vmatprep.subr.bf16.mxu0 0
  %3195 = vmatpush1.bf16.msra.mxu0 0
  %3196 = vmatprep.subr.bf16.mxu0 0
  %3197 = vmatpush1.bf16.msra.mxu0 0
  %3198 = vmatprep.subr.bf16.mxu0 0
  %3199 = vmatpush1.bf16.msra.mxu0 0
  %3200 = vmatprep.subr.bf16.mxu0 0
  %3201 = vmatpush1.bf16.msra.mxu0 0
  %3202 = vmatprep.subr.bf16.mxu0 0
  %3203 = vmatpush1.bf16.msra.mxu0 0
  %3204 = vmatprep.mubr.bf16.mxu0 %v3077
  %3205 = vmatmul.mubr.bf16.gmra.mrb[0].mxu0 %v2933
  %v3206 = vpop.f32.mrb[0].mxu0
  %v3207 = vadd.f32 %v3020, %v3206
  %v3208 = vpop.f32.mrb[0].mxu0
  %v3209 = vpop.f32.mrb[0].mxu0
  %v3210 = vadd.f32 %v3020, %v3209
  %v3211 = vpop.f32.mrb[0].mxu0
  %3212 = vmatprep.mubr.bf16.mxu0 %v3080
  %3213 = vmatmul.mubr.bf16.gmra.mrb[0].mxu0 %v2935
  %v3214 = vpop.f32.mrb[0].mxu0
  %v3215 = vadd.f32 %v3020, %v3214
  %v3216 = vpop.f32.mrb[0].mxu0
  %v3217 = vpop.f32.mrb[0].mxu0
  %v3218 = vadd.f32 %v3020, %v3217
  %v3219 = vpop.f32.mrb[0].mxu0
  %3220 = vmatprep.mubr.bf16.mxu0 %v3083
  %3221 = vmatmul.mubr.bf16.gmra.mrb[0].mxu0 %v2937
  %v3222 = vpop.f32.mrb[0].mxu0
  %v3223 = vadd.f32 %v3020, %v3222
  %v3224 = vpop.f32.mrb[0].mxu0
  %v3225 = vpop.f32.mrb[0].mxu0
  %v3226 = vadd.f32 %v3020, %v3225
  %v3227 = vpop.f32.mrb[0].mxu0
  %3228 = vmatprep.mubr.bf16.mxu0 %v3086
  %3229 = vmatmul.mubr.bf16.gmra.mrb[0].mxu0 %v2939
  %v3230 = vpop.f32.mrb[0].mxu0
  %v3231 = vadd.f32 %v3020, %v3230
  %v3232 = vpop.f32.mrb[0].mxu0
  %v3233 = vpop.f32.mrb[0].mxu0
  %v3234 = vadd.f32 %v3020, %v3233
  %v3235 = vpop.f32.mrb[0].mxu0
  %3236 = vmatprep.mubr.bf16.mxu0 %v3089
  %3237 = vmatmul.mubr.bf16.gmra.mrb[0].mxu0 %v2941
  %v3238 = vpop.f32.mrb[0].mxu0
  %v3239 = vadd.f32 %v3020, %v3238
  %v3240 = vpop.f32.mrb[0].mxu0
  %v3241 = vpop.f32.mrb[0].mxu0
  %v3242 = vadd.f32 %v3020, %v3241
  %v3243 = vpop.f32.mrb[0].mxu0
  %3244 = vmatprep.mubr.bf16.mxu0 %v3092
  %3245 = vmatmul.mubr.bf16.gmra.mrb[0].mxu0 %v2943
  %v3246 = vpop.f32.mrb[0].mxu0
  %v3247 = vadd.f32 %v3020, %v3246
  %v3248 = vpop.f32.mrb[0].mxu0
  %v3249 = vpop.f32.mrb[0].mxu0
  %v3250 = vadd.f32 %v3020, %v3249
  %v3251 = vpop.f32.mrb[0].mxu0
  %3252 = vmatprep.mubr.bf16.mxu0 %v3095
  %3253 = vmatmul.mubr.bf16.gmra.mrb[0].mxu0 %v2945
  %v3254 = vpop.f32.mrb[0].mxu0
  %v3255 = vadd.f32 %v3020, %v3254
  %v3256 = vpop.f32.mrb[0].mxu0
  %v3257 = vpop.f32.mrb[0].mxu0
  %v3258 = vadd.f32 %v3020, %v3257
  %v3259 = vpop.f32.mrb[0].mxu0
  %3260 = vmatprep.mubr.bf16.mxu0 %v3098
  %3261 = vmatmul.mubr.bf16.gmra.mrb[0].mxu0 %v2947
  %v3262 = vpop.f32.mrb[0].mxu0
  %v3263 = vadd.f32 %v3020, %v3262
  %v3264 = vpop.f32.mrb[0].mxu0
  %v3265 = vpop.f32.mrb[0].mxu0
  %v3266 = vadd.f32 %v3020, %v3265
  %v3267 = vpop.f32.mrb[0].mxu0
  %3268 = vmatprep.mubr.bf16.mxu0 %v3101
  %3269 = vmatmul.mubr.bf16.gmra.mrb[0].mxu0 %v2949
  %v3270 = vpop.f32.mrb[0].mxu0
  %v3271 = vadd.f32 %v3020, %v3270
  %v3272 = vpop.f32.mrb[0].mxu0
  %v3273 = vpop.f32.mrb[0].mxu0
  %v3274 = vadd.f32 %v3020, %v3273
  %v3275 = vpop.f32.mrb[0].mxu0
  %3276 = vmatprep.mubr.bf16.mxu0 %v3104
  %3277 = vmatmul.mubr.bf16.gmra.mrb[0].mxu0 %v2951
  %v3278 = vpop.f32.mrb[0].mxu0
  %v3279 = vadd.f32 %v3020, %v3278
  %v3280 = vpop.f32.mrb[0].mxu0
  %v3281 = vpop.f32.mrb[0].mxu0
  %v3282 = vadd.f32 %v3020, %v3281
  %v3283 = vpop.f32.mrb[0].mxu0
  %3284 = vmatprep.mubr.bf16.mxu0 %v3107
  %3285 = vmatmul.mubr.bf16.gmra.mrb[0].mxu0 %v2953
  %v3286 = vpop.f32.mrb[0].mxu0
  %v3287 = vadd.f32 %v3020, %v3286
  %v3288 = vpop.f32.mrb[0].mxu0
  %v3289 = vpop.f32.mrb[0].mxu0
  %v3290 = vadd.f32 %v3020, %v3289
  %v3291 = vpop.f32.mrb[0].mxu0
  %3292 = vmatprep.mubr.bf16.mxu0 %v3110
  %3293 = vmatmul.mubr.bf16.gmra.mrb[0].mxu0 %v2955
  %v3294 = vpop.f32.mrb[0].mxu0
  %v3295 = vadd.f32 %v3020, %v3294
  %v3296 = vpop.f32.mrb[0].mxu0
  %v3297 = vpop.f32.mrb[0].mxu0
  %v3298 = vadd.f32 %v3020, %v3297
  %v3299 = vpop.f32.mrb[0].mxu0
  %3300 = vmatprep.mubr.bf16.mxu0 %v3113
  %3301 = vmatmul.mubr.bf16.gmra.mrb[0].mxu0 %v2957
  %v3302 = vpop.f32.mrb[0].mxu0
  %v3303 = vadd.f32 %v3020, %v3302
  %v3304 = vpop.f32.mrb[0].mxu0
  %v3305 = vpop.f32.mrb[0].mxu0
  %v3306 = vadd.f32 %v3020, %v3305
  %v3307 = vpop.f32.mrb[0].mxu0
  %3308 = vmatprep.mubr.bf16.mxu0 %v3116
  %3309 = vmatmul.mubr.bf16.gmra.mrb[0].mxu0 %v2959
  %v3310 = vpop.f32.mrb[0].mxu0
  %v3311 = vadd.f32 %v3020, %v3310
  %v3312 = vpop.f32.mrb[0].mxu0
  %v3313 = vpop.f32.mrb[0].mxu0
  %v3314 = vadd.f32 %v3020, %v3313
  %v3315 = vpop.f32.mrb[0].mxu0
  %3316 = vmatprep.mubr.bf16.mxu0 %v3119
  %3317 = vmatmul.mubr.bf16.gmra.mrb[0].mxu0 %v2961
  %v3318 = vpop.f32.mrb[0].mxu0
  %v3319 = vadd.f32 %v3020, %v3318
  %v3320 = vpop.f32.mrb[0].mxu0
  %v3321 = vpop.f32.mrb[0].mxu0
  %v3322 = vadd.f32 %v3020, %v3321
  %v3323 = vpop.f32.mrb[0].mxu0
  %3324 = vmatprep.mubr.bf16.mxu0 %v3122
  %3325 = vmatmul.mubr.bf16.gmra.mrb[0].mxu0 %v2963
  %v3326 = vpop.f32.mrb[0].mxu0
  %v3327 = vadd.f32 %v3020, %v3326
  %v3328 = vpop.f32.mrb[0].mxu0
  %v3329 = vpop.f32.mrb[0].mxu0
  %v3330 = vadd.f32 %v3020, %v3329
  %v3331 = vpop.f32.mrb[0].mxu0
  %3332 = vmatprep.mubr.bf16.mxu0 %v3125
  %3333 = vmatmul.mubr.bf16.gmra.mrb[0].mxu0 %v2965
  %v3334 = vpop.f32.mrb[0].mxu0
  %v3335 = vadd.f32 %v3020, %v3334
  %v3336 = vpop.f32.mrb[0].mxu0
  %v3337 = vpop.f32.mrb[0].mxu0
  %v3338 = vadd.f32 %v3020, %v3337
  %v3339 = vpop.f32.mrb[0].mxu0
  %3340 = vmatprep.mubr.bf16.mxu0 %v3128
  %3341 = vmatmul.mubr.bf16.gmra.mrb[0].mxu0 %v2967
  %v3342 = vpop.f32.mrb[0].mxu0
  %v3343 = vadd.f32 %v3020, %v3342
  %v3344 = vpop.f32.mrb[0].mxu0
  %v3345 = vpop.f32.mrb[0].mxu0
  %v3346 = vadd.f32 %v3020, %v3345
  %v3347 = vpop.f32.mrb[0].mxu0
  %3348 = vmatprep.mubr.bf16.mxu0 %v3131
  %3349 = vmatmul.mubr.bf16.gmra.mrb[0].mxu0 %v2969
  %v3350 = vpop.f32.mrb[0].mxu0
  %v3351 = vadd.f32 %v3020, %v3350
  %v3352 = vpop.f32.mrb[0].mxu0
  %v3353 = vpop.f32.mrb[0].mxu0
  %v3354 = vadd.f32 %v3020, %v3353
  %v3355 = vpop.f32.mrb[0].mxu0
  %3356 = vmatprep.mubr.bf16.mxu0 %v3134
  %3357 = vmatmul.mubr.bf16.gmra.mrb[0].mxu0 %v2971
  %v3358 = vpop.f32.mrb[0].mxu0
  %v3359 = vadd.f32 %v3020, %v3358
  %v3360 = vpop.f32.mrb[0].mxu0
  %v3361 = vpop.f32.mrb[0].mxu0
  %v3362 = vadd.f32 %v3020, %v3361
  %v3363 = vpop.f32.mrb[0].mxu0
  %3364 = vmatprep.mubr.bf16.mxu0 %v3137
  %3365 = vmatmul.mubr.bf16.gmra.mrb[0].mxu0 %v2973
  %v3366 = vpop.f32.mrb[0].mxu0
  %v3367 = vadd.f32 %v3020, %v3366
  %v3368 = vpop.f32.mrb[0].mxu0
  %v3369 = vpop.f32.mrb[0].mxu0
  %v3370 = vadd.f32 %v3020, %v3369
  %v3371 = vpop.f32.mrb[0].mxu0
  %3372 = vmatprep.mubr.bf16.mxu0 %v3140
  %3373 = vmatmul.mubr.bf16.gmra.mrb[0].mxu0 %v2975
  %v3374 = vpop.f32.mrb[0].mxu0
  %v3375 = vadd.f32 %v3020, %v3374
  %v3376 = vpop.f32.mrb[0].mxu0
  %v3377 = vpop.f32.mrb[0].mxu0
  %v3378 = vadd.f32 %v3020, %v3377
  %v3379 = vpop.f32.mrb[0].mxu0
  %3380 = vmatprep.mubr.bf16.mxu0 %v3143
  %3381 = vmatmul.mubr.bf16.gmra.mrb[0].mxu0 %v2977
  %v3382 = vpop.f32.mrb[0].mxu0
  %v3383 = vadd.f32 %v3020, %v3382
  %v3384 = vpop.f32.mrb[0].mxu0
  %v3385 = vpop.f32.mrb[0].mxu0
  %v3386 = vadd.f32 %v3020, %v3385
  %v3387 = vpop.f32.mrb[0].mxu0
  %3388 = vmatprep.mubr.bf16.mxu0 %v3146
  %3389 = vmatmul.mubr.bf16.gmra.mrb[0].mxu0 %v2979
  %v3390 = vpop.f32.mrb[0].mxu0
  %v3391 = vadd.f32 %v3020, %v3390
  %v3392 = vpop.f32.mrb[0].mxu0
  %v3393 = vpop.f32.mrb[0].mxu0
  %v3394 = vadd.f32 %v3020, %v3393
  %v3395 = vpop.f32.mrb[0].mxu0
  %3396 = vmatprep.mubr.bf16.mxu0 %v3149
  %3397 = vmatmul.mubr.bf16.gmra.mrb[0].mxu0 %v2981
  %v3398 = vpop.f32.mrb[0].mxu0
  %v3399 = vadd.f32 %v3020, %v3398
  %v3400 = vpop.f32.mrb[0].mxu0
  %v3401 = vpop.f32.mrb[0].mxu0
  %v3402 = vadd.f32 %v3020, %v3401
  %v3403 = vpop.f32.mrb[0].mxu0
  %3404 = vmatprep.mubr.bf16.mxu0 %v3152
  %3405 = vmatmul.mubr.bf16.gmra.mrb[0].mxu0 %v2983
  %v3406 = vpop.f32.mrb[0].mxu0
  %v3407 = vadd.f32 %v3020, %v3406
  %v3408 = vpop.f32.mrb[0].mxu0
  %v3409 = vpop.f32.mrb[0].mxu0
  %v3410 = vadd.f32 %v3020, %v3409
  %v3411 = vpop.f32.mrb[0].mxu0
  %3412 = vmatprep.mubr.bf16.mxu0 %v3155
  %3413 = vmatmul.mubr.bf16.gmra.mrb[0].mxu0 %v2985
  %v3414 = vpop.f32.mrb[0].mxu0
  %v3415 = vadd.f32 %v3020, %v3414
  %v3416 = vpop.f32.mrb[0].mxu0
  %v3417 = vpop.f32.mrb[0].mxu0
  %v3418 = vadd.f32 %v3020, %v3417
  %v3419 = vpop.f32.mrb[0].mxu0
  %3420 = vmatprep.mubr.bf16.mxu0 %v3158
  %3421 = vmatmul.mubr.bf16.gmra.mrb[0].mxu0 %v2987
  %v3422 = vpop.f32.mrb[0].mxu0
  %v3423 = vadd.f32 %v3020, %v3422
  %v3424 = vpop.f32.mrb[0].mxu0
  %v3425 = vpop.f32.mrb[0].mxu0
  %v3426 = vadd.f32 %v3020, %v3425
  %v3427 = vpop.f32.mrb[0].mxu0
  %3428 = vmatprep.mubr.bf16.mxu0 %v3161
  %3429 = vmatmul.mubr.bf16.gmra.mrb[0].mxu0 %v2989
  %v3430 = vpop.f32.mrb[0].mxu0
  %v3431 = vadd.f32 %v3020, %v3430
  %v3432 = vpop.f32.mrb[0].mxu0
  %v3433 = vpop.f32.mrb[0].mxu0
  %v3434 = vadd.f32 %v3020, %v3433
  %v3435 = vpop.f32.mrb[0].mxu0
  %3436 = vmatprep.mubr.bf16.mxu0 %v3164
  %3437 = vmatmul.mubr.bf16.gmra.mrb[0].mxu0 %v2991
  %v3438 = vpop.f32.mrb[0].mxu0
  %v3439 = vadd.f32 %v3020, %v3438
  %v3440 = vpop.f32.mrb[0].mxu0
  %v3441 = vpop.f32.mrb[0].mxu0
  %v3442 = vadd.f32 %v3020, %v3441
  %v3443 = vpop.f32.mrb[0].mxu0
  %3444 = vmatprep.mubr.bf16.mxu0 %v3167
  %3445 = vmatmul.mubr.bf16.gmra.mrb[0].mxu0 %v2993
  %v3446 = vpop.f32.mrb[0].mxu0
  %v3447 = vadd.f32 %v3020, %v3446
  %v3448 = vpop.f32.mrb[0].mxu0
  %v3449 = vpop.f32.mrb[0].mxu0
  %v3450 = vadd.f32 %v3020, %v3449
  %v3451 = vpop.f32.mrb[0].mxu0
  %3452 = vmatprep.mubr.bf16.mxu0 %v3170
  %3453 = vmatmul.mubr.bf16.gmra.mrb[0].mxu0 %v2995
  %v3454 = vpop.f32.mrb[0].mxu0
  %v3455 = vadd.f32 %v3020, %v3454
  %v3456 = vpop.f32.mrb[0].mxu0
  %v3457 = vpop.f32.mrb[0].mxu0
  %v3458 = vadd.f32 %v3020, %v3457
  %v3459 = vpop.f32.mrb[0].mxu0
  %3460 = vdwg.mxu0
  %v3461 = vld [vmem:[%s3] sm:$0xf]
  %v3462 = vld [vmem:[%s3 + $0x4] sm:$0xf]
  %v3463 = vld [vmem:[%s3 + $0x8] sm:$0xf]
  %v3464 = vld [vmem:[%s3 + $0xc] sm:$0xf]
  %v3465 = vld [vmem:[%s3 + $0x10] sm:$0xf]
  %v3466 = vld [vmem:[%s3 + $0x14] sm:$0xf]
  %v3467 = vld [vmem:[%s3 + $0x18] sm:$0xf]
  %v3468 = vld [vmem:[%s3 + $0x1c] sm:$0xf]
  %v3469 = vld [vmem:[%s3 + $0x20] sm:$0xf]
  %v3470 = vld [vmem:[%s3 + $0x24] sm:$0xf]
  %v3471 = vld [vmem:[%s3 + $0x28] sm:$0xf]
  %v3472 = vld [vmem:[%s3 + $0x2c] sm:$0xf]
  %v3473 = vld [vmem:[%s3 + $0x30] sm:$0xf]
  %v3474 = vld [vmem:[%s3 + $0x34] sm:$0xf]
  %v3475 = vld [vmem:[%s3 + $0x38] sm:$0xf]
  %v3476 = vld [vmem:[%s3 + $0x3c] sm:$0xf]
  %v3477 = vld [vmem:[%s3 + $0x40] sm:$0xf]
  %v3478 = vld [vmem:[%s3 + $0x44] sm:$0xf]
  %v3479 = vld [vmem:[%s3 + $0x48] sm:$0xf]
  %v3480 = vld [vmem:[%s3 + $0x4c] sm:$0xf]
  %v3481 = vld [vmem:[%s3 + $0x50] sm:$0xf]
  %v3482 = vld [vmem:[%s3 + $0x54] sm:$0xf]
  %v3483 = vld [vmem:[%s3 + $0x58] sm:$0xf]
  %v3484 = vld [vmem:[%s3 + $0x5c] sm:$0xf]
  %v3485 = vld [vmem:[%s3 + $0x60] sm:$0xf]
  %v3486 = vld [vmem:[%s3 + $0x64] sm:$0xf]
  %v3487 = vld [vmem:[%s3 + $0x68] sm:$0xf]
  %v3488 = vld [vmem:[%s3 + $0x6c] sm:$0xf]
  %v3489 = vld [vmem:[%s3 + $0x70] sm:$0xf]
  %v3490 = vld [vmem:[%s3 + $0x74] sm:$0xf]
  %v3491 = vld [vmem:[%s3 + $0x78] sm:$0xf]
  %v3492 = vld [vmem:[%s3 + $0x7c] sm:$0xf]
  %v3493 = vld [vmem:[%s3 + $0x80] sm:$0xf]
  %v3494 = vld [vmem:[%s3 + $0x84] sm:$0xf]
  %v3495 = vld [vmem:[%s3 + $0x88] sm:$0xf]
  %v3496 = vld [vmem:[%s3 + $0x8c] sm:$0xf]
  %v3497 = vld [vmem:[%s3 + $0x90] sm:$0xf]
  %v3498 = vld [vmem:[%s3 + $0x94] sm:$0xf]
  %v3499 = vld [vmem:[%s3 + $0x98] sm:$0xf]
  %v3500 = vld [vmem:[%s3 + $0x9c] sm:$0xf]
  %v3501 = vld [vmem:[%s3 + $0xa0] sm:$0xf]
  %v3502 = vld [vmem:[%s3 + $0xa4] sm:$0xf]
  %v3503 = vld [vmem:[%s3 + $0xa8] sm:$0xf]
  %v3504 = vld [vmem:[%s3 + $0xac] sm:$0xf]
  %v3505 = vld [vmem:[%s3 + $0xb0] sm:$0xf]
  %v3506 = vld [vmem:[%s3 + $0xb4] sm:$0xf]
  %v3507 = vld [vmem:[%s3 + $0xb8] sm:$0xf]
  %v3508 = vld [vmem:[%s3 + $0xbc] sm:$0xf]
  %v3509 = vld [vmem:[%s3 + $0xc0] sm:$0xf]
  %v3510 = vld [vmem:[%s3 + $0xc4] sm:$0xf]
  %v3511 = vld [vmem:[%s3 + $0xc8] sm:$0xf]
  %v3512 = vld [vmem:[%s3 + $0xcc] sm:$0xf]
  %v3513 = vld [vmem:[%s3 + $0xd0] sm:$0xf]
  %v3514 = vld [vmem:[%s3 + $0xd4] sm:$0xf]
  %v3515 = vld [vmem:[%s3 + $0xd8] sm:$0xf]
  %v3516 = vld [vmem:[%s3 + $0xdc] sm:$0xf]
  %v3517 = vld [vmem:[%s3 + $0xe0] sm:$0xf]
  %v3518 = vld [vmem:[%s3 + $0xe4] sm:$0xf]
  %v3519 = vld [vmem:[%s3 + $0xe8] sm:$0xf]
  %v3520 = vld [vmem:[%s3 + $0xec] sm:$0xf]
  %v3521 = vld [vmem:[%s3 + $0xf0] sm:$0xf]
  %v3522 = vld [vmem:[%s3 + $0xf4] sm:$0xf]
  %v3523 = vld [vmem:[%s3 + $0xf8] sm:$0xf]
  %v3524 = vld [vmem:[%s3 + $0xfc] sm:$0xf]
  %v3525 = vunpack.c.l.bf16 %v3461
  %v3526 = vunpack.c.l.bf16 %v3462
  %v3527 = vunpack.c.l.bf16 %v3463
  %v3528 = vunpack.c.l.bf16 %v3464
  %v3529 = vunpack.c.l.bf16 %v3465
  %v3530 = vunpack.c.l.bf16 %v3466
  %v3531 = vunpack.c.l.bf16 %v3467
  %v3532 = vunpack.c.l.bf16 %v3468
  %v3533 = vunpack.c.l.bf16 %v3469
  %v3534 = vunpack.c.l.bf16 %v3470
  %v3535 = vunpack.c.l.bf16 %v3471
  %v3536 = vunpack.c.l.bf16 %v3472
  %v3537 = vunpack.c.l.bf16 %v3473
  %v3538 = vunpack.c.l.bf16 %v3474
  %v3539 = vunpack.c.l.bf16 %v3475
  %v3540 = vunpack.c.l.bf16 %v3476
  %v3541 = vunpack.c.l.bf16 %v3477
  %v3542 = vunpack.c.l.bf16 %v3478
  %v3543 = vunpack.c.l.bf16 %v3479
  %v3544 = vunpack.c.l.bf16 %v3480
  %v3545 = vunpack.c.l.bf16 %v3481
  %v3546 = vunpack.c.l.bf16 %v3482
  %v3547 = vunpack.c.l.bf16 %v3483
  %v3548 = vunpack.c.l.bf16 %v3484
  %v3549 = vunpack.c.l.bf16 %v3485
  %v3550 = vunpack.c.l.bf16 %v3486
  %v3551 = vunpack.c.l.bf16 %v3487
  %v3552 = vunpack.c.l.bf16 %v3488
  %v3553 = vunpack.c.l.bf16 %v3489
  %v3554 = vunpack.c.l.bf16 %v3490
  %v3555 = vunpack.c.l.bf16 %v3491
  %v3556 = vunpack.c.l.bf16 %v3492
  %v3557 = vunpack.c.l.bf16 %v3493
  %v3558 = vunpack.c.l.bf16 %v3494
  %v3559 = vunpack.c.l.bf16 %v3495
  %v3560 = vunpack.c.l.bf16 %v3496
  %v3561 = vunpack.c.l.bf16 %v3497
  %v3562 = vunpack.c.l.bf16 %v3498
  %v3563 = vunpack.c.l.bf16 %v3499
  %v3564 = vunpack.c.l.bf16 %v3500
  %v3565 = vunpack.c.l.bf16 %v3501
  %v3566 = vunpack.c.l.bf16 %v3502
  %v3567 = vunpack.c.l.bf16 %v3503
  %v3568 = vunpack.c.l.bf16 %v3504
  %v3569 = vunpack.c.l.bf16 %v3505
  %v3570 = vunpack.c.l.bf16 %v3506
  %v3571 = vunpack.c.l.bf16 %v3507
  %v3572 = vunpack.c.l.bf16 %v3508
  %v3573 = vunpack.c.l.bf16 %v3509
  %v3574 = vunpack.c.l.bf16 %v3510
  %v3575 = vunpack.c.l.bf16 %v3511
  %v3576 = vunpack.c.l.bf16 %v3512
  %v3577 = vunpack.c.l.bf16 %v3513
  %v3578 = vunpack.c.l.bf16 %v3514
  %v3579 = vunpack.c.l.bf16 %v3515
  %v3580 = vunpack.c.l.bf16 %v3516
  %v3581 = vunpack.c.l.bf16 %v3517
  %v3582 = vunpack.c.l.bf16 %v3518
  %v3583 = vunpack.c.l.bf16 %v3519
  %v3584 = vunpack.c.l.bf16 %v3520
  %v3585 = vunpack.c.l.bf16 %v3521
  %v3586 = vunpack.c.l.bf16 %v3522
  %v3587 = vunpack.c.l.bf16 %v3523
  %v3588 = vunpack.c.l.bf16 %v3524
  %v3589 = vadd.f32 %v3207, %v3525
  %v3590 = vadd.f32 %v3210, %v3526
  %v3591 = vadd.f32 %v3215, %v3527
  %v3592 = vadd.f32 %v3218, %v3528
  %v3593 = vadd.f32 %v3223, %v3529
  %v3594 = vadd.f32 %v3226, %v3530
  %v3595 = vadd.f32 %v3231, %v3531
  %v3596 = vadd.f32 %v3234, %v3532
  %v3597 = vadd.f32 %v3239, %v3533
  %v3598 = vadd.f32 %v3242, %v3534
  %v3599 = vadd.f32 %v3247, %v3535
  %v3600 = vadd.f32 %v3250, %v3536
  %v3601 = vadd.f32 %v3255, %v3537
  %v3602 = vadd.f32 %v3258, %v3538
  %v3603 = vadd.f32 %v3263, %v3539
  %v3604 = vadd.f32 %v3266, %v3540
  %v3605 = vadd.f32 %v3271, %v3541
  %v3606 = vadd.f32 %v3274, %v3542
  %v3607 = vadd.f32 %v3279, %v3543
  %v3608 = vadd.f32 %v3282, %v3544
  %v3609 = vadd.f32 %v3287, %v3545
  %v3610 = vadd.f32 %v3290, %v3546
  %v3611 = vadd.f32 %v3295, %v3547
  %v3612 = vadd.f32 %v3298, %v3548
  %v3613 = vadd.f32 %v3303, %v3549
  %v3614 = vadd.f32 %v3306, %v3550
  %v3615 = vadd.f32 %v3311, %v3551
  %v3616 = vadd.f32 %v3314, %v3552
  %v3617 = vadd.f32 %v3319, %v3553
  %v3618 = vadd.f32 %v3322, %v3554
  %v3619 = vadd.f32 %v3327, %v3555
  %v3620 = vadd.f32 %v3330, %v3556
  %v3621 = vadd.f32 %v3335, %v3557
  %v3622 = vadd.f32 %v3338, %v3558
  %v3623 = vadd.f32 %v3343, %v3559
  %v3624 = vadd.f32 %v3346, %v3560
  %v3625 = vadd.f32 %v3351, %v3561
  %v3626 = vadd.f32 %v3354, %v3562
  %v3627 = vadd.f32 %v3359, %v3563
  %v3628 = vadd.f32 %v3362, %v3564
  %v3629 = vadd.f32 %v3367, %v3565
  %v3630 = vadd.f32 %v3370, %v3566
  %v3631 = vadd.f32 %v3375, %v3567
  %v3632 = vadd.f32 %v3378, %v3568
  %v3633 = vadd.f32 %v3383, %v3569
  %v3634 = vadd.f32 %v3386, %v3570
  %v3635 = vadd.f32 %v3391, %v3571
  %v3636 = vadd.f32 %v3394, %v3572
  %v3637 = vadd.f32 %v3399, %v3573
  %v3638 = vadd.f32 %v3402, %v3574
  %v3639 = vadd.f32 %v3407, %v3575
  %v3640 = vadd.f32 %v3410, %v3576
  %v3641 = vadd.f32 %v3415, %v3577
  %v3642 = vadd.f32 %v3418, %v3578
  %v3643 = vadd.f32 %v3423, %v3579
  %v3644 = vadd.f32 %v3426, %v3580
  %v3645 = vadd.f32 %v3431, %v3581
  %v3646 = vadd.f32 %v3434, %v3582
  %v3647 = vadd.f32 %v3439, %v3583
  %v3648 = vadd.f32 %v3442, %v3584
  %v3649 = vadd.f32 %v3447, %v3585
  %v3650 = vadd.f32 %v3450, %v3586
  %v3651 = vadd.f32 %v3455, %v3587
  %v3652 = vadd.f32 %v3458, %v3588
  %v3653 = vpack.c.bf16 %v3590, %v3589
  %v3654 = vpack.c.bf16 %v3592, %v3591
  %v3655 = vpack.c.bf16 %v3594, %v3593
  %v3656 = vpack.c.bf16 %v3596, %v3595
  %v3657 = vpack.c.bf16 %v3598, %v3597
  %v3658 = vpack.c.bf16 %v3600, %v3599
  %v3659 = vpack.c.bf16 %v3602, %v3601
  %v3660 = vpack.c.bf16 %v3604, %v3603
  %v3661 = vpack.c.bf16 %v3606, %v3605
  %v3662 = vpack.c.bf16 %v3608, %v3607
  %v3663 = vpack.c.bf16 %v3610, %v3609
  %v3664 = vpack.c.bf16 %v3612, %v3611
  %v3665 = vpack.c.bf16 %v3614, %v3613
  %v3666 = vpack.c.bf16 %v3616, %v3615
  %v3667 = vpack.c.bf16 %v3618, %v3617
  %v3668 = vpack.c.bf16 %v3620, %v3619
  %v3669 = vpack.c.bf16 %v3622, %v3621
  %v3670 = vpack.c.bf16 %v3624, %v3623
  %v3671 = vpack.c.bf16 %v3626, %v3625
  %v3672 = vpack.c.bf16 %v3628, %v3627
  %v3673 = vpack.c.bf16 %v3630, %v3629
  %v3674 = vpack.c.bf16 %v3632, %v3631
  %v3675 = vpack.c.bf16 %v3634, %v3633
  %v3676 = vpack.c.bf16 %v3636, %v3635
  %v3677 = vpack.c.bf16 %v3638, %v3637
  %v3678 = vpack.c.bf16 %v3640, %v3639
  %v3679 = vpack.c.bf16 %v3642, %v3641
  %v3680 = vpack.c.bf16 %v3644, %v3643
  %v3681 = vpack.c.bf16 %v3646, %v3645
  %v3682 = vpack.c.bf16 %v3648, %v3647
  %v3683 = vpack.c.bf16 %v3650, %v3649
  %v3684 = vpack.c.bf16 %v3652, %v3651
  %v3717 = vunpack.c.l.b16 %v3653
  %v3718 = vunpack.c.h.b16 %v3653
  %v3719 = vunpack.c.l.b16 %v3654
  %v3720 = vunpack.c.h.b16 %v3654
  %v3721 = vunpack.c.l.b16 %v3655
  %v3722 = vunpack.c.h.b16 %v3655
  %v3723 = vunpack.c.l.b16 %v3656
  %v3724 = vunpack.c.h.b16 %v3656
  %v3725 = vunpack.c.l.b16 %v3657
  %v3726 = vunpack.c.h.b16 %v3657
  %v3727 = vunpack.c.l.b16 %v3658
  %v3728 = vunpack.c.h.b16 %v3658
  %v3729 = vunpack.c.l.b16 %v3659
  %v3730 = vunpack.c.h.b16 %v3659
  %v3731 = vunpack.c.l.b16 %v3660
  %v3732 = vunpack.c.h.b16 %v3660
  %v3733 = vunpack.c.l.b16 %v3661
  %v3734 = vunpack.c.h.b16 %v3661
  %v3735 = vunpack.c.l.b16 %v3662
  %v3736 = vunpack.c.h.b16 %v3662
  %v3737 = vunpack.c.l.b16 %v3663
  %v3738 = vunpack.c.h.b16 %v3663
  %v3739 = vunpack.c.l.b16 %v3664
  %v3740 = vunpack.c.h.b16 %v3664
  %v3741 = vunpack.c.l.b16 %v3665
  %v3742 = vunpack.c.h.b16 %v3665
  %v3743 = vunpack.c.l.b16 %v3666
  %v3744 = vunpack.c.h.b16 %v3666
  %v3745 = vunpack.c.l.b16 %v3667
  %v3746 = vunpack.c.h.b16 %v3667
  %v3747 = vunpack.c.l.b16 %v3668
  %v3748 = vunpack.c.h.b16 %v3668
  %v3749 = vunpack.c.l.b16 %v3669
  %v3750 = vunpack.c.h.b16 %v3669
  %v3751 = vunpack.c.l.b16 %v3670
  %v3752 = vunpack.c.h.b16 %v3670
  %v3753 = vunpack.c.l.b16 %v3671
  %v3754 = vunpack.c.h.b16 %v3671
  %v3755 = vunpack.c.l.b16 %v3672
  %v3756 = vunpack.c.h.b16 %v3672
  %v3757 = vunpack.c.l.b16 %v3673
  %v3758 = vunpack.c.h.b16 %v3673
  %v3759 = vunpack.c.l.b16 %v3674
  %v3760 = vunpack.c.h.b16 %v3674
  %v3761 = vunpack.c.l.b16 %v3675
  %v3762 = vunpack.c.h.b16 %v3675
  %v3763 = vunpack.c.l.b16 %v3676
  %v3764 = vunpack.c.h.b16 %v3676
  %v3765 = vunpack.c.l.b16 %v3677
  %v3766 = vunpack.c.h.b16 %v3677
  %v3767 = vunpack.c.l.b16 %v3678
  %v3768 = vunpack.c.h.b16 %v3678
  %v3769 = vunpack.c.l.b16 %v3679
  %v3770 = vunpack.c.h.b16 %v3679
  %v3771 = vunpack.c.l.b16 %v3680
  %v3772 = vunpack.c.h.b16 %v3680
  %v3773 = vunpack.c.l.b16 %v3681
  %v3774 = vunpack.c.h.b16 %v3681
  %v3775 = vunpack.c.l.b16 %v3682
  %v3776 = vunpack.c.h.b16 %v3682
  %v3777 = vunpack.c.l.b16 %v3683
  %v3778 = vunpack.c.h.b16 %v3683
  %v3779 = vunpack.c.l.b16 %v3684
  %v3780 = vunpack.c.h.b16 %v3684
  %v3781 = vpack.c.b16 %v3717, %v3717
  %v3782 = vpack.c.b16 %v3718, %v3718
  %v3783 = vpack.c.b16 %v3719, %v3719
  %v3784 = vpack.c.b16 %v3720, %v3720
  %v3785 = vpack.c.b16 %v3721, %v3721
  %v3786 = vpack.c.b16 %v3722, %v3722
  %v3787 = vpack.c.b16 %v3723, %v3723
  %v3788 = vpack.c.b16 %v3724, %v3724
  %v3789 = vpack.c.b16 %v3725, %v3725
  %v3790 = vpack.c.b16 %v3726, %v3726
  %v3791 = vpack.c.b16 %v3727, %v3727
  %v3792 = vpack.c.b16 %v3728, %v3728
  %v3793 = vpack.c.b16 %v3729, %v3729
  %v3794 = vpack.c.b16 %v3730, %v3730
  %v3795 = vpack.c.b16 %v3731, %v3731
  %v3796 = vpack.c.b16 %v3732, %v3732
  %v3797 = vpack.c.b16 %v3733, %v3733
  %v3798 = vpack.c.b16 %v3734, %v3734
  %v3799 = vpack.c.b16 %v3735, %v3735
  %v3800 = vpack.c.b16 %v3736, %v3736
  %v3801 = vpack.c.b16 %v3737, %v3737
  %v3802 = vpack.c.b16 %v3738, %v3738
  %v3803 = vpack.c.b16 %v3739, %v3739
  %v3804 = vpack.c.b16 %v3740, %v3740
  %v3805 = vpack.c.b16 %v3741, %v3741
  %v3806 = vpack.c.b16 %v3742, %v3742
  %v3807 = vpack.c.b16 %v3743, %v3743
  %v3808 = vpack.c.b16 %v3744, %v3744
  %v3809 = vpack.c.b16 %v3745, %v3745
  %v3810 = vpack.c.b16 %v3746, %v3746
  %v3811 = vpack.c.b16 %v3747, %v3747
  %v3812 = vpack.c.b16 %v3748, %v3748
  %v3813 = vpack.c.b16 %v3749, %v3749
  %v3814 = vpack.c.b16 %v3750, %v3750
  %v3815 = vpack.c.b16 %v3751, %v3751
  %v3816 = vpack.c.b16 %v3752, %v3752
  %v3817 = vpack.c.b16 %v3753, %v3753
  %v3818 = vpack.c.b16 %v3754, %v3754
  %v3819 = vpack.c.b16 %v3755, %v3755
  %v3820 = vpack.c.b16 %v3756, %v3756
  %v3821 = vpack.c.b16 %v3757, %v3757
  %v3822 = vpack.c.b16 %v3758, %v3758
  %v3823 = vpack.c.b16 %v3759, %v3759
  %v3824 = vpack.c.b16 %v3760, %v3760
  %v3825 = vpack.c.b16 %v3761, %v3761
  %v3826 = vpack.c.b16 %v3762, %v3762
  %v3827 = vpack.c.b16 %v3763, %v3763
  %v3828 = vpack.c.b16 %v3764, %v3764
  %v3829 = vpack.c.b16 %v3765, %v3765
  %v3830 = vpack.c.b16 %v3766, %v3766
  %v3831 = vpack.c.b16 %v3767, %v3767
  %v3832 = vpack.c.b16 %v3768, %v3768
  %v3833 = vpack.c.b16 %v3769, %v3769
  %v3834 = vpack.c.b16 %v3770, %v3770
  %v3835 = vpack.c.b16 %v3771, %v3771
  %v3836 = vpack.c.b16 %v3772, %v3772
  %v3837 = vpack.c.b16 %v3773, %v3773
  %v3838 = vpack.c.b16 %v3774, %v3774
  %v3839 = vpack.c.b16 %v3775, %v3775
  %v3840 = vpack.c.b16 %v3776, %v3776
  %v3841 = vpack.c.b16 %v3777, %v3777
  %v3842 = vpack.c.b16 %v3778, %v3778
  %v3843 = vpack.c.b16 %v3779, %v3779
  %v3844 = vpack.c.b16 %v3780, %v3780
  %vm3909 = vcmask 19456
  %3910 = vst.msk [vmem:[%s4] sm:$0xf] %vm3909, %v3781
  %3911 = vst.msk [vmem:[%s4 + $0x4] sm:$0xf] %vm3909, %v3782
  %3912 = vst.msk [vmem:[%s4 + $0x8] sm:$0xf] %vm3909, %v3783
  %3913 = vst.msk [vmem:[%s4 + $0xc] sm:$0xf] %vm3909, %v3784
  %3914 = vst.msk [vmem:[%s4 + $0x10] sm:$0xf] %vm3909, %v3785
  %3915 = vst.msk [vmem:[%s4 + $0x14] sm:$0xf] %vm3909, %v3786
  %3916 = vst.msk [vmem:[%s4 + $0x18] sm:$0xf] %vm3909, %v3787
  %3917 = vst.msk [vmem:[%s4 + $0x1c] sm:$0xf] %vm3909, %v3788
  %3918 = vst.msk [vmem:[%s4 + $0x20] sm:$0xf] %vm3909, %v3789
  %3919 = vst.msk [vmem:[%s4 + $0x24] sm:$0xf] %vm3909, %v3790
  %3920 = vst.msk [vmem:[%s4 + $0x28] sm:$0xf] %vm3909, %v3791
  %3921 = vst.msk [vmem:[%s4 + $0x2c] sm:$0xf] %vm3909, %v3792
  %3922 = vst.msk [vmem:[%s4 + $0x30] sm:$0xf] %vm3909, %v3793
  %3923 = vst.msk [vmem:[%s4 + $0x34] sm:$0xf] %vm3909, %v3794
  %3924 = vst.msk [vmem:[%s4 + $0x38] sm:$0xf] %vm3909, %v3795
  %3925 = vst.msk [vmem:[%s4 + $0x3c] sm:$0xf] %vm3909, %v3796
  %3926 = vst.msk [vmem:[%s4 + $0x40] sm:$0xf] %vm3909, %v3797
  %3927 = vst.msk [vmem:[%s4 + $0x44] sm:$0xf] %vm3909, %v3798
  %3928 = vst.msk [vmem:[%s4 + $0x48] sm:$0xf] %vm3909, %v3799
  %3929 = vst.msk [vmem:[%s4 + $0x4c] sm:$0xf] %vm3909, %v3800
  %3930 = vst.msk [vmem:[%s4 + $0x50] sm:$0xf] %vm3909, %v3801
  %3931 = vst.msk [vmem:[%s4 + $0x54] sm:$0xf] %vm3909, %v3802
  %3932 = vst.msk [vmem:[%s4 + $0x58] sm:$0xf] %vm3909, %v3803
  %3933 = vst.msk [vmem:[%s4 + $0x5c] sm:$0xf] %vm3909, %v3804
  %3934 = vst.msk [vmem:[%s4 + $0x60] sm:$0xf] %vm3909, %v3805
  %3935 = vst.msk [vmem:[%s4 + $0x64] sm:$0xf] %vm3909, %v3806
  %3936 = vst.msk [vmem:[%s4 + $0x68] sm:$0xf] %vm3909, %v3807
  %3937 = vst.msk [vmem:[%s4 + $0x6c] sm:$0xf] %vm3909, %v3808
  %3938 = vst.msk [vmem:[%s4 + $0x70] sm:$0xf] %vm3909, %v3809
  %3939 = vst.msk [vmem:[%s4 + $0x74] sm:$0xf] %vm3909, %v3810
  %3940 = vst.msk [vmem:[%s4 + $0x78] sm:$0xf] %vm3909, %v3811
  %3941 = vst.msk [vmem:[%s4 + $0x7c] sm:$0xf] %vm3909, %v3812
  %3942 = vst.msk [vmem:[%s4 + $0x80] sm:$0xf] %vm3909, %v3813
  %3943 = vst.msk [vmem:[%s4 + $0x84] sm:$0xf] %vm3909, %v3814
  %3944 = vst.msk [vmem:[%s4 + $0x88] sm:$0xf] %vm3909, %v3815
  %3945 = vst.msk [vmem:[%s4 + $0x8c] sm:$0xf] %vm3909, %v3816
  %3946 = vst.msk [vmem:[%s4 + $0x90] sm:$0xf] %vm3909, %v3817
  %3947 = vst.msk [vmem:[%s4 + $0x94] sm:$0xf] %vm3909, %v3818
  %3948 = vst.msk [vmem:[%s4 + $0x98] sm:$0xf] %vm3909, %v3819
  %3949 = vst.msk [vmem:[%s4 + $0x9c] sm:$0xf] %vm3909, %v3820
  %3950 = vst.msk [vmem:[%s4 + $0xa0] sm:$0xf] %vm3909, %v3821
  %3951 = vst.msk [vmem:[%s4 + $0xa4] sm:$0xf] %vm3909, %v3822
  %3952 = vst.msk [vmem:[%s4 + $0xa8] sm:$0xf] %vm3909, %v3823
  %3953 = vst.msk [vmem:[%s4 + $0xac] sm:$0xf] %vm3909, %v3824
  %3954 = vst.msk [vmem:[%s4 + $0xb0] sm:$0xf] %vm3909, %v3825
  %3955 = vst.msk [vmem:[%s4 + $0xb4] sm:$0xf] %vm3909, %v3826
  %3956 = vst.msk [vmem:[%s4 + $0xb8] sm:$0xf] %vm3909, %v3827
  %3957 = vst.msk [vmem:[%s4 + $0xbc] sm:$0xf] %vm3909, %v3828
  %3958 = vst.msk [vmem:[%s4 + $0xc0] sm:$0xf] %vm3909, %v3829
  %3959 = vst.msk [vmem:[%s4 + $0xc4] sm:$0xf] %vm3909, %v3830
  %3960 = vst.msk [vmem:[%s4 + $0xc8] sm:$0xf] %vm3909, %v3831
  %3961 = vst.msk [vmem:[%s4 + $0xcc] sm:$0xf] %vm3909, %v3832
  %3962 = vst.msk [vmem:[%s4 + $0xd0] sm:$0xf] %vm3909, %v3833
  %3963 = vst.msk [vmem:[%s4 + $0xd4] sm:$0xf] %vm3909, %v3834
  %3964 = vst.msk [vmem:[%s4 + $0xd8] sm:$0xf] %vm3909, %v3835
  %3965 = vst.msk [vmem:[%s4 + $0xdc] sm:$0xf] %vm3909, %v3836
  %3966 = vst.msk [vmem:[%s4 + $0xe0] sm:$0xf] %vm3909, %v3837
  %3967 = vst.msk [vmem:[%s4 + $0xe4] sm:$0xf] %vm3909, %v3838
  %3968 = vst.msk [vmem:[%s4 + $0xe8] sm:$0xf] %vm3909, %v3839
  %3969 = vst.msk [vmem:[%s4 + $0xec] sm:$0xf] %vm3909, %v3840
  %3970 = vst.msk [vmem:[%s4 + $0xf0] sm:$0xf] %vm3909, %v3841
  %3971 = vst.msk [vmem:[%s4 + $0xf4] sm:$0xf] %vm3909, %v3842
  %3972 = vst.msk [vmem:[%s4 + $0xf8] sm:$0xf] %vm3909, %v3843
  %3973 = vst.msk [vmem:[%s4 + $0xfc] sm:$0xf] %vm3909, %v3844
  // Predicated region
  $region18: #{drsenmk_forward.15} parent=0 // pred_check
    _
  $region19: #{drsenmk_forward.15} parent=0 // pred_check_branch
    %3975 = sbr.rel (0) target = $region21
  $region20: #{drsenmk_forward.15} parent=0 // pred_region
    _
  $region21: #{drsenmk_forward.15} parent=0 // pred_fallthru
    _
  // Predicated region
  $region22: #{drsenmk_forward.15} parent=0 // pred_check
    _
  $region23: #{drsenmk_forward.15} parent=0 // pred_check_branch
    %3977 = sbr.rel (0) target = $region25
  $region24: #{drsenmk_forward.15} parent=0 // pred_region
    _
  $region25: #{drsenmk_forward.15} parent=0 // pred_fallthru
    _

</llo_original>
